<compile_context>
chip_gen: v7x
topology: tpu7x:2x2x1
jax: 0.10.0
libtpu: 0.0.40
codegen_flags: <defaults>
</compile_context>

<pallas_src>
import functools

import numpy as np
import jax
import jax.numpy as jnp
from jax.experimental import pallas as pl
from jax.experimental.pallas import tpu as pltpu


_VMEM = functools.partial(pl.BlockSpec, memory_space=pltpu.MemorySpace.VMEM)
_PARAMS = pltpu.CompilerParams(vmem_limit_bytes=32 * 1024 * 1024)


# --------------------------------------------------------------------------
# In-kernel building block: one "same"-padded 3x3x3 conv layer.
# src refs have layout (D+2, H+2, (W+2)*Cin) with an explicit zero halo; the
# banded weight matrices carry the kw/W structure, so each of the 9 (kd, kh)
# taps is a single full-lane matmul per output depth slice.
# --------------------------------------------------------------------------
def _conv_layer(src_refs, band_refs, bias_ref, dst_ref, *, depth, rows, relu):
    nout = bias_ref.shape[-1]

    def body(od, carry):
        acc = jnp.zeros((rows, nout), jnp.float32)
        for k in range(9):
            kd, kh = k // 3, k % 3
            for s_ref, b_ref in zip(src_refs, band_refs):
                lhs = s_ref[od + kd, kh:kh + rows, :].astype(jnp.bfloat16)
                acc = acc + jnp.dot(lhs, b_ref[k],
                                    preferred_element_type=jnp.float32)
        acc = acc + bias_ref[...]
        if relu:
            acc = jnp.maximum(acc, 0.0)
        dst_ref[1 + od, 1:1 + rows, :] = acc
        return carry

    jax.lax.fori_loop(0, depth, body, 0)


# ------------------------------- kernels ----------------------------------
def _enc_kernel(xp, band1, bias1, band2, bias2, e1b_out, e1a_scr):
    e1a_scr[...] = jnp.zeros(e1a_scr.shape, e1a_scr.dtype)
    e1b_out[...] = jnp.zeros(e1b_out.shape, e1b_out.dtype)
    _conv_layer([xp], [band1], bias1, e1a_scr, depth=16, rows=16, relu=True)
    _conv_layer([e1a_scr], [band2], bias2, e1b_out, depth=16, rows=16, relu=True)


def _bot_kernel(pp, band1, bias1, band2, bias2, b2_out, b1_scr):
    b1_scr[...] = jnp.zeros(b1_scr.shape, b1_scr.dtype)
    b2_out[...] = jnp.zeros(b2_out.shape, b2_out.dtype)
    _conv_layer([pp], [band1], bias1, b1_scr, depth=8, rows=8, relu=True)
    _conv_layer([b1_scr], [band2], bias2, b2_out, depth=8, rows=8, relu=True)


def _dec_kernel(up, e1b, band_u, band_e, bias_a, band_b, bias_b,
                head_w, head_b, out_ref, d1a_scr):
    d1a_scr[...] = jnp.zeros(d1a_scr.shape, d1a_scr.dtype)
    # decoder conv 1: skip-concat fused as split-K over (upsampled, encoder)
    _conv_layer([up, e1b], [band_u, band_e], bias_a, d1a_scr,
                depth=16, rows=16, relu=True)

    nmid = bias_b.shape[-1]

    def body(od, carry):
        acc = jnp.zeros((16, nmid), jnp.float32)
        for k in range(9):
            kd, kh = k // 3, k % 3
            lhs = d1a_scr[od + kd, kh:kh + 16, :].astype(jnp.bfloat16)
            acc = acc + jnp.dot(lhs, band_b[k],
                                preferred_element_type=jnp.float32)
        acc = jnp.maximum(acc + bias_b[...], 0.0)              # dec1b rows
        logits = jnp.dot(acc.astype(jnp.bfloat16), head_w[...],
                         preferred_element_type=jnp.float32) + head_b[...]
        out_ref[od, :, :] = logits
        return carry

    jax.lax.fori_loop(0, 16, body, 0)


# --------------------------- pallas_call wrappers --------------------------
def encoder(xp, band1, bias1, band2, bias2):
    return pl.pallas_call(
        _enc_kernel,
        out_shape=jax.ShapeDtypeStruct((18, 18, 18 * 8), jnp.float32),
        in_specs=[_VMEM()] * 5,
        out_specs=_VMEM(),
        scratch_shapes=[pltpu.VMEM((18, 18, 18 * 8), jnp.float32)],
        compiler_params=_PARAMS,
    )(xp, band1, bias1, band2, bias2)


def bottleneck(pp, band1, bias1, band2, bias2):
    return pl.pallas_call(
        _bot_kernel,
        out_shape=jax.ShapeDtypeStruct((10, 10, 10 * 16), jnp.float32),
        in_specs=[_VMEM()] * 5,
        out_specs=_VMEM(),
        scratch_shapes=[pltpu.VMEM((10, 10, 10 * 16), jnp.float32)],
        compiler_params=_PARAMS,
    )(pp, band1, bias1, band2, bias2)


def decoder(up, e1b_pad, band_u, band_e, bias_a, band_b, bias_b, head_w, head_b):
    return pl.pallas_call(
        _dec_kernel,
        out_shape=jax.ShapeDtypeStruct((16, 16, 32), jnp.float32),
        in_specs=[_VMEM()] * 9,
        out_specs=_VMEM(),
        scratch_shapes=[pltpu.VMEM((18, 18, 18 * 8), jnp.float32)],
        compiler_params=_PARAMS,
    )(up, e1b_pad, band_u, band_e, bias_a, band_b, bias_b, head_w, head_b)


# ------------------- host-side weight preprocessing (init) -----------------
def _make_bands(w, wp):
    """w: (3,3,3,Cin,Cout) -> 9 banded matrices (wp*Cin, wp*Cout), bf16."""
    w = np.asarray(w, np.float32)
    _, _, _, cin, cout = w.shape
    wtrue = wp - 2
    band = np.zeros((9, wp * cin, wp * cout), np.float32)
    for kd in range(3):
        for kh in range(3):
            k = kd * 3 + kh
            for kw in range(3):
                for wo in range(1, wtrue + 1):
                    wi = wo - 1 + kw
                    band[k, wi * cin:(wi + 1) * cin,
                         wo * cout:(wo + 1) * cout] = w[kd, kh, kw]
    return jnp.asarray(band, jnp.bfloat16)


def _make_bias_row(b, wp):
    b = np.asarray(b, np.float32)
    cout = b.shape[0]
    row = np.zeros((1, wp * cout), np.float32)      # zeros on the W halo
    for wo in range(1, wp - 1):
        row[0, wo * cout:(wo + 1) * cout] = b
    return jnp.asarray(row)


def _make_head(w, wp):
    """1x1x1 head (Cin,Cout) -> (wp*Cin, (wp-2)*Cout) block matrix, bf16."""
    w = np.asarray(w, np.float32)
    cin, cout = w.shape
    wtrue = wp - 2
    m = np.zeros((wp * cin, wtrue * cout), np.float32)
    for wo in range(wtrue):
        wi = wo + 1
        m[wi * cin:(wi + 1) * cin, wo * cout:(wo + 1) * cout] = w
    return jnp.asarray(m, jnp.bfloat16)


def _make_head_bias(b, wtrue):
    b = np.asarray(b, np.float32)
    return jnp.asarray(np.tile(b, wtrue)[None, :])


def init_params(key):
    def conv_w(k, ksize, cin, cout):
        fan_in = ksize ** 3 * cin
        scale = (2.0 / fan_in) ** 0.5
        return jax.random.normal(
            k, (ksize, ksize, ksize, cin, cout), jnp.float32) * scale

    keys = jax.random.split(key, 7)
    enc1a_w = conv_w(keys[0], 3, 1, 8)
    enc1b_w = conv_w(keys[1], 3, 8, 8)
    bot_a_w = conv_w(keys[2], 3, 8, 16)
    bot_b_w = conv_w(keys[3], 3, 16, 16)
    dec1a_w = conv_w(keys[4], 3, 24, 8)
    dec1b_w = conv_w(keys[5], 3, 8, 8)
    head_w = jax.random.normal(keys[6], (8, 2), jnp.float32) * (2.0 / 8) ** 0.5
    z = lambda n: np.zeros(n, np.float32)

    return {
        "enc_band1": _make_bands(enc1a_w, 18), "enc_bias1": _make_bias_row(z(8), 18),
        "enc_band2": _make_bands(enc1b_w, 18), "enc_bias2": _make_bias_row(z(8), 18),
        "bot_band1": _make_bands(bot_a_w, 10), "bot_bias1": _make_bias_row(z(16), 10),
        "bot_band2": _make_bands(bot_b_w, 10), "bot_bias2": _make_bias_row(z(16), 10),
        "dec_band_u": _make_bands(dec1a_w[:, :, :, 0:16, :], 18),
        "dec_band_e": _make_bands(dec1a_w[:, :, :, 16:24, :], 18),
        "dec_bias_a": _make_bias_row(z(8), 18),
        "dec_band_b": _make_bands(dec1b_w, 18), "dec_bias_b": _make_bias_row(z(8), 18),
        "head_w": _make_head(head_w, 18), "head_b": _make_head_bias(z(2), 16),
    }


# ------------------------------- forward -----------------------------------
def unet_forward(params, x_ncdhw):
    """x: (1, 1, 16, 16, 16) NCDHW -> dict with 'out': (1, 16, 16, 16, 2)."""
    x = x_ncdhw[0, 0]                                       # (16,16,16), C=1
    xp = jnp.pad(x, ((1, 1), (1, 1), (1, 1)))               # (18,18,18)

    e1b_pad = encoder(xp,
                      params["enc_band1"], params["enc_bias1"],
                      params["enc_band2"], params["enc_bias2"])   # (18,18,144)

    # 2x2x2 max pool on the native layout (tiny XLA reshape+reduce)
    e1b = e1b_pad[1:17, 1:17, 8:136].reshape(16, 16, 16, 8)
    pooled = e1b.reshape(8, 2, 8, 2, 8, 2, 8).max(axis=(1, 3, 5))  # (8,8,8,8)
    pp = jnp.pad(pooled.reshape(8, 8, 64), ((1, 1), (1, 1), (8, 8)))  # (10,10,80)

    b2_pad = bottleneck(pp,
                        params["bot_band1"], params["bot_bias1"],
                        params["bot_band2"], params["bot_bias2"])  # (10,10,160)

    # nearest-neighbour 2x upsample: one broadcast + reshape (no jnp.repeat)
    b2 = b2_pad[1:9, 1:9, 16:144].reshape(8, 8, 8, 16)
    u = jnp.broadcast_to(b2[:, None, :, None, :, None, :],
                         (8, 2, 8, 2, 8, 2, 16)).reshape(16, 16, 16, 16)
    up = jnp.pad(u.reshape(16, 16, 256), ((1, 1), (1, 1), (16, 16)))  # (18,18,288)

    logits = decoder(up, e1b_pad,
                     params["dec_band_u"], params["dec_band_e"],
                     params["dec_bias_a"],
                     params["dec_band_b"], params["dec_bias_b"],
                     params["head_w"], params["head_b"])        # (16,16,32)
    logits = logits.reshape(16, 16, 16, 2)[None]                # NDHWC
    return {"out": logits}


class Wrapper:
    """Mirror of the PyTorch Wrapper: forward + dict -> tuple conversion."""

    def __init__(self, net):
        self.net = net

    def __call__(self, x):
        y = self.net(x)
        if isinstance(y, dict):
            y = tuple(y.values())
        return y


# --------------------------------- main -------------------------------------
if __name__ == "__main__":
    key = jax.random.PRNGKey(0)
    pkey, xkey = jax.random.split(key)
    params = init_params(pkey)

    # PyTorch reference input: torch.rand(1, 1, 16, 16, 16)  (NCDHW)
    x = jax.random.uniform(xkey, (1, 1, 16, 16, 16), jnp.float32)

    unet = Wrapper(jax.jit(functools.partial(unet_forward, params)))
    y = unet(x)
    y = jax.block_until_ready(y)

    assert isinstance(y, tuple)
    assert y[0].shape == (1, 16, 16, 16, 2)
    assert bool(jnp.all(jnp.isfinite(y[0])))
    print("KERNEL_OK")
</pallas_src>

<mosaic_0001>
module attributes {stable_mosaic.version = 11 : i64} {
  func.func @_enc_kernel(%arg0: memref<18x18x18xf32, #tpu.memory_space<vmem>>, %arg1: memref<9x18x144xbf16, #tpu.memory_space<vmem>>, %arg2: memref<1x144xf32, #tpu.memory_space<vmem>>, %arg3: memref<9x144x144xbf16, #tpu.memory_space<vmem>>, %arg4: memref<1x144xf32, #tpu.memory_space<vmem>>, %arg5: memref<18x18x144xf32, #tpu.memory_space<vmem>>, %arg6: memref<18x18x144xf32, #tpu.memory_space<vmem>>) attributes {dimension_semantics = [], scalar_prefetch = 0 : i64, scratch_operands = 1 : i64, tpu.core_type = #tpu.core_type<tc>} {
    %cst = arith.constant 0.000000e+00 : f32
    %0 = vector.broadcast %cst : f32 to vector<18x18x144xf32>
    %c0 = arith.constant 0 : index
    %c0_0 = arith.constant 0 : index
    %c0_1 = arith.constant 0 : index
    %1 = vector.load %arg6[%c0, %c0_0, %c0_1] : memref<18x18x144xf32, #tpu.memory_space<vmem>>, vector<18x18x144xf32>
    tpu.vector_store %arg6[%c0, %c0_0, %c0_1], %0 {strides = array<i32>} : memref<18x18x144xf32, #tpu.memory_space<vmem>>, vector<18x18x144xf32>,
    %cst_2 = arith.constant 0.000000e+00 : f32
    %2 = vector.broadcast %cst_2 : f32 to vector<18x18x144xf32>
    %c0_3 = arith.constant 0 : index
    %c0_4 = arith.constant 0 : index
    %c0_5 = arith.constant 0 : index
    %3 = vector.load %arg5[%c0_3, %c0_4, %c0_5] : memref<18x18x144xf32, #tpu.memory_space<vmem>>, vector<18x18x144xf32>
    tpu.vector_store %arg5[%c0_3, %c0_4, %c0_5], %2 {strides = array<i32>} : memref<18x18x144xf32, #tpu.memory_space<vmem>>, vector<18x18x144xf32>,
    %c0_i32 = arith.constant 0 : i32
    %c16_i32 = arith.constant 16 : i32
    %4 = arith.addi %c0_i32, %c16_i32 : i32
    %c1_i32 = arith.constant 1 : i32
    scf.for %arg7 = %c0_i32 to %4 step %c1_i32  : i32 {
      %cst_11 = arith.constant 0.000000e+00 : f32
      %6 = vector.broadcast %cst_11 : f32 to vector<16x144xf32>
      %c0_i32_12 = arith.constant 0 : i32
      %7 = arith.addi %arg7, %c0_i32_12 : i32
      %8 = arith.index_cast %7 : i32 to index
      %c0_13 = arith.constant 0 : index
      %c0_14 = arith.constant 0 : index
      %9 = vector.load %arg0[%8, %c0_13, %c0_14] : memref<18x18x18xf32, #tpu.memory_space<vmem>>, vector<1x16x18xf32>
      %10 = vector.shape_cast %9 : vector<1x16x18xf32> to vector<16x18xf32>
      %11 = arith.truncf %10 : vector<16x18xf32> to vector<16x18xbf16>
      %c0_15 = arith.constant 0 : index
      %c0_16 = arith.constant 0 : index
      %c0_17 = arith.constant 0 : index
      %12 = vector.load %arg1[%c0_15, %c0_16, %c0_17] : memref<9x18x144xbf16, #tpu.memory_space<vmem>>, vector<1x18x144xbf16>
      %13 = vector.shape_cast %12 : vector<1x18x144xbf16> to vector<18x144xbf16>
      %cst_18 = arith.constant dense<0.000000e+00> : vector<16x144xf32>
      %14 = tpu.matmul %11, %13, %cst_18 {dimension_numbers = #tpu.dot_dimension_numbers<[1], [0], [0], [1], [0, 0, 1, 1], [], []>} : vector<16x18xbf16>, vector<18x144xbf16>, vector<16x144xf32> -> vector<16x144xf32>
      %15 = arith.addf %6, %14 : vector<16x144xf32>
      %c0_i32_19 = arith.constant 0 : i32
      %16 = arith.addi %arg7, %c0_i32_19 : i32
      %17 = arith.index_cast %16 : i32 to index
      %c1 = arith.constant 1 : index
      %c0_20 = arith.constant 0 : index
      %18 = vector.load %arg0[%17, %c1, %c0_20] : memref<18x18x18xf32, #tpu.memory_space<vmem>>, vector<1x16x18xf32>
      %19 = vector.shape_cast %18 : vector<1x16x18xf32> to vector<16x18xf32>
      %20 = arith.truncf %19 : vector<16x18xf32> to vector<16x18xbf16>
      %c1_21 = arith.constant 1 : index
      %c0_22 = arith.constant 0 : index
      %c0_23 = arith.constant 0 : index
      %21 = vector.load %arg1[%c1_21, %c0_22, %c0_23] : memref<9x18x144xbf16, #tpu.memory_space<vmem>>, vector<1x18x144xbf16>
      %22 = vector.shape_cast %21 : vector<1x18x144xbf16> to vector<18x144xbf16>
      %cst_24 = arith.constant dense<0.000000e+00> : vector<16x144xf32>
      %23 = tpu.matmul %20, %22, %cst_24 {dimension_numbers = #tpu.dot_dimension_numbers<[1], [0], [0], [1], [0, 0, 1, 1], [], []>} : vector<16x18xbf16>, vector<18x144xbf16>, vector<16x144xf32> -> vector<16x144xf32>
      %24 = arith.addf %15, %23 : vector<16x144xf32>
      %c0_i32_25 = arith.constant 0 : i32
      %25 = arith.addi %arg7, %c0_i32_25 : i32
      %26 = arith.index_cast %25 : i32 to index
      %c2 = arith.constant 2 : index
      %c0_26 = arith.constant 0 : index
      %27 = vector.load %arg0[%26, %c2, %c0_26] : memref<18x18x18xf32, #tpu.memory_space<vmem>>, vector<1x16x18xf32>
      %28 = vector.shape_cast %27 : vector<1x16x18xf32> to vector<16x18xf32>
      %29 = arith.truncf %28 : vector<16x18xf32> to vector<16x18xbf16>
      %c2_27 = arith.constant 2 : index
      %c0_28 = arith.constant 0 : index
      %c0_29 = arith.constant 0 : index
      %30 = vector.load %arg1[%c2_27, %c0_28, %c0_29] : memref<9x18x144xbf16, #tpu.memory_space<vmem>>, vector<1x18x144xbf16>
      %31 = vector.shape_cast %30 : vector<1x18x144xbf16> to vector<18x144xbf16>
      %cst_30 = arith.constant dense<0.000000e+00> : vector<16x144xf32>
      %32 = tpu.matmul %29, %31, %cst_30 {dimension_numbers = #tpu.dot_dimension_numbers<[1], [0], [0], [1], [0, 0, 1, 1], [], []>} : vector<16x18xbf16>, vector<18x144xbf16>, vector<16x144xf32> -> vector<16x144xf32>
      %33 = arith.addf %24, %32 : vector<16x144xf32>
      %c1_i32_31 = arith.constant 1 : i32
      %34 = arith.addi %arg7, %c1_i32_31 : i32
      %35 = arith.index_cast %34 : i32 to index
      %c0_32 = arith.constant 0 : index
      %c0_33 = arith.constant 0 : index
      %36 = vector.load %arg0[%35, %c0_32, %c0_33] : memref<18x18x18xf32, #tpu.memory_space<vmem>>, vector<1x16x18xf32>
      %37 = vector.shape_cast %36 : vector<1x16x18xf32> to vector<16x18xf32>
      %38 = arith.truncf %37 : vector<16x18xf32> to vector<16x18xbf16>
      %c3 = arith.constant 3 : index
      %c0_34 = arith.constant 0 : index
      %c0_35 = arith.constant 0 : index
      %39 = vector.load %arg1[%c3, %c0_34, %c0_35] : memref<9x18x144xbf16, #tpu.memory_space<vmem>>, vector<1x18x144xbf16>
      %40 = vector.shape_cast %39 : vector<1x18x144xbf16> to vector<18x144xbf16>
      %cst_36 = arith.constant dense<0.000000e+00> : vector<16x144xf32>
      %41 = tpu.matmul %38, %40, %cst_36 {dimension_numbers = #tpu.dot_dimension_numbers<[1], [0], [0], [1], [0, 0, 1, 1], [], []>} : vector<16x18xbf16>, vector<18x144xbf16>, vector<16x144xf32> -> vector<16x144xf32>
      %42 = arith.addf %33, %41 : vector<16x144xf32>
      %c1_i32_37 = arith.constant 1 : i32
      %43 = arith.addi %arg7, %c1_i32_37 : i32
      %44 = arith.index_cast %43 : i32 to index
      %c1_38 = arith.constant 1 : index
      %c0_39 = arith.constant 0 : index
      %45 = vector.load %arg0[%44, %c1_38, %c0_39] : memref<18x18x18xf32, #tpu.memory_space<vmem>>, vector<1x16x18xf32>
      %46 = vector.shape_cast %45 : vector<1x16x18xf32> to vector<16x18xf32>
      %47 = arith.truncf %46 : vector<16x18xf32> to vector<16x18xbf16>
      %c4 = arith.constant 4 : index
      %c0_40 = arith.constant 0 : index
      %c0_41 = arith.constant 0 : index
      %48 = vector.load %arg1[%c4, %c0_40, %c0_41] : memref<9x18x144xbf16, #tpu.memory_space<vmem>>, vector<1x18x144xbf16>
      %49 = vector.shape_cast %48 : vector<1x18x144xbf16> to vector<18x144xbf16>
      %cst_42 = arith.constant dense<0.000000e+00> : vector<16x144xf32>
      %50 = tpu.matmul %47, %49, %cst_42 {dimension_numbers = #tpu.dot_dimension_numbers<[1], [0], [0], [1], [0, 0, 1, 1], [], []>} : vector<16x18xbf16>, vector<18x144xbf16>, vector<16x144xf32> -> vector<16x144xf32>
      %51 = arith.addf %42, %50 : vector<16x144xf32>
      %c1_i32_43 = arith.constant 1 : i32
      %52 = arith.addi %arg7, %c1_i32_43 : i32
      %53 = arith.index_cast %52 : i32 to index
      %c2_44 = arith.constant 2 : index
      %c0_45 = arith.constant 0 : index
      %54 = vector.load %arg0[%53, %c2_44, %c0_45] : memref<18x18x18xf32, #tpu.memory_space<vmem>>, vector<1x16x18xf32>
      %55 = vector.shape_cast %54 : vector<1x16x18xf32> to vector<16x18xf32>
      %56 = arith.truncf %55 : vector<16x18xf32> to vector<16x18xbf16>
      %c5 = arith.constant 5 : index
      %c0_46 = arith.constant 0 : index
      %c0_47 = arith.constant 0 : index
      %57 = vector.load %arg1[%c5, %c0_46, %c0_47] : memref<9x18x144xbf16, #tpu.memory_space<vmem>>, vector<1x18x144xbf16>
      %58 = vector.shape_cast %57 : vector<1x18x144xbf16> to vector<18x144xbf16>
      %cst_48 = arith.constant dense<0.000000e+00> : vector<16x144xf32>
      %59 = tpu.matmul %56, %58, %cst_48 {dimension_numbers = #tpu.dot_dimension_numbers<[1], [0], [0], [1], [0, 0, 1, 1], [], []>} : vector<16x18xbf16>, vector<18x144xbf16>, vector<16x144xf32> -> vector<16x144xf32>
      %60 = arith.addf %51, %59 : vector<16x144xf32>
      %c2_i32 = arith.constant 2 : i32
      %61 = arith.addi %arg7, %c2_i32 : i32
      %62 = arith.index_cast %61 : i32 to index
      %c0_49 = arith.constant 0 : index
      %c0_50 = arith.constant 0 : index
      %63 = vector.load %arg0[%62, %c0_49, %c0_50] : memref<18x18x18xf32, #tpu.memory_space<vmem>>, vector<1x16x18xf32>
      %64 = vector.shape_cast %63 : vector<1x16x18xf32> to vector<16x18xf32>
      %65 = arith.truncf %64 : vector<16x18xf32> to vector<16x18xbf16>
      %c6 = arith.constant 6 : index
      %c0_51 = arith.constant 0 : index
      %c0_52 = arith.constant 0 : index
      %66 = vector.load %arg1[%c6, %c0_51, %c0_52] : memref<9x18x144xbf16, #tpu.memory_space<vmem>>, vector<1x18x144xbf16>
      %67 = vector.shape_cast %66 : vector<1x18x144xbf16> to vector<18x144xbf16>
      %cst_53 = arith.constant dense<0.000000e+00> : vector<16x144xf32>
      %68 = tpu.matmul %65, %67, %cst_53 {dimension_numbers = #tpu.dot_dimension_numbers<[1], [0], [0], [1], [0, 0, 1, 1], [], []>} : vector<16x18xbf16>, vector<18x144xbf16>, vector<16x144xf32> -> vector<16x144xf32>
      %69 = arith.addf %60, %68 : vector<16x144xf32>
      %c2_i32_54 = arith.constant 2 : i32
      %70 = arith.addi %arg7, %c2_i32_54 : i32
      %71 = arith.index_cast %70 : i32 to index
      %c1_55 = arith.constant 1 : index
      %c0_56 = arith.constant 0 : index
      %72 = vector.load %arg0[%71, %c1_55, %c0_56] : memref<18x18x18xf32, #tpu.memory_space<vmem>>, vector<1x16x18xf32>
      %73 = vector.shape_cast %72 : vector<1x16x18xf32> to vector<16x18xf32>
      %74 = arith.truncf %73 : vector<16x18xf32> to vector<16x18xbf16>
      %c7 = arith.constant 7 : index
      %c0_57 = arith.constant 0 : index
      %c0_58 = arith.constant 0 : index
      %75 = vector.load %arg1[%c7, %c0_57, %c0_58] : memref<9x18x144xbf16, #tpu.memory_space<vmem>>, vector<1x18x144xbf16>
      %76 = vector.shape_cast %75 : vector<1x18x144xbf16> to vector<18x144xbf16>
      %cst_59 = arith.constant dense<0.000000e+00> : vector<16x144xf32>
      %77 = tpu.matmul %74, %76, %cst_59 {dimension_numbers = #tpu.dot_dimension_numbers<[1], [0], [0], [1], [0, 0, 1, 1], [], []>} : vector<16x18xbf16>, vector<18x144xbf16>, vector<16x144xf32> -> vector<16x144xf32>
      %78 = arith.addf %69, %77 : vector<16x144xf32>
      %c2_i32_60 = arith.constant 2 : i32
      %79 = arith.addi %arg7, %c2_i32_60 : i32
      %80 = arith.index_cast %79 : i32 to index
      %c2_61 = arith.constant 2 : index
      %c0_62 = arith.constant 0 : index
      %81 = vector.load %arg0[%80, %c2_61, %c0_62] : memref<18x18x18xf32, #tpu.memory_space<vmem>>, vector<1x16x18xf32>
      %82 = vector.shape_cast %81 : vector<1x16x18xf32> to vector<16x18xf32>
      %83 = arith.truncf %82 : vector<16x18xf32> to vector<16x18xbf16>
      %c8 = arith.constant 8 : index
      %c0_63 = arith.constant 0 : index
      %c0_64 = arith.constant 0 : index
      %84 = vector.load %arg1[%c8, %c0_63, %c0_64] : memref<9x18x144xbf16, #tpu.memory_space<vmem>>, vector<1x18x144xbf16>
      %85 = vector.shape_cast %84 : vector<1x18x144xbf16> to vector<18x144xbf16>
      %cst_65 = arith.constant dense<0.000000e+00> : vector<16x144xf32>
      %86 = tpu.matmul %83, %85, %cst_65 {dimension_numbers = #tpu.dot_dimension_numbers<[1], [0], [0], [1], [0, 0, 1, 1], [], []>} : vector<16x18xbf16>, vector<18x144xbf16>, vector<16x144xf32> -> vector<16x144xf32>
      %87 = arith.addf %78, %86 : vector<16x144xf32>
      %c0_66 = arith.constant 0 : index
      %c0_67 = arith.constant 0 : index
      %88 = vector.load %arg2[%c0_66, %c0_67] : memref<1x144xf32, #tpu.memory_space<vmem>>, vector<1x144xf32>
      %89 = vector.broadcast %88 : vector<1x144xf32> to vector<16x144xf32>
      %90 = arith.addf %87, %89 : vector<16x144xf32>
      %cst_68 = arith.constant 0.000000e+00 : f32
      %91 = vector.broadcast %cst_68 : f32 to vector<16x144xf32>
      %92 = arith.maximumf %90, %91 : vector<16x144xf32>
      %c1_i32_69 = arith.constant 1 : i32
      %93 = arith.addi %c1_i32_69, %arg7 : i32
      %94 = arith.index_cast %93 : i32 to index
      %c1_70 = arith.constant 1 : index
      %c0_71 = arith.constant 0 : index
      %95 = vector.load %arg6[%94, %c1_70, %c0_71] : memref<18x18x144xf32, #tpu.memory_space<vmem>>, vector<1x16x144xf32>
      %96 = vector.shape_cast %95 : vector<1x16x144xf32> to vector<16x144xf32>
      %97 = vector.shape_cast %92 : vector<16x144xf32> to vector<1x16x144xf32>
      tpu.vector_store %arg6[%94, %c1_70, %c0_71], %97 {strides = array<i32>} : memref<18x18x144xf32, #tpu.memory_space<vmem>>, vector<1x16x144xf32>,
    }
    %c16_i32_6 = arith.constant 16 : i32
    %c0_i32_7 = arith.constant 0 : i32
    %c16_i32_8 = arith.constant 16 : i32
    %5 = arith.addi %c0_i32_7, %c16_i32_8 : i32
    %c1_i32_9 = arith.constant 1 : i32
    scf.for %arg7 = %c0_i32_7 to %5 step %c1_i32_9  : i32 {
      %cst_11 = arith.constant 0.000000e+00 : f32
      %6 = vector.broadcast %cst_11 : f32 to vector<16x144xf32>
      %c0_i32_12 = arith.constant 0 : i32
      %7 = arith.addi %arg7, %c0_i32_12 : i32
      %8 = arith.index_cast %7 : i32 to index
      %c0_13 = arith.constant 0 : index
      %c0_14 = arith.constant 0 : index
      %9 = vector.load %arg6[%8, %c0_13, %c0_14] : memref<18x18x144xf32, #tpu.memory_space<vmem>>, vector<1x16x144xf32>
      %10 = vector.shape_cast %9 : vector<1x16x144xf32> to vector<16x144xf32>
      %11 = arith.truncf %10 : vector<16x144xf32> to vector<16x144xbf16>
      %c0_15 = arith.constant 0 : index
      %c0_16 = arith.constant 0 : index
      %c0_17 = arith.constant 0 : index
      %12 = vector.load %arg3[%c0_15, %c0_16, %c0_17] : memref<9x144x144xbf16, #tpu.memory_space<vmem>>, vector<1x144x144xbf16>
      %13 = vector.shape_cast %12 : vector<1x144x144xbf16> to vector<144x144xbf16>
      %cst_18 = arith.constant dense<0.000000e+00> : vector<16x144xf32>
      %14 = tpu.matmul %11, %13, %cst_18 {dimension_numbers = #tpu.dot_dimension_numbers<[1], [0], [0], [1], [0, 0, 1, 1], [], []>} : vector<16x144xbf16>, vector<144x144xbf16>, vector<16x144xf32> -> vector<16x144xf32>
      %15 = arith.addf %6, %14 : vector<16x144xf32>
      %c0_i32_19 = arith.constant 0 : i32
      %16 = arith.addi %arg7, %c0_i32_19 : i32
      %17 = arith.index_cast %16 : i32 to index
      %c1 = arith.constant 1 : index
      %c0_20 = arith.constant 0 : index
      %18 = vector.load %arg6[%17, %c1, %c0_20] : memref<18x18x144xf32, #tpu.memory_space<vmem>>, vector<1x16x144xf32>
      %19 = vector.shape_cast %18 : vector<1x16x144xf32> to vector<16x144xf32>
      %20 = arith.truncf %19 : vector<16x144xf32> to vector<16x144xbf16>
      %c1_21 = arith.constant 1 : index
      %c0_22 = arith.constant 0 : index
      %c0_23 = arith.constant 0 : index
      %21 = vector.load %arg3[%c1_21, %c0_22, %c0_23] : memref<9x144x144xbf16, #tpu.memory_space<vmem>>, vector<1x144x144xbf16>
      %22 = vector.shape_cast %21 : vector<1x144x144xbf16> to vector<144x144xbf16>
      %cst_24 = arith.constant dense<0.000000e+00> : vector<16x144xf32>
      %23 = tpu.matmul %20, %22, %cst_24 {dimension_numbers = #tpu.dot_dimension_numbers<[1], [0], [0], [1], [0, 0, 1, 1], [], []>} : vector<16x144xbf16>, vector<144x144xbf16>, vector<16x144xf32> -> vector<16x144xf32>
      %24 = arith.addf %15, %23 : vector<16x144xf32>
      %c0_i32_25 = arith.constant 0 : i32
      %25 = arith.addi %arg7, %c0_i32_25 : i32
      %26 = arith.index_cast %25 : i32 to index
      %c2 = arith.constant 2 : index
      %c0_26 = arith.constant 0 : index
      %27 = vector.load %arg6[%26, %c2, %c0_26] : memref<18x18x144xf32, #tpu.memory_space<vmem>>, vector<1x16x144xf32>
      %28 = vector.shape_cast %27 : vector<1x16x144xf32> to vector<16x144xf32>
      %29 = arith.truncf %28 : vector<16x144xf32> to vector<16x144xbf16>
      %c2_27 = arith.constant 2 : index
      %c0_28 = arith.constant 0 : index
      %c0_29 = arith.constant 0 : index
      %30 = vector.load %arg3[%c2_27, %c0_28, %c0_29] : memref<9x144x144xbf16, #tpu.memory_space<vmem>>, vector<1x144x144xbf16>
      %31 = vector.shape_cast %30 : vector<1x144x144xbf16> to vector<144x144xbf16>
      %cst_30 = arith.constant dense<0.000000e+00> : vector<16x144xf32>
      %32 = tpu.matmul %29, %31, %cst_30 {dimension_numbers = #tpu.dot_dimension_numbers<[1], [0], [0], [1], [0, 0, 1, 1], [], []>} : vector<16x144xbf16>, vector<144x144xbf16>, vector<16x144xf32> -> vector<16x144xf32>
      %33 = arith.addf %24, %32 : vector<16x144xf32>
      %c1_i32_31 = arith.constant 1 : i32
      %34 = arith.addi %arg7, %c1_i32_31 : i32
      %35 = arith.index_cast %34 : i32 to index
      %c0_32 = arith.constant 0 : index
      %c0_33 = arith.constant 0 : index
      %36 = vector.load %arg6[%35, %c0_32, %c0_33] : memref<18x18x144xf32, #tpu.memory_space<vmem>>, vector<1x16x144xf32>
      %37 = vector.shape_cast %36 : vector<1x16x144xf32> to vector<16x144xf32>
      %38 = arith.truncf %37 : vector<16x144xf32> to vector<16x144xbf16>
      %c3 = arith.constant 3 : index
      %c0_34 = arith.constant 0 : index
      %c0_35 = arith.constant 0 : index
      %39 = vector.load %arg3[%c3, %c0_34, %c0_35] : memref<9x144x144xbf16, #tpu.memory_space<vmem>>, vector<1x144x144xbf16>
      %40 = vector.shape_cast %39 : vector<1x144x144xbf16> to vector<144x144xbf16>
      %cst_36 = arith.constant dense<0.000000e+00> : vector<16x144xf32>
      %41 = tpu.matmul %38, %40, %cst_36 {dimension_numbers = #tpu.dot_dimension_numbers<[1], [0], [0], [1], [0, 0, 1, 1], [], []>} : vector<16x144xbf16>, vector<144x144xbf16>, vector<16x144xf32> -> vector<16x144xf32>
      %42 = arith.addf %33, %41 : vector<16x144xf32>
      %c1_i32_37 = arith.constant 1 : i32
      %43 = arith.addi %arg7, %c1_i32_37 : i32
      %44 = arith.index_cast %43 : i32 to index
      %c1_38 = arith.constant 1 : index
      %c0_39 = arith.constant 0 : index
      %45 = vector.load %arg6[%44, %c1_38, %c0_39] : memref<18x18x144xf32, #tpu.memory_space<vmem>>, vector<1x16x144xf32>
      %46 = vector.shape_cast %45 : vector<1x16x144xf32> to vector<16x144xf32>
      %47 = arith.truncf %46 : vector<16x144xf32> to vector<16x144xbf16>
      %c4 = arith.constant 4 : index
      %c0_40 = arith.constant 0 : index
      %c0_41 = arith.constant 0 : index
      %48 = vector.load %arg3[%c4, %c0_40, %c0_41] : memref<9x144x144xbf16, #tpu.memory_space<vmem>>, vector<1x144x144xbf16>
      %49 = vector.shape_cast %48 : vector<1x144x144xbf16> to vector<144x144xbf16>
      %cst_42 = arith.constant dense<0.000000e+00> : vector<16x144xf32>
      %50 = tpu.matmul %47, %49, %cst_42 {dimension_numbers = #tpu.dot_dimension_numbers<[1], [0], [0], [1], [0, 0, 1, 1], [], []>} : vector<16x144xbf16>, vector<144x144xbf16>, vector<16x144xf32> -> vector<16x144xf32>
      %51 = arith.addf %42, %50 : vector<16x144xf32>
      %c1_i32_43 = arith.constant 1 : i32
      %52 = arith.addi %arg7, %c1_i32_43 : i32
      %53 = arith.index_cast %52 : i32 to index
      %c2_44 = arith.constant 2 : index
      %c0_45 = arith.constant 0 : index
      %54 = vector.load %arg6[%53, %c2_44, %c0_45] : memref<18x18x144xf32, #tpu.memory_space<vmem>>, vector<1x16x144xf32>
      %55 = vector.shape_cast %54 : vector<1x16x144xf32> to vector<16x144xf32>
      %56 = arith.truncf %55 : vector<16x144xf32> to vector<16x144xbf16>
      %c5 = arith.constant 5 : index
      %c0_46 = arith.constant 0 : index
      %c0_47 = arith.constant 0 : index
      %57 = vector.load %arg3[%c5, %c0_46, %c0_47] : memref<9x144x144xbf16, #tpu.memory_space<vmem>>, vector<1x144x144xbf16>
      %58 = vector.shape_cast %57 : vector<1x144x144xbf16> to vector<144x144xbf16>
      %cst_48 = arith.constant dense<0.000000e+00> : vector<16x144xf32>
      %59 = tpu.matmul %56, %58, %cst_48 {dimension_numbers = #tpu.dot_dimension_numbers<[1], [0], [0], [1], [0, 0, 1, 1], [], []>} : vector<16x144xbf16>, vector<144x144xbf16>, vector<16x144xf32> -> vector<16x144xf32>
      %60 = arith.addf %51, %59 : vector<16x144xf32>
      %c2_i32 = arith.constant 2 : i32
      %61 = arith.addi %arg7, %c2_i32 : i32
      %62 = arith.index_cast %61 : i32 to index
      %c0_49 = arith.constant 0 : index
      %c0_50 = arith.constant 0 : index
      %63 = vector.load %arg6[%62, %c0_49, %c0_50] : memref<18x18x144xf32, #tpu.memory_space<vmem>>, vector<1x16x144xf32>
      %64 = vector.shape_cast %63 : vector<1x16x144xf32> to vector<16x144xf32>
      %65 = arith.truncf %64 : vector<16x144xf32> to vector<16x144xbf16>
      %c6 = arith.constant 6 : index
      %c0_51 = arith.constant 0 : index
      %c0_52 = arith.constant 0 : index
      %66 = vector.load %arg3[%c6, %c0_51, %c0_52] : memref<9x144x144xbf16, #tpu.memory_space<vmem>>, vector<1x144x144xbf16>
      %67 = vector.shape_cast %66 : vector<1x144x144xbf16> to vector<144x144xbf16>
      %cst_53 = arith.constant dense<0.000000e+00> : vector<16x144xf32>
      %68 = tpu.matmul %65, %67, %cst_53 {dimension_numbers = #tpu.dot_dimension_numbers<[1], [0], [0], [1], [0, 0, 1, 1], [], []>} : vector<16x144xbf16>, vector<144x144xbf16>, vector<16x144xf32> -> vector<16x144xf32>
      %69 = arith.addf %60, %68 : vector<16x144xf32>
      %c2_i32_54 = arith.constant 2 : i32
      %70 = arith.addi %arg7, %c2_i32_54 : i32
      %71 = arith.index_cast %70 : i32 to index
      %c1_55 = arith.constant 1 : index
      %c0_56 = arith.constant 0 : index
      %72 = vector.load %arg6[%71, %c1_55, %c0_56] : memref<18x18x144xf32, #tpu.memory_space<vmem>>, vector<1x16x144xf32>
      %73 = vector.shape_cast %72 : vector<1x16x144xf32> to vector<16x144xf32>
      %74 = arith.truncf %73 : vector<16x144xf32> to vector<16x144xbf16>
      %c7 = arith.constant 7 : index
      %c0_57 = arith.constant 0 : index
      %c0_58 = arith.constant 0 : index
      %75 = vector.load %arg3[%c7, %c0_57, %c0_58] : memref<9x144x144xbf16, #tpu.memory_space<vmem>>, vector<1x144x144xbf16>
      %76 = vector.shape_cast %75 : vector<1x144x144xbf16> to vector<144x144xbf16>
      %cst_59 = arith.constant dense<0.000000e+00> : vector<16x144xf32>
      %77 = tpu.matmul %74, %76, %cst_59 {dimension_numbers = #tpu.dot_dimension_numbers<[1], [0], [0], [1], [0, 0, 1, 1], [], []>} : vector<16x144xbf16>, vector<144x144xbf16>, vector<16x144xf32> -> vector<16x144xf32>
      %78 = arith.addf %69, %77 : vector<16x144xf32>
      %c2_i32_60 = arith.constant 2 : i32
      %79 = arith.addi %arg7, %c2_i32_60 : i32
      %80 = arith.index_cast %79 : i32 to index
      %c2_61 = arith.constant 2 : index
      %c0_62 = arith.constant 0 : index
      %81 = vector.load %arg6[%80, %c2_61, %c0_62] : memref<18x18x144xf32, #tpu.memory_space<vmem>>, vector<1x16x144xf32>
      %82 = vector.shape_cast %81 : vector<1x16x144xf32> to vector<16x144xf32>
      %83 = arith.truncf %82 : vector<16x144xf32> to vector<16x144xbf16>
      %c8 = arith.constant 8 : index
      %c0_63 = arith.constant 0 : index
      %c0_64 = arith.constant 0 : index
      %84 = vector.load %arg3[%c8, %c0_63, %c0_64] : memref<9x144x144xbf16, #tpu.memory_space<vmem>>, vector<1x144x144xbf16>
      %85 = vector.shape_cast %84 : vector<1x144x144xbf16> to vector<144x144xbf16>
      %cst_65 = arith.constant dense<0.000000e+00> : vector<16x144xf32>
      %86 = tpu.matmul %83, %85, %cst_65 {dimension_numbers = #tpu.dot_dimension_numbers<[1], [0], [0], [1], [0, 0, 1, 1], [], []>} : vector<16x144xbf16>, vector<144x144xbf16>, vector<16x144xf32> -> vector<16x144xf32>
      %87 = arith.addf %78, %86 : vector<16x144xf32>
      %c0_66 = arith.constant 0 : index
      %c0_67 = arith.constant 0 : index
      %88 = vector.load %arg4[%c0_66, %c0_67] : memref<1x144xf32, #tpu.memory_space<vmem>>, vector<1x144xf32>
      %89 = vector.broadcast %88 : vector<1x144xf32> to vector<16x144xf32>
      %90 = arith.addf %87, %89 : vector<16x144xf32>
      %cst_68 = arith.constant 0.000000e+00 : f32
      %91 = vector.broadcast %cst_68 : f32 to vector<16x144xf32>
      %92 = arith.maximumf %90, %91 : vector<16x144xf32>
      %c1_i32_69 = arith.constant 1 : i32
      %93 = arith.addi %c1_i32_69, %arg7 : i32
      %94 = arith.index_cast %93 : i32 to index
      %c1_70 = arith.constant 1 : index
      %c0_71 = arith.constant 0 : index
      %95 = vector.load %arg5[%94, %c1_70, %c0_71] : memref<18x18x144xf32, #tpu.memory_space<vmem>>, vector<1x16x144xf32>
      %96 = vector.shape_cast %95 : vector<1x16x144xf32> to vector<16x144xf32>
      %97 = vector.shape_cast %92 : vector<16x144xf32> to vector<1x16x144xf32>
      tpu.vector_store %arg5[%94, %c1_70, %c0_71], %97 {strides = array<i32>} : memref<18x18x144xf32, #tpu.memory_space<vmem>>, vector<1x16x144xf32>,
    }
    %c16_i32_10 = arith.constant 16 : i32
    return
  }
}

module attributes {stable_mosaic.version = 11 : i64} {
  func.func @_bot_kernel(%arg0: memref<10x10x80xf32, #tpu.memory_space<vmem>>, %arg1: memref<9x80x160xbf16, #tpu.memory_space<vmem>>, %arg2: memref<1x160xf32, #tpu.memory_space<vmem>>, %arg3: memref<9x160x160xbf16, #tpu.memory_space<vmem>>, %arg4: memref<1x160xf32, #tpu.memory_space<vmem>>, %arg5: memref<10x10x160xf32, #tpu.memory_space<vmem>>, %arg6: memref<10x10x160xf32, #tpu.memory_space<vmem>>) attributes {dimension_semantics = [], scalar_prefetch = 0 : i64, scratch_operands = 1 : i64, tpu.core_type = #tpu.core_type<tc>} {
    %cst = arith.constant 0.000000e+00 : f32
    %0 = vector.broadcast %cst : f32 to vector<10x10x160xf32>
    %c0 = arith.constant 0 : index
    %c0_0 = arith.constant 0 : index
    %c0_1 = arith.constant 0 : index
    %1 = vector.load %arg6[%c0, %c0_0, %c0_1] : memref<10x10x160xf32, #tpu.memory_space<vmem>>, vector<10x10x160xf32>
    tpu.vector_store %arg6[%c0, %c0_0, %c0_1], %0 {strides = array<i32>} : memref<10x10x160xf32, #tpu.memory_space<vmem>>, vector<10x10x160xf32>,
    %cst_2 = arith.constant 0.000000e+00 : f32
    %2 = vector.broadcast %cst_2 : f32 to vector<10x10x160xf32>
    %c0_3 = arith.constant 0 : index
    %c0_4 = arith.constant 0 : index
    %c0_5 = arith.constant 0 : index
    %3 = vector.load %arg5[%c0_3, %c0_4, %c0_5] : memref<10x10x160xf32, #tpu.memory_space<vmem>>, vector<10x10x160xf32>
    tpu.vector_store %arg5[%c0_3, %c0_4, %c0_5], %2 {strides = array<i32>} : memref<10x10x160xf32, #tpu.memory_space<vmem>>, vector<10x10x160xf32>,
    %c0_i32 = arith.constant 0 : i32
    %c8_i32 = arith.constant 8 : i32
    %4 = arith.addi %c0_i32, %c8_i32 : i32
    %c1_i32 = arith.constant 1 : i32
    scf.for %arg7 = %c0_i32 to %4 step %c1_i32  : i32 {
      %cst_11 = arith.constant 0.000000e+00 : f32
      %6 = vector.broadcast %cst_11 : f32 to vector<8x160xf32>
      %c0_i32_12 = arith.constant 0 : i32
      %7 = arith.addi %arg7, %c0_i32_12 : i32
      %8 = arith.index_cast %7 : i32 to index
      %c0_13 = arith.constant 0 : index
      %c0_14 = arith.constant 0 : index
      %9 = vector.load %arg0[%8, %c0_13, %c0_14] : memref<10x10x80xf32, #tpu.memory_space<vmem>>, vector<1x8x80xf32>
      %10 = vector.shape_cast %9 : vector<1x8x80xf32> to vector<8x80xf32>
      %11 = arith.truncf %10 : vector<8x80xf32> to vector<8x80xbf16>
      %c0_15 = arith.constant 0 : index
      %c0_16 = arith.constant 0 : index
      %c0_17 = arith.constant 0 : index
      %12 = vector.load %arg1[%c0_15, %c0_16, %c0_17] : memref<9x80x160xbf16, #tpu.memory_space<vmem>>, vector<1x80x160xbf16>
      %13 = vector.shape_cast %12 : vector<1x80x160xbf16> to vector<80x160xbf16>
      %cst_18 = arith.constant dense<0.000000e+00> : vector<8x160xf32>
      %14 = tpu.matmul %11, %13, %cst_18 {dimension_numbers = #tpu.dot_dimension_numbers<[1], [0], [0], [1], [0, 0, 1, 1], [], []>} : vector<8x80xbf16>, vector<80x160xbf16>, vector<8x160xf32> -> vector<8x160xf32>
      %15 = arith.addf %6, %14 : vector<8x160xf32>
      %c0_i32_19 = arith.constant 0 : i32
      %16 = arith.addi %arg7, %c0_i32_19 : i32
      %17 = arith.index_cast %16 : i32 to index
      %c1 = arith.constant 1 : index
      %c0_20 = arith.constant 0 : index
      %18 = vector.load %arg0[%17, %c1, %c0_20] : memref<10x10x80xf32, #tpu.memory_space<vmem>>, vector<1x8x80xf32>
      %19 = vector.shape_cast %18 : vector<1x8x80xf32> to vector<8x80xf32>
      %20 = arith.truncf %19 : vector<8x80xf32> to vector<8x80xbf16>
      %c1_21 = arith.constant 1 : index
      %c0_22 = arith.constant 0 : index
      %c0_23 = arith.constant 0 : index
      %21 = vector.load %arg1[%c1_21, %c0_22, %c0_23] : memref<9x80x160xbf16, #tpu.memory_space<vmem>>, vector<1x80x160xbf16>
      %22 = vector.shape_cast %21 : vector<1x80x160xbf16> to vector<80x160xbf16>
      %cst_24 = arith.constant dense<0.000000e+00> : vector<8x160xf32>
      %23 = tpu.matmul %20, %22, %cst_24 {dimension_numbers = #tpu.dot_dimension_numbers<[1], [0], [0], [1], [0, 0, 1, 1], [], []>} : vector<8x80xbf16>, vector<80x160xbf16>, vector<8x160xf32> -> vector<8x160xf32>
      %24 = arith.addf %15, %23 : vector<8x160xf32>
      %c0_i32_25 = arith.constant 0 : i32
      %25 = arith.addi %arg7, %c0_i32_25 : i32
      %26 = arith.index_cast %25 : i32 to index
      %c2 = arith.constant 2 : index
      %c0_26 = arith.constant 0 : index
      %27 = vector.load %arg0[%26, %c2, %c0_26] : memref<10x10x80xf32, #tpu.memory_space<vmem>>, vector<1x8x80xf32>
      %28 = vector.shape_cast %27 : vector<1x8x80xf32> to vector<8x80xf32>
      %29 = arith.truncf %28 : vector<8x80xf32> to vector<8x80xbf16>
      %c2_27 = arith.constant 2 : index
      %c0_28 = arith.constant 0 : index
      %c0_29 = arith.constant 0 : index
      %30 = vector.load %arg1[%c2_27, %c0_28, %c0_29] : memref<9x80x160xbf16, #tpu.memory_space<vmem>>, vector<1x80x160xbf16>
      %31 = vector.shape_cast %30 : vector<1x80x160xbf16> to vector<80x160xbf16>
      %cst_30 = arith.constant dense<0.000000e+00> : vector<8x160xf32>
      %32 = tpu.matmul %29, %31, %cst_30 {dimension_numbers = #tpu.dot_dimension_numbers<[1], [0], [0], [1], [0, 0, 1, 1], [], []>} : vector<8x80xbf16>, vector<80x160xbf16>, vector<8x160xf32> -> vector<8x160xf32>
      %33 = arith.addf %24, %32 : vector<8x160xf32>
      %c1_i32_31 = arith.constant 1 : i32
      %34 = arith.addi %arg7, %c1_i32_31 : i32
      %35 = arith.index_cast %34 : i32 to index
      %c0_32 = arith.constant 0 : index
      %c0_33 = arith.constant 0 : index
      %36 = vector.load %arg0[%35, %c0_32, %c0_33] : memref<10x10x80xf32, #tpu.memory_space<vmem>>, vector<1x8x80xf32>
      %37 = vector.shape_cast %36 : vector<1x8x80xf32> to vector<8x80xf32>
      %38 = arith.truncf %37 : vector<8x80xf32> to vector<8x80xbf16>
      %c3 = arith.constant 3 : index
      %c0_34 = arith.constant 0 : index
      %c0_35 = arith.constant 0 : index
      %39 = vector.load %arg1[%c3, %c0_34, %c0_35] : memref<9x80x160xbf16, #tpu.memory_space<vmem>>, vector<1x80x160xbf16>
      %40 = vector.shape_cast %39 : vector<1x80x160xbf16> to vector<80x160xbf16>
      %cst_36 = arith.constant dense<0.000000e+00> : vector<8x160xf32>
      %41 = tpu.matmul %38, %40, %cst_36 {dimension_numbers = #tpu.dot_dimension_numbers<[1], [0], [0], [1], [0, 0, 1, 1], [], []>} : vector<8x80xbf16>, vector<80x160xbf16>, vector<8x160xf32> -> vector<8x160xf32>
      %42 = arith.addf %33, %41 : vector<8x160xf32>
      %c1_i32_37 = arith.constant 1 : i32
      %43 = arith.addi %arg7, %c1_i32_37 : i32
      %44 = arith.index_cast %43 : i32 to index
      %c1_38 = arith.constant 1 : index
      %c0_39 = arith.constant 0 : index
      %45 = vector.load %arg0[%44, %c1_38, %c0_39] : memref<10x10x80xf32, #tpu.memory_space<vmem>>, vector<1x8x80xf32>
      %46 = vector.shape_cast %45 : vector<1x8x80xf32> to vector<8x80xf32>
      %47 = arith.truncf %46 : vector<8x80xf32> to vector<8x80xbf16>
      %c4 = arith.constant 4 : index
      %c0_40 = arith.constant 0 : index
      %c0_41 = arith.constant 0 : index
      %48 = vector.load %arg1[%c4, %c0_40, %c0_41] : memref<9x80x160xbf16, #tpu.memory_space<vmem>>, vector<1x80x160xbf16>
      %49 = vector.shape_cast %48 : vector<1x80x160xbf16> to vector<80x160xbf16>
      %cst_42 = arith.constant dense<0.000000e+00> : vector<8x160xf32>
      %50 = tpu.matmul %47, %49, %cst_42 {dimension_numbers = #tpu.dot_dimension_numbers<[1], [0], [0], [1], [0, 0, 1, 1], [], []>} : vector<8x80xbf16>, vector<80x160xbf16>, vector<8x160xf32> -> vector<8x160xf32>
      %51 = arith.addf %42, %50 : vector<8x160xf32>
      %c1_i32_43 = arith.constant 1 : i32
      %52 = arith.addi %arg7, %c1_i32_43 : i32
      %53 = arith.index_cast %52 : i32 to index
      %c2_44 = arith.constant 2 : index
      %c0_45 = arith.constant 0 : index
      %54 = vector.load %arg0[%53, %c2_44, %c0_45] : memref<10x10x80xf32, #tpu.memory_space<vmem>>, vector<1x8x80xf32>
      %55 = vector.shape_cast %54 : vector<1x8x80xf32> to vector<8x80xf32>
      %56 = arith.truncf %55 : vector<8x80xf32> to vector<8x80xbf16>
      %c5 = arith.constant 5 : index
      %c0_46 = arith.constant 0 : index
      %c0_47 = arith.constant 0 : index
      %57 = vector.load %arg1[%c5, %c0_46, %c0_47] : memref<9x80x160xbf16, #tpu.memory_space<vmem>>, vector<1x80x160xbf16>
      %58 = vector.shape_cast %57 : vector<1x80x160xbf16> to vector<80x160xbf16>
      %cst_48 = arith.constant dense<0.000000e+00> : vector<8x160xf32>
      %59 = tpu.matmul %56, %58, %cst_48 {dimension_numbers = #tpu.dot_dimension_numbers<[1], [0], [0], [1], [0, 0, 1, 1], [], []>} : vector<8x80xbf16>, vector<80x160xbf16>, vector<8x160xf32> -> vector<8x160xf32>
      %60 = arith.addf %51, %59 : vector<8x160xf32>
      %c2_i32 = arith.constant 2 : i32
      %61 = arith.addi %arg7, %c2_i32 : i32
      %62 = arith.index_cast %61 : i32 to index
      %c0_49 = arith.constant 0 : index
      %c0_50 = arith.constant 0 : index
      %63 = vector.load %arg0[%62, %c0_49, %c0_50] : memref<10x10x80xf32, #tpu.memory_space<vmem>>, vector<1x8x80xf32>
      %64 = vector.shape_cast %63 : vector<1x8x80xf32> to vector<8x80xf32>
      %65 = arith.truncf %64 : vector<8x80xf32> to vector<8x80xbf16>
      %c6 = arith.constant 6 : index
      %c0_51 = arith.constant 0 : index
      %c0_52 = arith.constant 0 : index
      %66 = vector.load %arg1[%c6, %c0_51, %c0_52] : memref<9x80x160xbf16, #tpu.memory_space<vmem>>, vector<1x80x160xbf16>
      %67 = vector.shape_cast %66 : vector<1x80x160xbf16> to vector<80x160xbf16>
      %cst_53 = arith.constant dense<0.000000e+00> : vector<8x160xf32>
      %68 = tpu.matmul %65, %67, %cst_53 {dimension_numbers = #tpu.dot_dimension_numbers<[1], [0], [0], [1], [0, 0, 1, 1], [], []>} : vector<8x80xbf16>, vector<80x160xbf16>, vector<8x160xf32> -> vector<8x160xf32>
      %69 = arith.addf %60, %68 : vector<8x160xf32>
      %c2_i32_54 = arith.constant 2 : i32
      %70 = arith.addi %arg7, %c2_i32_54 : i32
      %71 = arith.index_cast %70 : i32 to index
      %c1_55 = arith.constant 1 : index
      %c0_56 = arith.constant 0 : index
      %72 = vector.load %arg0[%71, %c1_55, %c0_56] : memref<10x10x80xf32, #tpu.memory_space<vmem>>, vector<1x8x80xf32>
      %73 = vector.shape_cast %72 : vector<1x8x80xf32> to vector<8x80xf32>
      %74 = arith.truncf %73 : vector<8x80xf32> to vector<8x80xbf16>
      %c7 = arith.constant 7 : index
      %c0_57 = arith.constant 0 : index
      %c0_58 = arith.constant 0 : index
      %75 = vector.load %arg1[%c7, %c0_57, %c0_58] : memref<9x80x160xbf16, #tpu.memory_space<vmem>>, vector<1x80x160xbf16>
      %76 = vector.shape_cast %75 : vector<1x80x160xbf16> to vector<80x160xbf16>
      %cst_59 = arith.constant dense<0.000000e+00> : vector<8x160xf32>
      %77 = tpu.matmul %74, %76, %cst_59 {dimension_numbers = #tpu.dot_dimension_numbers<[1], [0], [0], [1], [0, 0, 1, 1], [], []>} : vector<8x80xbf16>, vector<80x160xbf16>, vector<8x160xf32> -> vector<8x160xf32>
      %78 = arith.addf %69, %77 : vector<8x160xf32>
      %c2_i32_60 = arith.constant 2 : i32
      %79 = arith.addi %arg7, %c2_i32_60 : i32
      %80 = arith.index_cast %79 : i32 to index
      %c2_61 = arith.constant 2 : index
      %c0_62 = arith.constant 0 : index
      %81 = vector.load %arg0[%80, %c2_61, %c0_62] : memref<10x10x80xf32, #tpu.memory_space<vmem>>, vector<1x8x80xf32>
      %82 = vector.shape_cast %81 : vector<1x8x80xf32> to vector<8x80xf32>
      %83 = arith.truncf %82 : vector<8x80xf32> to vector<8x80xbf16>
      %c8 = arith.constant 8 : index
      %c0_63 = arith.constant 0 : index
      %c0_64 = arith.constant 0 : index
      %84 = vector.load %arg1[%c8, %c0_63, %c0_64] : memref<9x80x160xbf16, #tpu.memory_space<vmem>>, vector<1x80x160xbf16>
      %85 = vector.shape_cast %84 : vector<1x80x160xbf16> to vector<80x160xbf16>
      %cst_65 = arith.constant dense<0.000000e+00> : vector<8x160xf32>
      %86 = tpu.matmul %83, %85, %cst_65 {dimension_numbers = #tpu.dot_dimension_numbers<[1], [0], [0], [1], [0, 0, 1, 1], [], []>} : vector<8x80xbf16>, vector<80x160xbf16>, vector<8x160xf32> -> vector<8x160xf32>
      %87 = arith.addf %78, %86 : vector<8x160xf32>
      %c0_66 = arith.constant 0 : index
      %c0_67 = arith.constant 0 : index
      %88 = vector.load %arg2[%c0_66, %c0_67] : memref<1x160xf32, #tpu.memory_space<vmem>>, vector<1x160xf32>
      %89 = vector.broadcast %88 : vector<1x160xf32> to vector<8x160xf32>
      %90 = arith.addf %87, %89 : vector<8x160xf32>
      %cst_68 = arith.constant 0.000000e+00 : f32
      %91 = vector.broadcast %cst_68 : f32 to vector<8x160xf32>
      %92 = arith.maximumf %90, %91 : vector<8x160xf32>
      %c1_i32_69 = arith.constant 1 : i32
      %93 = arith.addi %c1_i32_69, %arg7 : i32
      %94 = arith.index_cast %93 : i32 to index
      %c1_70 = arith.constant 1 : index
      %c0_71 = arith.constant 0 : index
      %95 = vector.load %arg6[%94, %c1_70, %c0_71] : memref<10x10x160xf32, #tpu.memory_space<vmem>>, vector<1x8x160xf32>
      %96 = vector.shape_cast %95 : vector<1x8x160xf32> to vector<8x160xf32>
      %97 = vector.shape_cast %92 : vector<8x160xf32> to vector<1x8x160xf32>
      tpu.vector_store %arg6[%94, %c1_70, %c0_71], %97 {strides = array<i32>} : memref<10x10x160xf32, #tpu.memory_space<vmem>>, vector<1x8x160xf32>,
    }
    %c8_i32_6 = arith.constant 8 : i32
    %c0_i32_7 = arith.constant 0 : i32
    %c8_i32_8 = arith.constant 8 : i32
    %5 = arith.addi %c0_i32_7, %c8_i32_8 : i32
    %c1_i32_9 = arith.constant 1 : i32
    scf.for %arg7 = %c0_i32_7 to %5 step %c1_i32_9  : i32 {
      %cst_11 = arith.constant 0.000000e+00 : f32
      %6 = vector.broadcast %cst_11 : f32 to vector<8x160xf32>
      %c0_i32_12 = arith.constant 0 : i32
      %7 = arith.addi %arg7, %c0_i32_12 : i32
      %8 = arith.index_cast %7 : i32 to index
      %c0_13 = arith.constant 0 : index
      %c0_14 = arith.constant 0 : index
      %9 = vector.load %arg6[%8, %c0_13, %c0_14] : memref<10x10x160xf32, #tpu.memory_space<vmem>>, vector<1x8x160xf32>
      %10 = vector.shape_cast %9 : vector<1x8x160xf32> to vector<8x160xf32>
      %11 = arith.truncf %10 : vector<8x160xf32> to vector<8x160xbf16>
      %c0_15 = arith.constant 0 : index
      %c0_16 = arith.constant 0 : index
      %c0_17 = arith.constant 0 : index
      %12 = vector.load %arg3[%c0_15, %c0_16, %c0_17] : memref<9x160x160xbf16, #tpu.memory_space<vmem>>, vector<1x160x160xbf16>
      %13 = vector.shape_cast %12 : vector<1x160x160xbf16> to vector<160x160xbf16>
      %cst_18 = arith.constant dense<0.000000e+00> : vector<8x160xf32>
      %14 = tpu.matmul %11, %13, %cst_18 {dimension_numbers = #tpu.dot_dimension_numbers<[1], [0], [0], [1], [0, 0, 1, 1], [], []>} : vector<8x160xbf16>, vector<160x160xbf16>, vector<8x160xf32> -> vector<8x160xf32>
      %15 = arith.addf %6, %14 : vector<8x160xf32>
      %c0_i32_19 = arith.constant 0 : i32
      %16 = arith.addi %arg7, %c0_i32_19 : i32
      %17 = arith.index_cast %16 : i32 to index
      %c1 = arith.constant 1 : index
      %c0_20 = arith.constant 0 : index
      %18 = vector.load %arg6[%17, %c1, %c0_20] : memref<10x10x160xf32, #tpu.memory_space<vmem>>, vector<1x8x160xf32>
      %19 = vector.shape_cast %18 : vector<1x8x160xf32> to vector<8x160xf32>
      %20 = arith.truncf %19 : vector<8x160xf32> to vector<8x160xbf16>
      %c1_21 = arith.constant 1 : index
      %c0_22 = arith.constant 0 : index
      %c0_23 = arith.constant 0 : index
      %21 = vector.load %arg3[%c1_21, %c0_22, %c0_23] : memref<9x160x160xbf16, #tpu.memory_space<vmem>>, vector<1x160x160xbf16>
      %22 = vector.shape_cast %21 : vector<1x160x160xbf16> to vector<160x160xbf16>
      %cst_24 = arith.constant dense<0.000000e+00> : vector<8x160xf32>
      %23 = tpu.matmul %20, %22, %cst_24 {dimension_numbers = #tpu.dot_dimension_numbers<[1], [0], [0], [1], [0, 0, 1, 1], [], []>} : vector<8x160xbf16>, vector<160x160xbf16>, vector<8x160xf32> -> vector<8x160xf32>
      %24 = arith.addf %15, %23 : vector<8x160xf32>
      %c0_i32_25 = arith.constant 0 : i32
      %25 = arith.addi %arg7, %c0_i32_25 : i32
      %26 = arith.index_cast %25 : i32 to index
      %c2 = arith.constant 2 : index
      %c0_26 = arith.constant 0 : index
      %27 = vector.load %arg6[%26, %c2, %c0_26] : memref<10x10x160xf32, #tpu.memory_space<vmem>>, vector<1x8x160xf32>
      %28 = vector.shape_cast %27 : vector<1x8x160xf32> to vector<8x160xf32>
      %29 = arith.truncf %28 : vector<8x160xf32> to vector<8x160xbf16>
      %c2_27 = arith.constant 2 : index
      %c0_28 = arith.constant 0 : index
      %c0_29 = arith.constant 0 : index
      %30 = vector.load %arg3[%c2_27, %c0_28, %c0_29] : memref<9x160x160xbf16, #tpu.memory_space<vmem>>, vector<1x160x160xbf16>
      %31 = vector.shape_cast %30 : vector<1x160x160xbf16> to vector<160x160xbf16>
      %cst_30 = arith.constant dense<0.000000e+00> : vector<8x160xf32>
      %32 = tpu.matmul %29, %31, %cst_30 {dimension_numbers = #tpu.dot_dimension_numbers<[1], [0], [0], [1], [0, 0, 1, 1], [], []>} : vector<8x160xbf16>, vector<160x160xbf16>, vector<8x160xf32> -> vector<8x160xf32>
      %33 = arith.addf %24, %32 : vector<8x160xf32>
      %c1_i32_31 = arith.constant 1 : i32
      %34 = arith.addi %arg7, %c1_i32_31 : i32
      %35 = arith.index_cast %34 : i32 to index
      %c0_32 = arith.constant 0 : index
      %c0_33 = arith.constant 0 : index
      %36 = vector.load %arg6[%35, %c0_32, %c0_33] : memref<10x10x160xf32, #tpu.memory_space<vmem>>, vector<1x8x160xf32>
      %37 = vector.shape_cast %36 : vector<1x8x160xf32> to vector<8x160xf32>
      %38 = arith.truncf %37 : vector<8x160xf32> to vector<8x160xbf16>
      %c3 = arith.constant 3 : index
      %c0_34 = arith.constant 0 : index
      %c0_35 = arith.constant 0 : index
      %39 = vector.load %arg3[%c3, %c0_34, %c0_35] : memref<9x160x160xbf16, #tpu.memory_space<vmem>>, vector<1x160x160xbf16>
      %40 = vector.shape_cast %39 : vector<1x160x160xbf16> to vector<160x160xbf16>
      %cst_36 = arith.constant dense<0.000000e+00> : vector<8x160xf32>
      %41 = tpu.matmul %38, %40, %cst_36 {dimension_numbers = #tpu.dot_dimension_numbers<[1], [0], [0], [1], [0, 0, 1, 1], [], []>} : vector<8x160xbf16>, vector<160x160xbf16>, vector<8x160xf32> -> vector<8x160xf32>
      %42 = arith.addf %33, %41 : vector<8x160xf32>
      %c1_i32_37 = arith.constant 1 : i32
      %43 = arith.addi %arg7, %c1_i32_37 : i32
      %44 = arith.index_cast %43 : i32 to index
      %c1_38 = arith.constant 1 : index
      %c0_39 = arith.constant 0 : index
      %45 = vector.load %arg6[%44, %c1_38, %c0_39] : memref<10x10x160xf32, #tpu.memory_space<vmem>>, vector<1x8x160xf32>
      %46 = vector.shape_cast %45 : vector<1x8x160xf32> to vector<8x160xf32>
      %47 = arith.truncf %46 : vector<8x160xf32> to vector<8x160xbf16>
      %c4 = arith.constant 4 : index
      %c0_40 = arith.constant 0 : index
      %c0_41 = arith.constant 0 : index
      %48 = vector.load %arg3[%c4, %c0_40, %c0_41] : memref<9x160x160xbf16, #tpu.memory_space<vmem>>, vector<1x160x160xbf16>
      %49 = vector.shape_cast %48 : vector<1x160x160xbf16> to vector<160x160xbf16>
      %cst_42 = arith.constant dense<0.000000e+00> : vector<8x160xf32>
      %50 = tpu.matmul %47, %49, %cst_42 {dimension_numbers = #tpu.dot_dimension_numbers<[1], [0], [0], [1], [0, 0, 1, 1], [], []>} : vector<8x160xbf16>, vector<160x160xbf16>, vector<8x160xf32> -> vector<8x160xf32>
      %51 = arith.addf %42, %50 : vector<8x160xf32>
      %c1_i32_43 = arith.constant 1 : i32
      %52 = arith.addi %arg7, %c1_i32_43 : i32
      %53 = arith.index_cast %52 : i32 to index
      %c2_44 = arith.constant 2 : index
      %c0_45 = arith.constant 0 : index
      %54 = vector.load %arg6[%53, %c2_44, %c0_45] : memref<10x10x160xf32, #tpu.memory_space<vmem>>, vector<1x8x160xf32>
      %55 = vector.shape_cast %54 : vector<1x8x160xf32> to vector<8x160xf32>
      %56 = arith.truncf %55 : vector<8x160xf32> to vector<8x160xbf16>
      %c5 = arith.constant 5 : index
      %c0_46 = arith.constant 0 : index
      %c0_47 = arith.constant 0 : index
      %57 = vector.load %arg3[%c5, %c0_46, %c0_47] : memref<9x160x160xbf16, #tpu.memory_space<vmem>>, vector<1x160x160xbf16>
      %58 = vector.shape_cast %57 : vector<1x160x160xbf16> to vector<160x160xbf16>
      %cst_48 = arith.constant dense<0.000000e+00> : vector<8x160xf32>
      %59 = tpu.matmul %56, %58, %cst_48 {dimension_numbers = #tpu.dot_dimension_numbers<[1], [0], [0], [1], [0, 0, 1, 1], [], []>} : vector<8x160xbf16>, vector<160x160xbf16>, vector<8x160xf32> -> vector<8x160xf32>
      %60 = arith.addf %51, %59 : vector<8x160xf32>
      %c2_i32 = arith.constant 2 : i32
      %61 = arith.addi %arg7, %c2_i32 : i32
      %62 = arith.index_cast %61 : i32 to index
      %c0_49 = arith.constant 0 : index
      %c0_50 = arith.constant 0 : index
      %63 = vector.load %arg6[%62, %c0_49, %c0_50] : memref<10x10x160xf32, #tpu.memory_space<vmem>>, vector<1x8x160xf32>
      %64 = vector.shape_cast %63 : vector<1x8x160xf32> to vector<8x160xf32>
      %65 = arith.truncf %64 : vector<8x160xf32> to vector<8x160xbf16>
      %c6 = arith.constant 6 : index
      %c0_51 = arith.constant 0 : index
      %c0_52 = arith.constant 0 : index
      %66 = vector.load %arg3[%c6, %c0_51, %c0_52] : memref<9x160x160xbf16, #tpu.memory_space<vmem>>, vector<1x160x160xbf16>
      %67 = vector.shape_cast %66 : vector<1x160x160xbf16> to vector<160x160xbf16>
      %cst_53 = arith.constant dense<0.000000e+00> : vector<8x160xf32>
      %68 = tpu.matmul %65, %67, %cst_53 {dimension_numbers = #tpu.dot_dimension_numbers<[1], [0], [0], [1], [0, 0, 1, 1], [], []>} : vector<8x160xbf16>, vector<160x160xbf16>, vector<8x160xf32> -> vector<8x160xf32>
      %69 = arith.addf %60, %68 : vector<8x160xf32>
      %c2_i32_54 = arith.constant 2 : i32
      %70 = arith.addi %arg7, %c2_i32_54 : i32
      %71 = arith.index_cast %70 : i32 to index
      %c1_55 = arith.constant 1 : index
      %c0_56 = arith.constant 0 : index
      %72 = vector.load %arg6[%71, %c1_55, %c0_56] : memref<10x10x160xf32, #tpu.memory_space<vmem>>, vector<1x8x160xf32>
      %73 = vector.shape_cast %72 : vector<1x8x160xf32> to vector<8x160xf32>
      %74 = arith.truncf %73 : vector<8x160xf32> to vector<8x160xbf16>
      %c7 = arith.constant 7 : index
      %c0_57 = arith.constant 0 : index
      %c0_58 = arith.constant 0 : index
      %75 = vector.load %arg3[%c7, %c0_57, %c0_58] : memref<9x160x160xbf16, #tpu.memory_space<vmem>>, vector<1x160x160xbf16>
      %76 = vector.shape_cast %75 : vector<1x160x160xbf16> to vector<160x160xbf16>
      %cst_59 = arith.constant dense<0.000000e+00> : vector<8x160xf32>
      %77 = tpu.matmul %74, %76, %cst_59 {dimension_numbers = #tpu.dot_dimension_numbers<[1], [0], [0], [1], [0, 0, 1, 1], [], []>} : vector<8x160xbf16>, vector<160x160xbf16>, vector<8x160xf32> -> vector<8x160xf32>
      %78 = arith.addf %69, %77 : vector<8x160xf32>
      %c2_i32_60 = arith.constant 2 : i32
      %79 = arith.addi %arg7, %c2_i32_60 : i32
      %80 = arith.index_cast %79 : i32 to index
      %c2_61 = arith.constant 2 : index
      %c0_62 = arith.constant 0 : index
      %81 = vector.load %arg6[%80, %c2_61, %c0_62] : memref<10x10x160xf32, #tpu.memory_space<vmem>>, vector<1x8x160xf32>
      %82 = vector.shape_cast %81 : vector<1x8x160xf32> to vector<8x160xf32>
      %83 = arith.truncf %82 : vector<8x160xf32> to vector<8x160xbf16>
      %c8 = arith.constant 8 : index
      %c0_63 = arith.constant 0 : index
      %c0_64 = arith.constant 0 : index
      %84 = vector.load %arg3[%c8, %c0_63, %c0_64] : memref<9x160x160xbf16, #tpu.memory_space<vmem>>, vector<1x160x160xbf16>
      %85 = vector.shape_cast %84 : vector<1x160x160xbf16> to vector<160x160xbf16>
      %cst_65 = arith.constant dense<0.000000e+00> : vector<8x160xf32>
      %86 = tpu.matmul %83, %85, %cst_65 {dimension_numbers = #tpu.dot_dimension_numbers<[1], [0], [0], [1], [0, 0, 1, 1], [], []>} : vector<8x160xbf16>, vector<160x160xbf16>, vector<8x160xf32> -> vector<8x160xf32>
      %87 = arith.addf %78, %86 : vector<8x160xf32>
      %c0_66 = arith.constant 0 : index
      %c0_67 = arith.constant 0 : index
      %88 = vector.load %arg4[%c0_66, %c0_67] : memref<1x160xf32, #tpu.memory_space<vmem>>, vector<1x160xf32>
      %89 = vector.broadcast %88 : vector<1x160xf32> to vector<8x160xf32>
      %90 = arith.addf %87, %89 : vector<8x160xf32>
      %cst_68 = arith.constant 0.000000e+00 : f32
      %91 = vector.broadcast %cst_68 : f32 to vector<8x160xf32>
      %92 = arith.maximumf %90, %91 : vector<8x160xf32>
      %c1_i32_69 = arith.constant 1 : i32
      %93 = arith.addi %c1_i32_69, %arg7 : i32
      %94 = arith.index_cast %93 : i32 to index
      %c1_70 = arith.constant 1 : index
      %c0_71 = arith.constant 0 : index
      %95 = vector.load %arg5[%94, %c1_70, %c0_71] : memref<10x10x160xf32, #tpu.memory_space<vmem>>, vector<1x8x160xf32>
      %96 = vector.shape_cast %95 : vector<1x8x160xf32> to vector<8x160xf32>
      %97 = vector.shape_cast %92 : vector<8x160xf32> to vector<1x8x160xf32>
      tpu.vector_store %arg5[%94, %c1_70, %c0_71], %97 {strides = array<i32>} : memref<10x10x160xf32, #tpu.memory_space<vmem>>, vector<1x8x160xf32>,
    }
    %c8_i32_10 = arith.constant 8 : i32
    return
  }
}

module attributes {stable_mosaic.version = 11 : i64} {
  func.func @_dec_kernel(%arg0: memref<18x18x288xf32, #tpu.memory_space<vmem>>, %arg1: memref<18x18x144xf32, #tpu.memory_space<vmem>>, %arg2: memref<9x288x144xbf16, #tpu.memory_space<vmem>>, %arg3: memref<9x144x144xbf16, #tpu.memory_space<vmem>>, %arg4: memref<1x144xf32, #tpu.memory_space<vmem>>, %arg5: memref<9x144x144xbf16, #tpu.memory_space<vmem>>, %arg6: memref<1x144xf32, #tpu.memory_space<vmem>>, %arg7: memref<144x32xbf16, #tpu.memory_space<vmem>>, %arg8: memref<1x32xf32, #tpu.memory_space<vmem>>, %arg9: memref<16x16x32xf32, #tpu.memory_space<vmem>>, %arg10: memref<18x18x144xf32, #tpu.memory_space<vmem>>) attributes {dimension_semantics = [], scalar_prefetch = 0 : i64, scratch_operands = 1 : i64, tpu.core_type = #tpu.core_type<tc>} {
    %cst = arith.constant 0.000000e+00 : f32
    %0 = vector.broadcast %cst : f32 to vector<18x18x144xf32>
    %c0 = arith.constant 0 : index
    %c0_0 = arith.constant 0 : index
    %c0_1 = arith.constant 0 : index
    %1 = vector.load %arg10[%c0, %c0_0, %c0_1] : memref<18x18x144xf32, #tpu.memory_space<vmem>>, vector<18x18x144xf32>
    tpu.vector_store %arg10[%c0, %c0_0, %c0_1], %0 {strides = array<i32>} : memref<18x18x144xf32, #tpu.memory_space<vmem>>, vector<18x18x144xf32>,
    %c0_i32 = arith.constant 0 : i32
    %c16_i32 = arith.constant 16 : i32
    %2 = arith.addi %c0_i32, %c16_i32 : i32
    %c1_i32 = arith.constant 1 : i32
    scf.for %arg11 = %c0_i32 to %2 step %c1_i32  : i32 {
      %cst_7 = arith.constant 0.000000e+00 : f32
      %4 = vector.broadcast %cst_7 : f32 to vector<16x144xf32>
      %c0_i32_8 = arith.constant 0 : i32
      %5 = arith.addi %arg11, %c0_i32_8 : i32
      %6 = arith.index_cast %5 : i32 to index
      %c0_9 = arith.constant 0 : index
      %c0_10 = arith.constant 0 : index
      %7 = vector.load %arg0[%6, %c0_9, %c0_10] : memref<18x18x288xf32, #tpu.memory_space<vmem>>, vector<1x16x288xf32>
      %8 = vector.shape_cast %7 : vector<1x16x288xf32> to vector<16x288xf32>
      %9 = arith.truncf %8 : vector<16x288xf32> to vector<16x288xbf16>
      %c0_11 = arith.constant 0 : index
      %c0_12 = arith.constant 0 : index
      %c0_13 = arith.constant 0 : index
      %10 = vector.load %arg2[%c0_11, %c0_12, %c0_13] : memref<9x288x144xbf16, #tpu.memory_space<vmem>>, vector<1x288x144xbf16>
      %11 = vector.shape_cast %10 : vector<1x288x144xbf16> to vector<288x144xbf16>
      %cst_14 = arith.constant dense<0.000000e+00> : vector<16x144xf32>
      %12 = tpu.matmul %9, %11, %cst_14 {dimension_numbers = #tpu.dot_dimension_numbers<[1], [0], [0], [1], [0, 0, 1, 1], [], []>} : vector<16x288xbf16>, vector<288x144xbf16>, vector<16x144xf32> -> vector<16x144xf32>
      %13 = arith.addf %4, %12 : vector<16x144xf32>
      %c0_i32_15 = arith.constant 0 : i32
      %14 = arith.addi %arg11, %c0_i32_15 : i32
      %15 = arith.index_cast %14 : i32 to index
      %c0_16 = arith.constant 0 : index
      %c0_17 = arith.constant 0 : index
      %16 = vector.load %arg1[%15, %c0_16, %c0_17] : memref<18x18x144xf32, #tpu.memory_space<vmem>>, vector<1x16x144xf32>
      %17 = vector.shape_cast %16 : vector<1x16x144xf32> to vector<16x144xf32>
      %18 = arith.truncf %17 : vector<16x144xf32> to vector<16x144xbf16>
      %c0_18 = arith.constant 0 : index
      %c0_19 = arith.constant 0 : index
      %c0_20 = arith.constant 0 : index
      %19 = vector.load %arg3[%c0_18, %c0_19, %c0_20] : memref<9x144x144xbf16, #tpu.memory_space<vmem>>, vector<1x144x144xbf16>
      %20 = vector.shape_cast %19 : vector<1x144x144xbf16> to vector<144x144xbf16>
      %cst_21 = arith.constant dense<0.000000e+00> : vector<16x144xf32>
      %21 = tpu.matmul %18, %20, %cst_21 {dimension_numbers = #tpu.dot_dimension_numbers<[1], [0], [0], [1], [0, 0, 1, 1], [], []>} : vector<16x144xbf16>, vector<144x144xbf16>, vector<16x144xf32> -> vector<16x144xf32>
      %22 = arith.addf %13, %21 : vector<16x144xf32>
      %c0_i32_22 = arith.constant 0 : i32
      %23 = arith.addi %arg11, %c0_i32_22 : i32
      %24 = arith.index_cast %23 : i32 to index
      %c1 = arith.constant 1 : index
      %c0_23 = arith.constant 0 : index
      %25 = vector.load %arg0[%24, %c1, %c0_23] : memref<18x18x288xf32, #tpu.memory_space<vmem>>, vector<1x16x288xf32>
      %26 = vector.shape_cast %25 : vector<1x16x288xf32> to vector<16x288xf32>
      %27 = arith.truncf %26 : vector<16x288xf32> to vector<16x288xbf16>
      %c1_24 = arith.constant 1 : index
      %c0_25 = arith.constant 0 : index
      %c0_26 = arith.constant 0 : index
      %28 = vector.load %arg2[%c1_24, %c0_25, %c0_26] : memref<9x288x144xbf16, #tpu.memory_space<vmem>>, vector<1x288x144xbf16>
      %29 = vector.shape_cast %28 : vector<1x288x144xbf16> to vector<288x144xbf16>
      %cst_27 = arith.constant dense<0.000000e+00> : vector<16x144xf32>
      %30 = tpu.matmul %27, %29, %cst_27 {dimension_numbers = #tpu.dot_dimension_numbers<[1], [0], [0], [1], [0, 0, 1, 1], [], []>} : vector<16x288xbf16>, vector<288x144xbf16>, vector<16x144xf32> -> vector<16x144xf32>
      %31 = arith.addf %22, %30 : vector<16x144xf32>
      %c0_i32_28 = arith.constant 0 : i32
      %32 = arith.addi %arg11, %c0_i32_28 : i32
      %33 = arith.index_cast %32 : i32 to index
      %c1_29 = arith.constant 1 : index
      %c0_30 = arith.constant 0 : index
      %34 = vector.load %arg1[%33, %c1_29, %c0_30] : memref<18x18x144xf32, #tpu.memory_space<vmem>>, vector<1x16x144xf32>
      %35 = vector.shape_cast %34 : vector<1x16x144xf32> to vector<16x144xf32>
      %36 = arith.truncf %35 : vector<16x144xf32> to vector<16x144xbf16>
      %c1_31 = arith.constant 1 : index
      %c0_32 = arith.constant 0 : index
      %c0_33 = arith.constant 0 : index
      %37 = vector.load %arg3[%c1_31, %c0_32, %c0_33] : memref<9x144x144xbf16, #tpu.memory_space<vmem>>, vector<1x144x144xbf16>
      %38 = vector.shape_cast %37 : vector<1x144x144xbf16> to vector<144x144xbf16>
      %cst_34 = arith.constant dense<0.000000e+00> : vector<16x144xf32>
      %39 = tpu.matmul %36, %38, %cst_34 {dimension_numbers = #tpu.dot_dimension_numbers<[1], [0], [0], [1], [0, 0, 1, 1], [], []>} : vector<16x144xbf16>, vector<144x144xbf16>, vector<16x144xf32> -> vector<16x144xf32>
      %40 = arith.addf %31, %39 : vector<16x144xf32>
      %c0_i32_35 = arith.constant 0 : i32
      %41 = arith.addi %arg11, %c0_i32_35 : i32
      %42 = arith.index_cast %41 : i32 to index
      %c2 = arith.constant 2 : index
      %c0_36 = arith.constant 0 : index
      %43 = vector.load %arg0[%42, %c2, %c0_36] : memref<18x18x288xf32, #tpu.memory_space<vmem>>, vector<1x16x288xf32>
      %44 = vector.shape_cast %43 : vector<1x16x288xf32> to vector<16x288xf32>
      %45 = arith.truncf %44 : vector<16x288xf32> to vector<16x288xbf16>
      %c2_37 = arith.constant 2 : index
      %c0_38 = arith.constant 0 : index
      %c0_39 = arith.constant 0 : index
      %46 = vector.load %arg2[%c2_37, %c0_38, %c0_39] : memref<9x288x144xbf16, #tpu.memory_space<vmem>>, vector<1x288x144xbf16>
      %47 = vector.shape_cast %46 : vector<1x288x144xbf16> to vector<288x144xbf16>
      %cst_40 = arith.constant dense<0.000000e+00> : vector<16x144xf32>
      %48 = tpu.matmul %45, %47, %cst_40 {dimension_numbers = #tpu.dot_dimension_numbers<[1], [0], [0], [1], [0, 0, 1, 1], [], []>} : vector<16x288xbf16>, vector<288x144xbf16>, vector<16x144xf32> -> vector<16x144xf32>
      %49 = arith.addf %40, %48 : vector<16x144xf32>
      %c0_i32_41 = arith.constant 0 : i32
      %50 = arith.addi %arg11, %c0_i32_41 : i32
      %51 = arith.index_cast %50 : i32 to index
      %c2_42 = arith.constant 2 : index
      %c0_43 = arith.constant 0 : index
      %52 = vector.load %arg1[%51, %c2_42, %c0_43] : memref<18x18x144xf32, #tpu.memory_space<vmem>>, vector<1x16x144xf32>
      %53 = vector.shape_cast %52 : vector<1x16x144xf32> to vector<16x144xf32>
      %54 = arith.truncf %53 : vector<16x144xf32> to vector<16x144xbf16>
      %c2_44 = arith.constant 2 : index
      %c0_45 = arith.constant 0 : index
      %c0_46 = arith.constant 0 : index
      %55 = vector.load %arg3[%c2_44, %c0_45, %c0_46] : memref<9x144x144xbf16, #tpu.memory_space<vmem>>, vector<1x144x144xbf16>
      %56 = vector.shape_cast %55 : vector<1x144x144xbf16> to vector<144x144xbf16>
      %cst_47 = arith.constant dense<0.000000e+00> : vector<16x144xf32>
      %57 = tpu.matmul %54, %56, %cst_47 {dimension_numbers = #tpu.dot_dimension_numbers<[1], [0], [0], [1], [0, 0, 1, 1], [], []>} : vector<16x144xbf16>, vector<144x144xbf16>, vector<16x144xf32> -> vector<16x144xf32>
      %58 = arith.addf %49, %57 : vector<16x144xf32>
      %c1_i32_48 = arith.constant 1 : i32
      %59 = arith.addi %arg11, %c1_i32_48 : i32
      %60 = arith.index_cast %59 : i32 to index
      %c0_49 = arith.constant 0 : index
      %c0_50 = arith.constant 0 : index
      %61 = vector.load %arg0[%60, %c0_49, %c0_50] : memref<18x18x288xf32, #tpu.memory_space<vmem>>, vector<1x16x288xf32>
      %62 = vector.shape_cast %61 : vector<1x16x288xf32> to vector<16x288xf32>
      %63 = arith.truncf %62 : vector<16x288xf32> to vector<16x288xbf16>
      %c3 = arith.constant 3 : index
      %c0_51 = arith.constant 0 : index
      %c0_52 = arith.constant 0 : index
      %64 = vector.load %arg2[%c3, %c0_51, %c0_52] : memref<9x288x144xbf16, #tpu.memory_space<vmem>>, vector<1x288x144xbf16>
      %65 = vector.shape_cast %64 : vector<1x288x144xbf16> to vector<288x144xbf16>
      %cst_53 = arith.constant dense<0.000000e+00> : vector<16x144xf32>
      %66 = tpu.matmul %63, %65, %cst_53 {dimension_numbers = #tpu.dot_dimension_numbers<[1], [0], [0], [1], [0, 0, 1, 1], [], []>} : vector<16x288xbf16>, vector<288x144xbf16>, vector<16x144xf32> -> vector<16x144xf32>
      %67 = arith.addf %58, %66 : vector<16x144xf32>
      %c1_i32_54 = arith.constant 1 : i32
      %68 = arith.addi %arg11, %c1_i32_54 : i32
      %69 = arith.index_cast %68 : i32 to index
      %c0_55 = arith.constant 0 : index
      %c0_56 = arith.constant 0 : index
      %70 = vector.load %arg1[%69, %c0_55, %c0_56] : memref<18x18x144xf32, #tpu.memory_space<vmem>>, vector<1x16x144xf32>
      %71 = vector.shape_cast %70 : vector<1x16x144xf32> to vector<16x144xf32>
      %72 = arith.truncf %71 : vector<16x144xf32> to vector<16x144xbf16>
      %c3_57 = arith.constant 3 : index
      %c0_58 = arith.constant 0 : index
      %c0_59 = arith.constant 0 : index
      %73 = vector.load %arg3[%c3_57, %c0_58, %c0_59] : memref<9x144x144xbf16, #tpu.memory_space<vmem>>, vector<1x144x144xbf16>
      %74 = vector.shape_cast %73 : vector<1x144x144xbf16> to vector<144x144xbf16>
      %cst_60 = arith.constant dense<0.000000e+00> : vector<16x144xf32>
      %75 = tpu.matmul %72, %74, %cst_60 {dimension_numbers = #tpu.dot_dimension_numbers<[1], [0], [0], [1], [0, 0, 1, 1], [], []>} : vector<16x144xbf16>, vector<144x144xbf16>, vector<16x144xf32> -> vector<16x144xf32>
      %76 = arith.addf %67, %75 : vector<16x144xf32>
      %c1_i32_61 = arith.constant 1 : i32
      %77 = arith.addi %arg11, %c1_i32_61 : i32
      %78 = arith.index_cast %77 : i32 to index
      %c1_62 = arith.constant 1 : index
      %c0_63 = arith.constant 0 : index
      %79 = vector.load %arg0[%78, %c1_62, %c0_63] : memref<18x18x288xf32, #tpu.memory_space<vmem>>, vector<1x16x288xf32>
      %80 = vector.shape_cast %79 : vector<1x16x288xf32> to vector<16x288xf32>
      %81 = arith.truncf %80 : vector<16x288xf32> to vector<16x288xbf16>
      %c4 = arith.constant 4 : index
      %c0_64 = arith.constant 0 : index
      %c0_65 = arith.constant 0 : index
      %82 = vector.load %arg2[%c4, %c0_64, %c0_65] : memref<9x288x144xbf16, #tpu.memory_space<vmem>>, vector<1x288x144xbf16>
      %83 = vector.shape_cast %82 : vector<1x288x144xbf16> to vector<288x144xbf16>
      %cst_66 = arith.constant dense<0.000000e+00> : vector<16x144xf32>
      %84 = tpu.matmul %81, %83, %cst_66 {dimension_numbers = #tpu.dot_dimension_numbers<[1], [0], [0], [1], [0, 0, 1, 1], [], []>} : vector<16x288xbf16>, vector<288x144xbf16>, vector<16x144xf32> -> vector<16x144xf32>
      %85 = arith.addf %76, %84 : vector<16x144xf32>
      %c1_i32_67 = arith.constant 1 : i32
      %86 = arith.addi %arg11, %c1_i32_67 : i32
      %87 = arith.index_cast %86 : i32 to index
      %c1_68 = arith.constant 1 : index
      %c0_69 = arith.constant 0 : index
      %88 = vector.load %arg1[%87, %c1_68, %c0_69] : memref<18x18x144xf32, #tpu.memory_space<vmem>>, vector<1x16x144xf32>
      %89 = vector.shape_cast %88 : vector<1x16x144xf32> to vector<16x144xf32>
      %90 = arith.truncf %89 : vector<16x144xf32> to vector<16x144xbf16>
      %c4_70 = arith.constant 4 : index
      %c0_71 = arith.constant 0 : index
      %c0_72 = arith.constant 0 : index
      %91 = vector.load %arg3[%c4_70, %c0_71, %c0_72] : memref<9x144x144xbf16, #tpu.memory_space<vmem>>, vector<1x144x144xbf16>
      %92 = vector.shape_cast %91 : vector<1x144x144xbf16> to vector<144x144xbf16>
      %cst_73 = arith.constant dense<0.000000e+00> : vector<16x144xf32>
      %93 = tpu.matmul %90, %92, %cst_73 {dimension_numbers = #tpu.dot_dimension_numbers<[1], [0], [0], [1], [0, 0, 1, 1], [], []>} : vector<16x144xbf16>, vector<144x144xbf16>, vector<16x144xf32> -> vector<16x144xf32>
      %94 = arith.addf %85, %93 : vector<16x144xf32>
      %c1_i32_74 = arith.constant 1 : i32
      %95 = arith.addi %arg11, %c1_i32_74 : i32
      %96 = arith.index_cast %95 : i32 to index
      %c2_75 = arith.constant 2 : index
      %c0_76 = arith.constant 0 : index
      %97 = vector.load %arg0[%96, %c2_75, %c0_76] : memref<18x18x288xf32, #tpu.memory_space<vmem>>, vector<1x16x288xf32>
      %98 = vector.shape_cast %97 : vector<1x16x288xf32> to vector<16x288xf32>
      %99 = arith.truncf %98 : vector<16x288xf32> to vector<16x288xbf16>
      %c5 = arith.constant 5 : index
      %c0_77 = arith.constant 0 : index
      %c0_78 = arith.constant 0 : index
      %100 = vector.load %arg2[%c5, %c0_77, %c0_78] : memref<9x288x144xbf16, #tpu.memory_space<vmem>>, vector<1x288x144xbf16>
      %101 = vector.shape_cast %100 : vector<1x288x144xbf16> to vector<288x144xbf16>
      %cst_79 = arith.constant dense<0.000000e+00> : vector<16x144xf32>
      %102 = tpu.matmul %99, %101, %cst_79 {dimension_numbers = #tpu.dot_dimension_numbers<[1], [0], [0], [1], [0, 0, 1, 1], [], []>} : vector<16x288xbf16>, vector<288x144xbf16>, vector<16x144xf32> -> vector<16x144xf32>
      %103 = arith.addf %94, %102 : vector<16x144xf32>
      %c1_i32_80 = arith.constant 1 : i32
      %104 = arith.addi %arg11, %c1_i32_80 : i32
      %105 = arith.index_cast %104 : i32 to index
      %c2_81 = arith.constant 2 : index
      %c0_82 = arith.constant 0 : index
      %106 = vector.load %arg1[%105, %c2_81, %c0_82] : memref<18x18x144xf32, #tpu.memory_space<vmem>>, vector<1x16x144xf32>
      %107 = vector.shape_cast %106 : vector<1x16x144xf32> to vector<16x144xf32>
      %108 = arith.truncf %107 : vector<16x144xf32> to vector<16x144xbf16>
      %c5_83 = arith.constant 5 : index
      %c0_84 = arith.constant 0 : index
      %c0_85 = arith.constant 0 : index
      %109 = vector.load %arg3[%c5_83, %c0_84, %c0_85] : memref<9x144x144xbf16, #tpu.memory_space<vmem>>, vector<1x144x144xbf16>
      %110 = vector.shape_cast %109 : vector<1x144x144xbf16> to vector<144x144xbf16>
      %cst_86 = arith.constant dense<0.000000e+00> : vector<16x144xf32>
      %111 = tpu.matmul %108, %110, %cst_86 {dimension_numbers = #tpu.dot_dimension_numbers<[1], [0], [0], [1], [0, 0, 1, 1], [], []>} : vector<16x144xbf16>, vector<144x144xbf16>, vector<16x144xf32> -> vector<16x144xf32>
      %112 = arith.addf %103, %111 : vector<16x144xf32>
      %c2_i32 = arith.constant 2 : i32
      %113 = arith.addi %arg11, %c2_i32 : i32
      %114 = arith.index_cast %113 : i32 to index
      %c0_87 = arith.constant 0 : index
      %c0_88 = arith.constant 0 : index
      %115 = vector.load %arg0[%114, %c0_87, %c0_88] : memref<18x18x288xf32, #tpu.memory_space<vmem>>, vector<1x16x288xf32>
      %116 = vector.shape_cast %115 : vector<1x16x288xf32> to vector<16x288xf32>
      %117 = arith.truncf %116 : vector<16x288xf32> to vector<16x288xbf16>
      %c6 = arith.constant 6 : index
      %c0_89 = arith.constant 0 : index
      %c0_90 = arith.constant 0 : index
      %118 = vector.load %arg2[%c6, %c0_89, %c0_90] : memref<9x288x144xbf16, #tpu.memory_space<vmem>>, vector<1x288x144xbf16>
      %119 = vector.shape_cast %118 : vector<1x288x144xbf16> to vector<288x144xbf16>
      %cst_91 = arith.constant dense<0.000000e+00> : vector<16x144xf32>
      %120 = tpu.matmul %117, %119, %cst_91 {dimension_numbers = #tpu.dot_dimension_numbers<[1], [0], [0], [1], [0, 0, 1, 1], [], []>} : vector<16x288xbf16>, vector<288x144xbf16>, vector<16x144xf32> -> vector<16x144xf32>
      %121 = arith.addf %112, %120 : vector<16x144xf32>
      %c2_i32_92 = arith.constant 2 : i32
      %122 = arith.addi %arg11, %c2_i32_92 : i32
      %123 = arith.index_cast %122 : i32 to index
      %c0_93 = arith.constant 0 : index
      %c0_94 = arith.constant 0 : index
      %124 = vector.load %arg1[%123, %c0_93, %c0_94] : memref<18x18x144xf32, #tpu.memory_space<vmem>>, vector<1x16x144xf32>
      %125 = vector.shape_cast %124 : vector<1x16x144xf32> to vector<16x144xf32>
      %126 = arith.truncf %125 : vector<16x144xf32> to vector<16x144xbf16>
      %c6_95 = arith.constant 6 : index
      %c0_96 = arith.constant 0 : index
      %c0_97 = arith.constant 0 : index
      %127 = vector.load %arg3[%c6_95, %c0_96, %c0_97] : memref<9x144x144xbf16, #tpu.memory_space<vmem>>, vector<1x144x144xbf16>
      %128 = vector.shape_cast %127 : vector<1x144x144xbf16> to vector<144x144xbf16>
      %cst_98 = arith.constant dense<0.000000e+00> : vector<16x144xf32>
      %129 = tpu.matmul %126, %128, %cst_98 {dimension_numbers = #tpu.dot_dimension_numbers<[1], [0], [0], [1], [0, 0, 1, 1], [], []>} : vector<16x144xbf16>, vector<144x144xbf16>, vector<16x144xf32> -> vector<16x144xf32>
      %130 = arith.addf %121, %129 : vector<16x144xf32>
      %c2_i32_99 = arith.constant 2 : i32
      %131 = arith.addi %arg11, %c2_i32_99 : i32
      %132 = arith.index_cast %131 : i32 to index
      %c1_100 = arith.constant 1 : index
      %c0_101 = arith.constant 0 : index
      %133 = vector.load %arg0[%132, %c1_100, %c0_101] : memref<18x18x288xf32, #tpu.memory_space<vmem>>, vector<1x16x288xf32>
      %134 = vector.shape_cast %133 : vector<1x16x288xf32> to vector<16x288xf32>
      %135 = arith.truncf %134 : vector<16x288xf32> to vector<16x288xbf16>
      %c7 = arith.constant 7 : index
      %c0_102 = arith.constant 0 : index
      %c0_103 = arith.constant 0 : index
      %136 = vector.load %arg2[%c7, %c0_102, %c0_103] : memref<9x288x144xbf16, #tpu.memory_space<vmem>>, vector<1x288x144xbf16>
      %137 = vector.shape_cast %136 : vector<1x288x144xbf16> to vector<288x144xbf16>
      %cst_104 = arith.constant dense<0.000000e+00> : vector<16x144xf32>
      %138 = tpu.matmul %135, %137, %cst_104 {dimension_numbers = #tpu.dot_dimension_numbers<[1], [0], [0], [1], [0, 0, 1, 1], [], []>} : vector<16x288xbf16>, vector<288x144xbf16>, vector<16x144xf32> -> vector<16x144xf32>
      %139 = arith.addf %130, %138 : vector<16x144xf32>
      %c2_i32_105 = arith.constant 2 : i32
      %140 = arith.addi %arg11, %c2_i32_105 : i32
      %141 = arith.index_cast %140 : i32 to index
      %c1_106 = arith.constant 1 : index
      %c0_107 = arith.constant 0 : index
      %142 = vector.load %arg1[%141, %c1_106, %c0_107] : memref<18x18x144xf32, #tpu.memory_space<vmem>>, vector<1x16x144xf32>
      %143 = vector.shape_cast %142 : vector<1x16x144xf32> to vector<16x144xf32>
      %144 = arith.truncf %143 : vector<16x144xf32> to vector<16x144xbf16>
      %c7_108 = arith.constant 7 : index
      %c0_109 = arith.constant 0 : index
      %c0_110 = arith.constant 0 : index
      %145 = vector.load %arg3[%c7_108, %c0_109, %c0_110] : memref<9x144x144xbf16, #tpu.memory_space<vmem>>, vector<1x144x144xbf16>
      %146 = vector.shape_cast %145 : vector<1x144x144xbf16> to vector<144x144xbf16>
      %cst_111 = arith.constant dense<0.000000e+00> : vector<16x144xf32>
      %147 = tpu.matmul %144, %146, %cst_111 {dimension_numbers = #tpu.dot_dimension_numbers<[1], [0], [0], [1], [0, 0, 1, 1], [], []>} : vector<16x144xbf16>, vector<144x144xbf16>, vector<16x144xf32> -> vector<16x144xf32>
      %148 = arith.addf %139, %147 : vector<16x144xf32>
      %c2_i32_112 = arith.constant 2 : i32
      %149 = arith.addi %arg11, %c2_i32_112 : i32
      %150 = arith.index_cast %149 : i32 to index
      %c2_113 = arith.constant 2 : index
      %c0_114 = arith.constant 0 : index
      %151 = vector.load %arg0[%150, %c2_113, %c0_114] : memref<18x18x288xf32, #tpu.memory_space<vmem>>, vector<1x16x288xf32>
      %152 = vector.shape_cast %151 : vector<1x16x288xf32> to vector<16x288xf32>
      %153 = arith.truncf %152 : vector<16x288xf32> to vector<16x288xbf16>
      %c8 = arith.constant 8 : index
      %c0_115 = arith.constant 0 : index
      %c0_116 = arith.constant 0 : index
      %154 = vector.load %arg2[%c8, %c0_115, %c0_116] : memref<9x288x144xbf16, #tpu.memory_space<vmem>>, vector<1x288x144xbf16>
      %155 = vector.shape_cast %154 : vector<1x288x144xbf16> to vector<288x144xbf16>
      %cst_117 = arith.constant dense<0.000000e+00> : vector<16x144xf32>
      %156 = tpu.matmul %153, %155, %cst_117 {dimension_numbers = #tpu.dot_dimension_numbers<[1], [0], [0], [1], [0, 0, 1, 1], [], []>} : vector<16x288xbf16>, vector<288x144xbf16>, vector<16x144xf32> -> vector<16x144xf32>
      %157 = arith.addf %148, %156 : vector<16x144xf32>
      %c2_i32_118 = arith.constant 2 : i32
      %158 = arith.addi %arg11, %c2_i32_118 : i32
      %159 = arith.index_cast %158 : i32 to index
      %c2_119 = arith.constant 2 : index
      %c0_120 = arith.constant 0 : index
      %160 = vector.load %arg1[%159, %c2_119, %c0_120] : memref<18x18x144xf32, #tpu.memory_space<vmem>>, vector<1x16x144xf32>
      %161 = vector.shape_cast %160 : vector<1x16x144xf32> to vector<16x144xf32>
      %162 = arith.truncf %161 : vector<16x144xf32> to vector<16x144xbf16>
      %c8_121 = arith.constant 8 : index
      %c0_122 = arith.constant 0 : index
      %c0_123 = arith.constant 0 : index
      %163 = vector.load %arg3[%c8_121, %c0_122, %c0_123] : memref<9x144x144xbf16, #tpu.memory_space<vmem>>, vector<1x144x144xbf16>
      %164 = vector.shape_cast %163 : vector<1x144x144xbf16> to vector<144x144xbf16>
      %cst_124 = arith.constant dense<0.000000e+00> : vector<16x144xf32>
      %165 = tpu.matmul %162, %164, %cst_124 {dimension_numbers = #tpu.dot_dimension_numbers<[1], [0], [0], [1], [0, 0, 1, 1], [], []>} : vector<16x144xbf16>, vector<144x144xbf16>, vector<16x144xf32> -> vector<16x144xf32>
      %166 = arith.addf %157, %165 : vector<16x144xf32>
      %c0_125 = arith.constant 0 : index
      %c0_126 = arith.constant 0 : index
      %167 = vector.load %arg4[%c0_125, %c0_126] : memref<1x144xf32, #tpu.memory_space<vmem>>, vector<1x144xf32>
      %168 = vector.broadcast %167 : vector<1x144xf32> to vector<16x144xf32>
      %169 = arith.addf %166, %168 : vector<16x144xf32>
      %cst_127 = arith.constant 0.000000e+00 : f32
      %170 = vector.broadcast %cst_127 : f32 to vector<16x144xf32>
      %171 = arith.maximumf %169, %170 : vector<16x144xf32>
      %c1_i32_128 = arith.constant 1 : i32
      %172 = arith.addi %c1_i32_128, %arg11 : i32
      %173 = arith.index_cast %172 : i32 to index
      %c1_129 = arith.constant 1 : index
      %c0_130 = arith.constant 0 : index
      %174 = vector.load %arg10[%173, %c1_129, %c0_130] : memref<18x18x144xf32, #tpu.memory_space<vmem>>, vector<1x16x144xf32>
      %175 = vector.shape_cast %174 : vector<1x16x144xf32> to vector<16x144xf32>
      %176 = vector.shape_cast %171 : vector<16x144xf32> to vector<1x16x144xf32>
      tpu.vector_store %arg10[%173, %c1_129, %c0_130], %176 {strides = array<i32>} : memref<18x18x144xf32, #tpu.memory_space<vmem>>, vector<1x16x144xf32>,
    }
    %c16_i32_2 = arith.constant 16 : i32
    %c0_i32_3 = arith.constant 0 : i32
    %c16_i32_4 = arith.constant 16 : i32
    %3 = arith.addi %c0_i32_3, %c16_i32_4 : i32
    %c1_i32_5 = arith.constant 1 : i32
    scf.for %arg11 = %c0_i32_3 to %3 step %c1_i32_5  : i32 {
      %cst_7 = arith.constant 0.000000e+00 : f32
      %4 = vector.broadcast %cst_7 : f32 to vector<16x144xf32>
      %c0_i32_8 = arith.constant 0 : i32
      %5 = arith.addi %arg11, %c0_i32_8 : i32
      %6 = arith.index_cast %5 : i32 to index
      %c0_9 = arith.constant 0 : index
      %c0_10 = arith.constant 0 : index
      %7 = vector.load %arg10[%6, %c0_9, %c0_10] : memref<18x18x144xf32, #tpu.memory_space<vmem>>, vector<1x16x144xf32>
      %8 = vector.shape_cast %7 : vector<1x16x144xf32> to vector<16x144xf32>
      %9 = arith.truncf %8 : vector<16x144xf32> to vector<16x144xbf16>
      %c0_11 = arith.constant 0 : index
      %c0_12 = arith.constant 0 : index
      %c0_13 = arith.constant 0 : index
      %10 = vector.load %arg5[%c0_11, %c0_12, %c0_13] : memref<9x144x144xbf16, #tpu.memory_space<vmem>>, vector<1x144x144xbf16>
      %11 = vector.shape_cast %10 : vector<1x144x144xbf16> to vector<144x144xbf16>
      %cst_14 = arith.constant dense<0.000000e+00> : vector<16x144xf32>
      %12 = tpu.matmul %9, %11, %cst_14 {dimension_numbers = #tpu.dot_dimension_numbers<[1], [0], [0], [1], [0, 0, 1, 1], [], []>} : vector<16x144xbf16>, vector<144x144xbf16>, vector<16x144xf32> -> vector<16x144xf32>
      %13 = arith.addf %4, %12 : vector<16x144xf32>
      %c0_i32_15 = arith.constant 0 : i32
      %14 = arith.addi %arg11, %c0_i32_15 : i32
      %15 = arith.index_cast %14 : i32 to index
      %c1 = arith.constant 1 : index
      %c0_16 = arith.constant 0 : index
      %16 = vector.load %arg10[%15, %c1, %c0_16] : memref<18x18x144xf32, #tpu.memory_space<vmem>>, vector<1x16x144xf32>
      %17 = vector.shape_cast %16 : vector<1x16x144xf32> to vector<16x144xf32>
      %18 = arith.truncf %17 : vector<16x144xf32> to vector<16x144xbf16>
      %c1_17 = arith.constant 1 : index
      %c0_18 = arith.constant 0 : index
      %c0_19 = arith.constant 0 : index
      %19 = vector.load %arg5[%c1_17, %c0_18, %c0_19] : memref<9x144x144xbf16, #tpu.memory_space<vmem>>, vector<1x144x144xbf16>
      %20 = vector.shape_cast %19 : vector<1x144x144xbf16> to vector<144x144xbf16>
      %cst_20 = arith.constant dense<0.000000e+00> : vector<16x144xf32>
      %21 = tpu.matmul %18, %20, %cst_20 {dimension_numbers = #tpu.dot_dimension_numbers<[1], [0], [0], [1], [0, 0, 1, 1], [], []>} : vector<16x144xbf16>, vector<144x144xbf16>, vector<16x144xf32> -> vector<16x144xf32>
      %22 = arith.addf %13, %21 : vector<16x144xf32>
      %c0_i32_21 = arith.constant 0 : i32
      %23 = arith.addi %arg11, %c0_i32_21 : i32
      %24 = arith.index_cast %23 : i32 to index
      %c2 = arith.constant 2 : index
      %c0_22 = arith.constant 0 : index
      %25 = vector.load %arg10[%24, %c2, %c0_22] : memref<18x18x144xf32, #tpu.memory_space<vmem>>, vector<1x16x144xf32>
      %26 = vector.shape_cast %25 : vector<1x16x144xf32> to vector<16x144xf32>
      %27 = arith.truncf %26 : vector<16x144xf32> to vector<16x144xbf16>
      %c2_23 = arith.constant 2 : index
      %c0_24 = arith.constant 0 : index
      %c0_25 = arith.constant 0 : index
      %28 = vector.load %arg5[%c2_23, %c0_24, %c0_25] : memref<9x144x144xbf16, #tpu.memory_space<vmem>>, vector<1x144x144xbf16>
      %29 = vector.shape_cast %28 : vector<1x144x144xbf16> to vector<144x144xbf16>
      %cst_26 = arith.constant dense<0.000000e+00> : vector<16x144xf32>
      %30 = tpu.matmul %27, %29, %cst_26 {dimension_numbers = #tpu.dot_dimension_numbers<[1], [0], [0], [1], [0, 0, 1, 1], [], []>} : vector<16x144xbf16>, vector<144x144xbf16>, vector<16x144xf32> -> vector<16x144xf32>
      %31 = arith.addf %22, %30 : vector<16x144xf32>
      %c1_i32_27 = arith.constant 1 : i32
      %32 = arith.addi %arg11, %c1_i32_27 : i32
      %33 = arith.index_cast %32 : i32 to index
      %c0_28 = arith.constant 0 : index
      %c0_29 = arith.constant 0 : index
      %34 = vector.load %arg10[%33, %c0_28, %c0_29] : memref<18x18x144xf32, #tpu.memory_space<vmem>>, vector<1x16x144xf32>
      %35 = vector.shape_cast %34 : vector<1x16x144xf32> to vector<16x144xf32>
      %36 = arith.truncf %35 : vector<16x144xf32> to vector<16x144xbf16>
      %c3 = arith.constant 3 : index
      %c0_30 = arith.constant 0 : index
      %c0_31 = arith.constant 0 : index
      %37 = vector.load %arg5[%c3, %c0_30, %c0_31] : memref<9x144x144xbf16, #tpu.memory_space<vmem>>, vector<1x144x144xbf16>
      %38 = vector.shape_cast %37 : vector<1x144x144xbf16> to vector<144x144xbf16>
      %cst_32 = arith.constant dense<0.000000e+00> : vector<16x144xf32>
      %39 = tpu.matmul %36, %38, %cst_32 {dimension_numbers = #tpu.dot_dimension_numbers<[1], [0], [0], [1], [0, 0, 1, 1], [], []>} : vector<16x144xbf16>, vector<144x144xbf16>, vector<16x144xf32> -> vector<16x144xf32>
      %40 = arith.addf %31, %39 : vector<16x144xf32>
      %c1_i32_33 = arith.constant 1 : i32
      %41 = arith.addi %arg11, %c1_i32_33 : i32
      %42 = arith.index_cast %41 : i32 to index
      %c1_34 = arith.constant 1 : index
      %c0_35 = arith.constant 0 : index
      %43 = vector.load %arg10[%42, %c1_34, %c0_35] : memref<18x18x144xf32, #tpu.memory_space<vmem>>, vector<1x16x144xf32>
      %44 = vector.shape_cast %43 : vector<1x16x144xf32> to vector<16x144xf32>
      %45 = arith.truncf %44 : vector<16x144xf32> to vector<16x144xbf16>
      %c4 = arith.constant 4 : index
      %c0_36 = arith.constant 0 : index
      %c0_37 = arith.constant 0 : index
      %46 = vector.load %arg5[%c4, %c0_36, %c0_37] : memref<9x144x144xbf16, #tpu.memory_space<vmem>>, vector<1x144x144xbf16>
      %47 = vector.shape_cast %46 : vector<1x144x144xbf16> to vector<144x144xbf16>
      %cst_38 = arith.constant dense<0.000000e+00> : vector<16x144xf32>
      %48 = tpu.matmul %45, %47, %cst_38 {dimension_numbers = #tpu.dot_dimension_numbers<[1], [0], [0], [1], [0, 0, 1, 1], [], []>} : vector<16x144xbf16>, vector<144x144xbf16>, vector<16x144xf32> -> vector<16x144xf32>
      %49 = arith.addf %40, %48 : vector<16x144xf32>
      %c1_i32_39 = arith.constant 1 : i32
      %50 = arith.addi %arg11, %c1_i32_39 : i32
      %51 = arith.index_cast %50 : i32 to index
      %c2_40 = arith.constant 2 : index
      %c0_41 = arith.constant 0 : index
      %52 = vector.load %arg10[%51, %c2_40, %c0_41] : memref<18x18x144xf32, #tpu.memory_space<vmem>>, vector<1x16x144xf32>
      %53 = vector.shape_cast %52 : vector<1x16x144xf32> to vector<16x144xf32>
      %54 = arith.truncf %53 : vector<16x144xf32> to vector<16x144xbf16>
      %c5 = arith.constant 5 : index
      %c0_42 = arith.constant 0 : index
      %c0_43 = arith.constant 0 : index
      %55 = vector.load %arg5[%c5, %c0_42, %c0_43] : memref<9x144x144xbf16, #tpu.memory_space<vmem>>, vector<1x144x144xbf16>
      %56 = vector.shape_cast %55 : vector<1x144x144xbf16> to vector<144x144xbf16>
      %cst_44 = arith.constant dense<0.000000e+00> : vector<16x144xf32>
      %57 = tpu.matmul %54, %56, %cst_44 {dimension_numbers = #tpu.dot_dimension_numbers<[1], [0], [0], [1], [0, 0, 1, 1], [], []>} : vector<16x144xbf16>, vector<144x144xbf16>, vector<16x144xf32> -> vector<16x144xf32>
      %58 = arith.addf %49, %57 : vector<16x144xf32>
      %c2_i32 = arith.constant 2 : i32
      %59 = arith.addi %arg11, %c2_i32 : i32
      %60 = arith.index_cast %59 : i32 to index
      %c0_45 = arith.constant 0 : index
      %c0_46 = arith.constant 0 : index
      %61 = vector.load %arg10[%60, %c0_45, %c0_46] : memref<18x18x144xf32, #tpu.memory_space<vmem>>, vector<1x16x144xf32>
      %62 = vector.shape_cast %61 : vector<1x16x144xf32> to vector<16x144xf32>
      %63 = arith.truncf %62 : vector<16x144xf32> to vector<16x144xbf16>
      %c6 = arith.constant 6 : index
      %c0_47 = arith.constant 0 : index
      %c0_48 = arith.constant 0 : index
      %64 = vector.load %arg5[%c6, %c0_47, %c0_48] : memref<9x144x144xbf16, #tpu.memory_space<vmem>>, vector<1x144x144xbf16>
      %65 = vector.shape_cast %64 : vector<1x144x144xbf16> to vector<144x144xbf16>
      %cst_49 = arith.constant dense<0.000000e+00> : vector<16x144xf32>
      %66 = tpu.matmul %63, %65, %cst_49 {dimension_numbers = #tpu.dot_dimension_numbers<[1], [0], [0], [1], [0, 0, 1, 1], [], []>} : vector<16x144xbf16>, vector<144x144xbf16>, vector<16x144xf32> -> vector<16x144xf32>
      %67 = arith.addf %58, %66 : vector<16x144xf32>
      %c2_i32_50 = arith.constant 2 : i32
      %68 = arith.addi %arg11, %c2_i32_50 : i32
      %69 = arith.index_cast %68 : i32 to index
      %c1_51 = arith.constant 1 : index
      %c0_52 = arith.constant 0 : index
      %70 = vector.load %arg10[%69, %c1_51, %c0_52] : memref<18x18x144xf32, #tpu.memory_space<vmem>>, vector<1x16x144xf32>
      %71 = vector.shape_cast %70 : vector<1x16x144xf32> to vector<16x144xf32>
      %72 = arith.truncf %71 : vector<16x144xf32> to vector<16x144xbf16>
      %c7 = arith.constant 7 : index
      %c0_53 = arith.constant 0 : index
      %c0_54 = arith.constant 0 : index
      %73 = vector.load %arg5[%c7, %c0_53, %c0_54] : memref<9x144x144xbf16, #tpu.memory_space<vmem>>, vector<1x144x144xbf16>
      %74 = vector.shape_cast %73 : vector<1x144x144xbf16> to vector<144x144xbf16>
      %cst_55 = arith.constant dense<0.000000e+00> : vector<16x144xf32>
      %75 = tpu.matmul %72, %74, %cst_55 {dimension_numbers = #tpu.dot_dimension_numbers<[1], [0], [0], [1], [0, 0, 1, 1], [], []>} : vector<16x144xbf16>, vector<144x144xbf16>, vector<16x144xf32> -> vector<16x144xf32>
      %76 = arith.addf %67, %75 : vector<16x144xf32>
      %c2_i32_56 = arith.constant 2 : i32
      %77 = arith.addi %arg11, %c2_i32_56 : i32
      %78 = arith.index_cast %77 : i32 to index
      %c2_57 = arith.constant 2 : index
      %c0_58 = arith.constant 0 : index
      %79 = vector.load %arg10[%78, %c2_57, %c0_58] : memref<18x18x144xf32, #tpu.memory_space<vmem>>, vector<1x16x144xf32>
      %80 = vector.shape_cast %79 : vector<1x16x144xf32> to vector<16x144xf32>
      %81 = arith.truncf %80 : vector<16x144xf32> to vector<16x144xbf16>
      %c8 = arith.constant 8 : index
      %c0_59 = arith.constant 0 : index
      %c0_60 = arith.constant 0 : index
      %82 = vector.load %arg5[%c8, %c0_59, %c0_60] : memref<9x144x144xbf16, #tpu.memory_space<vmem>>, vector<1x144x144xbf16>
      %83 = vector.shape_cast %82 : vector<1x144x144xbf16> to vector<144x144xbf16>
      %cst_61 = arith.constant dense<0.000000e+00> : vector<16x144xf32>
      %84 = tpu.matmul %81, %83, %cst_61 {dimension_numbers = #tpu.dot_dimension_numbers<[1], [0], [0], [1], [0, 0, 1, 1], [], []>} : vector<16x144xbf16>, vector<144x144xbf16>, vector<16x144xf32> -> vector<16x144xf32>
      %85 = arith.addf %76, %84 : vector<16x144xf32>
      %c0_62 = arith.constant 0 : index
      %c0_63 = arith.constant 0 : index
      %86 = vector.load %arg6[%c0_62, %c0_63] : memref<1x144xf32, #tpu.memory_space<vmem>>, vector<1x144xf32>
      %87 = vector.broadcast %86 : vector<1x144xf32> to vector<16x144xf32>
      %88 = arith.addf %85, %87 : vector<16x144xf32>
      %cst_64 = arith.constant 0.000000e+00 : f32
      %89 = vector.broadcast %cst_64 : f32 to vector<16x144xf32>
      %90 = arith.maximumf %88, %89 : vector<16x144xf32>
      %91 = arith.truncf %90 : vector<16x144xf32> to vector<16x144xbf16>
      %c0_65 = arith.constant 0 : index
      %c0_66 = arith.constant 0 : index
      %92 = vector.load %arg7[%c0_65, %c0_66] : memref<144x32xbf16, #tpu.memory_space<vmem>>, vector<144x32xbf16>
      %cst_67 = arith.constant dense<0.000000e+00> : vector<16x32xf32>
      %93 = tpu.matmul %91, %92, %cst_67 {dimension_numbers = #tpu.dot_dimension_numbers<[1], [0], [0], [1], [0, 0, 1, 1], [], []>} : vector<16x144xbf16>, vector<144x32xbf16>, vector<16x32xf32> -> vector<16x32xf32>
      %c0_68 = arith.constant 0 : index
      %c0_69 = arith.constant 0 : index
      %94 = vector.load %arg8[%c0_68, %c0_69] : memref<1x32xf32, #tpu.memory_space<vmem>>, vector<1x32xf32>
      %95 = vector.broadcast %94 : vector<1x32xf32> to vector<16x32xf32>
      %96 = arith.addf %93, %95 : vector<16x32xf32>
      %97 = arith.index_cast %arg11 : i32 to index
      %c0_70 = arith.constant 0 : index
      %c0_71 = arith.constant 0 : index
      %98 = vector.load %arg9[%97, %c0_70, %c0_71] : memref<16x16x32xf32, #tpu.memory_space<vmem>>, vector<1x16x32xf32>
      %99 = vector.shape_cast %98 : vector<1x16x32xf32> to vector<16x32xf32>
      %100 = vector.shape_cast %96 : vector<16x32xf32> to vector<1x16x32xf32>
      tpu.vector_store %arg9[%97, %c0_70, %c0_71], %100 {strides = array<i32>} : memref<16x16x32xf32, #tpu.memory_space<vmem>>, vector<1x16x32xf32>,
    }
    %c16_i32_6 = arith.constant 16 : i32
    return
  }
}

</mosaic_0001>

<llo_original>
// kernel: unet_forward.3
$region0: #{unet_forward.3}
  #allocation0 [shape = 'u32[]', space=smem, size = 0x4, offset = 0x4, fixed_abs, tag = 'smem constant byte address 0x4 - core index']
  #allocation1 [shape = 'u32[144,128]{1,0:T(1,128)}', space=vmem, size = 0x12000, scoped, tag = 'internal scratch']
  #allocation2 [shape = 'f32[18,18,144]{2,1,0:T(8,128)}', space=vmem, size = 0x6c000, scoped, tag = 'scratch operand']
  %s0 = inlined_call_operand.vmem [shape: f32[18,18,18], index: 0, kind: input, shape index: {}]
  %s1 = inlined_call_operand.hbm [shape: bf16[9,18,144], index: 1, kind: input, shape index: {}]
  %s2 = inlined_call_operand.vmem [shape: f32[1,144], index: 2, kind: input, shape index: {}, may-alias: {2,4}]
  %s3 = inlined_call_operand.vmem [shape: bf16[9,144,144], index: 3, kind: input, shape index: {}]
  %s4 = inlined_call_operand.vmem [shape: f32[1,144], index: 4, kind: input, shape index: {}, may-alias: {2,4}]
  %s5 = inlined_call_operand.vmem [shape: f32[18,18,144], index: 5, kind: output, shape index: {}]
  %s6 = sld [smem:[#allocation0]]
  $region48: #{unet_forward.3} parent=0
    _
  %s8 = ssub.s32 1, %s6
  %s9 = scalar_select 0, %s8, %s6
  $region1: #{unet_forward.3} parent=0
    #allocation3 [shape = 'u8[110592]{0}', space=vmem, size = 0x1b000, scoped, tag = 'input window, operand 1, single buffered']
    #allocation4 [shape = 's32[1]{0}', space=sflag, size = 0x4, scoped, tag = 'scoped memory for unet_forward.3']
    %10 = vsyncpa [#allocation4], 0
    // Predicated region
    $region2: #{unet_forward.3} parent=1 // pred_check
      _
    $region3: #{unet_forward.3} parent=1 // pred_check_branch
      %12 = sbr.rel (0) target = $region5
    $region4: #{unet_forward.3} parent=1 // pred_region
      _
    $region5: #{unet_forward.3} parent=1 // pred_fallthru
      _
    // Predicated region
    $region6: #{unet_forward.3} parent=1 // pred_check
      _
    $region7: #{unet_forward.3} parent=1 // pred_check_branch
      %14 = sbr.rel (0) target = $region9
    $region8: #{unet_forward.3} parent=1 // pred_region
      %s16 = ssub.s32 3456, 3456
      %17 = vsyncadd [#allocation4], %s16
      %s18 = sshll.u32 [#allocation3], 4
      %s19 = int_to_ptr.vmem [resolvable:$true] %s18
      %24 = dma.hbm_to_vmem [thread:$0]  %s1, 3456, %s19, [#allocation4], 128, 128, 8
    $region9: #{unet_forward.3} parent=1 // pred_fallthru
      _
    // Predicated region
    $region10: #{unet_forward.3} parent=1 // pred_check
      _
    $region11: #{unet_forward.3} parent=1 // pred_check_branch
      %26 = sbr.rel (0) target = $region13
    $region12: #{unet_forward.3} parent=1 // pred_region
      _
    $region13: #{unet_forward.3} parent=1 // pred_fallthru
      _
    // Predicated region
    $region14: #{unet_forward.3} parent=1 // pred_check
      _
    $region15: #{unet_forward.3} parent=1 // pred_check_branch
      %28 = sbr.rel (0) target = $region17
    $region16: #{unet_forward.3} parent=1 // pred_region
      _
    $region17: #{unet_forward.3} parent=1 // pred_fallthru
      _
    // Predicated region
    $region18: #{unet_forward.3} parent=1 // pred_check
      _
    $region19: #{unet_forward.3} parent=1 // pred_check_branch
      %30 = sbr.rel (0) target = $region21
    $region20: #{unet_forward.3} parent=1 // pred_region
      _
    $region21: #{unet_forward.3} parent=1 // pred_fallthru
      _
    // Predicated region
    $region22: #{unet_forward.3} parent=1 // pred_check
      _
    $region23: #{unet_forward.3} parent=1 // pred_check_branch
      %32 = sbr.rel (0) target = $region25
    $region24: #{unet_forward.3} parent=1 // pred_region
      %33 = dma.done [#allocation4], 3456
    $region25: #{unet_forward.3} parent=1 // pred_fallthru
      _
    %35 = vst [vmem:[#allocation2] sm:$0xff] 0.0
    %vm36 = vcmask 130048
    %37 = vst.msk [vmem:[#allocation2 + $0x8] sm:$0xff] %vm36, 0.0
    %38 = vst [vmem:[#allocation2 + $0x10] sm:$0xff] 0.0
    %39 = vst.msk [vmem:[#allocation2 + $0x18] sm:$0xff] %vm36, 0.0
    %40 = vst [vmem:[#allocation2 + $0x20] sm:$0x3] 0.0
    %vm41 = vcmask 123904
    %42 = vst.msk [vmem:[#allocation2 + $0x28] sm:$0x3] %vm41, 0.0
    %43 = vst [vmem:[#allocation2 + $0x30] sm:$0xff] 0.0
    %44 = vst.msk [vmem:[#allocation2 + $0x38] sm:$0xff] %vm36, 0.0
    %45 = vst [vmem:[#allocation2 + $0x40] sm:$0xff] 0.0
    %46 = vst.msk [vmem:[#allocation2 + $0x48] sm:$0xff] %vm36, 0.0
    %47 = vst [vmem:[#allocation2 + $0x50] sm:$0x3] 0.0
    %48 = vst.msk [vmem:[#allocation2 + $0x58] sm:$0x3] %vm41, 0.0
    %49 = vst [vmem:[#allocation2 + $0x60] sm:$0xff] 0.0
    %50 = vst.msk [vmem:[#allocation2 + $0x68] sm:$0xff] %vm36, 0.0
    %51 = vst [vmem:[#allocation2 + $0x70] sm:$0xff] 0.0
    %52 = vst.msk [vmem:[#allocation2 + $0x78] sm:$0xff] %vm36, 0.0
    %53 = vst [vmem:[#allocation2 + $0x80] sm:$0x3] 0.0
    %54 = vst.msk [vmem:[#allocation2 + $0x88] sm:$0x3] %vm41, 0.0
    %55 = vst [vmem:[#allocation2 + $0x90] sm:$0xff] 0.0
    %56 = vst.msk [vmem:[#allocation2 + $0x98] sm:$0xff] %vm36, 0.0
    %57 = vst [vmem:[#allocation2 + $0xa0] sm:$0xff] 0.0
    %58 = vst.msk [vmem:[#allocation2 + $0xa8] sm:$0xff] %vm36, 0.0
    %59 = vst [vmem:[#allocation2 + $0xb0] sm:$0x3] 0.0
    %60 = vst.msk [vmem:[#allocation2 + $0xb8] sm:$0x3] %vm41, 0.0
    %61 = vst [vmem:[#allocation2 + $0xc0] sm:$0xff] 0.0
    %62 = vst.msk [vmem:[#allocation2 + $0xc8] sm:$0xff] %vm36, 0.0
    %63 = vst [vmem:[#allocation2 + $0xd0] sm:$0xff] 0.0
    %64 = vst.msk [vmem:[#allocation2 + $0xd8] sm:$0xff] %vm36, 0.0
    %65 = vst [vmem:[#allocation2 + $0xe0] sm:$0x3] 0.0
    %66 = vst.msk [vmem:[#allocation2 + $0xe8] sm:$0x3] %vm41, 0.0
    %67 = vst [vmem:[#allocation2 + $0xf0] sm:$0xff] 0.0
    %68 = vst.msk [vmem:[#allocation2 + $0xf8] sm:$0xff] %vm36, 0.0
    %69 = vst [vmem:[#allocation2 + $0x100] sm:$0xff] 0.0
    %70 = vst.msk [vmem:[#allocation2 + $0x108] sm:$0xff] %vm36, 0.0
    %71 = vst [vmem:[#allocation2 + $0x110] sm:$0x3] 0.0
    %72 = vst.msk [vmem:[#allocation2 + $0x118] sm:$0x3] %vm41, 0.0
    %73 = vst [vmem:[#allocation2 + $0x120] sm:$0xff] 0.0
    %74 = vst.msk [vmem:[#allocation2 + $0x128] sm:$0xff] %vm36, 0.0
    %75 = vst [vmem:[#allocation2 + $0x130] sm:$0xff] 0.0
    %76 = vst.msk [vmem:[#allocation2 + $0x138] sm:$0xff] %vm36, 0.0
    %77 = vst [vmem:[#allocation2 + $0x140] sm:$0x3] 0.0
    %78 = vst.msk [vmem:[#allocation2 + $0x148] sm:$0x3] %vm41, 0.0
    %79 = vst [vmem:[#allocation2 + $0x150] sm:$0xff] 0.0
    %80 = vst.msk [vmem:[#allocation2 + $0x158] sm:$0xff] %vm36, 0.0
    %81 = vst [vmem:[#allocation2 + $0x160] sm:$0xff] 0.0
    %82 = vst.msk [vmem:[#allocation2 + $0x168] sm:$0xff] %vm36, 0.0
    %83 = vst [vmem:[#allocation2 + $0x170] sm:$0x3] 0.0
    %84 = vst.msk [vmem:[#allocation2 + $0x178] sm:$0x3] %vm41, 0.0
    %85 = vst [vmem:[#allocation2 + $0x180] sm:$0xff] 0.0
    %86 = vst.msk [vmem:[#allocation2 + $0x188] sm:$0xff] %vm36, 0.0
    %87 = vst [vmem:[#allocation2 + $0x190] sm:$0xff] 0.0
    %88 = vst.msk [vmem:[#allocation2 + $0x198] sm:$0xff] %vm36, 0.0
    %89 = vst [vmem:[#allocation2 + $0x1a0] sm:$0x3] 0.0
    %90 = vst.msk [vmem:[#allocation2 + $0x1a8] sm:$0x3] %vm41, 0.0
    %91 = vst [vmem:[#allocation2 + $0x1b0] sm:$0xff] 0.0
    %92 = vst.msk [vmem:[#allocation2 + $0x1b8] sm:$0xff] %vm36, 0.0
    %93 = vst [vmem:[#allocation2 + $0x1c0] sm:$0xff] 0.0
    %94 = vst.msk [vmem:[#allocation2 + $0x1c8] sm:$0xff] %vm36, 0.0
    %95 = vst [vmem:[#allocation2 + $0x1d0] sm:$0x3] 0.0
    %96 = vst.msk [vmem:[#allocation2 + $0x1d8] sm:$0x3] %vm41, 0.0
    %97 = vst [vmem:[#allocation2 + $0x1e0] sm:$0xff] 0.0
    %98 = vst.msk [vmem:[#allocation2 + $0x1e8] sm:$0xff] %vm36, 0.0
    %99 = vst [vmem:[#allocation2 + $0x1f0] sm:$0xff] 0.0
    %100 = vst.msk [vmem:[#allocation2 + $0x1f8] sm:$0xff] %vm36, 0.0
    %101 = vst [vmem:[#allocation2 + $0x200] sm:$0x3] 0.0
    %102 = vst.msk [vmem:[#allocation2 + $0x208] sm:$0x3] %vm41, 0.0
    %103 = vst [vmem:[#allocation2 + $0x210] sm:$0xff] 0.0
    %104 = vst.msk [vmem:[#allocation2 + $0x218] sm:$0xff] %vm36, 0.0
    %105 = vst [vmem:[#allocation2 + $0x220] sm:$0xff] 0.0
    %106 = vst.msk [vmem:[#allocation2 + $0x228] sm:$0xff] %vm36, 0.0
    %107 = vst [vmem:[#allocation2 + $0x230] sm:$0x3] 0.0
    %108 = vst.msk [vmem:[#allocation2 + $0x238] sm:$0x3] %vm41, 0.0
    %109 = vst [vmem:[#allocation2 + $0x240] sm:$0xff] 0.0
    %110 = vst.msk [vmem:[#allocation2 + $0x248] sm:$0xff] %vm36, 0.0
    %111 = vst [vmem:[#allocation2 + $0x250] sm:$0xff] 0.0
    %112 = vst.msk [vmem:[#allocation2 + $0x258] sm:$0xff] %vm36, 0.0
    %113 = vst [vmem:[#allocation2 + $0x260] sm:$0x3] 0.0
    %114 = vst.msk [vmem:[#allocation2 + $0x268] sm:$0x3] %vm41, 0.0
    %115 = vst [vmem:[#allocation2 + $0x270] sm:$0xff] 0.0
    %116 = vst.msk [vmem:[#allocation2 + $0x278] sm:$0xff] %vm36, 0.0
    %117 = vst [vmem:[#allocation2 + $0x280] sm:$0xff] 0.0
    %118 = vst.msk [vmem:[#allocation2 + $0x288] sm:$0xff] %vm36, 0.0
    %119 = vst [vmem:[#allocation2 + $0x290] sm:$0x3] 0.0
    %120 = vst.msk [vmem:[#allocation2 + $0x298] sm:$0x3] %vm41, 0.0
    %121 = vst [vmem:[#allocation2 + $0x2a0] sm:$0xff] 0.0
    %122 = vst.msk [vmem:[#allocation2 + $0x2a8] sm:$0xff] %vm36, 0.0
    %123 = vst [vmem:[#allocation2 + $0x2b0] sm:$0xff] 0.0
    %124 = vst.msk [vmem:[#allocation2 + $0x2b8] sm:$0xff] %vm36, 0.0
    %125 = vst [vmem:[#allocation2 + $0x2c0] sm:$0x3] 0.0
    %126 = vst.msk [vmem:[#allocation2 + $0x2c8] sm:$0x3] %vm41, 0.0
    %127 = vst [vmem:[#allocation2 + $0x2d0] sm:$0xff] 0.0
    %128 = vst.msk [vmem:[#allocation2 + $0x2d8] sm:$0xff] %vm36, 0.0
    %129 = vst [vmem:[#allocation2 + $0x2e0] sm:$0xff] 0.0
    %130 = vst.msk [vmem:[#allocation2 + $0x2e8] sm:$0xff] %vm36, 0.0
    %131 = vst [vmem:[#allocation2 + $0x2f0] sm:$0x3] 0.0
    %132 = vst.msk [vmem:[#allocation2 + $0x2f8] sm:$0x3] %vm41, 0.0
    %133 = vst [vmem:[#allocation2 + $0x300] sm:$0xff] 0.0
    %134 = vst.msk [vmem:[#allocation2 + $0x308] sm:$0xff] %vm36, 0.0
    %135 = vst [vmem:[#allocation2 + $0x310] sm:$0xff] 0.0
    %136 = vst.msk [vmem:[#allocation2 + $0x318] sm:$0xff] %vm36, 0.0
    %137 = vst [vmem:[#allocation2 + $0x320] sm:$0x3] 0.0
    %138 = vst.msk [vmem:[#allocation2 + $0x328] sm:$0x3] %vm41, 0.0
    %139 = vst [vmem:[#allocation2 + $0x330] sm:$0xff] 0.0
    %140 = vst.msk [vmem:[#allocation2 + $0x338] sm:$0xff] %vm36, 0.0
    %141 = vst [vmem:[#allocation2 + $0x340] sm:$0xff] 0.0
    %142 = vst.msk [vmem:[#allocation2 + $0x348] sm:$0xff] %vm36, 0.0
    %143 = vst [vmem:[#allocation2 + $0x350] sm:$0x3] 0.0
    %144 = vst.msk [vmem:[#allocation2 + $0x358] sm:$0x3] %vm41, 0.0
    %145 = vst [vmem:[%s5] sm:$0xff] 0.0
    %146 = vst.msk [vmem:[%s5 + $0x8] sm:$0xff] %vm36, 0.0
    %147 = vst [vmem:[%s5 + $0x10] sm:$0xff] 0.0
    %148 = vst.msk [vmem:[%s5 + $0x18] sm:$0xff] %vm36, 0.0
    %149 = vst [vmem:[%s5 + $0x20] sm:$0x3] 0.0
    %150 = vst.msk [vmem:[%s5 + $0x28] sm:$0x3] %vm41, 0.0
    %151 = vst [vmem:[%s5 + $0x30] sm:$0xff] 0.0
    %152 = vst.msk [vmem:[%s5 + $0x38] sm:$0xff] %vm36, 0.0
    %153 = vst [vmem:[%s5 + $0x40] sm:$0xff] 0.0
    %154 = vst.msk [vmem:[%s5 + $0x48] sm:$0xff] %vm36, 0.0
    %155 = vst [vmem:[%s5 + $0x50] sm:$0x3] 0.0
    %156 = vst.msk [vmem:[%s5 + $0x58] sm:$0x3] %vm41, 0.0
    %157 = vst [vmem:[%s5 + $0x60] sm:$0xff] 0.0
    %158 = vst.msk [vmem:[%s5 + $0x68] sm:$0xff] %vm36, 0.0
    %159 = vst [vmem:[%s5 + $0x70] sm:$0xff] 0.0
    %160 = vst.msk [vmem:[%s5 + $0x78] sm:$0xff] %vm36, 0.0
    %161 = vst [vmem:[%s5 + $0x80] sm:$0x3] 0.0
    %162 = vst.msk [vmem:[%s5 + $0x88] sm:$0x3] %vm41, 0.0
    %163 = vst [vmem:[%s5 + $0x90] sm:$0xff] 0.0
    %164 = vst.msk [vmem:[%s5 + $0x98] sm:$0xff] %vm36, 0.0
    %165 = vst [vmem:[%s5 + $0xa0] sm:$0xff] 0.0
    %166 = vst.msk [vmem:[%s5 + $0xa8] sm:$0xff] %vm36, 0.0
    %167 = vst [vmem:[%s5 + $0xb0] sm:$0x3] 0.0
    %168 = vst.msk [vmem:[%s5 + $0xb8] sm:$0x3] %vm41, 0.0
    %169 = vst [vmem:[%s5 + $0xc0] sm:$0xff] 0.0
    %170 = vst.msk [vmem:[%s5 + $0xc8] sm:$0xff] %vm36, 0.0
    %171 = vst [vmem:[%s5 + $0xd0] sm:$0xff] 0.0
    %172 = vst.msk [vmem:[%s5 + $0xd8] sm:$0xff] %vm36, 0.0
    %173 = vst [vmem:[%s5 + $0xe0] sm:$0x3] 0.0
    %174 = vst.msk [vmem:[%s5 + $0xe8] sm:$0x3] %vm41, 0.0
    %175 = vst [vmem:[%s5 + $0xf0] sm:$0xff] 0.0
    %176 = vst.msk [vmem:[%s5 + $0xf8] sm:$0xff] %vm36, 0.0
    %177 = vst [vmem:[%s5 + $0x100] sm:$0xff] 0.0
    %178 = vst.msk [vmem:[%s5 + $0x108] sm:$0xff] %vm36, 0.0
    %179 = vst [vmem:[%s5 + $0x110] sm:$0x3] 0.0
    %180 = vst.msk [vmem:[%s5 + $0x118] sm:$0x3] %vm41, 0.0
    %181 = vst [vmem:[%s5 + $0x120] sm:$0xff] 0.0
    %182 = vst.msk [vmem:[%s5 + $0x128] sm:$0xff] %vm36, 0.0
    %183 = vst [vmem:[%s5 + $0x130] sm:$0xff] 0.0
    %184 = vst.msk [vmem:[%s5 + $0x138] sm:$0xff] %vm36, 0.0
    %185 = vst [vmem:[%s5 + $0x140] sm:$0x3] 0.0
    %186 = vst.msk [vmem:[%s5 + $0x148] sm:$0x3] %vm41, 0.0
    %187 = vst [vmem:[%s5 + $0x150] sm:$0xff] 0.0
    %188 = vst.msk [vmem:[%s5 + $0x158] sm:$0xff] %vm36, 0.0
    %189 = vst [vmem:[%s5 + $0x160] sm:$0xff] 0.0
    %190 = vst.msk [vmem:[%s5 + $0x168] sm:$0xff] %vm36, 0.0
    %191 = vst [vmem:[%s5 + $0x170] sm:$0x3] 0.0
    %192 = vst.msk [vmem:[%s5 + $0x178] sm:$0x3] %vm41, 0.0
    %193 = vst [vmem:[%s5 + $0x180] sm:$0xff] 0.0
    %194 = vst.msk [vmem:[%s5 + $0x188] sm:$0xff] %vm36, 0.0
    %195 = vst [vmem:[%s5 + $0x190] sm:$0xff] 0.0
    %196 = vst.msk [vmem:[%s5 + $0x198] sm:$0xff] %vm36, 0.0
    %197 = vst [vmem:[%s5 + $0x1a0] sm:$0x3] 0.0
    %198 = vst.msk [vmem:[%s5 + $0x1a8] sm:$0x3] %vm41, 0.0
    %199 = vst [vmem:[%s5 + $0x1b0] sm:$0xff] 0.0
    %200 = vst.msk [vmem:[%s5 + $0x1b8] sm:$0xff] %vm36, 0.0
    %201 = vst [vmem:[%s5 + $0x1c0] sm:$0xff] 0.0
    %202 = vst.msk [vmem:[%s5 + $0x1c8] sm:$0xff] %vm36, 0.0
    %203 = vst [vmem:[%s5 + $0x1d0] sm:$0x3] 0.0
    %204 = vst.msk [vmem:[%s5 + $0x1d8] sm:$0x3] %vm41, 0.0
    %205 = vst [vmem:[%s5 + $0x1e0] sm:$0xff] 0.0
    %206 = vst.msk [vmem:[%s5 + $0x1e8] sm:$0xff] %vm36, 0.0
    %207 = vst [vmem:[%s5 + $0x1f0] sm:$0xff] 0.0
    %208 = vst.msk [vmem:[%s5 + $0x1f8] sm:$0xff] %vm36, 0.0
    %209 = vst [vmem:[%s5 + $0x200] sm:$0x3] 0.0
    %210 = vst.msk [vmem:[%s5 + $0x208] sm:$0x3] %vm41, 0.0
    %211 = vst [vmem:[%s5 + $0x210] sm:$0xff] 0.0
    %212 = vst.msk [vmem:[%s5 + $0x218] sm:$0xff] %vm36, 0.0
    %213 = vst [vmem:[%s5 + $0x220] sm:$0xff] 0.0
    %214 = vst.msk [vmem:[%s5 + $0x228] sm:$0xff] %vm36, 0.0
    %215 = vst [vmem:[%s5 + $0x230] sm:$0x3] 0.0
    %216 = vst.msk [vmem:[%s5 + $0x238] sm:$0x3] %vm41, 0.0
    %217 = vst [vmem:[%s5 + $0x240] sm:$0xff] 0.0
    %218 = vst.msk [vmem:[%s5 + $0x248] sm:$0xff] %vm36, 0.0
    %219 = vst [vmem:[%s5 + $0x250] sm:$0xff] 0.0
    %220 = vst.msk [vmem:[%s5 + $0x258] sm:$0xff] %vm36, 0.0
    %221 = vst [vmem:[%s5 + $0x260] sm:$0x3] 0.0
    %222 = vst.msk [vmem:[%s5 + $0x268] sm:$0x3] %vm41, 0.0
    %223 = vst [vmem:[%s5 + $0x270] sm:$0xff] 0.0
    %224 = vst.msk [vmem:[%s5 + $0x278] sm:$0xff] %vm36, 0.0
    %225 = vst [vmem:[%s5 + $0x280] sm:$0xff] 0.0
    %226 = vst.msk [vmem:[%s5 + $0x288] sm:$0xff] %vm36, 0.0
    %227 = vst [vmem:[%s5 + $0x290] sm:$0x3] 0.0
    %228 = vst.msk [vmem:[%s5 + $0x298] sm:$0x3] %vm41, 0.0
    %229 = vst [vmem:[%s5 + $0x2a0] sm:$0xff] 0.0
    %230 = vst.msk [vmem:[%s5 + $0x2a8] sm:$0xff] %vm36, 0.0
    %231 = vst [vmem:[%s5 + $0x2b0] sm:$0xff] 0.0
    %232 = vst.msk [vmem:[%s5 + $0x2b8] sm:$0xff] %vm36, 0.0
    %233 = vst [vmem:[%s5 + $0x2c0] sm:$0x3] 0.0
    %234 = vst.msk [vmem:[%s5 + $0x2c8] sm:$0x3] %vm41, 0.0
    %235 = vst [vmem:[%s5 + $0x2d0] sm:$0xff] 0.0
    %236 = vst.msk [vmem:[%s5 + $0x2d8] sm:$0xff] %vm36, 0.0
    %237 = vst [vmem:[%s5 + $0x2e0] sm:$0xff] 0.0
    %238 = vst.msk [vmem:[%s5 + $0x2e8] sm:$0xff] %vm36, 0.0
    %239 = vst [vmem:[%s5 + $0x2f0] sm:$0x3] 0.0
    %240 = vst.msk [vmem:[%s5 + $0x2f8] sm:$0x3] %vm41, 0.0
    %241 = vst [vmem:[%s5 + $0x300] sm:$0xff] 0.0
    %242 = vst.msk [vmem:[%s5 + $0x308] sm:$0xff] %vm36, 0.0
    %243 = vst [vmem:[%s5 + $0x310] sm:$0xff] 0.0
    %244 = vst.msk [vmem:[%s5 + $0x318] sm:$0xff] %vm36, 0.0
    %245 = vst [vmem:[%s5 + $0x320] sm:$0x3] 0.0
    %246 = vst.msk [vmem:[%s5 + $0x328] sm:$0x3] %vm41, 0.0
    %247 = vst [vmem:[%s5 + $0x330] sm:$0xff] 0.0
    %248 = vst.msk [vmem:[%s5 + $0x338] sm:$0xff] %vm36, 0.0
    %249 = vst [vmem:[%s5 + $0x340] sm:$0xff] 0.0
    %250 = vst.msk [vmem:[%s5 + $0x348] sm:$0xff] %vm36, 0.0
    %251 = vst [vmem:[%s5 + $0x350] sm:$0x3] 0.0
    %252 = vst.msk [vmem:[%s5 + $0x358] sm:$0x3] %vm41, 0.0
    loop: start=0, step=1, limit=16
    $region26: #{unet_forward.3} parent=1 // loop_pre_header
      _
    $region27: #{unet_forward.3} parent=1 // loop_header
      %s254 = sphi 0, %s258
      %p255 = scmp.ge.s32.totalorder %s254, 16
    $region28: #{unet_forward.3} parent=1 // loop_header_branch
      %257 = sbr.rel (%p255) target = $region32
    $region29: #{unet_forward.3} parent=1 // loop_body
      %s259 = smul.u32 %s254, 24
      %s260 = scalar_lea.vmem %s0, %s259
      %v261 = vld [vmem:[%s260] sm:$0xff]
      %v262 = vld [vmem:[%s260 + $0x8] sm:$0xff]
      %v263 = vpack.c.bf16 %v262, %v261
      %v264 = vld [vmem:[#allocation3] sm:$0xff]
      %v265 = vld [vmem:[#allocation3 + $0x8] sm:$0xff]
      %v266 = vld [vmem:[#allocation3 + $0x10] sm:$0x11]
      %v267 = vld [vmem:[%s260 + $0x1] sm:$0xff]
      %v268 = vld [vmem:[%s260 + $0x9] sm:$0xff]
      %v269 = vpack.c.bf16 %v268, %v267
      %s270 = scalar_lea.vmem [#allocation3], 24
      %v271 = vld [vmem:[%s270] sm:$0xff]
      %v272 = vld [vmem:[%s270 + $0x8] sm:$0xff]
      %v273 = vld [vmem:[%s270 + $0x10] sm:$0x11]
      %v277 = vunpack.c.l.b16 %v271
      %v278 = vunpack.c.h.b16 %v271
      %v279 = vunpack.c.l.b16 %v272
      %v280 = vunpack.c.h.b16 %v272
      %v281 = vunpack.c.l.b16 %v273
      %v282 = vunpack.c.h.b16 %v273
      %v283 = vpack.c.b16 %v279, %v277
      %v284 = vpack.c.b16 %v280, %v278
      %v285 = vpack.c.b16 %v281, %v281
      %v286 = vpack.c.b16 %v282, %v282
      %vm289 = vcmask 146432
      %v291 = vsel %vm289, %v269, 0
      %vm293 = vcmask 1040384
      %v295 = vsel %vm293, %v285, 0
      %v298 = vsel %vm293, %v286, 0
      %300 = vmatprep.subr.bf16.mxu0 %v284
      %301 = vmatpush1.bf16.msra.mxu0 %v283
      %302 = vmatprep.subr.bf16.mxu0 %v298
      %303 = vmatpush1.bf16.msra.mxu0 %v295
      %304 = vmatprep.subr.bf16.mxu0 0
      %305 = vmatpush1.bf16.msra.mxu0 0
      %306 = vmatprep.subr.bf16.mxu0 0
      %307 = vmatpush1.bf16.msra.mxu0 0
      %308 = vmatprep.subr.bf16.mxu0 0
      %309 = vmatpush1.bf16.msra.mxu0 0
      %310 = vmatprep.subr.bf16.mxu0 0
      %311 = vmatpush1.bf16.msra.mxu0 0
      %312 = vmatprep.subr.bf16.mxu0 0
      %313 = vmatpush1.bf16.msra.mxu0 0
      %314 = vmatprep.subr.bf16.mxu0 0
      %315 = vmatpush1.bf16.msra.mxu0 0
      %316 = vmatprep.subr.bf16.mxu0 0
      %317 = vmatpush1.bf16.msra.mxu0 0
      %318 = vmatprep.subr.bf16.mxu0 0
      %319 = vmatpush1.bf16.msra.mxu0 0
      %320 = vmatprep.subr.bf16.mxu0 0
      %321 = vmatpush1.bf16.msra.mxu0 0
      %322 = vmatprep.subr.bf16.mxu0 0
      %323 = vmatpush1.bf16.msra.mxu0 0
      %324 = vmatprep.subr.bf16.mxu0 0
      %325 = vmatpush1.bf16.msra.mxu0 0
      %326 = vmatprep.subr.bf16.mxu0 0
      %327 = vmatpush1.bf16.msra.mxu0 0
      %328 = vmatprep.subr.bf16.mxu0 0
      %329 = vmatpush1.bf16.msra.mxu0 0
      %330 = vmatprep.subr.bf16.mxu0 0
      %331 = vmatpush1.bf16.msra.mxu0 0
      %332 = vmatprep.mubr.bf16.mxu0 0
      %333 = vmatmul.mubr.bf16.gmra.mrb[0].mxu0 %v291
      %v334 = vpop.f32.mrb[0].mxu0
      %v335 = vadd.f32 0.0, %v334
      %v336 = vpop.f32.mrb[0].mxu0
      %v337 = vadd.f32 0.0, %v336
      %v338 = vpop.f32.mrb[0].mxu0
      %v339 = vadd.f32 0.0, %v338
      %v340 = vpop.f32.mrb[0].mxu0
      %v341 = vadd.f32 0.0, %v340
      %342 = vdwg.mxu0
      %v346 = vunpack.c.l.b16 %v264
      %v347 = vunpack.c.h.b16 %v264
      %v348 = vunpack.c.l.b16 %v265
      %v349 = vunpack.c.h.b16 %v265
      %v350 = vunpack.c.l.b16 %v266
      %v351 = vunpack.c.h.b16 %v266
      %v352 = vpack.c.b16 %v348, %v346
      %v353 = vpack.c.b16 %v349, %v347
      %v354 = vpack.c.b16 %v350, %v350
      %v355 = vpack.c.b16 %v351, %v351
      %v359 = vsel %vm289, %v263, 0
      %v362 = vsel %vm293, %v354, 0
      %v365 = vsel %vm293, %v355, 0
      %367 = vmatprep.subr.bf16.mxu0 %v353
      %368 = vmatpush1.bf16.msra.mxu0 %v352
      %369 = vmatprep.subr.bf16.mxu0 %v365
      %370 = vmatpush1.bf16.msra.mxu0 %v362
      %371 = vmatprep.subr.bf16.mxu0 0
      %372 = vmatpush1.bf16.msra.mxu0 0
      %373 = vmatprep.subr.bf16.mxu0 0
      %374 = vmatpush1.bf16.msra.mxu0 0
      %375 = vmatprep.subr.bf16.mxu0 0
      %376 = vmatpush1.bf16.msra.mxu0 0
      %377 = vmatprep.subr.bf16.mxu0 0
      %378 = vmatpush1.bf16.msra.mxu0 0
      %379 = vmatprep.subr.bf16.mxu0 0
      %380 = vmatpush1.bf16.msra.mxu0 0
      %381 = vmatprep.subr.bf16.mxu0 0
      %382 = vmatpush1.bf16.msra.mxu0 0
      %383 = vmatprep.subr.bf16.mxu0 0
      %384 = vmatpush1.bf16.msra.mxu0 0
      %385 = vmatprep.subr.bf16.mxu0 0
      %386 = vmatpush1.bf16.msra.mxu0 0
      %387 = vmatprep.subr.bf16.mxu0 0
      %388 = vmatpush1.bf16.msra.mxu0 0
      %389 = vmatprep.subr.bf16.mxu0 0
      %390 = vmatpush1.bf16.msra.mxu0 0
      %391 = vmatprep.subr.bf16.mxu0 0
      %392 = vmatpush1.bf16.msra.mxu0 0
      %393 = vmatprep.subr.bf16.mxu0 0
      %394 = vmatpush1.bf16.msra.mxu0 0
      %395 = vmatprep.subr.bf16.mxu0 0
      %396 = vmatpush1.bf16.msra.mxu0 0
      %397 = vmatprep.subr.bf16.mxu0 0
      %398 = vmatpush1.bf16.msra.mxu0 0
      %399 = vmatprep.mubr.bf16.mxu0 0
      %400 = vmatmul.mubr.bf16.gmra.mrb[0].mxu0 %v359
      %v401 = vpop.f32.mrb[0].mxu0
      %v402 = vadd.f32 %v335, %v401
      %v403 = vpop.f32.mrb[0].mxu0
      %v404 = vadd.f32 %v337, %v403
      %v405 = vpop.f32.mrb[0].mxu0
      %v406 = vadd.f32 %v339, %v405
      %v407 = vpop.f32.mrb[0].mxu0
      %v408 = vadd.f32 %v341, %v407
      %409 = vdwg.mxu0
      %v410 = vld [vmem:[%s260 + $0x2] sm:$0xff]
      %v411 = vld [vmem:[%s260 + $0xa] sm:$0xff]
      %v412 = vpack.c.bf16 %v411, %v410
      %s413 = scalar_lea.vmem [#allocation3], 48
      %v414 = vld [vmem:[%s413] sm:$0xff]
      %v415 = vld [vmem:[%s413 + $0x8] sm:$0xff]
      %v416 = vld [vmem:[%s413 + $0x10] sm:$0x11]
      %v420 = vunpack.c.l.b16 %v414
      %v421 = vunpack.c.h.b16 %v414
      %v422 = vunpack.c.l.b16 %v415
      %v423 = vunpack.c.h.b16 %v415
      %v424 = vunpack.c.l.b16 %v416
      %v425 = vunpack.c.h.b16 %v416
      %v426 = vpack.c.b16 %v422, %v420
      %v427 = vpack.c.b16 %v423, %v421
      %v428 = vpack.c.b16 %v424, %v424
      %v429 = vpack.c.b16 %v425, %v425
      %v433 = vsel %vm289, %v412, 0
      %v436 = vsel %vm293, %v428, 0
      %v439 = vsel %vm293, %v429, 0
      %441 = vmatprep.subr.bf16.mxu0 %v427
      %442 = vmatpush1.bf16.msra.mxu0 %v426
      %443 = vmatprep.subr.bf16.mxu0 %v439
      %444 = vmatpush1.bf16.msra.mxu0 %v436
      %445 = vmatprep.subr.bf16.mxu0 0
      %446 = vmatpush1.bf16.msra.mxu0 0
      %447 = vmatprep.subr.bf16.mxu0 0
      %448 = vmatpush1.bf16.msra.mxu0 0
      %449 = vmatprep.subr.bf16.mxu0 0
      %450 = vmatpush1.bf16.msra.mxu0 0
      %451 = vmatprep.subr.bf16.mxu0 0
      %452 = vmatpush1.bf16.msra.mxu0 0
      %453 = vmatprep.subr.bf16.mxu0 0
      %454 = vmatpush1.bf16.msra.mxu0 0
      %455 = vmatprep.subr.bf16.mxu0 0
      %456 = vmatpush1.bf16.msra.mxu0 0
      %457 = vmatprep.subr.bf16.mxu0 0
      %458 = vmatpush1.bf16.msra.mxu0 0
      %459 = vmatprep.subr.bf16.mxu0 0
      %460 = vmatpush1.bf16.msra.mxu0 0
      %461 = vmatprep.subr.bf16.mxu0 0
      %462 = vmatpush1.bf16.msra.mxu0 0
      %463 = vmatprep.subr.bf16.mxu0 0
      %464 = vmatpush1.bf16.msra.mxu0 0
      %465 = vmatprep.subr.bf16.mxu0 0
      %466 = vmatpush1.bf16.msra.mxu0 0
      %467 = vmatprep.subr.bf16.mxu0 0
      %468 = vmatpush1.bf16.msra.mxu0 0
      %469 = vmatprep.subr.bf16.mxu0 0
      %470 = vmatpush1.bf16.msra.mxu0 0
      %471 = vmatprep.subr.bf16.mxu0 0
      %472 = vmatpush1.bf16.msra.mxu0 0
      %473 = vmatprep.mubr.bf16.mxu0 0
      %474 = vmatmul.mubr.bf16.gmra.mrb[0].mxu0 %v433
      %v475 = vpop.f32.mrb[0].mxu0
      %v476 = vadd.f32 0.0, %v475
      %v477 = vpop.f32.mrb[0].mxu0
      %v478 = vadd.f32 0.0, %v477
      %v479 = vpop.f32.mrb[0].mxu0
      %v480 = vadd.f32 0.0, %v479
      %v481 = vpop.f32.mrb[0].mxu0
      %v482 = vadd.f32 0.0, %v481
      %483 = vdwg.mxu0
      %v484 = vadd.f32 %v402, %v476
      %v485 = vadd.f32 %v404, %v478
      %v486 = vadd.f32 %v406, %v480
      %v487 = vadd.f32 %v408, %v482
      %s488 = sadd.s32 %s254, 1
      %s489 = smul.u32 %s488, 24
      %s490 = scalar_lea.vmem %s0, %s489
      %v491 = vld [vmem:[%s490] sm:$0xff]
      %v492 = vld [vmem:[%s490 + $0x8] sm:$0xff]
      %v493 = vpack.c.bf16 %v492, %v491
      %s494 = scalar_lea.vmem [#allocation3], 72
      %v495 = vld [vmem:[%s494] sm:$0xff]
      %v496 = vld [vmem:[%s494 + $0x8] sm:$0xff]
      %v497 = vld [vmem:[%s494 + $0x10] sm:$0x11]
      %v501 = vunpack.c.l.b16 %v495
      %v502 = vunpack.c.h.b16 %v495
      %v503 = vunpack.c.l.b16 %v496
      %v504 = vunpack.c.h.b16 %v496
      %v505 = vunpack.c.l.b16 %v497
      %v506 = vunpack.c.h.b16 %v497
      %v507 = vpack.c.b16 %v503, %v501
      %v508 = vpack.c.b16 %v504, %v502
      %v509 = vpack.c.b16 %v505, %v505
      %v510 = vpack.c.b16 %v506, %v506
      %v514 = vsel %vm289, %v493, 0
      %v517 = vsel %vm293, %v509, 0
      %v520 = vsel %vm293, %v510, 0
      %522 = vmatprep.subr.bf16.mxu0 %v508
      %523 = vmatpush1.bf16.msra.mxu0 %v507
      %524 = vmatprep.subr.bf16.mxu0 %v520
      %525 = vmatpush1.bf16.msra.mxu0 %v517
      %526 = vmatprep.subr.bf16.mxu0 0
      %527 = vmatpush1.bf16.msra.mxu0 0
      %528 = vmatprep.subr.bf16.mxu0 0
      %529 = vmatpush1.bf16.msra.mxu0 0
      %530 = vmatprep.subr.bf16.mxu0 0
      %531 = vmatpush1.bf16.msra.mxu0 0
      %532 = vmatprep.subr.bf16.mxu0 0
      %533 = vmatpush1.bf16.msra.mxu0 0
      %534 = vmatprep.subr.bf16.mxu0 0
      %535 = vmatpush1.bf16.msra.mxu0 0
      %536 = vmatprep.subr.bf16.mxu0 0
      %537 = vmatpush1.bf16.msra.mxu0 0
      %538 = vmatprep.subr.bf16.mxu0 0
      %539 = vmatpush1.bf16.msra.mxu0 0
      %540 = vmatprep.subr.bf16.mxu0 0
      %541 = vmatpush1.bf16.msra.mxu0 0
      %542 = vmatprep.subr.bf16.mxu0 0
      %543 = vmatpush1.bf16.msra.mxu0 0
      %544 = vmatprep.subr.bf16.mxu0 0
      %545 = vmatpush1.bf16.msra.mxu0 0
      %546 = vmatprep.subr.bf16.mxu0 0
      %547 = vmatpush1.bf16.msra.mxu0 0
      %548 = vmatprep.subr.bf16.mxu0 0
      %549 = vmatpush1.bf16.msra.mxu0 0
      %550 = vmatprep.subr.bf16.mxu0 0
      %551 = vmatpush1.bf16.msra.mxu0 0
      %552 = vmatprep.subr.bf16.mxu0 0
      %553 = vmatpush1.bf16.msra.mxu0 0
      %554 = vmatprep.mubr.bf16.mxu0 0
      %555 = vmatmul.mubr.bf16.gmra.mrb[0].mxu0 %v514
      %v556 = vpop.f32.mrb[0].mxu0
      %v557 = vadd.f32 0.0, %v556
      %v558 = vpop.f32.mrb[0].mxu0
      %v559 = vadd.f32 0.0, %v558
      %v560 = vpop.f32.mrb[0].mxu0
      %v561 = vadd.f32 0.0, %v560
      %v562 = vpop.f32.mrb[0].mxu0
      %v563 = vadd.f32 0.0, %v562
      %564 = vdwg.mxu0
      %v565 = vadd.f32 %v484, %v557
      %v566 = vadd.f32 %v485, %v559
      %v567 = vadd.f32 %v486, %v561
      %v568 = vadd.f32 %v487, %v563
      %v569 = vld [vmem:[%s490 + $0x1] sm:$0xff]
      %v570 = vld [vmem:[%s490 + $0x9] sm:$0xff]
      %v571 = vpack.c.bf16 %v570, %v569
      %s572 = scalar_lea.vmem [#allocation3], 96
      %v573 = vld [vmem:[%s572] sm:$0xff]
      %v574 = vld [vmem:[%s572 + $0x8] sm:$0xff]
      %v575 = vld [vmem:[%s572 + $0x10] sm:$0x11]
      %v579 = vunpack.c.l.b16 %v573
      %v580 = vunpack.c.h.b16 %v573
      %v581 = vunpack.c.l.b16 %v574
      %v582 = vunpack.c.h.b16 %v574
      %v583 = vunpack.c.l.b16 %v575
      %v584 = vunpack.c.h.b16 %v575
      %v585 = vpack.c.b16 %v581, %v579
      %v586 = vpack.c.b16 %v582, %v580
      %v587 = vpack.c.b16 %v583, %v583
      %v588 = vpack.c.b16 %v584, %v584
      %v592 = vsel %vm289, %v571, 0
      %v595 = vsel %vm293, %v587, 0
      %v598 = vsel %vm293, %v588, 0
      %600 = vmatprep.subr.bf16.mxu0 %v586
      %601 = vmatpush1.bf16.msra.mxu0 %v585
      %602 = vmatprep.subr.bf16.mxu0 %v598
      %603 = vmatpush1.bf16.msra.mxu0 %v595
      %604 = vmatprep.subr.bf16.mxu0 0
      %605 = vmatpush1.bf16.msra.mxu0 0
      %606 = vmatprep.subr.bf16.mxu0 0
      %607 = vmatpush1.bf16.msra.mxu0 0
      %608 = vmatprep.subr.bf16.mxu0 0
      %609 = vmatpush1.bf16.msra.mxu0 0
      %610 = vmatprep.subr.bf16.mxu0 0
      %611 = vmatpush1.bf16.msra.mxu0 0
      %612 = vmatprep.subr.bf16.mxu0 0
      %613 = vmatpush1.bf16.msra.mxu0 0
      %614 = vmatprep.subr.bf16.mxu0 0
      %615 = vmatpush1.bf16.msra.mxu0 0
      %616 = vmatprep.subr.bf16.mxu0 0
      %617 = vmatpush1.bf16.msra.mxu0 0
      %618 = vmatprep.subr.bf16.mxu0 0
      %619 = vmatpush1.bf16.msra.mxu0 0
      %620 = vmatprep.subr.bf16.mxu0 0
      %621 = vmatpush1.bf16.msra.mxu0 0
      %622 = vmatprep.subr.bf16.mxu0 0
      %623 = vmatpush1.bf16.msra.mxu0 0
      %624 = vmatprep.subr.bf16.mxu0 0
      %625 = vmatpush1.bf16.msra.mxu0 0
      %626 = vmatprep.subr.bf16.mxu0 0
      %627 = vmatpush1.bf16.msra.mxu0 0
      %628 = vmatprep.subr.bf16.mxu0 0
      %629 = vmatpush1.bf16.msra.mxu0 0
      %630 = vmatprep.subr.bf16.mxu0 0
      %631 = vmatpush1.bf16.msra.mxu0 0
      %632 = vmatprep.mubr.bf16.mxu0 0
      %633 = vmatmul.mubr.bf16.gmra.mrb[0].mxu0 %v592
      %v634 = vpop.f32.mrb[0].mxu0
      %v635 = vadd.f32 0.0, %v634
      %v636 = vpop.f32.mrb[0].mxu0
      %v637 = vadd.f32 0.0, %v636
      %v638 = vpop.f32.mrb[0].mxu0
      %v639 = vadd.f32 0.0, %v638
      %v640 = vpop.f32.mrb[0].mxu0
      %v641 = vadd.f32 0.0, %v640
      %642 = vdwg.mxu0
      %v643 = vadd.f32 %v565, %v635
      %v644 = vadd.f32 %v566, %v637
      %v645 = vadd.f32 %v567, %v639
      %v646 = vadd.f32 %v568, %v641
      %v647 = vld [vmem:[%s490 + $0x2] sm:$0xff]
      %v648 = vld [vmem:[%s490 + $0xa] sm:$0xff]
      %v649 = vpack.c.bf16 %v648, %v647
      %s650 = scalar_lea.vmem [#allocation3], 120
      %v651 = vld [vmem:[%s650] sm:$0xff]
      %v652 = vld [vmem:[%s650 + $0x8] sm:$0xff]
      %v653 = vld [vmem:[%s650 + $0x10] sm:$0x11]
      %v657 = vunpack.c.l.b16 %v651
      %v658 = vunpack.c.h.b16 %v651
      %v659 = vunpack.c.l.b16 %v652
      %v660 = vunpack.c.h.b16 %v652
      %v661 = vunpack.c.l.b16 %v653
      %v662 = vunpack.c.h.b16 %v653
      %v663 = vpack.c.b16 %v659, %v657
      %v664 = vpack.c.b16 %v660, %v658
      %v665 = vpack.c.b16 %v661, %v661
      %v666 = vpack.c.b16 %v662, %v662
      %v670 = vsel %vm289, %v649, 0
      %v673 = vsel %vm293, %v665, 0
      %v676 = vsel %vm293, %v666, 0
      %678 = vmatprep.subr.bf16.mxu0 %v664
      %679 = vmatpush1.bf16.msra.mxu0 %v663
      %680 = vmatprep.subr.bf16.mxu0 %v676
      %681 = vmatpush1.bf16.msra.mxu0 %v673
      %682 = vmatprep.subr.bf16.mxu0 0
      %683 = vmatpush1.bf16.msra.mxu0 0
      %684 = vmatprep.subr.bf16.mxu0 0
      %685 = vmatpush1.bf16.msra.mxu0 0
      %686 = vmatprep.subr.bf16.mxu0 0
      %687 = vmatpush1.bf16.msra.mxu0 0
      %688 = vmatprep.subr.bf16.mxu0 0
      %689 = vmatpush1.bf16.msra.mxu0 0
      %690 = vmatprep.subr.bf16.mxu0 0
      %691 = vmatpush1.bf16.msra.mxu0 0
      %692 = vmatprep.subr.bf16.mxu0 0
      %693 = vmatpush1.bf16.msra.mxu0 0
      %694 = vmatprep.subr.bf16.mxu0 0
      %695 = vmatpush1.bf16.msra.mxu0 0
      %696 = vmatprep.subr.bf16.mxu0 0
      %697 = vmatpush1.bf16.msra.mxu0 0
      %698 = vmatprep.subr.bf16.mxu0 0
      %699 = vmatpush1.bf16.msra.mxu0 0
      %700 = vmatprep.subr.bf16.mxu0 0
      %701 = vmatpush1.bf16.msra.mxu0 0
      %702 = vmatprep.subr.bf16.mxu0 0
      %703 = vmatpush1.bf16.msra.mxu0 0
      %704 = vmatprep.subr.bf16.mxu0 0
      %705 = vmatpush1.bf16.msra.mxu0 0
      %706 = vmatprep.subr.bf16.mxu0 0
      %707 = vmatpush1.bf16.msra.mxu0 0
      %708 = vmatprep.subr.bf16.mxu0 0
      %709 = vmatpush1.bf16.msra.mxu0 0
      %710 = vmatprep.mubr.bf16.mxu0 0
      %711 = vmatmul.mubr.bf16.gmra.mrb[0].mxu0 %v670
      %v712 = vpop.f32.mrb[0].mxu0
      %v713 = vadd.f32 0.0, %v712
      %v714 = vpop.f32.mrb[0].mxu0
      %v715 = vadd.f32 0.0, %v714
      %v716 = vpop.f32.mrb[0].mxu0
      %v717 = vadd.f32 0.0, %v716
      %v718 = vpop.f32.mrb[0].mxu0
      %v719 = vadd.f32 0.0, %v718
      %720 = vdwg.mxu0
      %v721 = vadd.f32 %v643, %v713
      %v722 = vadd.f32 %v644, %v715
      %v723 = vadd.f32 %v645, %v717
      %v724 = vadd.f32 %v646, %v719
      %s725 = sadd.s32 %s254, 2
      %s726 = smul.u32 %s725, 24
      %s727 = scalar_lea.vmem %s0, %s726
      %v728 = vld [vmem:[%s727] sm:$0xff]
      %v729 = vld [vmem:[%s727 + $0x8] sm:$0xff]
      %v730 = vpack.c.bf16 %v729, %v728
      %s731 = scalar_lea.vmem [#allocation3], 144
      %v732 = vld [vmem:[%s731] sm:$0xff]
      %v733 = vld [vmem:[%s731 + $0x8] sm:$0xff]
      %v734 = vld [vmem:[%s731 + $0x10] sm:$0x11]
      %v738 = vunpack.c.l.b16 %v732
      %v739 = vunpack.c.h.b16 %v732
      %v740 = vunpack.c.l.b16 %v733
      %v741 = vunpack.c.h.b16 %v733
      %v742 = vunpack.c.l.b16 %v734
      %v743 = vunpack.c.h.b16 %v734
      %v744 = vpack.c.b16 %v740, %v738
      %v745 = vpack.c.b16 %v741, %v739
      %v746 = vpack.c.b16 %v742, %v742
      %v747 = vpack.c.b16 %v743, %v743
      %v751 = vsel %vm289, %v730, 0
      %v754 = vsel %vm293, %v746, 0
      %v757 = vsel %vm293, %v747, 0
      %759 = vmatprep.subr.bf16.mxu0 %v745
      %760 = vmatpush1.bf16.msra.mxu0 %v744
      %761 = vmatprep.subr.bf16.mxu0 %v757
      %762 = vmatpush1.bf16.msra.mxu0 %v754
      %763 = vmatprep.subr.bf16.mxu0 0
      %764 = vmatpush1.bf16.msra.mxu0 0
      %765 = vmatprep.subr.bf16.mxu0 0
      %766 = vmatpush1.bf16.msra.mxu0 0
      %767 = vmatprep.subr.bf16.mxu0 0
      %768 = vmatpush1.bf16.msra.mxu0 0
      %769 = vmatprep.subr.bf16.mxu0 0
      %770 = vmatpush1.bf16.msra.mxu0 0
      %771 = vmatprep.subr.bf16.mxu0 0
      %772 = vmatpush1.bf16.msra.mxu0 0
      %773 = vmatprep.subr.bf16.mxu0 0
      %774 = vmatpush1.bf16.msra.mxu0 0
      %775 = vmatprep.subr.bf16.mxu0 0
      %776 = vmatpush1.bf16.msra.mxu0 0
      %777 = vmatprep.subr.bf16.mxu0 0
      %778 = vmatpush1.bf16.msra.mxu0 0
      %779 = vmatprep.subr.bf16.mxu0 0
      %780 = vmatpush1.bf16.msra.mxu0 0
      %781 = vmatprep.subr.bf16.mxu0 0
      %782 = vmatpush1.bf16.msra.mxu0 0
      %783 = vmatprep.subr.bf16.mxu0 0
      %784 = vmatpush1.bf16.msra.mxu0 0
      %785 = vmatprep.subr.bf16.mxu0 0
      %786 = vmatpush1.bf16.msra.mxu0 0
      %787 = vmatprep.subr.bf16.mxu0 0
      %788 = vmatpush1.bf16.msra.mxu0 0
      %789 = vmatprep.subr.bf16.mxu0 0
      %790 = vmatpush1.bf16.msra.mxu0 0
      %791 = vmatprep.mubr.bf16.mxu0 0
      %792 = vmatmul.mubr.bf16.gmra.mrb[0].mxu0 %v751
      %v793 = vpop.f32.mrb[0].mxu0
      %v794 = vadd.f32 0.0, %v793
      %v795 = vpop.f32.mrb[0].mxu0
      %v796 = vadd.f32 0.0, %v795
      %v797 = vpop.f32.mrb[0].mxu0
      %v798 = vadd.f32 0.0, %v797
      %v799 = vpop.f32.mrb[0].mxu0
      %v800 = vadd.f32 0.0, %v799
      %801 = vdwg.mxu0
      %v802 = vadd.f32 %v721, %v794
      %v803 = vadd.f32 %v722, %v796
      %v804 = vadd.f32 %v723, %v798
      %v805 = vadd.f32 %v724, %v800
      %v806 = vld [vmem:[%s727 + $0x1] sm:$0xff]
      %v807 = vld [vmem:[%s727 + $0x9] sm:$0xff]
      %v808 = vpack.c.bf16 %v807, %v806
      %s809 = scalar_lea.vmem [#allocation3], 168
      %v810 = vld [vmem:[%s809] sm:$0xff]
      %v811 = vld [vmem:[%s809 + $0x8] sm:$0xff]
      %v812 = vld [vmem:[%s809 + $0x10] sm:$0x11]
      %v816 = vunpack.c.l.b16 %v810
      %v817 = vunpack.c.h.b16 %v810
      %v818 = vunpack.c.l.b16 %v811
      %v819 = vunpack.c.h.b16 %v811
      %v820 = vunpack.c.l.b16 %v812
      %v821 = vunpack.c.h.b16 %v812
      %v822 = vpack.c.b16 %v818, %v816
      %v823 = vpack.c.b16 %v819, %v817
      %v824 = vpack.c.b16 %v820, %v820
      %v825 = vpack.c.b16 %v821, %v821
      %v829 = vsel %vm289, %v808, 0
      %v832 = vsel %vm293, %v824, 0
      %v835 = vsel %vm293, %v825, 0
      %837 = vmatprep.subr.bf16.mxu0 %v823
      %838 = vmatpush1.bf16.msra.mxu0 %v822
      %839 = vmatprep.subr.bf16.mxu0 %v835
      %840 = vmatpush1.bf16.msra.mxu0 %v832
      %841 = vmatprep.subr.bf16.mxu0 0
      %842 = vmatpush1.bf16.msra.mxu0 0
      %843 = vmatprep.subr.bf16.mxu0 0
      %844 = vmatpush1.bf16.msra.mxu0 0
      %845 = vmatprep.subr.bf16.mxu0 0
      %846 = vmatpush1.bf16.msra.mxu0 0
      %847 = vmatprep.subr.bf16.mxu0 0
      %848 = vmatpush1.bf16.msra.mxu0 0
      %849 = vmatprep.subr.bf16.mxu0 0
      %850 = vmatpush1.bf16.msra.mxu0 0
      %851 = vmatprep.subr.bf16.mxu0 0
      %852 = vmatpush1.bf16.msra.mxu0 0
      %853 = vmatprep.subr.bf16.mxu0 0
      %854 = vmatpush1.bf16.msra.mxu0 0
      %855 = vmatprep.subr.bf16.mxu0 0
      %856 = vmatpush1.bf16.msra.mxu0 0
      %857 = vmatprep.subr.bf16.mxu0 0
      %858 = vmatpush1.bf16.msra.mxu0 0
      %859 = vmatprep.subr.bf16.mxu0 0
      %860 = vmatpush1.bf16.msra.mxu0 0
      %861 = vmatprep.subr.bf16.mxu0 0
      %862 = vmatpush1.bf16.msra.mxu0 0
      %863 = vmatprep.subr.bf16.mxu0 0
      %864 = vmatpush1.bf16.msra.mxu0 0
      %865 = vmatprep.subr.bf16.mxu0 0
      %866 = vmatpush1.bf16.msra.mxu0 0
      %867 = vmatprep.subr.bf16.mxu0 0
      %868 = vmatpush1.bf16.msra.mxu0 0
      %869 = vmatprep.mubr.bf16.mxu0 0
      %870 = vmatmul.mubr.bf16.gmra.mrb[0].mxu0 %v829
      %v871 = vpop.f32.mrb[0].mxu0
      %v872 = vadd.f32 0.0, %v871
      %v873 = vpop.f32.mrb[0].mxu0
      %v874 = vadd.f32 0.0, %v873
      %v875 = vpop.f32.mrb[0].mxu0
      %v876 = vadd.f32 0.0, %v875
      %v877 = vpop.f32.mrb[0].mxu0
      %v878 = vadd.f32 0.0, %v877
      %879 = vdwg.mxu0
      %v880 = vadd.f32 %v802, %v872
      %v881 = vadd.f32 %v803, %v874
      %v882 = vadd.f32 %v804, %v876
      %v883 = vadd.f32 %v805, %v878
      %v884 = vld [vmem:[%s727 + $0x2] sm:$0xff]
      %v885 = vld [vmem:[%s727 + $0xa] sm:$0xff]
      %v886 = vpack.c.bf16 %v885, %v884
      %s887 = scalar_lea.vmem [#allocation3], 192
      %v888 = vld [vmem:[%s887] sm:$0xff]
      %v889 = vld [vmem:[%s887 + $0x8] sm:$0xff]
      %v890 = vld [vmem:[%s887 + $0x10] sm:$0x11]
      %v894 = vunpack.c.l.b16 %v888
      %v895 = vunpack.c.h.b16 %v888
      %v896 = vunpack.c.l.b16 %v889
      %v897 = vunpack.c.h.b16 %v889
      %v898 = vunpack.c.l.b16 %v890
      %v899 = vunpack.c.h.b16 %v890
      %v900 = vpack.c.b16 %v896, %v894
      %v901 = vpack.c.b16 %v897, %v895
      %v902 = vpack.c.b16 %v898, %v898
      %v903 = vpack.c.b16 %v899, %v899
      %v907 = vsel %vm289, %v886, 0
      %v910 = vsel %vm293, %v902, 0
      %v913 = vsel %vm293, %v903, 0
      %915 = vmatprep.subr.bf16.mxu0 %v901
      %916 = vmatpush1.bf16.msra.mxu0 %v900
      %917 = vmatprep.subr.bf16.mxu0 %v913
      %918 = vmatpush1.bf16.msra.mxu0 %v910
      %919 = vmatprep.subr.bf16.mxu0 0
      %920 = vmatpush1.bf16.msra.mxu0 0
      %921 = vmatprep.subr.bf16.mxu0 0
      %922 = vmatpush1.bf16.msra.mxu0 0
      %923 = vmatprep.subr.bf16.mxu0 0
      %924 = vmatpush1.bf16.msra.mxu0 0
      %925 = vmatprep.subr.bf16.mxu0 0
      %926 = vmatpush1.bf16.msra.mxu0 0
      %927 = vmatprep.subr.bf16.mxu0 0
      %928 = vmatpush1.bf16.msra.mxu0 0
      %929 = vmatprep.subr.bf16.mxu0 0
      %930 = vmatpush1.bf16.msra.mxu0 0
      %931 = vmatprep.subr.bf16.mxu0 0
      %932 = vmatpush1.bf16.msra.mxu0 0
      %933 = vmatprep.subr.bf16.mxu0 0
      %934 = vmatpush1.bf16.msra.mxu0 0
      %935 = vmatprep.subr.bf16.mxu0 0
      %936 = vmatpush1.bf16.msra.mxu0 0
      %937 = vmatprep.subr.bf16.mxu0 0
      %938 = vmatpush1.bf16.msra.mxu0 0
      %939 = vmatprep.subr.bf16.mxu0 0
      %940 = vmatpush1.bf16.msra.mxu0 0
      %941 = vmatprep.subr.bf16.mxu0 0
      %942 = vmatpush1.bf16.msra.mxu0 0
      %943 = vmatprep.subr.bf16.mxu0 0
      %944 = vmatpush1.bf16.msra.mxu0 0
      %945 = vmatprep.subr.bf16.mxu0 0
      %946 = vmatpush1.bf16.msra.mxu0 0
      %947 = vmatprep.mubr.bf16.mxu0 0
      %948 = vmatmul.mubr.bf16.gmra.mrb[0].mxu0 %v907
      %v949 = vpop.f32.mrb[0].mxu0
      %v950 = vadd.f32 0.0, %v949
      %v951 = vpop.f32.mrb[0].mxu0
      %v952 = vadd.f32 0.0, %v951
      %v953 = vpop.f32.mrb[0].mxu0
      %v954 = vadd.f32 0.0, %v953
      %v955 = vpop.f32.mrb[0].mxu0
      %v956 = vadd.f32 0.0, %v955
      %957 = vdwg.mxu0
      %v958 = vadd.f32 %v880, %v950
      %v959 = vadd.f32 %v881, %v952
      %v960 = vadd.f32 %v882, %v954
      %v961 = vadd.f32 %v883, %v956
      %v962 = vld [vmem:[%s2] sm:$0x3]
      %v964 = vlaneseq
      %v965 = vshrl.u32 %v964, 7
      %v966 = vsub.s32 0, %v965
      %v967 = vrot.slane %v962, %v966
      %v968 = vlaneseq
      %v969 = vshrl.u32 %v968, 7
      %v970 = vsub.s32 1, %v969
      %v971 = vrot.slane %v962, %v970
      %v974 = vadd.f32 %v958, %v967
      %v975 = vadd.f32 %v959, %v971
      %v976 = vadd.f32 %v960, %v967
      %v977 = vadd.f32 %v961, %v971
      %v978 = vmax.f32 %v974, 0.0
      %v979 = vmax.f32 %v975, 0.0
      %v980 = vmax.f32 %v976, 0.0
      %v981 = vmax.f32 %v977, 0.0
      %v986 = vrot.slane %v978, 7
      %v987 = vrot.slane %v979, 7
      %v988 = vrot.slane %v980, 7
      %v989 = vsel %vm293, %v986, %v988
      %v990 = vrot.slane %v981, 7
      %v991 = vsel %vm293, %v987, %v990
      %s998 = smul.u32 %s488, 6
      %s999 = smul.addr %s998, 8
      %s1000 = scalar_lea.vmem [#allocation2], %s999
      %1001 = vst [vmem:[%s1000] sm:$0xfe] %v986
      %vm1002 = vcmask 130049
      %1003 = vst.msk [vmem:[%s1000 + $0x8] sm:$0xfe] %vm1002, %v987
      %1004 = vst [vmem:[%s1000 + $0x10] sm:$0xff] %v989
      %1005 = vst.msk [vmem:[%s1000 + $0x18] sm:$0xff] %vm36, %v991
      %1006 = vst [vmem:[%s1000 + $0x20] sm:$0x1] %v988
      %vm1007 = vcmask 122880
      %1008 = vst.msk [vmem:[%s1000 + $0x28] sm:$0x1] %vm1007, %v990
    $region30: #{unet_forward.3} parent=1 // loop_footer
      %s258 = sadd.s32 1, %s254
    $region31: #{unet_forward.3} parent=1 // loop_footer_branch
      %253 = sbr.rel target = $region27
    $region32: #{unet_forward.3} parent=1 // loop_exit
      _
    loop: start=0, step=1, limit=16
    $region33: #{unet_forward.3} parent=1 // loop_pre_header
      _
    $region34: #{unet_forward.3} parent=1 // loop_header
      %s1010 = sphi 0, %s1014
      %p1011 = scmp.ge.s32.totalorder %s1010, 16
    $region35: #{unet_forward.3} parent=1 // loop_header_branch
      %1013 = sbr.rel (%p1011) target = $region39
    $region36: #{unet_forward.3} parent=1 // loop_body
      %s1015 = smul.u32 %s1010, 6
      %s1016 = smul.addr %s1015, 8
      %s1017 = scalar_lea.vmem [#allocation2], %s1016
      %v1018 = vld [vmem:[%s1017] sm:$0xff]
      %v1019 = vld [vmem:[%s1017 + $0x8] sm:$0xff]
      %v1020 = vld [vmem:[%s1017 + $0x10] sm:$0xff]
      %v1021 = vld [vmem:[%s1017 + $0x18] sm:$0xff]
      %v1022 = vpack.c.bf16 %v1020, %v1018
      %v1023 = vpack.c.bf16 %v1021, %v1019
      %v1024 = vld [vmem:[%s3] sm:$0xff]
      %v1025 = vld [vmem:[%s3 + $0x8] sm:$0xff]
      %v1026 = vld [vmem:[%s3 + $0x10] sm:$0xff]
      %v1027 = vld [vmem:[%s3 + $0x18] sm:$0xff]
      %v1028 = vld [vmem:[%s3 + $0x20] sm:$0xff]
      %v1029 = vld [vmem:[%s3 + $0x28] sm:$0xff]
      %v1030 = vld [vmem:[%s3 + $0x30] sm:$0xff]
      %v1031 = vld [vmem:[%s3 + $0x38] sm:$0xff]
      %v1032 = vld [vmem:[%s3 + $0x40] sm:$0xff]
      %v1033 = vld [vmem:[%s3 + $0x48] sm:$0xff]
      %v1034 = vld [vmem:[%s3 + $0x50] sm:$0xff]
      %v1035 = vld [vmem:[%s3 + $0x58] sm:$0xff]
      %v1036 = vld [vmem:[%s3 + $0x60] sm:$0xff]
      %v1037 = vld [vmem:[%s3 + $0x68] sm:$0xff]
      %v1038 = vld [vmem:[%s3 + $0x70] sm:$0xff]
      %v1039 = vld [vmem:[%s3 + $0x78] sm:$0xff]
      %v1040 = vld [vmem:[%s3 + $0x80] sm:$0xff]
      %v1041 = vld [vmem:[%s3 + $0x88] sm:$0xff]
      %v1042 = vld [vmem:[%s1017] sm:$0xfe]
      %v1043 = vld [vmem:[%s1017 + $0x8] sm:$0xfe]
      %v1044 = vld [vmem:[%s1017 + $0x20] sm:$0x1]
      %v1045 = vld [vmem:[%s1017 + $0x28] sm:$0x1]
      %v1046 = vpack.c.bf16 %v1020, %v1042
      %v1047 = vpack.c.bf16 %v1021, %v1043
      %v1048 = vpack.c.bf16 %v1044, %v1044
      %v1049 = vpack.c.bf16 %v1045, %v1045
      %s1050 = scalar_lea.vmem %s3, 144
      %v1051 = vld [vmem:[%s1050] sm:$0xff]
      %v1052 = vld [vmem:[%s1050 + $0x8] sm:$0xff]
      %v1053 = vld [vmem:[%s1050 + $0x10] sm:$0xff]
      %v1054 = vld [vmem:[%s1050 + $0x18] sm:$0xff]
      %v1055 = vld [vmem:[%s1050 + $0x20] sm:$0xff]
      %v1056 = vld [vmem:[%s1050 + $0x28] sm:$0xff]
      %v1057 = vld [vmem:[%s1050 + $0x30] sm:$0xff]
      %v1058 = vld [vmem:[%s1050 + $0x38] sm:$0xff]
      %v1059 = vld [vmem:[%s1050 + $0x40] sm:$0xff]
      %v1060 = vld [vmem:[%s1050 + $0x48] sm:$0xff]
      %v1061 = vld [vmem:[%s1050 + $0x50] sm:$0xff]
      %v1062 = vld [vmem:[%s1050 + $0x58] sm:$0xff]
      %v1063 = vld [vmem:[%s1050 + $0x60] sm:$0xff]
      %v1064 = vld [vmem:[%s1050 + $0x68] sm:$0xff]
      %v1065 = vld [vmem:[%s1050 + $0x70] sm:$0xff]
      %v1066 = vld [vmem:[%s1050 + $0x78] sm:$0xff]
      %v1067 = vld [vmem:[%s1050 + $0x80] sm:$0xff]
      %v1068 = vld [vmem:[%s1050 + $0x88] sm:$0xff]
      %vm1069 = vsmask.f32 7424
      %v1071 = vshrl.u32 %v1046, 16
      %v1073 = vshll.u32 %v1046, 16
      %v1075 = vrot.slane %v1073, 1
      %v1076 = vor.u32 %v1071, %v1075
      %v1078 = vshll.u32 %v1048, 16
      %v1080 = vrot.slane %v1078, 1
      %v1081 = vsel %vm1069, %v1076, %v1080
      %v1083 = vshrl.u32 %v1047, 16
      %v1085 = vshll.u32 %v1047, 16
      %v1087 = vrot.slane %v1085, 1
      %v1088 = vor.u32 %v1083, %v1087
      %v1090 = vshll.u32 %v1049, 16
      %v1092 = vrot.slane %v1090, 1
      %v1093 = vsel %vm1069, %v1088, %v1092
      %v1113 = vunpack.c.l.b16 %v1051
      %v1114 = vunpack.c.h.b16 %v1051
      %v1115 = vunpack.c.l.b16 %v1052
      %v1116 = vunpack.c.h.b16 %v1052
      %v1117 = vunpack.c.l.b16 %v1053
      %v1118 = vunpack.c.h.b16 %v1053
      %v1119 = vunpack.c.l.b16 %v1054
      %v1120 = vunpack.c.h.b16 %v1054
      %v1121 = vunpack.c.l.b16 %v1055
      %v1122 = vunpack.c.h.b16 %v1055
      %v1123 = vunpack.c.l.b16 %v1056
      %v1124 = vunpack.c.h.b16 %v1056
      %v1125 = vunpack.c.l.b16 %v1057
      %v1126 = vunpack.c.h.b16 %v1057
      %v1127 = vunpack.c.l.b16 %v1058
      %v1128 = vunpack.c.h.b16 %v1058
      %v1129 = vunpack.c.l.b16 %v1059
      %v1130 = vunpack.c.h.b16 %v1059
      %v1131 = vunpack.c.l.b16 %v1060
      %v1132 = vunpack.c.h.b16 %v1060
      %v1133 = vunpack.c.l.b16 %v1061
      %v1134 = vunpack.c.h.b16 %v1061
      %v1135 = vunpack.c.l.b16 %v1062
      %v1136 = vunpack.c.h.b16 %v1062
      %v1137 = vunpack.c.l.b16 %v1063
      %v1138 = vunpack.c.h.b16 %v1063
      %v1139 = vunpack.c.l.b16 %v1064
      %v1140 = vunpack.c.h.b16 %v1064
      %v1141 = vunpack.c.l.b16 %v1065
      %v1142 = vunpack.c.h.b16 %v1065
      %v1143 = vunpack.c.l.b16 %v1066
      %v1144 = vunpack.c.h.b16 %v1066
      %v1145 = vunpack.c.l.b16 %v1067
      %v1146 = vunpack.c.h.b16 %v1067
      %v1147 = vunpack.c.l.b16 %v1068
      %v1148 = vunpack.c.h.b16 %v1068
      %v1149 = vpack.c.b16 %v1115, %v1113
      %v1150 = vpack.c.b16 %v1116, %v1114
      %v1151 = vpack.c.b16 %v1119, %v1117
      %v1152 = vpack.c.b16 %v1120, %v1118
      %v1153 = vpack.c.b16 %v1123, %v1121
      %v1154 = vpack.c.b16 %v1124, %v1122
      %v1155 = vpack.c.b16 %v1127, %v1125
      %v1156 = vpack.c.b16 %v1128, %v1126
      %v1157 = vpack.c.b16 %v1131, %v1129
      %v1158 = vpack.c.b16 %v1132, %v1130
      %v1159 = vpack.c.b16 %v1135, %v1133
      %v1160 = vpack.c.b16 %v1136, %v1134
      %v1161 = vpack.c.b16 %v1139, %v1137
      %v1162 = vpack.c.b16 %v1140, %v1138
      %v1163 = vpack.c.b16 %v1143, %v1141
      %v1164 = vpack.c.b16 %v1144, %v1142
      %v1165 = vpack.c.b16 %v1147, %v1145
      %v1166 = vpack.c.b16 %v1148, %v1146
      %v1186 = vsel %vm36, %v1093, 0
      %1188 = vmatprep.subr.bf16.mxu0 %v1150
      %1189 = vmatpush1.bf16.msra.mxu0 %v1149
      %1190 = vmatprep.subr.bf16.mxu0 %v1152
      %1191 = vmatpush1.bf16.msra.mxu0 %v1151
      %1192 = vmatprep.subr.bf16.mxu0 %v1154
      %1193 = vmatpush1.bf16.msra.mxu0 %v1153
      %1194 = vmatprep.subr.bf16.mxu0 %v1156
      %1195 = vmatpush1.bf16.msra.mxu0 %v1155
      %1196 = vmatprep.subr.bf16.mxu0 %v1158
      %1197 = vmatpush1.bf16.msra.mxu0 %v1157
      %1198 = vmatprep.subr.bf16.mxu0 %v1160
      %1199 = vmatpush1.bf16.msra.mxu0 %v1159
      %1200 = vmatprep.subr.bf16.mxu0 %v1162
      %1201 = vmatpush1.bf16.msra.mxu0 %v1161
      %1202 = vmatprep.subr.bf16.mxu0 %v1164
      %1203 = vmatpush1.bf16.msra.mxu0 %v1163
      %1204 = vmatprep.subr.bf16.mxu0 %v1166
      %1205 = vmatpush1.bf16.msra.mxu0 %v1165
      %1206 = vmatprep.subr.bf16.mxu0 0
      %1207 = vmatpush1.bf16.msra.mxu0 0
      %1208 = vmatprep.subr.bf16.mxu0 0
      %1209 = vmatpush1.bf16.msra.mxu0 0
      %1210 = vmatprep.subr.bf16.mxu0 0
      %1211 = vmatpush1.bf16.msra.mxu0 0
      %1212 = vmatprep.subr.bf16.mxu0 0
      %1213 = vmatpush1.bf16.msra.mxu0 0
      %1214 = vmatprep.subr.bf16.mxu0 0
      %1215 = vmatpush1.bf16.msra.mxu0 0
      %1216 = vmatprep.subr.bf16.mxu0 0
      %1217 = vmatpush1.bf16.msra.mxu0 0
      %1218 = vmatprep.subr.bf16.mxu0 0
      %1219 = vmatpush1.bf16.msra.mxu0 0
      %1220 = vmatprep.mubr.bf16.mxu0 %v1186
      %1221 = vmatmul.mubr.bf16.gmra.mrb[0].mxu0 %v1081
      %v1222 = vpop.f32.mrb[0].mxu0
      %v1223 = vadd.f32 0.0, %v1222
      %v1224 = vpop.f32.mrb[0].mxu0
      %v1225 = vadd.f32 0.0, %v1224
      %v1226 = vpop.f32.mrb[0].mxu0
      %v1227 = vadd.f32 0.0, %v1226
      %v1228 = vpop.f32.mrb[0].mxu0
      %v1229 = vadd.f32 0.0, %v1228
      %1230 = vdwg.mxu0
      %v1249 = vunpack.c.l.b16 %v1024
      %v1250 = vunpack.c.h.b16 %v1024
      %v1251 = vunpack.c.l.b16 %v1025
      %v1252 = vunpack.c.h.b16 %v1025
      %v1253 = vunpack.c.l.b16 %v1026
      %v1254 = vunpack.c.h.b16 %v1026
      %v1255 = vunpack.c.l.b16 %v1027
      %v1256 = vunpack.c.h.b16 %v1027
      %v1257 = vunpack.c.l.b16 %v1028
      %v1258 = vunpack.c.h.b16 %v1028
      %v1259 = vunpack.c.l.b16 %v1029
      %v1260 = vunpack.c.h.b16 %v1029
      %v1261 = vunpack.c.l.b16 %v1030
      %v1262 = vunpack.c.h.b16 %v1030
      %v1263 = vunpack.c.l.b16 %v1031
      %v1264 = vunpack.c.h.b16 %v1031
      %v1265 = vunpack.c.l.b16 %v1032
      %v1266 = vunpack.c.h.b16 %v1032
      %v1267 = vunpack.c.l.b16 %v1033
      %v1268 = vunpack.c.h.b16 %v1033
      %v1269 = vunpack.c.l.b16 %v1034
      %v1270 = vunpack.c.h.b16 %v1034
      %v1271 = vunpack.c.l.b16 %v1035
      %v1272 = vunpack.c.h.b16 %v1035
      %v1273 = vunpack.c.l.b16 %v1036
      %v1274 = vunpack.c.h.b16 %v1036
      %v1275 = vunpack.c.l.b16 %v1037
      %v1276 = vunpack.c.h.b16 %v1037
      %v1277 = vunpack.c.l.b16 %v1038
      %v1278 = vunpack.c.h.b16 %v1038
      %v1279 = vunpack.c.l.b16 %v1039
      %v1280 = vunpack.c.h.b16 %v1039
      %v1281 = vunpack.c.l.b16 %v1040
      %v1282 = vunpack.c.h.b16 %v1040
      %v1283 = vunpack.c.l.b16 %v1041
      %v1284 = vunpack.c.h.b16 %v1041
      %v1285 = vpack.c.b16 %v1251, %v1249
      %v1286 = vpack.c.b16 %v1252, %v1250
      %v1287 = vpack.c.b16 %v1255, %v1253
      %v1288 = vpack.c.b16 %v1256, %v1254
      %v1289 = vpack.c.b16 %v1259, %v1257
      %v1290 = vpack.c.b16 %v1260, %v1258
      %v1291 = vpack.c.b16 %v1263, %v1261
      %v1292 = vpack.c.b16 %v1264, %v1262
      %v1293 = vpack.c.b16 %v1267, %v1265
      %v1294 = vpack.c.b16 %v1268, %v1266
      %v1295 = vpack.c.b16 %v1271, %v1269
      %v1296 = vpack.c.b16 %v1272, %v1270
      %v1297 = vpack.c.b16 %v1275, %v1273
      %v1298 = vpack.c.b16 %v1276, %v1274
      %v1299 = vpack.c.b16 %v1279, %v1277
      %v1300 = vpack.c.b16 %v1280, %v1278
      %v1301 = vpack.c.b16 %v1283, %v1281
      %v1302 = vpack.c.b16 %v1284, %v1282
      %v1322 = vsel %vm36, %v1023, 0
      %1324 = vmatprep.subr.bf16.mxu0 %v1286
      %1325 = vmatpush1.bf16.msra.mxu0 %v1285
      %1326 = vmatprep.subr.bf16.mxu0 %v1288
      %1327 = vmatpush1.bf16.msra.mxu0 %v1287
      %1328 = vmatprep.subr.bf16.mxu0 %v1290
      %1329 = vmatpush1.bf16.msra.mxu0 %v1289
      %1330 = vmatprep.subr.bf16.mxu0 %v1292
      %1331 = vmatpush1.bf16.msra.mxu0 %v1291
      %1332 = vmatprep.subr.bf16.mxu0 %v1294
      %1333 = vmatpush1.bf16.msra.mxu0 %v1293
      %1334 = vmatprep.subr.bf16.mxu0 %v1296
      %1335 = vmatpush1.bf16.msra.mxu0 %v1295
      %1336 = vmatprep.subr.bf16.mxu0 %v1298
      %1337 = vmatpush1.bf16.msra.mxu0 %v1297
      %1338 = vmatprep.subr.bf16.mxu0 %v1300
      %1339 = vmatpush1.bf16.msra.mxu0 %v1299
      %1340 = vmatprep.subr.bf16.mxu0 %v1302
      %1341 = vmatpush1.bf16.msra.mxu0 %v1301
      %1342 = vmatprep.subr.bf16.mxu0 0
      %1343 = vmatpush1.bf16.msra.mxu0 0
      %1344 = vmatprep.subr.bf16.mxu0 0
      %1345 = vmatpush1.bf16.msra.mxu0 0
      %1346 = vmatprep.subr.bf16.mxu0 0
      %1347 = vmatpush1.bf16.msra.mxu0 0
      %1348 = vmatprep.subr.bf16.mxu0 0
      %1349 = vmatpush1.bf16.msra.mxu0 0
      %1350 = vmatprep.subr.bf16.mxu0 0
      %1351 = vmatpush1.bf16.msra.mxu0 0
      %1352 = vmatprep.subr.bf16.mxu0 0
      %1353 = vmatpush1.bf16.msra.mxu0 0
      %1354 = vmatprep.subr.bf16.mxu0 0
      %1355 = vmatpush1.bf16.msra.mxu0 0
      %1356 = vmatprep.mubr.bf16.mxu0 %v1322
      %1357 = vmatmul.mubr.bf16.gmra.mrb[0].mxu0 %v1022
      %v1358 = vpop.f32.mrb[0].mxu0
      %v1359 = vadd.f32 %v1223, %v1358
      %v1360 = vpop.f32.mrb[0].mxu0
      %v1361 = vadd.f32 %v1225, %v1360
      %v1362 = vpop.f32.mrb[0].mxu0
      %v1363 = vadd.f32 %v1227, %v1362
      %v1364 = vpop.f32.mrb[0].mxu0
      %v1365 = vadd.f32 %v1229, %v1364
      %1366 = vdwg.mxu0
      %v1367 = vld [vmem:[%s1017] sm:$0xfc]
      %v1368 = vld [vmem:[%s1017 + $0x8] sm:$0xfc]
      %v1369 = vld [vmem:[%s1017 + $0x20] sm:$0x3]
      %v1370 = vld [vmem:[%s1017 + $0x28] sm:$0x3]
      %v1371 = vpack.c.bf16 %v1020, %v1367
      %v1372 = vpack.c.bf16 %v1021, %v1368
      %v1373 = vpack.c.bf16 %v1369, %v1369
      %v1374 = vpack.c.bf16 %v1370, %v1370
      %s1375 = scalar_lea.vmem %s3, 288
      %v1376 = vld [vmem:[%s1375] sm:$0xff]
      %v1377 = vld [vmem:[%s1375 + $0x8] sm:$0xff]
      %v1378 = vld [vmem:[%s1375 + $0x10] sm:$0xff]
      %v1379 = vld [vmem:[%s1375 + $0x18] sm:$0xff]
      %v1380 = vld [vmem:[%s1375 + $0x20] sm:$0xff]
      %v1381 = vld [vmem:[%s1375 + $0x28] sm:$0xff]
      %v1382 = vld [vmem:[%s1375 + $0x30] sm:$0xff]
      %v1383 = vld [vmem:[%s1375 + $0x38] sm:$0xff]
      %v1384 = vld [vmem:[%s1375 + $0x40] sm:$0xff]
      %v1385 = vld [vmem:[%s1375 + $0x48] sm:$0xff]
      %v1386 = vld [vmem:[%s1375 + $0x50] sm:$0xff]
      %v1387 = vld [vmem:[%s1375 + $0x58] sm:$0xff]
      %v1388 = vld [vmem:[%s1375 + $0x60] sm:$0xff]
      %v1389 = vld [vmem:[%s1375 + $0x68] sm:$0xff]
      %v1390 = vld [vmem:[%s1375 + $0x70] sm:$0xff]
      %v1391 = vld [vmem:[%s1375 + $0x78] sm:$0xff]
      %v1392 = vld [vmem:[%s1375 + $0x80] sm:$0xff]
      %v1393 = vld [vmem:[%s1375 + $0x88] sm:$0xff]
      %vm1398 = vcmask 1046528
      %v1399 = vrot.slane %v1371, 1
      %v1400 = vrot.slane %v1373, 1
      %v1401 = vsel %vm1398, %v1399, %v1400
      %v1402 = vrot.slane %v1372, 1
      %v1403 = vrot.slane %v1374, 1
      %v1404 = vsel %vm1398, %v1402, %v1403
      %v1424 = vunpack.c.l.b16 %v1376
      %v1425 = vunpack.c.h.b16 %v1376
      %v1426 = vunpack.c.l.b16 %v1377
      %v1427 = vunpack.c.h.b16 %v1377
      %v1428 = vunpack.c.l.b16 %v1378
      %v1429 = vunpack.c.h.b16 %v1378
      %v1430 = vunpack.c.l.b16 %v1379
      %v1431 = vunpack.c.h.b16 %v1379
      %v1432 = vunpack.c.l.b16 %v1380
      %v1433 = vunpack.c.h.b16 %v1380
      %v1434 = vunpack.c.l.b16 %v1381
      %v1435 = vunpack.c.h.b16 %v1381
      %v1436 = vunpack.c.l.b16 %v1382
      %v1437 = vunpack.c.h.b16 %v1382
      %v1438 = vunpack.c.l.b16 %v1383
      %v1439 = vunpack.c.h.b16 %v1383
      %v1440 = vunpack.c.l.b16 %v1384
      %v1441 = vunpack.c.h.b16 %v1384
      %v1442 = vunpack.c.l.b16 %v1385
      %v1443 = vunpack.c.h.b16 %v1385
      %v1444 = vunpack.c.l.b16 %v1386
      %v1445 = vunpack.c.h.b16 %v1386
      %v1446 = vunpack.c.l.b16 %v1387
      %v1447 = vunpack.c.h.b16 %v1387
      %v1448 = vunpack.c.l.b16 %v1388
      %v1449 = vunpack.c.h.b16 %v1388
      %v1450 = vunpack.c.l.b16 %v1389
      %v1451 = vunpack.c.h.b16 %v1389
      %v1452 = vunpack.c.l.b16 %v1390
      %v1453 = vunpack.c.h.b16 %v1390
      %v1454 = vunpack.c.l.b16 %v1391
      %v1455 = vunpack.c.h.b16 %v1391
      %v1456 = vunpack.c.l.b16 %v1392
      %v1457 = vunpack.c.h.b16 %v1392
      %v1458 = vunpack.c.l.b16 %v1393
      %v1459 = vunpack.c.h.b16 %v1393
      %v1460 = vpack.c.b16 %v1426, %v1424
      %v1461 = vpack.c.b16 %v1427, %v1425
      %v1462 = vpack.c.b16 %v1430, %v1428
      %v1463 = vpack.c.b16 %v1431, %v1429
      %v1464 = vpack.c.b16 %v1434, %v1432
      %v1465 = vpack.c.b16 %v1435, %v1433
      %v1466 = vpack.c.b16 %v1438, %v1436
      %v1467 = vpack.c.b16 %v1439, %v1437
      %v1468 = vpack.c.b16 %v1442, %v1440
      %v1469 = vpack.c.b16 %v1443, %v1441
      %v1470 = vpack.c.b16 %v1446, %v1444
      %v1471 = vpack.c.b16 %v1447, %v1445
      %v1472 = vpack.c.b16 %v1450, %v1448
      %v1473 = vpack.c.b16 %v1451, %v1449
      %v1474 = vpack.c.b16 %v1454, %v1452
      %v1475 = vpack.c.b16 %v1455, %v1453
      %v1476 = vpack.c.b16 %v1458, %v1456
      %v1477 = vpack.c.b16 %v1459, %v1457
      %v1497 = vsel %vm36, %v1404, 0
      %1499 = vmatprep.subr.bf16.mxu0 %v1461
      %1500 = vmatpush1.bf16.msra.mxu0 %v1460
      %1501 = vmatprep.subr.bf16.mxu0 %v1463
      %1502 = vmatpush1.bf16.msra.mxu0 %v1462
      %1503 = vmatprep.subr.bf16.mxu0 %v1465
      %1504 = vmatpush1.bf16.msra.mxu0 %v1464
      %1505 = vmatprep.subr.bf16.mxu0 %v1467
      %1506 = vmatpush1.bf16.msra.mxu0 %v1466
      %1507 = vmatprep.subr.bf16.mxu0 %v1469
      %1508 = vmatpush1.bf16.msra.mxu0 %v1468
      %1509 = vmatprep.subr.bf16.mxu0 %v1471
      %1510 = vmatpush1.bf16.msra.mxu0 %v1470
      %1511 = vmatprep.subr.bf16.mxu0 %v1473
      %1512 = vmatpush1.bf16.msra.mxu0 %v1472
      %1513 = vmatprep.subr.bf16.mxu0 %v1475
      %1514 = vmatpush1.bf16.msra.mxu0 %v1474
      %1515 = vmatprep.subr.bf16.mxu0 %v1477
      %1516 = vmatpush1.bf16.msra.mxu0 %v1476
      %1517 = vmatprep.subr.bf16.mxu0 0
      %1518 = vmatpush1.bf16.msra.mxu0 0
      %1519 = vmatprep.subr.bf16.mxu0 0
      %1520 = vmatpush1.bf16.msra.mxu0 0
      %1521 = vmatprep.subr.bf16.mxu0 0
      %1522 = vmatpush1.bf16.msra.mxu0 0
      %1523 = vmatprep.subr.bf16.mxu0 0
      %1524 = vmatpush1.bf16.msra.mxu0 0
      %1525 = vmatprep.subr.bf16.mxu0 0
      %1526 = vmatpush1.bf16.msra.mxu0 0
      %1527 = vmatprep.subr.bf16.mxu0 0
      %1528 = vmatpush1.bf16.msra.mxu0 0
      %1529 = vmatprep.subr.bf16.mxu0 0
      %1530 = vmatpush1.bf16.msra.mxu0 0
      %1531 = vmatprep.mubr.bf16.mxu0 %v1497
      %1532 = vmatmul.mubr.bf16.gmra.mrb[0].mxu0 %v1401
      %v1533 = vpop.f32.mrb[0].mxu0
      %v1534 = vadd.f32 0.0, %v1533
      %v1535 = vpop.f32.mrb[0].mxu0
      %v1536 = vadd.f32 0.0, %v1535
      %v1537 = vpop.f32.mrb[0].mxu0
      %v1538 = vadd.f32 0.0, %v1537
      %v1539 = vpop.f32.mrb[0].mxu0
      %v1540 = vadd.f32 0.0, %v1539
      %1541 = vdwg.mxu0
      %v1542 = vadd.f32 %v1359, %v1534
      %v1543 = vadd.f32 %v1361, %v1536
      %v1544 = vadd.f32 %v1363, %v1538
      %v1545 = vadd.f32 %v1365, %v1540
      %s1546 = sadd.s32 %s1010, 1
      %s1547 = smul.u32 %s1546, 6
      %s1548 = smul.addr %s1547, 8
      %s1549 = scalar_lea.vmem [#allocation2], %s1548
      %v1550 = vld [vmem:[%s1549] sm:$0xff]
      %v1551 = vld [vmem:[%s1549 + $0x8] sm:$0xff]
      %v1552 = vld [vmem:[%s1549 + $0x10] sm:$0xff]
      %v1553 = vld [vmem:[%s1549 + $0x18] sm:$0xff]
      %v1554 = vpack.c.bf16 %v1552, %v1550
      %v1555 = vpack.c.bf16 %v1553, %v1551
      %s1556 = scalar_lea.vmem %s3, 432
      %v1557 = vld [vmem:[%s1556] sm:$0xff]
      %v1558 = vld [vmem:[%s1556 + $0x8] sm:$0xff]
      %v1559 = vld [vmem:[%s1556 + $0x10] sm:$0xff]
      %v1560 = vld [vmem:[%s1556 + $0x18] sm:$0xff]
      %v1561 = vld [vmem:[%s1556 + $0x20] sm:$0xff]
      %v1562 = vld [vmem:[%s1556 + $0x28] sm:$0xff]
      %v1563 = vld [vmem:[%s1556 + $0x30] sm:$0xff]
      %v1564 = vld [vmem:[%s1556 + $0x38] sm:$0xff]
      %v1565 = vld [vmem:[%s1556 + $0x40] sm:$0xff]
      %v1566 = vld [vmem:[%s1556 + $0x48] sm:$0xff]
      %v1567 = vld [vmem:[%s1556 + $0x50] sm:$0xff]
      %v1568 = vld [vmem:[%s1556 + $0x58] sm:$0xff]
      %v1569 = vld [vmem:[%s1556 + $0x60] sm:$0xff]
      %v1570 = vld [vmem:[%s1556 + $0x68] sm:$0xff]
      %v1571 = vld [vmem:[%s1556 + $0x70] sm:$0xff]
      %v1572 = vld [vmem:[%s1556 + $0x78] sm:$0xff]
      %v1573 = vld [vmem:[%s1556 + $0x80] sm:$0xff]
      %v1574 = vld [vmem:[%s1556 + $0x88] sm:$0xff]
      %v1593 = vunpack.c.l.b16 %v1557
      %v1594 = vunpack.c.h.b16 %v1557
      %v1595 = vunpack.c.l.b16 %v1558
      %v1596 = vunpack.c.h.b16 %v1558
      %v1597 = vunpack.c.l.b16 %v1559
      %v1598 = vunpack.c.h.b16 %v1559
      %v1599 = vunpack.c.l.b16 %v1560
      %v1600 = vunpack.c.h.b16 %v1560
      %v1601 = vunpack.c.l.b16 %v1561
      %v1602 = vunpack.c.h.b16 %v1561
      %v1603 = vunpack.c.l.b16 %v1562
      %v1604 = vunpack.c.h.b16 %v1562
      %v1605 = vunpack.c.l.b16 %v1563
      %v1606 = vunpack.c.h.b16 %v1563
      %v1607 = vunpack.c.l.b16 %v1564
      %v1608 = vunpack.c.h.b16 %v1564
      %v1609 = vunpack.c.l.b16 %v1565
      %v1610 = vunpack.c.h.b16 %v1565
      %v1611 = vunpack.c.l.b16 %v1566
      %v1612 = vunpack.c.h.b16 %v1566
      %v1613 = vunpack.c.l.b16 %v1567
      %v1614 = vunpack.c.h.b16 %v1567
      %v1615 = vunpack.c.l.b16 %v1568
      %v1616 = vunpack.c.h.b16 %v1568
      %v1617 = vunpack.c.l.b16 %v1569
      %v1618 = vunpack.c.h.b16 %v1569
      %v1619 = vunpack.c.l.b16 %v1570
      %v1620 = vunpack.c.h.b16 %v1570
      %v1621 = vunpack.c.l.b16 %v1571
      %v1622 = vunpack.c.h.b16 %v1571
      %v1623 = vunpack.c.l.b16 %v1572
      %v1624 = vunpack.c.h.b16 %v1572
      %v1625 = vunpack.c.l.b16 %v1573
      %v1626 = vunpack.c.h.b16 %v1573
      %v1627 = vunpack.c.l.b16 %v1574
      %v1628 = vunpack.c.h.b16 %v1574
      %v1629 = vpack.c.b16 %v1595, %v1593
      %v1630 = vpack.c.b16 %v1596, %v1594
      %v1631 = vpack.c.b16 %v1599, %v1597
      %v1632 = vpack.c.b16 %v1600, %v1598
      %v1633 = vpack.c.b16 %v1603, %v1601
      %v1634 = vpack.c.b16 %v1604, %v1602
      %v1635 = vpack.c.b16 %v1607, %v1605
      %v1636 = vpack.c.b16 %v1608, %v1606
      %v1637 = vpack.c.b16 %v1611, %v1609
      %v1638 = vpack.c.b16 %v1612, %v1610
      %v1639 = vpack.c.b16 %v1615, %v1613
      %v1640 = vpack.c.b16 %v1616, %v1614
      %v1641 = vpack.c.b16 %v1619, %v1617
      %v1642 = vpack.c.b16 %v1620, %v1618
      %v1643 = vpack.c.b16 %v1623, %v1621
      %v1644 = vpack.c.b16 %v1624, %v1622
      %v1645 = vpack.c.b16 %v1627, %v1625
      %v1646 = vpack.c.b16 %v1628, %v1626
      %v1666 = vsel %vm36, %v1555, 0
      %1668 = vmatprep.subr.bf16.mxu0 %v1630
      %1669 = vmatpush1.bf16.msra.mxu0 %v1629
      %1670 = vmatprep.subr.bf16.mxu0 %v1632
      %1671 = vmatpush1.bf16.msra.mxu0 %v1631
      %1672 = vmatprep.subr.bf16.mxu0 %v1634
      %1673 = vmatpush1.bf16.msra.mxu0 %v1633
      %1674 = vmatprep.subr.bf16.mxu0 %v1636
      %1675 = vmatpush1.bf16.msra.mxu0 %v1635
      %1676 = vmatprep.subr.bf16.mxu0 %v1638
      %1677 = vmatpush1.bf16.msra.mxu0 %v1637
      %1678 = vmatprep.subr.bf16.mxu0 %v1640
      %1679 = vmatpush1.bf16.msra.mxu0 %v1639
      %1680 = vmatprep.subr.bf16.mxu0 %v1642
      %1681 = vmatpush1.bf16.msra.mxu0 %v1641
      %1682 = vmatprep.subr.bf16.mxu0 %v1644
      %1683 = vmatpush1.bf16.msra.mxu0 %v1643
      %1684 = vmatprep.subr.bf16.mxu0 %v1646
      %1685 = vmatpush1.bf16.msra.mxu0 %v1645
      %1686 = vmatprep.subr.bf16.mxu0 0
      %1687 = vmatpush1.bf16.msra.mxu0 0
      %1688 = vmatprep.subr.bf16.mxu0 0
      %1689 = vmatpush1.bf16.msra.mxu0 0
      %1690 = vmatprep.subr.bf16.mxu0 0
      %1691 = vmatpush1.bf16.msra.mxu0 0
      %1692 = vmatprep.subr.bf16.mxu0 0
      %1693 = vmatpush1.bf16.msra.mxu0 0
      %1694 = vmatprep.subr.bf16.mxu0 0
      %1695 = vmatpush1.bf16.msra.mxu0 0
      %1696 = vmatprep.subr.bf16.mxu0 0
      %1697 = vmatpush1.bf16.msra.mxu0 0
      %1698 = vmatprep.subr.bf16.mxu0 0
      %1699 = vmatpush1.bf16.msra.mxu0 0
      %1700 = vmatprep.mubr.bf16.mxu0 %v1666
      %1701 = vmatmul.mubr.bf16.gmra.mrb[0].mxu0 %v1554
      %v1702 = vpop.f32.mrb[0].mxu0
      %v1703 = vadd.f32 0.0, %v1702
      %v1704 = vpop.f32.mrb[0].mxu0
      %v1705 = vadd.f32 0.0, %v1704
      %v1706 = vpop.f32.mrb[0].mxu0
      %v1707 = vadd.f32 0.0, %v1706
      %v1708 = vpop.f32.mrb[0].mxu0
      %v1709 = vadd.f32 0.0, %v1708
      %1710 = vdwg.mxu0
      %v1711 = vadd.f32 %v1542, %v1703
      %v1712 = vadd.f32 %v1543, %v1705
      %v1713 = vadd.f32 %v1544, %v1707
      %v1714 = vadd.f32 %v1545, %v1709
      %v1715 = vld [vmem:[%s1549] sm:$0xfe]
      %v1716 = vld [vmem:[%s1549 + $0x8] sm:$0xfe]
      %v1717 = vld [vmem:[%s1549 + $0x10] sm:$0xff]
      %v1718 = vld [vmem:[%s1549 + $0x18] sm:$0xff]
      %v1719 = vld [vmem:[%s1549 + $0x20] sm:$0x1]
      %v1720 = vld [vmem:[%s1549 + $0x28] sm:$0x1]
      %v1721 = vpack.c.bf16 %v1717, %v1715
      %v1722 = vpack.c.bf16 %v1718, %v1716
      %v1723 = vpack.c.bf16 %v1719, %v1719
      %v1724 = vpack.c.bf16 %v1720, %v1720
      %s1725 = scalar_lea.vmem %s3, 576
      %v1726 = vld [vmem:[%s1725] sm:$0xff]
      %v1727 = vld [vmem:[%s1725 + $0x8] sm:$0xff]
      %v1728 = vld [vmem:[%s1725 + $0x10] sm:$0xff]
      %v1729 = vld [vmem:[%s1725 + $0x18] sm:$0xff]
      %v1730 = vld [vmem:[%s1725 + $0x20] sm:$0xff]
      %v1731 = vld [vmem:[%s1725 + $0x28] sm:$0xff]
      %v1732 = vld [vmem:[%s1725 + $0x30] sm:$0xff]
      %v1733 = vld [vmem:[%s1725 + $0x38] sm:$0xff]
      %v1734 = vld [vmem:[%s1725 + $0x40] sm:$0xff]
      %v1735 = vld [vmem:[%s1725 + $0x48] sm:$0xff]
      %v1736 = vld [vmem:[%s1725 + $0x50] sm:$0xff]
      %v1737 = vld [vmem:[%s1725 + $0x58] sm:$0xff]
      %v1738 = vld [vmem:[%s1725 + $0x60] sm:$0xff]
      %v1739 = vld [vmem:[%s1725 + $0x68] sm:$0xff]
      %v1740 = vld [vmem:[%s1725 + $0x70] sm:$0xff]
      %v1741 = vld [vmem:[%s1725 + $0x78] sm:$0xff]
      %v1742 = vld [vmem:[%s1725 + $0x80] sm:$0xff]
      %v1743 = vld [vmem:[%s1725 + $0x88] sm:$0xff]
      %v1745 = vshrl.u32 %v1721, 16
      %v1747 = vshll.u32 %v1721, 16
      %v1749 = vrot.slane %v1747, 1
      %v1750 = vor.u32 %v1745, %v1749
      %v1752 = vshll.u32 %v1723, 16
      %v1754 = vrot.slane %v1752, 1
      %v1755 = vsel %vm1069, %v1750, %v1754
      %v1757 = vshrl.u32 %v1722, 16
      %v1759 = vshll.u32 %v1722, 16
      %v1761 = vrot.slane %v1759, 1
      %v1762 = vor.u32 %v1757, %v1761
      %v1764 = vshll.u32 %v1724, 16
      %v1766 = vrot.slane %v1764, 1
      %v1767 = vsel %vm1069, %v1762, %v1766
      %v1787 = vunpack.c.l.b16 %v1726
      %v1788 = vunpack.c.h.b16 %v1726
      %v1789 = vunpack.c.l.b16 %v1727
      %v1790 = vunpack.c.h.b16 %v1727
      %v1791 = vunpack.c.l.b16 %v1728
      %v1792 = vunpack.c.h.b16 %v1728
      %v1793 = vunpack.c.l.b16 %v1729
      %v1794 = vunpack.c.h.b16 %v1729
      %v1795 = vunpack.c.l.b16 %v1730
      %v1796 = vunpack.c.h.b16 %v1730
      %v1797 = vunpack.c.l.b16 %v1731
      %v1798 = vunpack.c.h.b16 %v1731
      %v1799 = vunpack.c.l.b16 %v1732
      %v1800 = vunpack.c.h.b16 %v1732
      %v1801 = vunpack.c.l.b16 %v1733
      %v1802 = vunpack.c.h.b16 %v1733
      %v1803 = vunpack.c.l.b16 %v1734
      %v1804 = vunpack.c.h.b16 %v1734
      %v1805 = vunpack.c.l.b16 %v1735
      %v1806 = vunpack.c.h.b16 %v1735
      %v1807 = vunpack.c.l.b16 %v1736
      %v1808 = vunpack.c.h.b16 %v1736
      %v1809 = vunpack.c.l.b16 %v1737
      %v1810 = vunpack.c.h.b16 %v1737
      %v1811 = vunpack.c.l.b16 %v1738
      %v1812 = vunpack.c.h.b16 %v1738
      %v1813 = vunpack.c.l.b16 %v1739
      %v1814 = vunpack.c.h.b16 %v1739
      %v1815 = vunpack.c.l.b16 %v1740
      %v1816 = vunpack.c.h.b16 %v1740
      %v1817 = vunpack.c.l.b16 %v1741
      %v1818 = vunpack.c.h.b16 %v1741
      %v1819 = vunpack.c.l.b16 %v1742
      %v1820 = vunpack.c.h.b16 %v1742
      %v1821 = vunpack.c.l.b16 %v1743
      %v1822 = vunpack.c.h.b16 %v1743
      %v1823 = vpack.c.b16 %v1789, %v1787
      %v1824 = vpack.c.b16 %v1790, %v1788
      %v1825 = vpack.c.b16 %v1793, %v1791
      %v1826 = vpack.c.b16 %v1794, %v1792
      %v1827 = vpack.c.b16 %v1797, %v1795
      %v1828 = vpack.c.b16 %v1798, %v1796
      %v1829 = vpack.c.b16 %v1801, %v1799
      %v1830 = vpack.c.b16 %v1802, %v1800
      %v1831 = vpack.c.b16 %v1805, %v1803
      %v1832 = vpack.c.b16 %v1806, %v1804
      %v1833 = vpack.c.b16 %v1809, %v1807
      %v1834 = vpack.c.b16 %v1810, %v1808
      %v1835 = vpack.c.b16 %v1813, %v1811
      %v1836 = vpack.c.b16 %v1814, %v1812
      %v1837 = vpack.c.b16 %v1817, %v1815
      %v1838 = vpack.c.b16 %v1818, %v1816
      %v1839 = vpack.c.b16 %v1821, %v1819
      %v1840 = vpack.c.b16 %v1822, %v1820
      %v1860 = vsel %vm36, %v1767, 0
      %1862 = vmatprep.subr.bf16.mxu0 %v1824
      %1863 = vmatpush1.bf16.msra.mxu0 %v1823
      %1864 = vmatprep.subr.bf16.mxu0 %v1826
      %1865 = vmatpush1.bf16.msra.mxu0 %v1825
      %1866 = vmatprep.subr.bf16.mxu0 %v1828
      %1867 = vmatpush1.bf16.msra.mxu0 %v1827
      %1868 = vmatprep.subr.bf16.mxu0 %v1830
      %1869 = vmatpush1.bf16.msra.mxu0 %v1829
      %1870 = vmatprep.subr.bf16.mxu0 %v1832
      %1871 = vmatpush1.bf16.msra.mxu0 %v1831
      %1872 = vmatprep.subr.bf16.mxu0 %v1834
      %1873 = vmatpush1.bf16.msra.mxu0 %v1833
      %1874 = vmatprep.subr.bf16.mxu0 %v1836
      %1875 = vmatpush1.bf16.msra.mxu0 %v1835
      %1876 = vmatprep.subr.bf16.mxu0 %v1838
      %1877 = vmatpush1.bf16.msra.mxu0 %v1837
      %1878 = vmatprep.subr.bf16.mxu0 %v1840
      %1879 = vmatpush1.bf16.msra.mxu0 %v1839
      %1880 = vmatprep.subr.bf16.mxu0 0
      %1881 = vmatpush1.bf16.msra.mxu0 0
      %1882 = vmatprep.subr.bf16.mxu0 0
      %1883 = vmatpush1.bf16.msra.mxu0 0
      %1884 = vmatprep.subr.bf16.mxu0 0
      %1885 = vmatpush1.bf16.msra.mxu0 0
      %1886 = vmatprep.subr.bf16.mxu0 0
      %1887 = vmatpush1.bf16.msra.mxu0 0
      %1888 = vmatprep.subr.bf16.mxu0 0
      %1889 = vmatpush1.bf16.msra.mxu0 0
      %1890 = vmatprep.subr.bf16.mxu0 0
      %1891 = vmatpush1.bf16.msra.mxu0 0
      %1892 = vmatprep.subr.bf16.mxu0 0
      %1893 = vmatpush1.bf16.msra.mxu0 0
      %1894 = vmatprep.mubr.bf16.mxu0 %v1860
      %1895 = vmatmul.mubr.bf16.gmra.mrb[0].mxu0 %v1755
      %v1896 = vpop.f32.mrb[0].mxu0
      %v1897 = vadd.f32 0.0, %v1896
      %v1898 = vpop.f32.mrb[0].mxu0
      %v1899 = vadd.f32 0.0, %v1898
      %v1900 = vpop.f32.mrb[0].mxu0
      %v1901 = vadd.f32 0.0, %v1900
      %v1902 = vpop.f32.mrb[0].mxu0
      %v1903 = vadd.f32 0.0, %v1902
      %1904 = vdwg.mxu0
      %v1905 = vadd.f32 %v1711, %v1897
      %v1906 = vadd.f32 %v1712, %v1899
      %v1907 = vadd.f32 %v1713, %v1901
      %v1908 = vadd.f32 %v1714, %v1903
      %v1909 = vld [vmem:[%s1549] sm:$0xfc]
      %v1910 = vld [vmem:[%s1549 + $0x8] sm:$0xfc]
      %v1911 = vld [vmem:[%s1549 + $0x20] sm:$0x3]
      %v1912 = vld [vmem:[%s1549 + $0x28] sm:$0x3]
      %v1913 = vpack.c.bf16 %v1717, %v1909
      %v1914 = vpack.c.bf16 %v1718, %v1910
      %v1915 = vpack.c.bf16 %v1911, %v1911
      %v1916 = vpack.c.bf16 %v1912, %v1912
      %s1917 = scalar_lea.vmem %s3, 720
      %v1918 = vld [vmem:[%s1917] sm:$0xff]
      %v1919 = vld [vmem:[%s1917 + $0x8] sm:$0xff]
      %v1920 = vld [vmem:[%s1917 + $0x10] sm:$0xff]
      %v1921 = vld [vmem:[%s1917 + $0x18] sm:$0xff]
      %v1922 = vld [vmem:[%s1917 + $0x20] sm:$0xff]
      %v1923 = vld [vmem:[%s1917 + $0x28] sm:$0xff]
      %v1924 = vld [vmem:[%s1917 + $0x30] sm:$0xff]
      %v1925 = vld [vmem:[%s1917 + $0x38] sm:$0xff]
      %v1926 = vld [vmem:[%s1917 + $0x40] sm:$0xff]
      %v1927 = vld [vmem:[%s1917 + $0x48] sm:$0xff]
      %v1928 = vld [vmem:[%s1917 + $0x50] sm:$0xff]
      %v1929 = vld [vmem:[%s1917 + $0x58] sm:$0xff]
      %v1930 = vld [vmem:[%s1917 + $0x60] sm:$0xff]
      %v1931 = vld [vmem:[%s1917 + $0x68] sm:$0xff]
      %v1932 = vld [vmem:[%s1917 + $0x70] sm:$0xff]
      %v1933 = vld [vmem:[%s1917 + $0x78] sm:$0xff]
      %v1934 = vld [vmem:[%s1917 + $0x80] sm:$0xff]
      %v1935 = vld [vmem:[%s1917 + $0x88] sm:$0xff]
      %v1940 = vrot.slane %v1913, 1
      %v1941 = vrot.slane %v1915, 1
      %v1942 = vsel %vm1398, %v1940, %v1941
      %v1943 = vrot.slane %v1914, 1
      %v1944 = vrot.slane %v1916, 1
      %v1945 = vsel %vm1398, %v1943, %v1944
      %v1965 = vunpack.c.l.b16 %v1918
      %v1966 = vunpack.c.h.b16 %v1918
      %v1967 = vunpack.c.l.b16 %v1919
      %v1968 = vunpack.c.h.b16 %v1919
      %v1969 = vunpack.c.l.b16 %v1920
      %v1970 = vunpack.c.h.b16 %v1920
      %v1971 = vunpack.c.l.b16 %v1921
      %v1972 = vunpack.c.h.b16 %v1921
      %v1973 = vunpack.c.l.b16 %v1922
      %v1974 = vunpack.c.h.b16 %v1922
      %v1975 = vunpack.c.l.b16 %v1923
      %v1976 = vunpack.c.h.b16 %v1923
      %v1977 = vunpack.c.l.b16 %v1924
      %v1978 = vunpack.c.h.b16 %v1924
      %v1979 = vunpack.c.l.b16 %v1925
      %v1980 = vunpack.c.h.b16 %v1925
      %v1981 = vunpack.c.l.b16 %v1926
      %v1982 = vunpack.c.h.b16 %v1926
      %v1983 = vunpack.c.l.b16 %v1927
      %v1984 = vunpack.c.h.b16 %v1927
      %v1985 = vunpack.c.l.b16 %v1928
      %v1986 = vunpack.c.h.b16 %v1928
      %v1987 = vunpack.c.l.b16 %v1929
      %v1988 = vunpack.c.h.b16 %v1929
      %v1989 = vunpack.c.l.b16 %v1930
      %v1990 = vunpack.c.h.b16 %v1930
      %v1991 = vunpack.c.l.b16 %v1931
      %v1992 = vunpack.c.h.b16 %v1931
      %v1993 = vunpack.c.l.b16 %v1932
      %v1994 = vunpack.c.h.b16 %v1932
      %v1995 = vunpack.c.l.b16 %v1933
      %v1996 = vunpack.c.h.b16 %v1933
      %v1997 = vunpack.c.l.b16 %v1934
      %v1998 = vunpack.c.h.b16 %v1934
      %v1999 = vunpack.c.l.b16 %v1935
      %v2000 = vunpack.c.h.b16 %v1935
      %v2001 = vpack.c.b16 %v1967, %v1965
      %v2002 = vpack.c.b16 %v1968, %v1966
      %v2003 = vpack.c.b16 %v1971, %v1969
      %v2004 = vpack.c.b16 %v1972, %v1970
      %v2005 = vpack.c.b16 %v1975, %v1973
      %v2006 = vpack.c.b16 %v1976, %v1974
      %v2007 = vpack.c.b16 %v1979, %v1977
      %v2008 = vpack.c.b16 %v1980, %v1978
      %v2009 = vpack.c.b16 %v1983, %v1981
      %v2010 = vpack.c.b16 %v1984, %v1982
      %v2011 = vpack.c.b16 %v1987, %v1985
      %v2012 = vpack.c.b16 %v1988, %v1986
      %v2013 = vpack.c.b16 %v1991, %v1989
      %v2014 = vpack.c.b16 %v1992, %v1990
      %v2015 = vpack.c.b16 %v1995, %v1993
      %v2016 = vpack.c.b16 %v1996, %v1994
      %v2017 = vpack.c.b16 %v1999, %v1997
      %v2018 = vpack.c.b16 %v2000, %v1998
      %v2038 = vsel %vm36, %v1945, 0
      %2040 = vmatprep.subr.bf16.mxu0 %v2002
      %2041 = vmatpush1.bf16.msra.mxu0 %v2001
      %2042 = vmatprep.subr.bf16.mxu0 %v2004
      %2043 = vmatpush1.bf16.msra.mxu0 %v2003
      %2044 = vmatprep.subr.bf16.mxu0 %v2006
      %2045 = vmatpush1.bf16.msra.mxu0 %v2005
      %2046 = vmatprep.subr.bf16.mxu0 %v2008
      %2047 = vmatpush1.bf16.msra.mxu0 %v2007
      %2048 = vmatprep.subr.bf16.mxu0 %v2010
      %2049 = vmatpush1.bf16.msra.mxu0 %v2009
      %2050 = vmatprep.subr.bf16.mxu0 %v2012
      %2051 = vmatpush1.bf16.msra.mxu0 %v2011
      %2052 = vmatprep.subr.bf16.mxu0 %v2014
      %2053 = vmatpush1.bf16.msra.mxu0 %v2013
      %2054 = vmatprep.subr.bf16.mxu0 %v2016
      %2055 = vmatpush1.bf16.msra.mxu0 %v2015
      %2056 = vmatprep.subr.bf16.mxu0 %v2018
      %2057 = vmatpush1.bf16.msra.mxu0 %v2017
      %2058 = vmatprep.subr.bf16.mxu0 0
      %2059 = vmatpush1.bf16.msra.mxu0 0
      %2060 = vmatprep.subr.bf16.mxu0 0
      %2061 = vmatpush1.bf16.msra.mxu0 0
      %2062 = vmatprep.subr.bf16.mxu0 0
      %2063 = vmatpush1.bf16.msra.mxu0 0
      %2064 = vmatprep.subr.bf16.mxu0 0
      %2065 = vmatpush1.bf16.msra.mxu0 0
      %2066 = vmatprep.subr.bf16.mxu0 0
      %2067 = vmatpush1.bf16.msra.mxu0 0
      %2068 = vmatprep.subr.bf16.mxu0 0
      %2069 = vmatpush1.bf16.msra.mxu0 0
      %2070 = vmatprep.subr.bf16.mxu0 0
      %2071 = vmatpush1.bf16.msra.mxu0 0
      %2072 = vmatprep.mubr.bf16.mxu0 %v2038
      %2073 = vmatmul.mubr.bf16.gmra.mrb[0].mxu0 %v1942
      %v2074 = vpop.f32.mrb[0].mxu0
      %v2075 = vadd.f32 0.0, %v2074
      %v2076 = vpop.f32.mrb[0].mxu0
      %v2077 = vadd.f32 0.0, %v2076
      %v2078 = vpop.f32.mrb[0].mxu0
      %v2079 = vadd.f32 0.0, %v2078
      %v2080 = vpop.f32.mrb[0].mxu0
      %v2081 = vadd.f32 0.0, %v2080
      %2082 = vdwg.mxu0
      %v2083 = vadd.f32 %v1905, %v2075
      %v2084 = vadd.f32 %v1906, %v2077
      %v2085 = vadd.f32 %v1907, %v2079
      %v2086 = vadd.f32 %v1908, %v2081
      %s2087 = sadd.s32 %s1010, 2
      %s2088 = smul.u32 %s2087, 6
      %s2089 = smul.addr %s2088, 8
      %s2090 = scalar_lea.vmem [#allocation2], %s2089
      %v2091 = vld [vmem:[%s2090] sm:$0xff]
      %v2092 = vld [vmem:[%s2090 + $0x8] sm:$0xff]
      %v2093 = vld [vmem:[%s2090 + $0x10] sm:$0xff]
      %v2094 = vld [vmem:[%s2090 + $0x18] sm:$0xff]
      %v2095 = vpack.c.bf16 %v2093, %v2091
      %v2096 = vpack.c.bf16 %v2094, %v2092
      %s2097 = scalar_lea.vmem %s3, 864
      %v2098 = vld [vmem:[%s2097] sm:$0xff]
      %v2099 = vld [vmem:[%s2097 + $0x8] sm:$0xff]
      %v2100 = vld [vmem:[%s2097 + $0x10] sm:$0xff]
      %v2101 = vld [vmem:[%s2097 + $0x18] sm:$0xff]
      %v2102 = vld [vmem:[%s2097 + $0x20] sm:$0xff]
      %v2103 = vld [vmem:[%s2097 + $0x28] sm:$0xff]
      %v2104 = vld [vmem:[%s2097 + $0x30] sm:$0xff]
      %v2105 = vld [vmem:[%s2097 + $0x38] sm:$0xff]
      %v2106 = vld [vmem:[%s2097 + $0x40] sm:$0xff]
      %v2107 = vld [vmem:[%s2097 + $0x48] sm:$0xff]
      %v2108 = vld [vmem:[%s2097 + $0x50] sm:$0xff]
      %v2109 = vld [vmem:[%s2097 + $0x58] sm:$0xff]
      %v2110 = vld [vmem:[%s2097 + $0x60] sm:$0xff]
      %v2111 = vld [vmem:[%s2097 + $0x68] sm:$0xff]
      %v2112 = vld [vmem:[%s2097 + $0x70] sm:$0xff]
      %v2113 = vld [vmem:[%s2097 + $0x78] sm:$0xff]
      %v2114 = vld [vmem:[%s2097 + $0x80] sm:$0xff]
      %v2115 = vld [vmem:[%s2097 + $0x88] sm:$0xff]
      %v2134 = vunpack.c.l.b16 %v2098
      %v2135 = vunpack.c.h.b16 %v2098
      %v2136 = vunpack.c.l.b16 %v2099
      %v2137 = vunpack.c.h.b16 %v2099
      %v2138 = vunpack.c.l.b16 %v2100
      %v2139 = vunpack.c.h.b16 %v2100
      %v2140 = vunpack.c.l.b16 %v2101
      %v2141 = vunpack.c.h.b16 %v2101
      %v2142 = vunpack.c.l.b16 %v2102
      %v2143 = vunpack.c.h.b16 %v2102
      %v2144 = vunpack.c.l.b16 %v2103
      %v2145 = vunpack.c.h.b16 %v2103
      %v2146 = vunpack.c.l.b16 %v2104
      %v2147 = vunpack.c.h.b16 %v2104
      %v2148 = vunpack.c.l.b16 %v2105
      %v2149 = vunpack.c.h.b16 %v2105
      %v2150 = vunpack.c.l.b16 %v2106
      %v2151 = vunpack.c.h.b16 %v2106
      %v2152 = vunpack.c.l.b16 %v2107
      %v2153 = vunpack.c.h.b16 %v2107
      %v2154 = vunpack.c.l.b16 %v2108
      %v2155 = vunpack.c.h.b16 %v2108
      %v2156 = vunpack.c.l.b16 %v2109
      %v2157 = vunpack.c.h.b16 %v2109
      %v2158 = vunpack.c.l.b16 %v2110
      %v2159 = vunpack.c.h.b16 %v2110
      %v2160 = vunpack.c.l.b16 %v2111
      %v2161 = vunpack.c.h.b16 %v2111
      %v2162 = vunpack.c.l.b16 %v2112
      %v2163 = vunpack.c.h.b16 %v2112
      %v2164 = vunpack.c.l.b16 %v2113
      %v2165 = vunpack.c.h.b16 %v2113
      %v2166 = vunpack.c.l.b16 %v2114
      %v2167 = vunpack.c.h.b16 %v2114
      %v2168 = vunpack.c.l.b16 %v2115
      %v2169 = vunpack.c.h.b16 %v2115
      %v2170 = vpack.c.b16 %v2136, %v2134
      %v2171 = vpack.c.b16 %v2137, %v2135
      %v2172 = vpack.c.b16 %v2140, %v2138
      %v2173 = vpack.c.b16 %v2141, %v2139
      %v2174 = vpack.c.b16 %v2144, %v2142
      %v2175 = vpack.c.b16 %v2145, %v2143
      %v2176 = vpack.c.b16 %v2148, %v2146
      %v2177 = vpack.c.b16 %v2149, %v2147
      %v2178 = vpack.c.b16 %v2152, %v2150
      %v2179 = vpack.c.b16 %v2153, %v2151
      %v2180 = vpack.c.b16 %v2156, %v2154
      %v2181 = vpack.c.b16 %v2157, %v2155
      %v2182 = vpack.c.b16 %v2160, %v2158
      %v2183 = vpack.c.b16 %v2161, %v2159
      %v2184 = vpack.c.b16 %v2164, %v2162
      %v2185 = vpack.c.b16 %v2165, %v2163
      %v2186 = vpack.c.b16 %v2168, %v2166
      %v2187 = vpack.c.b16 %v2169, %v2167
      %v2207 = vsel %vm36, %v2096, 0
      %2209 = vmatprep.subr.bf16.mxu0 %v2171
      %2210 = vmatpush1.bf16.msra.mxu0 %v2170
      %2211 = vmatprep.subr.bf16.mxu0 %v2173
      %2212 = vmatpush1.bf16.msra.mxu0 %v2172
      %2213 = vmatprep.subr.bf16.mxu0 %v2175
      %2214 = vmatpush1.bf16.msra.mxu0 %v2174
      %2215 = vmatprep.subr.bf16.mxu0 %v2177
      %2216 = vmatpush1.bf16.msra.mxu0 %v2176
      %2217 = vmatprep.subr.bf16.mxu0 %v2179
      %2218 = vmatpush1.bf16.msra.mxu0 %v2178
      %2219 = vmatprep.subr.bf16.mxu0 %v2181
      %2220 = vmatpush1.bf16.msra.mxu0 %v2180
      %2221 = vmatprep.subr.bf16.mxu0 %v2183
      %2222 = vmatpush1.bf16.msra.mxu0 %v2182
      %2223 = vmatprep.subr.bf16.mxu0 %v2185
      %2224 = vmatpush1.bf16.msra.mxu0 %v2184
      %2225 = vmatprep.subr.bf16.mxu0 %v2187
      %2226 = vmatpush1.bf16.msra.mxu0 %v2186
      %2227 = vmatprep.subr.bf16.mxu0 0
      %2228 = vmatpush1.bf16.msra.mxu0 0
      %2229 = vmatprep.subr.bf16.mxu0 0
      %2230 = vmatpush1.bf16.msra.mxu0 0
      %2231 = vmatprep.subr.bf16.mxu0 0
      %2232 = vmatpush1.bf16.msra.mxu0 0
      %2233 = vmatprep.subr.bf16.mxu0 0
      %2234 = vmatpush1.bf16.msra.mxu0 0
      %2235 = vmatprep.subr.bf16.mxu0 0
      %2236 = vmatpush1.bf16.msra.mxu0 0
      %2237 = vmatprep.subr.bf16.mxu0 0
      %2238 = vmatpush1.bf16.msra.mxu0 0
      %2239 = vmatprep.subr.bf16.mxu0 0
      %2240 = vmatpush1.bf16.msra.mxu0 0
      %2241 = vmatprep.mubr.bf16.mxu0 %v2207
      %2242 = vmatmul.mubr.bf16.gmra.mrb[0].mxu0 %v2095
      %v2243 = vpop.f32.mrb[0].mxu0
      %v2244 = vadd.f32 0.0, %v2243
      %v2245 = vpop.f32.mrb[0].mxu0
      %v2246 = vadd.f32 0.0, %v2245
      %v2247 = vpop.f32.mrb[0].mxu0
      %v2248 = vadd.f32 0.0, %v2247
      %v2249 = vpop.f32.mrb[0].mxu0
      %v2250 = vadd.f32 0.0, %v2249
      %2251 = vdwg.mxu0
      %v2252 = vadd.f32 %v2083, %v2244
      %v2253 = vadd.f32 %v2084, %v2246
      %v2254 = vadd.f32 %v2085, %v2248
      %v2255 = vadd.f32 %v2086, %v2250
      %v2256 = vld [vmem:[%s2090] sm:$0xfe]
      %v2257 = vld [vmem:[%s2090 + $0x8] sm:$0xfe]
      %v2258 = vld [vmem:[%s2090 + $0x10] sm:$0xff]
      %v2259 = vld [vmem:[%s2090 + $0x18] sm:$0xff]
      %v2260 = vld [vmem:[%s2090 + $0x20] sm:$0x1]
      %v2261 = vld [vmem:[%s2090 + $0x28] sm:$0x1]
      %v2262 = vpack.c.bf16 %v2258, %v2256
      %v2263 = vpack.c.bf16 %v2259, %v2257
      %v2264 = vpack.c.bf16 %v2260, %v2260
      %v2265 = vpack.c.bf16 %v2261, %v2261
      %s2266 = scalar_lea.vmem %s3, 1008
      %v2267 = vld [vmem:[%s2266] sm:$0xff]
      %v2268 = vld [vmem:[%s2266 + $0x8] sm:$0xff]
      %v2269 = vld [vmem:[%s2266 + $0x10] sm:$0xff]
      %v2270 = vld [vmem:[%s2266 + $0x18] sm:$0xff]
      %v2271 = vld [vmem:[%s2266 + $0x20] sm:$0xff]
      %v2272 = vld [vmem:[%s2266 + $0x28] sm:$0xff]
      %v2273 = vld [vmem:[%s2266 + $0x30] sm:$0xff]
      %v2274 = vld [vmem:[%s2266 + $0x38] sm:$0xff]
      %v2275 = vld [vmem:[%s2266 + $0x40] sm:$0xff]
      %v2276 = vld [vmem:[%s2266 + $0x48] sm:$0xff]
      %v2277 = vld [vmem:[%s2266 + $0x50] sm:$0xff]
      %v2278 = vld [vmem:[%s2266 + $0x58] sm:$0xff]
      %v2279 = vld [vmem:[%s2266 + $0x60] sm:$0xff]
      %v2280 = vld [vmem:[%s2266 + $0x68] sm:$0xff]
      %v2281 = vld [vmem:[%s2266 + $0x70] sm:$0xff]
      %v2282 = vld [vmem:[%s2266 + $0x78] sm:$0xff]
      %v2283 = vld [vmem:[%s2266 + $0x80] sm:$0xff]
      %v2284 = vld [vmem:[%s2266 + $0x88] sm:$0xff]
      %v2286 = vshrl.u32 %v2262, 16
      %v2288 = vshll.u32 %v2262, 16
      %v2290 = vrot.slane %v2288, 1
      %v2291 = vor.u32 %v2286, %v2290
      %v2293 = vshll.u32 %v2264, 16
      %v2295 = vrot.slane %v2293, 1
      %v2296 = vsel %vm1069, %v2291, %v2295
      %v2298 = vshrl.u32 %v2263, 16
      %v2300 = vshll.u32 %v2263, 16
      %v2302 = vrot.slane %v2300, 1
      %v2303 = vor.u32 %v2298, %v2302
      %v2305 = vshll.u32 %v2265, 16
      %v2307 = vrot.slane %v2305, 1
      %v2308 = vsel %vm1069, %v2303, %v2307
      %v2328 = vunpack.c.l.b16 %v2267
      %v2329 = vunpack.c.h.b16 %v2267
      %v2330 = vunpack.c.l.b16 %v2268
      %v2331 = vunpack.c.h.b16 %v2268
      %v2332 = vunpack.c.l.b16 %v2269
      %v2333 = vunpack.c.h.b16 %v2269
      %v2334 = vunpack.c.l.b16 %v2270
      %v2335 = vunpack.c.h.b16 %v2270
      %v2336 = vunpack.c.l.b16 %v2271
      %v2337 = vunpack.c.h.b16 %v2271
      %v2338 = vunpack.c.l.b16 %v2272
      %v2339 = vunpack.c.h.b16 %v2272
      %v2340 = vunpack.c.l.b16 %v2273
      %v2341 = vunpack.c.h.b16 %v2273
      %v2342 = vunpack.c.l.b16 %v2274
      %v2343 = vunpack.c.h.b16 %v2274
      %v2344 = vunpack.c.l.b16 %v2275
      %v2345 = vunpack.c.h.b16 %v2275
      %v2346 = vunpack.c.l.b16 %v2276
      %v2347 = vunpack.c.h.b16 %v2276
      %v2348 = vunpack.c.l.b16 %v2277
      %v2349 = vunpack.c.h.b16 %v2277
      %v2350 = vunpack.c.l.b16 %v2278
      %v2351 = vunpack.c.h.b16 %v2278
      %v2352 = vunpack.c.l.b16 %v2279
      %v2353 = vunpack.c.h.b16 %v2279
      %v2354 = vunpack.c.l.b16 %v2280
      %v2355 = vunpack.c.h.b16 %v2280
      %v2356 = vunpack.c.l.b16 %v2281
      %v2357 = vunpack.c.h.b16 %v2281
      %v2358 = vunpack.c.l.b16 %v2282
      %v2359 = vunpack.c.h.b16 %v2282
      %v2360 = vunpack.c.l.b16 %v2283
      %v2361 = vunpack.c.h.b16 %v2283
      %v2362 = vunpack.c.l.b16 %v2284
      %v2363 = vunpack.c.h.b16 %v2284
      %v2364 = vpack.c.b16 %v2330, %v2328
      %v2365 = vpack.c.b16 %v2331, %v2329
      %v2366 = vpack.c.b16 %v2334, %v2332
      %v2367 = vpack.c.b16 %v2335, %v2333
      %v2368 = vpack.c.b16 %v2338, %v2336
      %v2369 = vpack.c.b16 %v2339, %v2337
      %v2370 = vpack.c.b16 %v2342, %v2340
      %v2371 = vpack.c.b16 %v2343, %v2341
      %v2372 = vpack.c.b16 %v2346, %v2344
      %v2373 = vpack.c.b16 %v2347, %v2345
      %v2374 = vpack.c.b16 %v2350, %v2348
      %v2375 = vpack.c.b16 %v2351, %v2349
      %v2376 = vpack.c.b16 %v2354, %v2352
      %v2377 = vpack.c.b16 %v2355, %v2353
      %v2378 = vpack.c.b16 %v2358, %v2356
      %v2379 = vpack.c.b16 %v2359, %v2357
      %v2380 = vpack.c.b16 %v2362, %v2360
      %v2381 = vpack.c.b16 %v2363, %v2361
      %v2401 = vsel %vm36, %v2308, 0
      %2403 = vmatprep.subr.bf16.mxu0 %v2365
      %2404 = vmatpush1.bf16.msra.mxu0 %v2364
      %2405 = vmatprep.subr.bf16.mxu0 %v2367
      %2406 = vmatpush1.bf16.msra.mxu0 %v2366
      %2407 = vmatprep.subr.bf16.mxu0 %v2369
      %2408 = vmatpush1.bf16.msra.mxu0 %v2368
      %2409 = vmatprep.subr.bf16.mxu0 %v2371
      %2410 = vmatpush1.bf16.msra.mxu0 %v2370
      %2411 = vmatprep.subr.bf16.mxu0 %v2373
      %2412 = vmatpush1.bf16.msra.mxu0 %v2372
      %2413 = vmatprep.subr.bf16.mxu0 %v2375
      %2414 = vmatpush1.bf16.msra.mxu0 %v2374
      %2415 = vmatprep.subr.bf16.mxu0 %v2377
      %2416 = vmatpush1.bf16.msra.mxu0 %v2376
      %2417 = vmatprep.subr.bf16.mxu0 %v2379
      %2418 = vmatpush1.bf16.msra.mxu0 %v2378
      %2419 = vmatprep.subr.bf16.mxu0 %v2381
      %2420 = vmatpush1.bf16.msra.mxu0 %v2380
      %2421 = vmatprep.subr.bf16.mxu0 0
      %2422 = vmatpush1.bf16.msra.mxu0 0
      %2423 = vmatprep.subr.bf16.mxu0 0
      %2424 = vmatpush1.bf16.msra.mxu0 0
      %2425 = vmatprep.subr.bf16.mxu0 0
      %2426 = vmatpush1.bf16.msra.mxu0 0
      %2427 = vmatprep.subr.bf16.mxu0 0
      %2428 = vmatpush1.bf16.msra.mxu0 0
      %2429 = vmatprep.subr.bf16.mxu0 0
      %2430 = vmatpush1.bf16.msra.mxu0 0
      %2431 = vmatprep.subr.bf16.mxu0 0
      %2432 = vmatpush1.bf16.msra.mxu0 0
      %2433 = vmatprep.subr.bf16.mxu0 0
      %2434 = vmatpush1.bf16.msra.mxu0 0
      %2435 = vmatprep.mubr.bf16.mxu0 %v2401
      %2436 = vmatmul.mubr.bf16.gmra.mrb[0].mxu0 %v2296
      %v2437 = vpop.f32.mrb[0].mxu0
      %v2438 = vadd.f32 0.0, %v2437
      %v2439 = vpop.f32.mrb[0].mxu0
      %v2440 = vadd.f32 0.0, %v2439
      %v2441 = vpop.f32.mrb[0].mxu0
      %v2442 = vadd.f32 0.0, %v2441
      %v2443 = vpop.f32.mrb[0].mxu0
      %v2444 = vadd.f32 0.0, %v2443
      %2445 = vdwg.mxu0
      %v2446 = vadd.f32 %v2252, %v2438
      %v2447 = vadd.f32 %v2253, %v2440
      %v2448 = vadd.f32 %v2254, %v2442
      %v2449 = vadd.f32 %v2255, %v2444
      %v2450 = vld [vmem:[%s2090] sm:$0xfc]
      %v2451 = vld [vmem:[%s2090 + $0x8] sm:$0xfc]
      %v2452 = vld [vmem:[%s2090 + $0x20] sm:$0x3]
      %v2453 = vld [vmem:[%s2090 + $0x28] sm:$0x3]
      %v2454 = vpack.c.bf16 %v2258, %v2450
      %v2455 = vpack.c.bf16 %v2259, %v2451
      %v2456 = vpack.c.bf16 %v2452, %v2452
      %v2457 = vpack.c.bf16 %v2453, %v2453
      %s2458 = scalar_lea.vmem %s3, 1152
      %v2459 = vld [vmem:[%s2458] sm:$0xff]
      %v2460 = vld [vmem:[%s2458 + $0x8] sm:$0xff]
      %v2461 = vld [vmem:[%s2458 + $0x10] sm:$0xff]
      %v2462 = vld [vmem:[%s2458 + $0x18] sm:$0xff]
      %v2463 = vld [vmem:[%s2458 + $0x20] sm:$0xff]
      %v2464 = vld [vmem:[%s2458 + $0x28] sm:$0xff]
      %v2465 = vld [vmem:[%s2458 + $0x30] sm:$0xff]
      %v2466 = vld [vmem:[%s2458 + $0x38] sm:$0xff]
      %v2467 = vld [vmem:[%s2458 + $0x40] sm:$0xff]
      %v2468 = vld [vmem:[%s2458 + $0x48] sm:$0xff]
      %v2469 = vld [vmem:[%s2458 + $0x50] sm:$0xff]
      %v2470 = vld [vmem:[%s2458 + $0x58] sm:$0xff]
      %v2471 = vld [vmem:[%s2458 + $0x60] sm:$0xff]
      %v2472 = vld [vmem:[%s2458 + $0x68] sm:$0xff]
      %v2473 = vld [vmem:[%s2458 + $0x70] sm:$0xff]
      %v2474 = vld [vmem:[%s2458 + $0x78] sm:$0xff]
      %v2475 = vld [vmem:[%s2458 + $0x80] sm:$0xff]
      %v2476 = vld [vmem:[%s2458 + $0x88] sm:$0xff]
      %v2481 = vrot.slane %v2454, 1
      %v2482 = vrot.slane %v2456, 1
      %v2483 = vsel %vm1398, %v2481, %v2482
      %v2484 = vrot.slane %v2455, 1
      %v2485 = vrot.slane %v2457, 1
      %v2486 = vsel %vm1398, %v2484, %v2485
      %v2506 = vunpack.c.l.b16 %v2459
      %v2507 = vunpack.c.h.b16 %v2459
      %v2508 = vunpack.c.l.b16 %v2460
      %v2509 = vunpack.c.h.b16 %v2460
      %v2510 = vunpack.c.l.b16 %v2461
      %v2511 = vunpack.c.h.b16 %v2461
      %v2512 = vunpack.c.l.b16 %v2462
      %v2513 = vunpack.c.h.b16 %v2462
      %v2514 = vunpack.c.l.b16 %v2463
      %v2515 = vunpack.c.h.b16 %v2463
      %v2516 = vunpack.c.l.b16 %v2464
      %v2517 = vunpack.c.h.b16 %v2464
      %v2518 = vunpack.c.l.b16 %v2465
      %v2519 = vunpack.c.h.b16 %v2465
      %v2520 = vunpack.c.l.b16 %v2466
      %v2521 = vunpack.c.h.b16 %v2466
      %v2522 = vunpack.c.l.b16 %v2467
      %v2523 = vunpack.c.h.b16 %v2467
      %v2524 = vunpack.c.l.b16 %v2468
      %v2525 = vunpack.c.h.b16 %v2468
      %v2526 = vunpack.c.l.b16 %v2469
      %v2527 = vunpack.c.h.b16 %v2469
      %v2528 = vunpack.c.l.b16 %v2470
      %v2529 = vunpack.c.h.b16 %v2470
      %v2530 = vunpack.c.l.b16 %v2471
      %v2531 = vunpack.c.h.b16 %v2471
      %v2532 = vunpack.c.l.b16 %v2472
      %v2533 = vunpack.c.h.b16 %v2472
      %v2534 = vunpack.c.l.b16 %v2473
      %v2535 = vunpack.c.h.b16 %v2473
      %v2536 = vunpack.c.l.b16 %v2474
      %v2537 = vunpack.c.h.b16 %v2474
      %v2538 = vunpack.c.l.b16 %v2475
      %v2539 = vunpack.c.h.b16 %v2475
      %v2540 = vunpack.c.l.b16 %v2476
      %v2541 = vunpack.c.h.b16 %v2476
      %v2542 = vpack.c.b16 %v2508, %v2506
      %v2543 = vpack.c.b16 %v2509, %v2507
      %v2544 = vpack.c.b16 %v2512, %v2510
      %v2545 = vpack.c.b16 %v2513, %v2511
      %v2546 = vpack.c.b16 %v2516, %v2514
      %v2547 = vpack.c.b16 %v2517, %v2515
      %v2548 = vpack.c.b16 %v2520, %v2518
      %v2549 = vpack.c.b16 %v2521, %v2519
      %v2550 = vpack.c.b16 %v2524, %v2522
      %v2551 = vpack.c.b16 %v2525, %v2523
      %v2552 = vpack.c.b16 %v2528, %v2526
      %v2553 = vpack.c.b16 %v2529, %v2527
      %v2554 = vpack.c.b16 %v2532, %v2530
      %v2555 = vpack.c.b16 %v2533, %v2531
      %v2556 = vpack.c.b16 %v2536, %v2534
      %v2557 = vpack.c.b16 %v2537, %v2535
      %v2558 = vpack.c.b16 %v2540, %v2538
      %v2559 = vpack.c.b16 %v2541, %v2539
      %v2579 = vsel %vm36, %v2486, 0
      %2581 = vmatprep.subr.bf16.mxu0 %v2543
      %2582 = vmatpush1.bf16.msra.mxu0 %v2542
      %2583 = vmatprep.subr.bf16.mxu0 %v2545
      %2584 = vmatpush1.bf16.msra.mxu0 %v2544
      %2585 = vmatprep.subr.bf16.mxu0 %v2547
      %2586 = vmatpush1.bf16.msra.mxu0 %v2546
      %2587 = vmatprep.subr.bf16.mxu0 %v2549
      %2588 = vmatpush1.bf16.msra.mxu0 %v2548
      %2589 = vmatprep.subr.bf16.mxu0 %v2551
      %2590 = vmatpush1.bf16.msra.mxu0 %v2550
      %2591 = vmatprep.subr.bf16.mxu0 %v2553
      %2592 = vmatpush1.bf16.msra.mxu0 %v2552
      %2593 = vmatprep.subr.bf16.mxu0 %v2555
      %2594 = vmatpush1.bf16.msra.mxu0 %v2554
      %2595 = vmatprep.subr.bf16.mxu0 %v2557
      %2596 = vmatpush1.bf16.msra.mxu0 %v2556
      %2597 = vmatprep.subr.bf16.mxu0 %v2559
      %2598 = vmatpush1.bf16.msra.mxu0 %v2558
      %2599 = vmatprep.subr.bf16.mxu0 0
      %2600 = vmatpush1.bf16.msra.mxu0 0
      %2601 = vmatprep.subr.bf16.mxu0 0
      %2602 = vmatpush1.bf16.msra.mxu0 0
      %2603 = vmatprep.subr.bf16.mxu0 0
      %2604 = vmatpush1.bf16.msra.mxu0 0
      %2605 = vmatprep.subr.bf16.mxu0 0
      %2606 = vmatpush1.bf16.msra.mxu0 0
      %2607 = vmatprep.subr.bf16.mxu0 0
      %2608 = vmatpush1.bf16.msra.mxu0 0
      %2609 = vmatprep.subr.bf16.mxu0 0
      %2610 = vmatpush1.bf16.msra.mxu0 0
      %2611 = vmatprep.subr.bf16.mxu0 0
      %2612 = vmatpush1.bf16.msra.mxu0 0
      %2613 = vmatprep.mubr.bf16.mxu0 %v2579
      %2614 = vmatmul.mubr.bf16.gmra.mrb[0].mxu0 %v2483
      %v2615 = vpop.f32.mrb[0].mxu0
      %v2616 = vadd.f32 0.0, %v2615
      %v2617 = vpop.f32.mrb[0].mxu0
      %v2618 = vadd.f32 0.0, %v2617
      %v2619 = vpop.f32.mrb[0].mxu0
      %v2620 = vadd.f32 0.0, %v2619
      %v2621 = vpop.f32.mrb[0].mxu0
      %v2622 = vadd.f32 0.0, %v2621
      %2623 = vdwg.mxu0
      %v2624 = vadd.f32 %v2446, %v2616
      %v2625 = vadd.f32 %v2447, %v2618
      %v2626 = vadd.f32 %v2448, %v2620
      %v2627 = vadd.f32 %v2449, %v2622
      %v2628 = vld [vmem:[%s4] sm:$0x3]
      %v2630 = vlaneseq
      %v2631 = vshrl.u32 %v2630, 7
      %v2632 = vsub.s32 0, %v2631
      %v2633 = vrot.slane %v2628, %v2632
      %v2634 = vlaneseq
      %v2635 = vshrl.u32 %v2634, 7
      %v2636 = vsub.s32 1, %v2635
      %v2637 = vrot.slane %v2628, %v2636
      %v2640 = vadd.f32 %v2624, %v2633
      %v2641 = vadd.f32 %v2625, %v2637
      %v2642 = vadd.f32 %v2626, %v2633
      %v2643 = vadd.f32 %v2627, %v2637
      %v2644 = vmax.f32 %v2640, 0.0
      %v2645 = vmax.f32 %v2641, 0.0
      %v2646 = vmax.f32 %v2642, 0.0
      %v2647 = vmax.f32 %v2643, 0.0
      %vm2652 = vcmask 1040384
      %v2653 = vrot.slane %v2644, 7
      %v2654 = vrot.slane %v2645, 7
      %v2655 = vrot.slane %v2646, 7
      %v2656 = vsel %vm2652, %v2653, %v2655
      %v2657 = vrot.slane %v2647, 7
      %v2658 = vsel %vm2652, %v2654, %v2657
      %s2665 = smul.addr %s1547, 8
      %s2666 = scalar_lea.vmem %s5, %s2665
      %2667 = vst [vmem:[%s2666] sm:$0xfe] %v2653
      %vm2668 = vcmask 130049
      %2669 = vst.msk [vmem:[%s2666 + $0x8] sm:$0xfe] %vm2668, %v2654
      %2670 = vst [vmem:[%s2666 + $0x10] sm:$0xff] %v2656
      %2671 = vst.msk [vmem:[%s2666 + $0x18] sm:$0xff] %vm36, %v2658
      %2672 = vst [vmem:[%s2666 + $0x20] sm:$0x1] %v2655
      %vm2673 = vcmask 122880
      %2674 = vst.msk [vmem:[%s2666 + $0x28] sm:$0x1] %vm2673, %v2657
    $region37: #{unet_forward.3} parent=1 // loop_footer
      %s1014 = sadd.s32 1, %s1010
    $region38: #{unet_forward.3} parent=1 // loop_footer_branch
      %1009 = sbr.rel target = $region34
    $region39: #{unet_forward.3} parent=1 // loop_exit
      _
    // Predicated region
    $region40: #{unet_forward.3} parent=1 // pred_check
      _
    $region41: #{unet_forward.3} parent=1 // pred_check_branch
      %2676 = sbr.rel (0) target = $region43
    $region42: #{unet_forward.3} parent=1 // pred_region
      _
    $region43: #{unet_forward.3} parent=1 // pred_fallthru
      _
    // Predicated region
    $region44: #{unet_forward.3} parent=1 // pred_check
      _
    $region45: #{unet_forward.3} parent=1 // pred_check_branch
      %2678 = sbr.rel (0) target = $region47
    $region46: #{unet_forward.3} parent=1 // pred_region
      _
    $region47: #{unet_forward.3} parent=1 // pred_fallthru
      _
    %2679 = vsyncpa [#allocation4], 1

// kernel: unet_forward.4
$region0: #{unet_forward.4}
  #allocation0 [shape = 'u32[]', space=smem, size = 0x4, offset = 0x4, fixed_abs, tag = 'smem constant byte address 0x4 - core index']
  #allocation1 [shape = 'u32[144,128]{1,0:T(1,128)}', space=vmem, size = 0x12000, scoped, tag = 'internal scratch']
  #allocation2 [shape = 'f32[10,10,160]{2,1,0:T(8,128)}', space=vmem, size = 0x28000, scoped, tag = 'scratch operand']
  %s0 = inlined_call_operand.vmem [shape: f32[10,10,80], index: 0, kind: input, shape index: {}]
  %s1 = inlined_call_operand.vmem [shape: bf16[9,80,160], index: 1, kind: input, shape index: {}]
  %s2 = inlined_call_operand.vmem [shape: f32[1,160], index: 2, kind: input, shape index: {}, may-alias: {2,4}]
  %s3 = inlined_call_operand.vmem [shape: bf16[9,160,160], index: 3, kind: input, shape index: {}]
  %s4 = inlined_call_operand.vmem [shape: f32[1,160], index: 4, kind: input, shape index: {}, may-alias: {2,4}]
  %s5 = inlined_call_operand.vmem [shape: f32[10,10,160], index: 5, kind: output, shape index: {}]
  %s6 = sld [smem:[#allocation0]]
  $region44: #{unet_forward.4} parent=0
    _
  %s8 = ssub.s32 1, %s6
  %s9 = scalar_select 0, %s8, %s6
  // Predicated region
  $region2: #{unet_forward.4} parent=0 // pred_check
    _
  $region3: #{unet_forward.4} parent=0 // pred_check_branch
    %11 = sbr.rel (0) target = $region5
  $region4: #{unet_forward.4} parent=0 // pred_region
    _
  $region5: #{unet_forward.4} parent=0 // pred_fallthru
    _
  // Predicated region
  $region6: #{unet_forward.4} parent=0 // pred_check
    _
  $region7: #{unet_forward.4} parent=0 // pred_check_branch
    %13 = sbr.rel (0) target = $region9
  $region8: #{unet_forward.4} parent=0 // pred_region
    _
  $region9: #{unet_forward.4} parent=0 // pred_fallthru
    _
  // Predicated region
  $region10: #{unet_forward.4} parent=0 // pred_check
    _
  $region11: #{unet_forward.4} parent=0 // pred_check_branch
    %15 = sbr.rel (0) target = $region13
  $region12: #{unet_forward.4} parent=0 // pred_region
    _
  $region13: #{unet_forward.4} parent=0 // pred_fallthru
    _
  // Predicated region
  $region14: #{unet_forward.4} parent=0 // pred_check
    _
  $region15: #{unet_forward.4} parent=0 // pred_check_branch
    %17 = sbr.rel (0) target = $region17
  $region16: #{unet_forward.4} parent=0 // pred_region
    _
  $region17: #{unet_forward.4} parent=0 // pred_fallthru
    _
  // Predicated region
  $region18: #{unet_forward.4} parent=0 // pred_check
    _
  $region19: #{unet_forward.4} parent=0 // pred_check_branch
    %19 = sbr.rel (0) target = $region21
  $region20: #{unet_forward.4} parent=0 // pred_region
    _
  $region21: #{unet_forward.4} parent=0 // pred_fallthru
    _
  %21 = vst [vmem:[#allocation2] sm:$0xff] 0.0
  %vm22 = vcmask 261120
  %23 = vst.msk [vmem:[#allocation2 + $0x8] sm:$0xff] %vm22, 0.0
  %24 = vst [vmem:[#allocation2 + $0x10] sm:$0x3] 0.0
  %vm25 = vcmask 254976
  %26 = vst.msk [vmem:[#allocation2 + $0x18] sm:$0x3] %vm25, 0.0
  %27 = vst [vmem:[#allocation2 + $0x20] sm:$0xff] 0.0
  %28 = vst.msk [vmem:[#allocation2 + $0x28] sm:$0xff] %vm22, 0.0
  %29 = vst [vmem:[#allocation2 + $0x30] sm:$0x3] 0.0
  %30 = vst.msk [vmem:[#allocation2 + $0x38] sm:$0x3] %vm25, 0.0
  %31 = vst [vmem:[#allocation2 + $0x40] sm:$0xff] 0.0
  %32 = vst.msk [vmem:[#allocation2 + $0x48] sm:$0xff] %vm22, 0.0
  %33 = vst [vmem:[#allocation2 + $0x50] sm:$0x3] 0.0
  %34 = vst.msk [vmem:[#allocation2 + $0x58] sm:$0x3] %vm25, 0.0
  %35 = vst [vmem:[#allocation2 + $0x60] sm:$0xff] 0.0
  %36 = vst.msk [vmem:[#allocation2 + $0x68] sm:$0xff] %vm22, 0.0
  %37 = vst [vmem:[#allocation2 + $0x70] sm:$0x3] 0.0
  %38 = vst.msk [vmem:[#allocation2 + $0x78] sm:$0x3] %vm25, 0.0
  %39 = vst [vmem:[#allocation2 + $0x80] sm:$0xff] 0.0
  %40 = vst.msk [vmem:[#allocation2 + $0x88] sm:$0xff] %vm22, 0.0
  %41 = vst [vmem:[#allocation2 + $0x90] sm:$0x3] 0.0
  %42 = vst.msk [vmem:[#allocation2 + $0x98] sm:$0x3] %vm25, 0.0
  %43 = vst [vmem:[#allocation2 + $0xa0] sm:$0xff] 0.0
  %44 = vst.msk [vmem:[#allocation2 + $0xa8] sm:$0xff] %vm22, 0.0
  %45 = vst [vmem:[#allocation2 + $0xb0] sm:$0x3] 0.0
  %46 = vst.msk [vmem:[#allocation2 + $0xb8] sm:$0x3] %vm25, 0.0
  %47 = vst [vmem:[#allocation2 + $0xc0] sm:$0xff] 0.0
  %48 = vst.msk [vmem:[#allocation2 + $0xc8] sm:$0xff] %vm22, 0.0
  %49 = vst [vmem:[#allocation2 + $0xd0] sm:$0x3] 0.0
  %50 = vst.msk [vmem:[#allocation2 + $0xd8] sm:$0x3] %vm25, 0.0
  %51 = vst [vmem:[#allocation2 + $0xe0] sm:$0xff] 0.0
  %52 = vst.msk [vmem:[#allocation2 + $0xe8] sm:$0xff] %vm22, 0.0
  %53 = vst [vmem:[#allocation2 + $0xf0] sm:$0x3] 0.0
  %54 = vst.msk [vmem:[#allocation2 + $0xf8] sm:$0x3] %vm25, 0.0
  %55 = vst [vmem:[#allocation2 + $0x100] sm:$0xff] 0.0
  %56 = vst.msk [vmem:[#allocation2 + $0x108] sm:$0xff] %vm22, 0.0
  %57 = vst [vmem:[#allocation2 + $0x110] sm:$0x3] 0.0
  %58 = vst.msk [vmem:[#allocation2 + $0x118] sm:$0x3] %vm25, 0.0
  %59 = vst [vmem:[#allocation2 + $0x120] sm:$0xff] 0.0
  %60 = vst.msk [vmem:[#allocation2 + $0x128] sm:$0xff] %vm22, 0.0
  %61 = vst [vmem:[#allocation2 + $0x130] sm:$0x3] 0.0
  %62 = vst.msk [vmem:[#allocation2 + $0x138] sm:$0x3] %vm25, 0.0
  %63 = vst [vmem:[%s5] sm:$0xff] 0.0
  %64 = vst.msk [vmem:[%s5 + $0x8] sm:$0xff] %vm22, 0.0
  %65 = vst [vmem:[%s5 + $0x10] sm:$0x3] 0.0
  %66 = vst.msk [vmem:[%s5 + $0x18] sm:$0x3] %vm25, 0.0
  %67 = vst [vmem:[%s5 + $0x20] sm:$0xff] 0.0
  %68 = vst.msk [vmem:[%s5 + $0x28] sm:$0xff] %vm22, 0.0
  %69 = vst [vmem:[%s5 + $0x30] sm:$0x3] 0.0
  %70 = vst.msk [vmem:[%s5 + $0x38] sm:$0x3] %vm25, 0.0
  %71 = vst [vmem:[%s5 + $0x40] sm:$0xff] 0.0
  %72 = vst.msk [vmem:[%s5 + $0x48] sm:$0xff] %vm22, 0.0
  %73 = vst [vmem:[%s5 + $0x50] sm:$0x3] 0.0
  %74 = vst.msk [vmem:[%s5 + $0x58] sm:$0x3] %vm25, 0.0
  %75 = vst [vmem:[%s5 + $0x60] sm:$0xff] 0.0
  %76 = vst.msk [vmem:[%s5 + $0x68] sm:$0xff] %vm22, 0.0
  %77 = vst [vmem:[%s5 + $0x70] sm:$0x3] 0.0
  %78 = vst.msk [vmem:[%s5 + $0x78] sm:$0x3] %vm25, 0.0
  %79 = vst [vmem:[%s5 + $0x80] sm:$0xff] 0.0
  %80 = vst.msk [vmem:[%s5 + $0x88] sm:$0xff] %vm22, 0.0
  %81 = vst [vmem:[%s5 + $0x90] sm:$0x3] 0.0
  %82 = vst.msk [vmem:[%s5 + $0x98] sm:$0x3] %vm25, 0.0
  %83 = vst [vmem:[%s5 + $0xa0] sm:$0xff] 0.0
  %84 = vst.msk [vmem:[%s5 + $0xa8] sm:$0xff] %vm22, 0.0
  %85 = vst [vmem:[%s5 + $0xb0] sm:$0x3] 0.0
  %86 = vst.msk [vmem:[%s5 + $0xb8] sm:$0x3] %vm25, 0.0
  %87 = vst [vmem:[%s5 + $0xc0] sm:$0xff] 0.0
  %88 = vst.msk [vmem:[%s5 + $0xc8] sm:$0xff] %vm22, 0.0
  %89 = vst [vmem:[%s5 + $0xd0] sm:$0x3] 0.0
  %90 = vst.msk [vmem:[%s5 + $0xd8] sm:$0x3] %vm25, 0.0
  %91 = vst [vmem:[%s5 + $0xe0] sm:$0xff] 0.0
  %92 = vst.msk [vmem:[%s5 + $0xe8] sm:$0xff] %vm22, 0.0
  %93 = vst [vmem:[%s5 + $0xf0] sm:$0x3] 0.0
  %94 = vst.msk [vmem:[%s5 + $0xf8] sm:$0x3] %vm25, 0.0
  %95 = vst [vmem:[%s5 + $0x100] sm:$0xff] 0.0
  %96 = vst.msk [vmem:[%s5 + $0x108] sm:$0xff] %vm22, 0.0
  %97 = vst [vmem:[%s5 + $0x110] sm:$0x3] 0.0
  %98 = vst.msk [vmem:[%s5 + $0x118] sm:$0x3] %vm25, 0.0
  %99 = vst [vmem:[%s5 + $0x120] sm:$0xff] 0.0
  %100 = vst.msk [vmem:[%s5 + $0x128] sm:$0xff] %vm22, 0.0
  %101 = vst [vmem:[%s5 + $0x130] sm:$0x3] 0.0
  %102 = vst.msk [vmem:[%s5 + $0x138] sm:$0x3] %vm25, 0.0
  loop: start=0, step=1, limit=8
  $region22: #{unet_forward.4} parent=0 // loop_pre_header
    _
  $region23: #{unet_forward.4} parent=0 // loop_header
    %s104 = sphi 0, %s108
    %p105 = scmp.ge.s32.totalorder %s104, 8
  $region24: #{unet_forward.4} parent=0 // loop_header_branch
    %107 = sbr.rel (%p105) target = $region28
  $region25: #{unet_forward.4} parent=0 // loop_body
    %s109 = smul.u32 %s104, 16
    %s110 = scalar_lea.vmem %s0, %s109
    %v111 = vld [vmem:[%s110] sm:$0xff]
    %v112 = vpack.c.bf16 %v111, %v111
    %v113 = vld [vmem:[%s1] sm:$0xff]
    %v114 = vld [vmem:[%s1 + $0x8] sm:$0xff]
    %v115 = vld [vmem:[%s1 + $0x10] sm:$0xff]
    %v116 = vld [vmem:[%s1 + $0x18] sm:$0xff]
    %v117 = vld [vmem:[%s1 + $0x20] sm:$0xff]
    %v118 = vld [vmem:[%s1 + $0x28] sm:$0xff]
    %v119 = vld [vmem:[%s1 + $0x30] sm:$0xff]
    %v120 = vld [vmem:[%s1 + $0x38] sm:$0xff]
    %v121 = vld [vmem:[%s1 + $0x40] sm:$0xff]
    %v122 = vld [vmem:[%s1 + $0x48] sm:$0xff]
    %v123 = vld [vmem:[%s110 + $0x1] sm:$0xff]
    %v124 = vpack.c.bf16 %v123, %v123
    %s125 = scalar_lea.vmem %s1, 80
    %v126 = vld [vmem:[%s125] sm:$0xff]
    %v127 = vld [vmem:[%s125 + $0x8] sm:$0xff]
    %v128 = vld [vmem:[%s125 + $0x10] sm:$0xff]
    %v129 = vld [vmem:[%s125 + $0x18] sm:$0xff]
    %v130 = vld [vmem:[%s125 + $0x20] sm:$0xff]
    %v131 = vld [vmem:[%s125 + $0x28] sm:$0xff]
    %v132 = vld [vmem:[%s125 + $0x30] sm:$0xff]
    %v133 = vld [vmem:[%s125 + $0x38] sm:$0xff]
    %v134 = vld [vmem:[%s125 + $0x40] sm:$0xff]
    %v135 = vld [vmem:[%s125 + $0x48] sm:$0xff]
    %v146 = vunpack.c.l.b16 %v126
    %v147 = vunpack.c.h.b16 %v126
    %v148 = vunpack.c.l.b16 %v127
    %v149 = vunpack.c.h.b16 %v127
    %v150 = vunpack.c.l.b16 %v128
    %v151 = vunpack.c.h.b16 %v128
    %v152 = vunpack.c.l.b16 %v129
    %v153 = vunpack.c.h.b16 %v129
    %v154 = vunpack.c.l.b16 %v130
    %v155 = vunpack.c.h.b16 %v130
    %v156 = vunpack.c.l.b16 %v131
    %v157 = vunpack.c.h.b16 %v131
    %v158 = vunpack.c.l.b16 %v132
    %v159 = vunpack.c.h.b16 %v132
    %v160 = vunpack.c.l.b16 %v133
    %v161 = vunpack.c.h.b16 %v133
    %v162 = vunpack.c.l.b16 %v134
    %v163 = vunpack.c.h.b16 %v134
    %v164 = vunpack.c.l.b16 %v135
    %v165 = vunpack.c.h.b16 %v135
    %v166 = vpack.c.b16 %v148, %v146
    %v167 = vpack.c.b16 %v149, %v147
    %v168 = vpack.c.b16 %v152, %v150
    %v169 = vpack.c.b16 %v153, %v151
    %v170 = vpack.c.b16 %v156, %v154
    %v171 = vpack.c.b16 %v157, %v155
    %v172 = vpack.c.b16 %v160, %v158
    %v173 = vpack.c.b16 %v161, %v159
    %v174 = vpack.c.b16 %v164, %v162
    %v175 = vpack.c.b16 %v165, %v163
    %vm186 = vcmask 654336
    %v188 = vsel %vm186, %v124, 0
    %190 = vmatprep.subr.bf16.mxu0 %v167
    %191 = vmatpush1.bf16.msra.mxu0 %v166
    %192 = vmatprep.subr.bf16.mxu0 %v169
    %193 = vmatpush1.bf16.msra.mxu0 %v168
    %194 = vmatprep.subr.bf16.mxu0 %v171
    %195 = vmatpush1.bf16.msra.mxu0 %v170
    %196 = vmatprep.subr.bf16.mxu0 %v173
    %197 = vmatpush1.bf16.msra.mxu0 %v172
    %198 = vmatprep.subr.bf16.mxu0 %v175
    %199 = vmatpush1.bf16.msra.mxu0 %v174
    %200 = vmatprep.subr.bf16.mxu0 0
    %201 = vmatpush1.bf16.msra.mxu0 0
    %202 = vmatprep.subr.bf16.mxu0 0
    %203 = vmatpush1.bf16.msra.mxu0 0
    %204 = vmatprep.subr.bf16.mxu0 0
    %205 = vmatpush1.bf16.msra.mxu0 0
    %206 = vmatprep.subr.bf16.mxu0 0
    %207 = vmatpush1.bf16.msra.mxu0 0
    %208 = vmatprep.subr.bf16.mxu0 0
    %209 = vmatpush1.bf16.msra.mxu0 0
    %210 = vmatprep.subr.bf16.mxu0 0
    %211 = vmatpush1.bf16.msra.mxu0 0
    %212 = vmatprep.subr.bf16.mxu0 0
    %213 = vmatpush1.bf16.msra.mxu0 0
    %214 = vmatprep.subr.bf16.mxu0 0
    %215 = vmatpush1.bf16.msra.mxu0 0
    %216 = vmatprep.subr.bf16.mxu0 0
    %217 = vmatpush1.bf16.msra.mxu0 0
    %218 = vmatprep.subr.bf16.mxu0 0
    %219 = vmatpush1.bf16.msra.mxu0 0
    %220 = vmatprep.subr.bf16.mxu0 0
    %221 = vmatpush1.bf16.msra.mxu0 0
    %222 = vmatprep.mubr.bf16.mxu0 0
    %223 = vmatmul.mubr.bf16.gmra.mrb[0].mxu0 %v188
    %v224 = vpop.f32.mrb[0].mxu0
    %v225 = vadd.f32 0.0, %v224
    %v226 = vpop.f32.mrb[0].mxu0
    %v227 = vadd.f32 0.0, %v226
    %v228 = vpop.f32.mrb[0].mxu0
    %v229 = vpop.f32.mrb[0].mxu0
    %230 = vdwg.mxu0
    %v241 = vunpack.c.l.b16 %v113
    %v242 = vunpack.c.h.b16 %v113
    %v243 = vunpack.c.l.b16 %v114
    %v244 = vunpack.c.h.b16 %v114
    %v245 = vunpack.c.l.b16 %v115
    %v246 = vunpack.c.h.b16 %v115
    %v247 = vunpack.c.l.b16 %v116
    %v248 = vunpack.c.h.b16 %v116
    %v249 = vunpack.c.l.b16 %v117
    %v250 = vunpack.c.h.b16 %v117
    %v251 = vunpack.c.l.b16 %v118
    %v252 = vunpack.c.h.b16 %v118
    %v253 = vunpack.c.l.b16 %v119
    %v254 = vunpack.c.h.b16 %v119
    %v255 = vunpack.c.l.b16 %v120
    %v256 = vunpack.c.h.b16 %v120
    %v257 = vunpack.c.l.b16 %v121
    %v258 = vunpack.c.h.b16 %v121
    %v259 = vunpack.c.l.b16 %v122
    %v260 = vunpack.c.h.b16 %v122
    %v261 = vpack.c.b16 %v243, %v241
    %v262 = vpack.c.b16 %v244, %v242
    %v263 = vpack.c.b16 %v247, %v245
    %v264 = vpack.c.b16 %v248, %v246
    %v265 = vpack.c.b16 %v251, %v249
    %v266 = vpack.c.b16 %v252, %v250
    %v267 = vpack.c.b16 %v255, %v253
    %v268 = vpack.c.b16 %v256, %v254
    %v269 = vpack.c.b16 %v259, %v257
    %v270 = vpack.c.b16 %v260, %v258
    %v282 = vsel %vm186, %v112, 0
    %284 = vmatprep.subr.bf16.mxu0 %v262
    %285 = vmatpush1.bf16.msra.mxu0 %v261
    %286 = vmatprep.subr.bf16.mxu0 %v264
    %287 = vmatpush1.bf16.msra.mxu0 %v263
    %288 = vmatprep.subr.bf16.mxu0 %v266
    %289 = vmatpush1.bf16.msra.mxu0 %v265
    %290 = vmatprep.subr.bf16.mxu0 %v268
    %291 = vmatpush1.bf16.msra.mxu0 %v267
    %292 = vmatprep.subr.bf16.mxu0 %v270
    %293 = vmatpush1.bf16.msra.mxu0 %v269
    %294 = vmatprep.subr.bf16.mxu0 0
    %295 = vmatpush1.bf16.msra.mxu0 0
    %296 = vmatprep.subr.bf16.mxu0 0
    %297 = vmatpush1.bf16.msra.mxu0 0
    %298 = vmatprep.subr.bf16.mxu0 0
    %299 = vmatpush1.bf16.msra.mxu0 0
    %300 = vmatprep.subr.bf16.mxu0 0
    %301 = vmatpush1.bf16.msra.mxu0 0
    %302 = vmatprep.subr.bf16.mxu0 0
    %303 = vmatpush1.bf16.msra.mxu0 0
    %304 = vmatprep.subr.bf16.mxu0 0
    %305 = vmatpush1.bf16.msra.mxu0 0
    %306 = vmatprep.subr.bf16.mxu0 0
    %307 = vmatpush1.bf16.msra.mxu0 0
    %308 = vmatprep.subr.bf16.mxu0 0
    %309 = vmatpush1.bf16.msra.mxu0 0
    %310 = vmatprep.subr.bf16.mxu0 0
    %311 = vmatpush1.bf16.msra.mxu0 0
    %312 = vmatprep.subr.bf16.mxu0 0
    %313 = vmatpush1.bf16.msra.mxu0 0
    %314 = vmatprep.subr.bf16.mxu0 0
    %315 = vmatpush1.bf16.msra.mxu0 0
    %316 = vmatprep.mubr.bf16.mxu0 0
    %317 = vmatmul.mubr.bf16.gmra.mrb[0].mxu0 %v282
    %v318 = vpop.f32.mrb[0].mxu0
    %v319 = vadd.f32 %v225, %v318
    %v320 = vpop.f32.mrb[0].mxu0
    %v321 = vadd.f32 %v227, %v320
    %v322 = vpop.f32.mrb[0].mxu0
    %v323 = vpop.f32.mrb[0].mxu0
    %324 = vdwg.mxu0
    %v325 = vld [vmem:[%s110 + $0x2] sm:$0xff]
    %v326 = vpack.c.bf16 %v325, %v325
    %s327 = scalar_lea.vmem %s1, 160
    %v328 = vld [vmem:[%s327] sm:$0xff]
    %v329 = vld [vmem:[%s327 + $0x8] sm:$0xff]
    %v330 = vld [vmem:[%s327 + $0x10] sm:$0xff]
    %v331 = vld [vmem:[%s327 + $0x18] sm:$0xff]
    %v332 = vld [vmem:[%s327 + $0x20] sm:$0xff]
    %v333 = vld [vmem:[%s327 + $0x28] sm:$0xff]
    %v334 = vld [vmem:[%s327 + $0x30] sm:$0xff]
    %v335 = vld [vmem:[%s327 + $0x38] sm:$0xff]
    %v336 = vld [vmem:[%s327 + $0x40] sm:$0xff]
    %v337 = vld [vmem:[%s327 + $0x48] sm:$0xff]
    %v348 = vunpack.c.l.b16 %v328
    %v349 = vunpack.c.h.b16 %v328
    %v350 = vunpack.c.l.b16 %v329
    %v351 = vunpack.c.h.b16 %v329
    %v352 = vunpack.c.l.b16 %v330
    %v353 = vunpack.c.h.b16 %v330
    %v354 = vunpack.c.l.b16 %v331
    %v355 = vunpack.c.h.b16 %v331
    %v356 = vunpack.c.l.b16 %v332
    %v357 = vunpack.c.h.b16 %v332
    %v358 = vunpack.c.l.b16 %v333
    %v359 = vunpack.c.h.b16 %v333
    %v360 = vunpack.c.l.b16 %v334
    %v361 = vunpack.c.h.b16 %v334
    %v362 = vunpack.c.l.b16 %v335
    %v363 = vunpack.c.h.b16 %v335
    %v364 = vunpack.c.l.b16 %v336
    %v365 = vunpack.c.h.b16 %v336
    %v366 = vunpack.c.l.b16 %v337
    %v367 = vunpack.c.h.b16 %v337
    %v368 = vpack.c.b16 %v350, %v348
    %v369 = vpack.c.b16 %v351, %v349
    %v370 = vpack.c.b16 %v354, %v352
    %v371 = vpack.c.b16 %v355, %v353
    %v372 = vpack.c.b16 %v358, %v356
    %v373 = vpack.c.b16 %v359, %v357
    %v374 = vpack.c.b16 %v362, %v360
    %v375 = vpack.c.b16 %v363, %v361
    %v376 = vpack.c.b16 %v366, %v364
    %v377 = vpack.c.b16 %v367, %v365
    %v389 = vsel %vm186, %v326, 0
    %391 = vmatprep.subr.bf16.mxu0 %v369
    %392 = vmatpush1.bf16.msra.mxu0 %v368
    %393 = vmatprep.subr.bf16.mxu0 %v371
    %394 = vmatpush1.bf16.msra.mxu0 %v370
    %395 = vmatprep.subr.bf16.mxu0 %v373
    %396 = vmatpush1.bf16.msra.mxu0 %v372
    %397 = vmatprep.subr.bf16.mxu0 %v375
    %398 = vmatpush1.bf16.msra.mxu0 %v374
    %399 = vmatprep.subr.bf16.mxu0 %v377
    %400 = vmatpush1.bf16.msra.mxu0 %v376
    %401 = vmatprep.subr.bf16.mxu0 0
    %402 = vmatpush1.bf16.msra.mxu0 0
    %403 = vmatprep.subr.bf16.mxu0 0
    %404 = vmatpush1.bf16.msra.mxu0 0
    %405 = vmatprep.subr.bf16.mxu0 0
    %406 = vmatpush1.bf16.msra.mxu0 0
    %407 = vmatprep.subr.bf16.mxu0 0
    %408 = vmatpush1.bf16.msra.mxu0 0
    %409 = vmatprep.subr.bf16.mxu0 0
    %410 = vmatpush1.bf16.msra.mxu0 0
    %411 = vmatprep.subr.bf16.mxu0 0
    %412 = vmatpush1.bf16.msra.mxu0 0
    %413 = vmatprep.subr.bf16.mxu0 0
    %414 = vmatpush1.bf16.msra.mxu0 0
    %415 = vmatprep.subr.bf16.mxu0 0
    %416 = vmatpush1.bf16.msra.mxu0 0
    %417 = vmatprep.subr.bf16.mxu0 0
    %418 = vmatpush1.bf16.msra.mxu0 0
    %419 = vmatprep.subr.bf16.mxu0 0
    %420 = vmatpush1.bf16.msra.mxu0 0
    %421 = vmatprep.subr.bf16.mxu0 0
    %422 = vmatpush1.bf16.msra.mxu0 0
    %423 = vmatprep.mubr.bf16.mxu0 0
    %424 = vmatmul.mubr.bf16.gmra.mrb[0].mxu0 %v389
    %v425 = vpop.f32.mrb[0].mxu0
    %v426 = vadd.f32 0.0, %v425
    %v427 = vpop.f32.mrb[0].mxu0
    %v428 = vadd.f32 0.0, %v427
    %v429 = vpop.f32.mrb[0].mxu0
    %v430 = vpop.f32.mrb[0].mxu0
    %431 = vdwg.mxu0
    %v432 = vadd.f32 %v319, %v426
    %v433 = vadd.f32 %v321, %v428
    %s434 = sadd.s32 %s104, 1
    %s435 = smul.u32 %s434, 16
    %s436 = scalar_lea.vmem %s0, %s435
    %v437 = vld [vmem:[%s436] sm:$0xff]
    %v438 = vpack.c.bf16 %v437, %v437
    %s439 = scalar_lea.vmem %s1, 240
    %v440 = vld [vmem:[%s439] sm:$0xff]
    %v441 = vld [vmem:[%s439 + $0x8] sm:$0xff]
    %v442 = vld [vmem:[%s439 + $0x10] sm:$0xff]
    %v443 = vld [vmem:[%s439 + $0x18] sm:$0xff]
    %v444 = vld [vmem:[%s439 + $0x20] sm:$0xff]
    %v445 = vld [vmem:[%s439 + $0x28] sm:$0xff]
    %v446 = vld [vmem:[%s439 + $0x30] sm:$0xff]
    %v447 = vld [vmem:[%s439 + $0x38] sm:$0xff]
    %v448 = vld [vmem:[%s439 + $0x40] sm:$0xff]
    %v449 = vld [vmem:[%s439 + $0x48] sm:$0xff]
    %v460 = vunpack.c.l.b16 %v440
    %v461 = vunpack.c.h.b16 %v440
    %v462 = vunpack.c.l.b16 %v441
    %v463 = vunpack.c.h.b16 %v441
    %v464 = vunpack.c.l.b16 %v442
    %v465 = vunpack.c.h.b16 %v442
    %v466 = vunpack.c.l.b16 %v443
    %v467 = vunpack.c.h.b16 %v443
    %v468 = vunpack.c.l.b16 %v444
    %v469 = vunpack.c.h.b16 %v444
    %v470 = vunpack.c.l.b16 %v445
    %v471 = vunpack.c.h.b16 %v445
    %v472 = vunpack.c.l.b16 %v446
    %v473 = vunpack.c.h.b16 %v446
    %v474 = vunpack.c.l.b16 %v447
    %v475 = vunpack.c.h.b16 %v447
    %v476 = vunpack.c.l.b16 %v448
    %v477 = vunpack.c.h.b16 %v448
    %v478 = vunpack.c.l.b16 %v449
    %v479 = vunpack.c.h.b16 %v449
    %v480 = vpack.c.b16 %v462, %v460
    %v481 = vpack.c.b16 %v463, %v461
    %v482 = vpack.c.b16 %v466, %v464
    %v483 = vpack.c.b16 %v467, %v465
    %v484 = vpack.c.b16 %v470, %v468
    %v485 = vpack.c.b16 %v471, %v469
    %v486 = vpack.c.b16 %v474, %v472
    %v487 = vpack.c.b16 %v475, %v473
    %v488 = vpack.c.b16 %v478, %v476
    %v489 = vpack.c.b16 %v479, %v477
    %v501 = vsel %vm186, %v438, 0
    %503 = vmatprep.subr.bf16.mxu0 %v481
    %504 = vmatpush1.bf16.msra.mxu0 %v480
    %505 = vmatprep.subr.bf16.mxu0 %v483
    %506 = vmatpush1.bf16.msra.mxu0 %v482
    %507 = vmatprep.subr.bf16.mxu0 %v485
    %508 = vmatpush1.bf16.msra.mxu0 %v484
    %509 = vmatprep.subr.bf16.mxu0 %v487
    %510 = vmatpush1.bf16.msra.mxu0 %v486
    %511 = vmatprep.subr.bf16.mxu0 %v489
    %512 = vmatpush1.bf16.msra.mxu0 %v488
    %513 = vmatprep.subr.bf16.mxu0 0
    %514 = vmatpush1.bf16.msra.mxu0 0
    %515 = vmatprep.subr.bf16.mxu0 0
    %516 = vmatpush1.bf16.msra.mxu0 0
    %517 = vmatprep.subr.bf16.mxu0 0
    %518 = vmatpush1.bf16.msra.mxu0 0
    %519 = vmatprep.subr.bf16.mxu0 0
    %520 = vmatpush1.bf16.msra.mxu0 0
    %521 = vmatprep.subr.bf16.mxu0 0
    %522 = vmatpush1.bf16.msra.mxu0 0
    %523 = vmatprep.subr.bf16.mxu0 0
    %524 = vmatpush1.bf16.msra.mxu0 0
    %525 = vmatprep.subr.bf16.mxu0 0
    %526 = vmatpush1.bf16.msra.mxu0 0
    %527 = vmatprep.subr.bf16.mxu0 0
    %528 = vmatpush1.bf16.msra.mxu0 0
    %529 = vmatprep.subr.bf16.mxu0 0
    %530 = vmatpush1.bf16.msra.mxu0 0
    %531 = vmatprep.subr.bf16.mxu0 0
    %532 = vmatpush1.bf16.msra.mxu0 0
    %533 = vmatprep.subr.bf16.mxu0 0
    %534 = vmatpush1.bf16.msra.mxu0 0
    %535 = vmatprep.mubr.bf16.mxu0 0
    %536 = vmatmul.mubr.bf16.gmra.mrb[0].mxu0 %v501
    %v537 = vpop.f32.mrb[0].mxu0
    %v538 = vadd.f32 0.0, %v537
    %v539 = vpop.f32.mrb[0].mxu0
    %v540 = vadd.f32 0.0, %v539
    %v541 = vpop.f32.mrb[0].mxu0
    %v542 = vpop.f32.mrb[0].mxu0
    %543 = vdwg.mxu0
    %v544 = vadd.f32 %v432, %v538
    %v545 = vadd.f32 %v433, %v540
    %v546 = vld [vmem:[%s436 + $0x1] sm:$0xff]
    %v547 = vpack.c.bf16 %v546, %v546
    %s548 = scalar_lea.vmem %s1, 320
    %v549 = vld [vmem:[%s548] sm:$0xff]
    %v550 = vld [vmem:[%s548 + $0x8] sm:$0xff]
    %v551 = vld [vmem:[%s548 + $0x10] sm:$0xff]
    %v552 = vld [vmem:[%s548 + $0x18] sm:$0xff]
    %v553 = vld [vmem:[%s548 + $0x20] sm:$0xff]
    %v554 = vld [vmem:[%s548 + $0x28] sm:$0xff]
    %v555 = vld [vmem:[%s548 + $0x30] sm:$0xff]
    %v556 = vld [vmem:[%s548 + $0x38] sm:$0xff]
    %v557 = vld [vmem:[%s548 + $0x40] sm:$0xff]
    %v558 = vld [vmem:[%s548 + $0x48] sm:$0xff]
    %v569 = vunpack.c.l.b16 %v549
    %v570 = vunpack.c.h.b16 %v549
    %v571 = vunpack.c.l.b16 %v550
    %v572 = vunpack.c.h.b16 %v550
    %v573 = vunpack.c.l.b16 %v551
    %v574 = vunpack.c.h.b16 %v551
    %v575 = vunpack.c.l.b16 %v552
    %v576 = vunpack.c.h.b16 %v552
    %v577 = vunpack.c.l.b16 %v553
    %v578 = vunpack.c.h.b16 %v553
    %v579 = vunpack.c.l.b16 %v554
    %v580 = vunpack.c.h.b16 %v554
    %v581 = vunpack.c.l.b16 %v555
    %v582 = vunpack.c.h.b16 %v555
    %v583 = vunpack.c.l.b16 %v556
    %v584 = vunpack.c.h.b16 %v556
    %v585 = vunpack.c.l.b16 %v557
    %v586 = vunpack.c.h.b16 %v557
    %v587 = vunpack.c.l.b16 %v558
    %v588 = vunpack.c.h.b16 %v558
    %v589 = vpack.c.b16 %v571, %v569
    %v590 = vpack.c.b16 %v572, %v570
    %v591 = vpack.c.b16 %v575, %v573
    %v592 = vpack.c.b16 %v576, %v574
    %v593 = vpack.c.b16 %v579, %v577
    %v594 = vpack.c.b16 %v580, %v578
    %v595 = vpack.c.b16 %v583, %v581
    %v596 = vpack.c.b16 %v584, %v582
    %v597 = vpack.c.b16 %v587, %v585
    %v598 = vpack.c.b16 %v588, %v586
    %v610 = vsel %vm186, %v547, 0
    %612 = vmatprep.subr.bf16.mxu0 %v590
    %613 = vmatpush1.bf16.msra.mxu0 %v589
    %614 = vmatprep.subr.bf16.mxu0 %v592
    %615 = vmatpush1.bf16.msra.mxu0 %v591
    %616 = vmatprep.subr.bf16.mxu0 %v594
    %617 = vmatpush1.bf16.msra.mxu0 %v593
    %618 = vmatprep.subr.bf16.mxu0 %v596
    %619 = vmatpush1.bf16.msra.mxu0 %v595
    %620 = vmatprep.subr.bf16.mxu0 %v598
    %621 = vmatpush1.bf16.msra.mxu0 %v597
    %622 = vmatprep.subr.bf16.mxu0 0
    %623 = vmatpush1.bf16.msra.mxu0 0
    %624 = vmatprep.subr.bf16.mxu0 0
    %625 = vmatpush1.bf16.msra.mxu0 0
    %626 = vmatprep.subr.bf16.mxu0 0
    %627 = vmatpush1.bf16.msra.mxu0 0
    %628 = vmatprep.subr.bf16.mxu0 0
    %629 = vmatpush1.bf16.msra.mxu0 0
    %630 = vmatprep.subr.bf16.mxu0 0
    %631 = vmatpush1.bf16.msra.mxu0 0
    %632 = vmatprep.subr.bf16.mxu0 0
    %633 = vmatpush1.bf16.msra.mxu0 0
    %634 = vmatprep.subr.bf16.mxu0 0
    %635 = vmatpush1.bf16.msra.mxu0 0
    %636 = vmatprep.subr.bf16.mxu0 0
    %637 = vmatpush1.bf16.msra.mxu0 0
    %638 = vmatprep.subr.bf16.mxu0 0
    %639 = vmatpush1.bf16.msra.mxu0 0
    %640 = vmatprep.subr.bf16.mxu0 0
    %641 = vmatpush1.bf16.msra.mxu0 0
    %642 = vmatprep.subr.bf16.mxu0 0
    %643 = vmatpush1.bf16.msra.mxu0 0
    %644 = vmatprep.mubr.bf16.mxu0 0
    %645 = vmatmul.mubr.bf16.gmra.mrb[0].mxu0 %v610
    %v646 = vpop.f32.mrb[0].mxu0
    %v647 = vadd.f32 0.0, %v646
    %v648 = vpop.f32.mrb[0].mxu0
    %v649 = vadd.f32 0.0, %v648
    %v650 = vpop.f32.mrb[0].mxu0
    %v651 = vpop.f32.mrb[0].mxu0
    %652 = vdwg.mxu0
    %v653 = vadd.f32 %v544, %v647
    %v654 = vadd.f32 %v545, %v649
    %v655 = vld [vmem:[%s436 + $0x2] sm:$0xff]
    %v656 = vpack.c.bf16 %v655, %v655
    %s657 = scalar_lea.vmem %s1, 400
    %v658 = vld [vmem:[%s657] sm:$0xff]
    %v659 = vld [vmem:[%s657 + $0x8] sm:$0xff]
    %v660 = vld [vmem:[%s657 + $0x10] sm:$0xff]
    %v661 = vld [vmem:[%s657 + $0x18] sm:$0xff]
    %v662 = vld [vmem:[%s657 + $0x20] sm:$0xff]
    %v663 = vld [vmem:[%s657 + $0x28] sm:$0xff]
    %v664 = vld [vmem:[%s657 + $0x30] sm:$0xff]
    %v665 = vld [vmem:[%s657 + $0x38] sm:$0xff]
    %v666 = vld [vmem:[%s657 + $0x40] sm:$0xff]
    %v667 = vld [vmem:[%s657 + $0x48] sm:$0xff]
    %v678 = vunpack.c.l.b16 %v658
    %v679 = vunpack.c.h.b16 %v658
    %v680 = vunpack.c.l.b16 %v659
    %v681 = vunpack.c.h.b16 %v659
    %v682 = vunpack.c.l.b16 %v660
    %v683 = vunpack.c.h.b16 %v660
    %v684 = vunpack.c.l.b16 %v661
    %v685 = vunpack.c.h.b16 %v661
    %v686 = vunpack.c.l.b16 %v662
    %v687 = vunpack.c.h.b16 %v662
    %v688 = vunpack.c.l.b16 %v663
    %v689 = vunpack.c.h.b16 %v663
    %v690 = vunpack.c.l.b16 %v664
    %v691 = vunpack.c.h.b16 %v664
    %v692 = vunpack.c.l.b16 %v665
    %v693 = vunpack.c.h.b16 %v665
    %v694 = vunpack.c.l.b16 %v666
    %v695 = vunpack.c.h.b16 %v666
    %v696 = vunpack.c.l.b16 %v667
    %v697 = vunpack.c.h.b16 %v667
    %v698 = vpack.c.b16 %v680, %v678
    %v699 = vpack.c.b16 %v681, %v679
    %v700 = vpack.c.b16 %v684, %v682
    %v701 = vpack.c.b16 %v685, %v683
    %v702 = vpack.c.b16 %v688, %v686
    %v703 = vpack.c.b16 %v689, %v687
    %v704 = vpack.c.b16 %v692, %v690
    %v705 = vpack.c.b16 %v693, %v691
    %v706 = vpack.c.b16 %v696, %v694
    %v707 = vpack.c.b16 %v697, %v695
    %v719 = vsel %vm186, %v656, 0
    %721 = vmatprep.subr.bf16.mxu0 %v699
    %722 = vmatpush1.bf16.msra.mxu0 %v698
    %723 = vmatprep.subr.bf16.mxu0 %v701
    %724 = vmatpush1.bf16.msra.mxu0 %v700
    %725 = vmatprep.subr.bf16.mxu0 %v703
    %726 = vmatpush1.bf16.msra.mxu0 %v702
    %727 = vmatprep.subr.bf16.mxu0 %v705
    %728 = vmatpush1.bf16.msra.mxu0 %v704
    %729 = vmatprep.subr.bf16.mxu0 %v707
    %730 = vmatpush1.bf16.msra.mxu0 %v706
    %731 = vmatprep.subr.bf16.mxu0 0
    %732 = vmatpush1.bf16.msra.mxu0 0
    %733 = vmatprep.subr.bf16.mxu0 0
    %734 = vmatpush1.bf16.msra.mxu0 0
    %735 = vmatprep.subr.bf16.mxu0 0
    %736 = vmatpush1.bf16.msra.mxu0 0
    %737 = vmatprep.subr.bf16.mxu0 0
    %738 = vmatpush1.bf16.msra.mxu0 0
    %739 = vmatprep.subr.bf16.mxu0 0
    %740 = vmatpush1.bf16.msra.mxu0 0
    %741 = vmatprep.subr.bf16.mxu0 0
    %742 = vmatpush1.bf16.msra.mxu0 0
    %743 = vmatprep.subr.bf16.mxu0 0
    %744 = vmatpush1.bf16.msra.mxu0 0
    %745 = vmatprep.subr.bf16.mxu0 0
    %746 = vmatpush1.bf16.msra.mxu0 0
    %747 = vmatprep.subr.bf16.mxu0 0
    %748 = vmatpush1.bf16.msra.mxu0 0
    %749 = vmatprep.subr.bf16.mxu0 0
    %750 = vmatpush1.bf16.msra.mxu0 0
    %751 = vmatprep.subr.bf16.mxu0 0
    %752 = vmatpush1.bf16.msra.mxu0 0
    %753 = vmatprep.mubr.bf16.mxu0 0
    %754 = vmatmul.mubr.bf16.gmra.mrb[0].mxu0 %v719
    %v755 = vpop.f32.mrb[0].mxu0
    %v756 = vadd.f32 0.0, %v755
    %v757 = vpop.f32.mrb[0].mxu0
    %v758 = vadd.f32 0.0, %v757
    %v759 = vpop.f32.mrb[0].mxu0
    %v760 = vpop.f32.mrb[0].mxu0
    %761 = vdwg.mxu0
    %v762 = vadd.f32 %v653, %v756
    %v763 = vadd.f32 %v654, %v758
    %s764 = sadd.s32 %s104, 2
    %s765 = smul.u32 %s764, 16
    %s766 = scalar_lea.vmem %s0, %s765
    %v767 = vld [vmem:[%s766] sm:$0xff]
    %v768 = vpack.c.bf16 %v767, %v767
    %s769 = scalar_lea.vmem %s1, 480
    %v770 = vld [vmem:[%s769] sm:$0xff]
    %v771 = vld [vmem:[%s769 + $0x8] sm:$0xff]
    %v772 = vld [vmem:[%s769 + $0x10] sm:$0xff]
    %v773 = vld [vmem:[%s769 + $0x18] sm:$0xff]
    %v774 = vld [vmem:[%s769 + $0x20] sm:$0xff]
    %v775 = vld [vmem:[%s769 + $0x28] sm:$0xff]
    %v776 = vld [vmem:[%s769 + $0x30] sm:$0xff]
    %v777 = vld [vmem:[%s769 + $0x38] sm:$0xff]
    %v778 = vld [vmem:[%s769 + $0x40] sm:$0xff]
    %v779 = vld [vmem:[%s769 + $0x48] sm:$0xff]
    %v790 = vunpack.c.l.b16 %v770
    %v791 = vunpack.c.h.b16 %v770
    %v792 = vunpack.c.l.b16 %v771
    %v793 = vunpack.c.h.b16 %v771
    %v794 = vunpack.c.l.b16 %v772
    %v795 = vunpack.c.h.b16 %v772
    %v796 = vunpack.c.l.b16 %v773
    %v797 = vunpack.c.h.b16 %v773
    %v798 = vunpack.c.l.b16 %v774
    %v799 = vunpack.c.h.b16 %v774
    %v800 = vunpack.c.l.b16 %v775
    %v801 = vunpack.c.h.b16 %v775
    %v802 = vunpack.c.l.b16 %v776
    %v803 = vunpack.c.h.b16 %v776
    %v804 = vunpack.c.l.b16 %v777
    %v805 = vunpack.c.h.b16 %v777
    %v806 = vunpack.c.l.b16 %v778
    %v807 = vunpack.c.h.b16 %v778
    %v808 = vunpack.c.l.b16 %v779
    %v809 = vunpack.c.h.b16 %v779
    %v810 = vpack.c.b16 %v792, %v790
    %v811 = vpack.c.b16 %v793, %v791
    %v812 = vpack.c.b16 %v796, %v794
    %v813 = vpack.c.b16 %v797, %v795
    %v814 = vpack.c.b16 %v800, %v798
    %v815 = vpack.c.b16 %v801, %v799
    %v816 = vpack.c.b16 %v804, %v802
    %v817 = vpack.c.b16 %v805, %v803
    %v818 = vpack.c.b16 %v808, %v806
    %v819 = vpack.c.b16 %v809, %v807
    %v831 = vsel %vm186, %v768, 0
    %833 = vmatprep.subr.bf16.mxu0 %v811
    %834 = vmatpush1.bf16.msra.mxu0 %v810
    %835 = vmatprep.subr.bf16.mxu0 %v813
    %836 = vmatpush1.bf16.msra.mxu0 %v812
    %837 = vmatprep.subr.bf16.mxu0 %v815
    %838 = vmatpush1.bf16.msra.mxu0 %v814
    %839 = vmatprep.subr.bf16.mxu0 %v817
    %840 = vmatpush1.bf16.msra.mxu0 %v816
    %841 = vmatprep.subr.bf16.mxu0 %v819
    %842 = vmatpush1.bf16.msra.mxu0 %v818
    %843 = vmatprep.subr.bf16.mxu0 0
    %844 = vmatpush1.bf16.msra.mxu0 0
    %845 = vmatprep.subr.bf16.mxu0 0
    %846 = vmatpush1.bf16.msra.mxu0 0
    %847 = vmatprep.subr.bf16.mxu0 0
    %848 = vmatpush1.bf16.msra.mxu0 0
    %849 = vmatprep.subr.bf16.mxu0 0
    %850 = vmatpush1.bf16.msra.mxu0 0
    %851 = vmatprep.subr.bf16.mxu0 0
    %852 = vmatpush1.bf16.msra.mxu0 0
    %853 = vmatprep.subr.bf16.mxu0 0
    %854 = vmatpush1.bf16.msra.mxu0 0
    %855 = vmatprep.subr.bf16.mxu0 0
    %856 = vmatpush1.bf16.msra.mxu0 0
    %857 = vmatprep.subr.bf16.mxu0 0
    %858 = vmatpush1.bf16.msra.mxu0 0
    %859 = vmatprep.subr.bf16.mxu0 0
    %860 = vmatpush1.bf16.msra.mxu0 0
    %861 = vmatprep.subr.bf16.mxu0 0
    %862 = vmatpush1.bf16.msra.mxu0 0
    %863 = vmatprep.subr.bf16.mxu0 0
    %864 = vmatpush1.bf16.msra.mxu0 0
    %865 = vmatprep.mubr.bf16.mxu0 0
    %866 = vmatmul.mubr.bf16.gmra.mrb[0].mxu0 %v831
    %v867 = vpop.f32.mrb[0].mxu0
    %v868 = vadd.f32 0.0, %v867
    %v869 = vpop.f32.mrb[0].mxu0
    %v870 = vadd.f32 0.0, %v869
    %v871 = vpop.f32.mrb[0].mxu0
    %v872 = vpop.f32.mrb[0].mxu0
    %873 = vdwg.mxu0
    %v874 = vadd.f32 %v762, %v868
    %v875 = vadd.f32 %v763, %v870
    %v876 = vld [vmem:[%s766 + $0x1] sm:$0xff]
    %v877 = vpack.c.bf16 %v876, %v876
    %s878 = scalar_lea.vmem %s1, 560
    %v879 = vld [vmem:[%s878] sm:$0xff]
    %v880 = vld [vmem:[%s878 + $0x8] sm:$0xff]
    %v881 = vld [vmem:[%s878 + $0x10] sm:$0xff]
    %v882 = vld [vmem:[%s878 + $0x18] sm:$0xff]
    %v883 = vld [vmem:[%s878 + $0x20] sm:$0xff]
    %v884 = vld [vmem:[%s878 + $0x28] sm:$0xff]
    %v885 = vld [vmem:[%s878 + $0x30] sm:$0xff]
    %v886 = vld [vmem:[%s878 + $0x38] sm:$0xff]
    %v887 = vld [vmem:[%s878 + $0x40] sm:$0xff]
    %v888 = vld [vmem:[%s878 + $0x48] sm:$0xff]
    %v899 = vunpack.c.l.b16 %v879
    %v900 = vunpack.c.h.b16 %v879
    %v901 = vunpack.c.l.b16 %v880
    %v902 = vunpack.c.h.b16 %v880
    %v903 = vunpack.c.l.b16 %v881
    %v904 = vunpack.c.h.b16 %v881
    %v905 = vunpack.c.l.b16 %v882
    %v906 = vunpack.c.h.b16 %v882
    %v907 = vunpack.c.l.b16 %v883
    %v908 = vunpack.c.h.b16 %v883
    %v909 = vunpack.c.l.b16 %v884
    %v910 = vunpack.c.h.b16 %v884
    %v911 = vunpack.c.l.b16 %v885
    %v912 = vunpack.c.h.b16 %v885
    %v913 = vunpack.c.l.b16 %v886
    %v914 = vunpack.c.h.b16 %v886
    %v915 = vunpack.c.l.b16 %v887
    %v916 = vunpack.c.h.b16 %v887
    %v917 = vunpack.c.l.b16 %v888
    %v918 = vunpack.c.h.b16 %v888
    %v919 = vpack.c.b16 %v901, %v899
    %v920 = vpack.c.b16 %v902, %v900
    %v921 = vpack.c.b16 %v905, %v903
    %v922 = vpack.c.b16 %v906, %v904
    %v923 = vpack.c.b16 %v909, %v907
    %v924 = vpack.c.b16 %v910, %v908
    %v925 = vpack.c.b16 %v913, %v911
    %v926 = vpack.c.b16 %v914, %v912
    %v927 = vpack.c.b16 %v917, %v915
    %v928 = vpack.c.b16 %v918, %v916
    %v940 = vsel %vm186, %v877, 0
    %942 = vmatprep.subr.bf16.mxu0 %v920
    %943 = vmatpush1.bf16.msra.mxu0 %v919
    %944 = vmatprep.subr.bf16.mxu0 %v922
    %945 = vmatpush1.bf16.msra.mxu0 %v921
    %946 = vmatprep.subr.bf16.mxu0 %v924
    %947 = vmatpush1.bf16.msra.mxu0 %v923
    %948 = vmatprep.subr.bf16.mxu0 %v926
    %949 = vmatpush1.bf16.msra.mxu0 %v925
    %950 = vmatprep.subr.bf16.mxu0 %v928
    %951 = vmatpush1.bf16.msra.mxu0 %v927
    %952 = vmatprep.subr.bf16.mxu0 0
    %953 = vmatpush1.bf16.msra.mxu0 0
    %954 = vmatprep.subr.bf16.mxu0 0
    %955 = vmatpush1.bf16.msra.mxu0 0
    %956 = vmatprep.subr.bf16.mxu0 0
    %957 = vmatpush1.bf16.msra.mxu0 0
    %958 = vmatprep.subr.bf16.mxu0 0
    %959 = vmatpush1.bf16.msra.mxu0 0
    %960 = vmatprep.subr.bf16.mxu0 0
    %961 = vmatpush1.bf16.msra.mxu0 0
    %962 = vmatprep.subr.bf16.mxu0 0
    %963 = vmatpush1.bf16.msra.mxu0 0
    %964 = vmatprep.subr.bf16.mxu0 0
    %965 = vmatpush1.bf16.msra.mxu0 0
    %966 = vmatprep.subr.bf16.mxu0 0
    %967 = vmatpush1.bf16.msra.mxu0 0
    %968 = vmatprep.subr.bf16.mxu0 0
    %969 = vmatpush1.bf16.msra.mxu0 0
    %970 = vmatprep.subr.bf16.mxu0 0
    %971 = vmatpush1.bf16.msra.mxu0 0
    %972 = vmatprep.subr.bf16.mxu0 0
    %973 = vmatpush1.bf16.msra.mxu0 0
    %974 = vmatprep.mubr.bf16.mxu0 0
    %975 = vmatmul.mubr.bf16.gmra.mrb[0].mxu0 %v940
    %v976 = vpop.f32.mrb[0].mxu0
    %v977 = vadd.f32 0.0, %v976
    %v978 = vpop.f32.mrb[0].mxu0
    %v979 = vadd.f32 0.0, %v978
    %v980 = vpop.f32.mrb[0].mxu0
    %v981 = vpop.f32.mrb[0].mxu0
    %982 = vdwg.mxu0
    %v983 = vadd.f32 %v874, %v977
    %v984 = vadd.f32 %v875, %v979
    %v985 = vld [vmem:[%s766 + $0x2] sm:$0xff]
    %v986 = vpack.c.bf16 %v985, %v985
    %s987 = scalar_lea.vmem %s1, 640
    %v988 = vld [vmem:[%s987] sm:$0xff]
    %v989 = vld [vmem:[%s987 + $0x8] sm:$0xff]
    %v990 = vld [vmem:[%s987 + $0x10] sm:$0xff]
    %v991 = vld [vmem:[%s987 + $0x18] sm:$0xff]
    %v992 = vld [vmem:[%s987 + $0x20] sm:$0xff]
    %v993 = vld [vmem:[%s987 + $0x28] sm:$0xff]
    %v994 = vld [vmem:[%s987 + $0x30] sm:$0xff]
    %v995 = vld [vmem:[%s987 + $0x38] sm:$0xff]
    %v996 = vld [vmem:[%s987 + $0x40] sm:$0xff]
    %v997 = vld [vmem:[%s987 + $0x48] sm:$0xff]
    %v1008 = vunpack.c.l.b16 %v988
    %v1009 = vunpack.c.h.b16 %v988
    %v1010 = vunpack.c.l.b16 %v989
    %v1011 = vunpack.c.h.b16 %v989
    %v1012 = vunpack.c.l.b16 %v990
    %v1013 = vunpack.c.h.b16 %v990
    %v1014 = vunpack.c.l.b16 %v991
    %v1015 = vunpack.c.h.b16 %v991
    %v1016 = vunpack.c.l.b16 %v992
    %v1017 = vunpack.c.h.b16 %v992
    %v1018 = vunpack.c.l.b16 %v993
    %v1019 = vunpack.c.h.b16 %v993
    %v1020 = vunpack.c.l.b16 %v994
    %v1021 = vunpack.c.h.b16 %v994
    %v1022 = vunpack.c.l.b16 %v995
    %v1023 = vunpack.c.h.b16 %v995
    %v1024 = vunpack.c.l.b16 %v996
    %v1025 = vunpack.c.h.b16 %v996
    %v1026 = vunpack.c.l.b16 %v997
    %v1027 = vunpack.c.h.b16 %v997
    %v1028 = vpack.c.b16 %v1010, %v1008
    %v1029 = vpack.c.b16 %v1011, %v1009
    %v1030 = vpack.c.b16 %v1014, %v1012
    %v1031 = vpack.c.b16 %v1015, %v1013
    %v1032 = vpack.c.b16 %v1018, %v1016
    %v1033 = vpack.c.b16 %v1019, %v1017
    %v1034 = vpack.c.b16 %v1022, %v1020
    %v1035 = vpack.c.b16 %v1023, %v1021
    %v1036 = vpack.c.b16 %v1026, %v1024
    %v1037 = vpack.c.b16 %v1027, %v1025
    %v1049 = vsel %vm186, %v986, 0
    %1051 = vmatprep.subr.bf16.mxu0 %v1029
    %1052 = vmatpush1.bf16.msra.mxu0 %v1028
    %1053 = vmatprep.subr.bf16.mxu0 %v1031
    %1054 = vmatpush1.bf16.msra.mxu0 %v1030
    %1055 = vmatprep.subr.bf16.mxu0 %v1033
    %1056 = vmatpush1.bf16.msra.mxu0 %v1032
    %1057 = vmatprep.subr.bf16.mxu0 %v1035
    %1058 = vmatpush1.bf16.msra.mxu0 %v1034
    %1059 = vmatprep.subr.bf16.mxu0 %v1037
    %1060 = vmatpush1.bf16.msra.mxu0 %v1036
    %1061 = vmatprep.subr.bf16.mxu0 0
    %1062 = vmatpush1.bf16.msra.mxu0 0
    %1063 = vmatprep.subr.bf16.mxu0 0
    %1064 = vmatpush1.bf16.msra.mxu0 0
    %1065 = vmatprep.subr.bf16.mxu0 0
    %1066 = vmatpush1.bf16.msra.mxu0 0
    %1067 = vmatprep.subr.bf16.mxu0 0
    %1068 = vmatpush1.bf16.msra.mxu0 0
    %1069 = vmatprep.subr.bf16.mxu0 0
    %1070 = vmatpush1.bf16.msra.mxu0 0
    %1071 = vmatprep.subr.bf16.mxu0 0
    %1072 = vmatpush1.bf16.msra.mxu0 0
    %1073 = vmatprep.subr.bf16.mxu0 0
    %1074 = vmatpush1.bf16.msra.mxu0 0
    %1075 = vmatprep.subr.bf16.mxu0 0
    %1076 = vmatpush1.bf16.msra.mxu0 0
    %1077 = vmatprep.subr.bf16.mxu0 0
    %1078 = vmatpush1.bf16.msra.mxu0 0
    %1079 = vmatprep.subr.bf16.mxu0 0
    %1080 = vmatpush1.bf16.msra.mxu0 0
    %1081 = vmatprep.subr.bf16.mxu0 0
    %1082 = vmatpush1.bf16.msra.mxu0 0
    %1083 = vmatprep.mubr.bf16.mxu0 0
    %1084 = vmatmul.mubr.bf16.gmra.mrb[0].mxu0 %v1049
    %v1085 = vpop.f32.mrb[0].mxu0
    %v1086 = vadd.f32 0.0, %v1085
    %v1087 = vpop.f32.mrb[0].mxu0
    %v1088 = vadd.f32 0.0, %v1087
    %v1089 = vpop.f32.mrb[0].mxu0
    %v1090 = vpop.f32.mrb[0].mxu0
    %1091 = vdwg.mxu0
    %v1092 = vadd.f32 %v983, %v1086
    %v1093 = vadd.f32 %v984, %v1088
    %v1094 = vld [vmem:[%s2] sm:$0x3]
    %v1096 = vlaneseq
    %v1097 = vshrl.u32 %v1096, 7
    %v1098 = vsub.s32 0, %v1097
    %v1099 = vrot.slane %v1094, %v1098
    %v1100 = vlaneseq
    %v1101 = vshrl.u32 %v1100, 7
    %v1102 = vsub.s32 1, %v1101
    %v1103 = vrot.slane %v1094, %v1102
    %v1106 = vadd.f32 %v1092, %v1099
    %v1107 = vadd.f32 %v1093, %v1103
    %v1108 = vmax.f32 %v1106, 0.0
    %v1109 = vmax.f32 %v1107, 0.0
    %v1112 = vrot.slane %v1108, 7
    %v1113 = vrot.slane %v1109, 7
    %s1116 = smul.u32 %s434, 4
    %s1117 = smul.addr %s1116, 8
    %s1118 = scalar_lea.vmem [#allocation2], %s1117
    %1119 = vst [vmem:[%s1118] sm:$0xfe] %v1112
    %vm1120 = vcmask 261121
    %1121 = vst.msk [vmem:[%s1118 + $0x8] sm:$0xfe] %vm1120, %v1113
    %1122 = vst [vmem:[%s1118 + $0x10] sm:$0x1] %v1112
    %vm1123 = vcmask 253952
    %1124 = vst.msk [vmem:[%s1118 + $0x18] sm:$0x1] %vm1123, %v1113
  $region26: #{unet_forward.4} parent=0 // loop_footer
    %s108 = sadd.s32 1, %s104
  $region27: #{unet_forward.4} parent=0 // loop_footer_branch
    %103 = sbr.rel target = $region23
  $region28: #{unet_forward.4} parent=0 // loop_exit
    _
  loop: start=0, step=1, limit=8
  $region29: #{unet_forward.4} parent=0 // loop_pre_header
    _
  $region30: #{unet_forward.4} parent=0 // loop_header
    %s1126 = sphi 0, %s1130
    %p1127 = scmp.ge.s32.totalorder %s1126, 8
  $region31: #{unet_forward.4} parent=0 // loop_header_branch
    %1129 = sbr.rel (%p1127) target = $region35
  $region32: #{unet_forward.4} parent=0 // loop_body
    %s1131 = smul.u32 %s1126, 4
    %s1132 = smul.addr %s1131, 8
    %s1133 = scalar_lea.vmem [#allocation2], %s1132
    %v1134 = vld [vmem:[%s1133] sm:$0xff]
    %v1135 = vld [vmem:[%s1133 + $0x8] sm:$0xff]
    %v1136 = vpack.c.bf16 %v1134, %v1134
    %v1137 = vpack.c.bf16 %v1135, %v1135
    %v1138 = vld [vmem:[%s3] sm:$0xff]
    %v1139 = vld [vmem:[%s3 + $0x8] sm:$0xff]
    %v1140 = vld [vmem:[%s3 + $0x10] sm:$0xff]
    %v1141 = vld [vmem:[%s3 + $0x18] sm:$0xff]
    %v1142 = vld [vmem:[%s3 + $0x20] sm:$0xff]
    %v1143 = vld [vmem:[%s3 + $0x28] sm:$0xff]
    %v1144 = vld [vmem:[%s3 + $0x30] sm:$0xff]
    %v1145 = vld [vmem:[%s3 + $0x38] sm:$0xff]
    %v1146 = vld [vmem:[%s3 + $0x40] sm:$0xff]
    %v1147 = vld [vmem:[%s3 + $0x48] sm:$0xff]
    %v1148 = vld [vmem:[%s3 + $0x50] sm:$0xff]
    %v1149 = vld [vmem:[%s3 + $0x58] sm:$0xff]
    %v1150 = vld [vmem:[%s3 + $0x60] sm:$0xff]
    %v1151 = vld [vmem:[%s3 + $0x68] sm:$0xff]
    %v1152 = vld [vmem:[%s3 + $0x70] sm:$0xff]
    %v1153 = vld [vmem:[%s3 + $0x78] sm:$0xff]
    %v1154 = vld [vmem:[%s3 + $0x80] sm:$0xff]
    %v1155 = vld [vmem:[%s3 + $0x88] sm:$0xff]
    %v1156 = vld [vmem:[%s3 + $0x90] sm:$0xff]
    %v1157 = vld [vmem:[%s3 + $0x98] sm:$0xff]
    %v1158 = vld [vmem:[%s1133] sm:$0xfe]
    %v1159 = vld [vmem:[%s1133 + $0x8] sm:$0xfe]
    %v1160 = vld [vmem:[%s1133 + $0x10] sm:$0x1]
    %v1161 = vld [vmem:[%s1133 + $0x18] sm:$0x1]
    %v1162 = vpack.c.bf16 %v1160, %v1158
    %v1163 = vpack.c.bf16 %v1161, %v1159
    %s1164 = scalar_lea.vmem %s3, 160
    %v1165 = vld [vmem:[%s1164] sm:$0xff]
    %v1166 = vld [vmem:[%s1164 + $0x8] sm:$0xff]
    %v1167 = vld [vmem:[%s1164 + $0x10] sm:$0xff]
    %v1168 = vld [vmem:[%s1164 + $0x18] sm:$0xff]
    %v1169 = vld [vmem:[%s1164 + $0x20] sm:$0xff]
    %v1170 = vld [vmem:[%s1164 + $0x28] sm:$0xff]
    %v1171 = vld [vmem:[%s1164 + $0x30] sm:$0xff]
    %v1172 = vld [vmem:[%s1164 + $0x38] sm:$0xff]
    %v1173 = vld [vmem:[%s1164 + $0x40] sm:$0xff]
    %v1174 = vld [vmem:[%s1164 + $0x48] sm:$0xff]
    %v1175 = vld [vmem:[%s1164 + $0x50] sm:$0xff]
    %v1176 = vld [vmem:[%s1164 + $0x58] sm:$0xff]
    %v1177 = vld [vmem:[%s1164 + $0x60] sm:$0xff]
    %v1178 = vld [vmem:[%s1164 + $0x68] sm:$0xff]
    %v1179 = vld [vmem:[%s1164 + $0x70] sm:$0xff]
    %v1180 = vld [vmem:[%s1164 + $0x78] sm:$0xff]
    %v1181 = vld [vmem:[%s1164 + $0x80] sm:$0xff]
    %v1182 = vld [vmem:[%s1164 + $0x88] sm:$0xff]
    %v1183 = vld [vmem:[%s1164 + $0x90] sm:$0xff]
    %v1184 = vld [vmem:[%s1164 + $0x98] sm:$0xff]
    %v1186 = vshrl.u32 %v1162, 16
    %v1188 = vshll.u32 %v1162, 16
    %v1190 = vrot.slane %v1188, 1
    %v1191 = vor.u32 %v1186, %v1190
    %v1193 = vshrl.u32 %v1163, 16
    %v1195 = vshll.u32 %v1163, 16
    %v1197 = vrot.slane %v1195, 1
    %v1198 = vor.u32 %v1193, %v1197
    %v1220 = vunpack.c.l.b16 %v1165
    %v1221 = vunpack.c.h.b16 %v1165
    %v1222 = vunpack.c.l.b16 %v1166
    %v1223 = vunpack.c.h.b16 %v1166
    %v1224 = vunpack.c.l.b16 %v1167
    %v1225 = vunpack.c.h.b16 %v1167
    %v1226 = vunpack.c.l.b16 %v1168
    %v1227 = vunpack.c.h.b16 %v1168
    %v1228 = vunpack.c.l.b16 %v1169
    %v1229 = vunpack.c.h.b16 %v1169
    %v1230 = vunpack.c.l.b16 %v1170
    %v1231 = vunpack.c.h.b16 %v1170
    %v1232 = vunpack.c.l.b16 %v1171
    %v1233 = vunpack.c.h.b16 %v1171
    %v1234 = vunpack.c.l.b16 %v1172
    %v1235 = vunpack.c.h.b16 %v1172
    %v1236 = vunpack.c.l.b16 %v1173
    %v1237 = vunpack.c.h.b16 %v1173
    %v1238 = vunpack.c.l.b16 %v1174
    %v1239 = vunpack.c.h.b16 %v1174
    %v1240 = vunpack.c.l.b16 %v1175
    %v1241 = vunpack.c.h.b16 %v1175
    %v1242 = vunpack.c.l.b16 %v1176
    %v1243 = vunpack.c.h.b16 %v1176
    %v1244 = vunpack.c.l.b16 %v1177
    %v1245 = vunpack.c.h.b16 %v1177
    %v1246 = vunpack.c.l.b16 %v1178
    %v1247 = vunpack.c.h.b16 %v1178
    %v1248 = vunpack.c.l.b16 %v1179
    %v1249 = vunpack.c.h.b16 %v1179
    %v1250 = vunpack.c.l.b16 %v1180
    %v1251 = vunpack.c.h.b16 %v1180
    %v1252 = vunpack.c.l.b16 %v1181
    %v1253 = vunpack.c.h.b16 %v1181
    %v1254 = vunpack.c.l.b16 %v1182
    %v1255 = vunpack.c.h.b16 %v1182
    %v1256 = vunpack.c.l.b16 %v1183
    %v1257 = vunpack.c.h.b16 %v1183
    %v1258 = vunpack.c.l.b16 %v1184
    %v1259 = vunpack.c.h.b16 %v1184
    %v1260 = vpack.c.b16 %v1222, %v1220
    %v1261 = vpack.c.b16 %v1223, %v1221
    %v1262 = vpack.c.b16 %v1226, %v1224
    %v1263 = vpack.c.b16 %v1227, %v1225
    %v1264 = vpack.c.b16 %v1230, %v1228
    %v1265 = vpack.c.b16 %v1231, %v1229
    %v1266 = vpack.c.b16 %v1234, %v1232
    %v1267 = vpack.c.b16 %v1235, %v1233
    %v1268 = vpack.c.b16 %v1238, %v1236
    %v1269 = vpack.c.b16 %v1239, %v1237
    %v1270 = vpack.c.b16 %v1242, %v1240
    %v1271 = vpack.c.b16 %v1243, %v1241
    %v1272 = vpack.c.b16 %v1246, %v1244
    %v1273 = vpack.c.b16 %v1247, %v1245
    %v1274 = vpack.c.b16 %v1250, %v1248
    %v1275 = vpack.c.b16 %v1251, %v1249
    %v1276 = vpack.c.b16 %v1254, %v1252
    %v1277 = vpack.c.b16 %v1255, %v1253
    %v1278 = vpack.c.b16 %v1258, %v1256
    %v1279 = vpack.c.b16 %v1259, %v1257
    %v1301 = vsel %vm22, %v1198, 0
    %1303 = vmatprep.subr.bf16.mxu0 %v1261
    %1304 = vmatpush1.bf16.msra.mxu0 %v1260
    %1305 = vmatprep.subr.bf16.mxu0 %v1263
    %1306 = vmatpush1.bf16.msra.mxu0 %v1262
    %1307 = vmatprep.subr.bf16.mxu0 %v1265
    %1308 = vmatpush1.bf16.msra.mxu0 %v1264
    %1309 = vmatprep.subr.bf16.mxu0 %v1267
    %1310 = vmatpush1.bf16.msra.mxu0 %v1266
    %1311 = vmatprep.subr.bf16.mxu0 %v1269
    %1312 = vmatpush1.bf16.msra.mxu0 %v1268
    %1313 = vmatprep.subr.bf16.mxu0 %v1271
    %1314 = vmatpush1.bf16.msra.mxu0 %v1270
    %1315 = vmatprep.subr.bf16.mxu0 %v1273
    %1316 = vmatpush1.bf16.msra.mxu0 %v1272
    %1317 = vmatprep.subr.bf16.mxu0 %v1275
    %1318 = vmatpush1.bf16.msra.mxu0 %v1274
    %1319 = vmatprep.subr.bf16.mxu0 %v1277
    %1320 = vmatpush1.bf16.msra.mxu0 %v1276
    %1321 = vmatprep.subr.bf16.mxu0 %v1279
    %1322 = vmatpush1.bf16.msra.mxu0 %v1278
    %1323 = vmatprep.subr.bf16.mxu0 0
    %1324 = vmatpush1.bf16.msra.mxu0 0
    %1325 = vmatprep.subr.bf16.mxu0 0
    %1326 = vmatpush1.bf16.msra.mxu0 0
    %1327 = vmatprep.subr.bf16.mxu0 0
    %1328 = vmatpush1.bf16.msra.mxu0 0
    %1329 = vmatprep.subr.bf16.mxu0 0
    %1330 = vmatpush1.bf16.msra.mxu0 0
    %1331 = vmatprep.subr.bf16.mxu0 0
    %1332 = vmatpush1.bf16.msra.mxu0 0
    %1333 = vmatprep.subr.bf16.mxu0 0
    %1334 = vmatpush1.bf16.msra.mxu0 0
    %1335 = vmatprep.mubr.bf16.mxu0 %v1301
    %1336 = vmatmul.mubr.bf16.gmra.mrb[0].mxu0 %v1191
    %v1337 = vpop.f32.mrb[0].mxu0
    %v1338 = vadd.f32 0.0, %v1337
    %v1339 = vpop.f32.mrb[0].mxu0
    %v1340 = vadd.f32 0.0, %v1339
    %v1341 = vpop.f32.mrb[0].mxu0
    %v1342 = vpop.f32.mrb[0].mxu0
    %1343 = vdwg.mxu0
    %v1364 = vunpack.c.l.b16 %v1138
    %v1365 = vunpack.c.h.b16 %v1138
    %v1366 = vunpack.c.l.b16 %v1139
    %v1367 = vunpack.c.h.b16 %v1139
    %v1368 = vunpack.c.l.b16 %v1140
    %v1369 = vunpack.c.h.b16 %v1140
    %v1370 = vunpack.c.l.b16 %v1141
    %v1371 = vunpack.c.h.b16 %v1141
    %v1372 = vunpack.c.l.b16 %v1142
    %v1373 = vunpack.c.h.b16 %v1142
    %v1374 = vunpack.c.l.b16 %v1143
    %v1375 = vunpack.c.h.b16 %v1143
    %v1376 = vunpack.c.l.b16 %v1144
    %v1377 = vunpack.c.h.b16 %v1144
    %v1378 = vunpack.c.l.b16 %v1145
    %v1379 = vunpack.c.h.b16 %v1145
    %v1380 = vunpack.c.l.b16 %v1146
    %v1381 = vunpack.c.h.b16 %v1146
    %v1382 = vunpack.c.l.b16 %v1147
    %v1383 = vunpack.c.h.b16 %v1147
    %v1384 = vunpack.c.l.b16 %v1148
    %v1385 = vunpack.c.h.b16 %v1148
    %v1386 = vunpack.c.l.b16 %v1149
    %v1387 = vunpack.c.h.b16 %v1149
    %v1388 = vunpack.c.l.b16 %v1150
    %v1389 = vunpack.c.h.b16 %v1150
    %v1390 = vunpack.c.l.b16 %v1151
    %v1391 = vunpack.c.h.b16 %v1151
    %v1392 = vunpack.c.l.b16 %v1152
    %v1393 = vunpack.c.h.b16 %v1152
    %v1394 = vunpack.c.l.b16 %v1153
    %v1395 = vunpack.c.h.b16 %v1153
    %v1396 = vunpack.c.l.b16 %v1154
    %v1397 = vunpack.c.h.b16 %v1154
    %v1398 = vunpack.c.l.b16 %v1155
    %v1399 = vunpack.c.h.b16 %v1155
    %v1400 = vunpack.c.l.b16 %v1156
    %v1401 = vunpack.c.h.b16 %v1156
    %v1402 = vunpack.c.l.b16 %v1157
    %v1403 = vunpack.c.h.b16 %v1157
    %v1404 = vpack.c.b16 %v1366, %v1364
    %v1405 = vpack.c.b16 %v1367, %v1365
    %v1406 = vpack.c.b16 %v1370, %v1368
    %v1407 = vpack.c.b16 %v1371, %v1369
    %v1408 = vpack.c.b16 %v1374, %v1372
    %v1409 = vpack.c.b16 %v1375, %v1373
    %v1410 = vpack.c.b16 %v1378, %v1376
    %v1411 = vpack.c.b16 %v1379, %v1377
    %v1412 = vpack.c.b16 %v1382, %v1380
    %v1413 = vpack.c.b16 %v1383, %v1381
    %v1414 = vpack.c.b16 %v1386, %v1384
    %v1415 = vpack.c.b16 %v1387, %v1385
    %v1416 = vpack.c.b16 %v1390, %v1388
    %v1417 = vpack.c.b16 %v1391, %v1389
    %v1418 = vpack.c.b16 %v1394, %v1392
    %v1419 = vpack.c.b16 %v1395, %v1393
    %v1420 = vpack.c.b16 %v1398, %v1396
    %v1421 = vpack.c.b16 %v1399, %v1397
    %v1422 = vpack.c.b16 %v1402, %v1400
    %v1423 = vpack.c.b16 %v1403, %v1401
    %v1445 = vsel %vm22, %v1137, 0
    %1447 = vmatprep.subr.bf16.mxu0 %v1405
    %1448 = vmatpush1.bf16.msra.mxu0 %v1404
    %1449 = vmatprep.subr.bf16.mxu0 %v1407
    %1450 = vmatpush1.bf16.msra.mxu0 %v1406
    %1451 = vmatprep.subr.bf16.mxu0 %v1409
    %1452 = vmatpush1.bf16.msra.mxu0 %v1408
    %1453 = vmatprep.subr.bf16.mxu0 %v1411
    %1454 = vmatpush1.bf16.msra.mxu0 %v1410
    %1455 = vmatprep.subr.bf16.mxu0 %v1413
    %1456 = vmatpush1.bf16.msra.mxu0 %v1412
    %1457 = vmatprep.subr.bf16.mxu0 %v1415
    %1458 = vmatpush1.bf16.msra.mxu0 %v1414
    %1459 = vmatprep.subr.bf16.mxu0 %v1417
    %1460 = vmatpush1.bf16.msra.mxu0 %v1416
    %1461 = vmatprep.subr.bf16.mxu0 %v1419
    %1462 = vmatpush1.bf16.msra.mxu0 %v1418
    %1463 = vmatprep.subr.bf16.mxu0 %v1421
    %1464 = vmatpush1.bf16.msra.mxu0 %v1420
    %1465 = vmatprep.subr.bf16.mxu0 %v1423
    %1466 = vmatpush1.bf16.msra.mxu0 %v1422
    %1467 = vmatprep.subr.bf16.mxu0 0
    %1468 = vmatpush1.bf16.msra.mxu0 0
    %1469 = vmatprep.subr.bf16.mxu0 0
    %1470 = vmatpush1.bf16.msra.mxu0 0
    %1471 = vmatprep.subr.bf16.mxu0 0
    %1472 = vmatpush1.bf16.msra.mxu0 0
    %1473 = vmatprep.subr.bf16.mxu0 0
    %1474 = vmatpush1.bf16.msra.mxu0 0
    %1475 = vmatprep.subr.bf16.mxu0 0
    %1476 = vmatpush1.bf16.msra.mxu0 0
    %1477 = vmatprep.subr.bf16.mxu0 0
    %1478 = vmatpush1.bf16.msra.mxu0 0
    %1479 = vmatprep.mubr.bf16.mxu0 %v1445
    %1480 = vmatmul.mubr.bf16.gmra.mrb[0].mxu0 %v1136
    %v1481 = vpop.f32.mrb[0].mxu0
    %v1482 = vadd.f32 %v1338, %v1481
    %v1483 = vpop.f32.mrb[0].mxu0
    %v1484 = vadd.f32 %v1340, %v1483
    %v1485 = vpop.f32.mrb[0].mxu0
    %v1486 = vpop.f32.mrb[0].mxu0
    %1487 = vdwg.mxu0
    %v1488 = vld [vmem:[%s1133] sm:$0xfc]
    %v1489 = vld [vmem:[%s1133 + $0x8] sm:$0xfc]
    %v1490 = vld [vmem:[%s1133 + $0x10] sm:$0x3]
    %v1491 = vld [vmem:[%s1133 + $0x18] sm:$0x3]
    %v1492 = vpack.c.bf16 %v1490, %v1488
    %v1493 = vpack.c.bf16 %v1491, %v1489
    %s1494 = scalar_lea.vmem %s3, 320
    %v1495 = vld [vmem:[%s1494] sm:$0xff]
    %v1496 = vld [vmem:[%s1494 + $0x8] sm:$0xff]
    %v1497 = vld [vmem:[%s1494 + $0x10] sm:$0xff]
    %v1498 = vld [vmem:[%s1494 + $0x18] sm:$0xff]
    %v1499 = vld [vmem:[%s1494 + $0x20] sm:$0xff]
    %v1500 = vld [vmem:[%s1494 + $0x28] sm:$0xff]
    %v1501 = vld [vmem:[%s1494 + $0x30] sm:$0xff]
    %v1502 = vld [vmem:[%s1494 + $0x38] sm:$0xff]
    %v1503 = vld [vmem:[%s1494 + $0x40] sm:$0xff]
    %v1504 = vld [vmem:[%s1494 + $0x48] sm:$0xff]
    %v1505 = vld [vmem:[%s1494 + $0x50] sm:$0xff]
    %v1506 = vld [vmem:[%s1494 + $0x58] sm:$0xff]
    %v1507 = vld [vmem:[%s1494 + $0x60] sm:$0xff]
    %v1508 = vld [vmem:[%s1494 + $0x68] sm:$0xff]
    %v1509 = vld [vmem:[%s1494 + $0x70] sm:$0xff]
    %v1510 = vld [vmem:[%s1494 + $0x78] sm:$0xff]
    %v1511 = vld [vmem:[%s1494 + $0x80] sm:$0xff]
    %v1512 = vld [vmem:[%s1494 + $0x88] sm:$0xff]
    %v1513 = vld [vmem:[%s1494 + $0x90] sm:$0xff]
    %v1514 = vld [vmem:[%s1494 + $0x98] sm:$0xff]
    %v1517 = vrot.slane %v1492, 1
    %v1518 = vrot.slane %v1493, 1
    %v1540 = vunpack.c.l.b16 %v1495
    %v1541 = vunpack.c.h.b16 %v1495
    %v1542 = vunpack.c.l.b16 %v1496
    %v1543 = vunpack.c.h.b16 %v1496
    %v1544 = vunpack.c.l.b16 %v1497
    %v1545 = vunpack.c.h.b16 %v1497
    %v1546 = vunpack.c.l.b16 %v1498
    %v1547 = vunpack.c.h.b16 %v1498
    %v1548 = vunpack.c.l.b16 %v1499
    %v1549 = vunpack.c.h.b16 %v1499
    %v1550 = vunpack.c.l.b16 %v1500
    %v1551 = vunpack.c.h.b16 %v1500
    %v1552 = vunpack.c.l.b16 %v1501
    %v1553 = vunpack.c.h.b16 %v1501
    %v1554 = vunpack.c.l.b16 %v1502
    %v1555 = vunpack.c.h.b16 %v1502
    %v1556 = vunpack.c.l.b16 %v1503
    %v1557 = vunpack.c.h.b16 %v1503
    %v1558 = vunpack.c.l.b16 %v1504
    %v1559 = vunpack.c.h.b16 %v1504
    %v1560 = vunpack.c.l.b16 %v1505
    %v1561 = vunpack.c.h.b16 %v1505
    %v1562 = vunpack.c.l.b16 %v1506
    %v1563 = vunpack.c.h.b16 %v1506
    %v1564 = vunpack.c.l.b16 %v1507
    %v1565 = vunpack.c.h.b16 %v1507
    %v1566 = vunpack.c.l.b16 %v1508
    %v1567 = vunpack.c.h.b16 %v1508
    %v1568 = vunpack.c.l.b16 %v1509
    %v1569 = vunpack.c.h.b16 %v1509
    %v1570 = vunpack.c.l.b16 %v1510
    %v1571 = vunpack.c.h.b16 %v1510
    %v1572 = vunpack.c.l.b16 %v1511
    %v1573 = vunpack.c.h.b16 %v1511
    %v1574 = vunpack.c.l.b16 %v1512
    %v1575 = vunpack.c.h.b16 %v1512
    %v1576 = vunpack.c.l.b16 %v1513
    %v1577 = vunpack.c.h.b16 %v1513
    %v1578 = vunpack.c.l.b16 %v1514
    %v1579 = vunpack.c.h.b16 %v1514
    %v1580 = vpack.c.b16 %v1542, %v1540
    %v1581 = vpack.c.b16 %v1543, %v1541
    %v1582 = vpack.c.b16 %v1546, %v1544
    %v1583 = vpack.c.b16 %v1547, %v1545
    %v1584 = vpack.c.b16 %v1550, %v1548
    %v1585 = vpack.c.b16 %v1551, %v1549
    %v1586 = vpack.c.b16 %v1554, %v1552
    %v1587 = vpack.c.b16 %v1555, %v1553
    %v1588 = vpack.c.b16 %v1558, %v1556
    %v1589 = vpack.c.b16 %v1559, %v1557
    %v1590 = vpack.c.b16 %v1562, %v1560
    %v1591 = vpack.c.b16 %v1563, %v1561
    %v1592 = vpack.c.b16 %v1566, %v1564
    %v1593 = vpack.c.b16 %v1567, %v1565
    %v1594 = vpack.c.b16 %v1570, %v1568
    %v1595 = vpack.c.b16 %v1571, %v1569
    %v1596 = vpack.c.b16 %v1574, %v1572
    %v1597 = vpack.c.b16 %v1575, %v1573
    %v1598 = vpack.c.b16 %v1578, %v1576
    %v1599 = vpack.c.b16 %v1579, %v1577
    %v1621 = vsel %vm22, %v1518, 0
    %1623 = vmatprep.subr.bf16.mxu0 %v1581
    %1624 = vmatpush1.bf16.msra.mxu0 %v1580
    %1625 = vmatprep.subr.bf16.mxu0 %v1583
    %1626 = vmatpush1.bf16.msra.mxu0 %v1582
    %1627 = vmatprep.subr.bf16.mxu0 %v1585
    %1628 = vmatpush1.bf16.msra.mxu0 %v1584
    %1629 = vmatprep.subr.bf16.mxu0 %v1587
    %1630 = vmatpush1.bf16.msra.mxu0 %v1586
    %1631 = vmatprep.subr.bf16.mxu0 %v1589
    %1632 = vmatpush1.bf16.msra.mxu0 %v1588
    %1633 = vmatprep.subr.bf16.mxu0 %v1591
    %1634 = vmatpush1.bf16.msra.mxu0 %v1590
    %1635 = vmatprep.subr.bf16.mxu0 %v1593
    %1636 = vmatpush1.bf16.msra.mxu0 %v1592
    %1637 = vmatprep.subr.bf16.mxu0 %v1595
    %1638 = vmatpush1.bf16.msra.mxu0 %v1594
    %1639 = vmatprep.subr.bf16.mxu0 %v1597
    %1640 = vmatpush1.bf16.msra.mxu0 %v1596
    %1641 = vmatprep.subr.bf16.mxu0 %v1599
    %1642 = vmatpush1.bf16.msra.mxu0 %v1598
    %1643 = vmatprep.subr.bf16.mxu0 0
    %1644 = vmatpush1.bf16.msra.mxu0 0
    %1645 = vmatprep.subr.bf16.mxu0 0
    %1646 = vmatpush1.bf16.msra.mxu0 0
    %1647 = vmatprep.subr.bf16.mxu0 0
    %1648 = vmatpush1.bf16.msra.mxu0 0
    %1649 = vmatprep.subr.bf16.mxu0 0
    %1650 = vmatpush1.bf16.msra.mxu0 0
    %1651 = vmatprep.subr.bf16.mxu0 0
    %1652 = vmatpush1.bf16.msra.mxu0 0
    %1653 = vmatprep.subr.bf16.mxu0 0
    %1654 = vmatpush1.bf16.msra.mxu0 0
    %1655 = vmatprep.mubr.bf16.mxu0 %v1621
    %1656 = vmatmul.mubr.bf16.gmra.mrb[0].mxu0 %v1517
    %v1657 = vpop.f32.mrb[0].mxu0
    %v1658 = vadd.f32 0.0, %v1657
    %v1659 = vpop.f32.mrb[0].mxu0
    %v1660 = vadd.f32 0.0, %v1659
    %v1661 = vpop.f32.mrb[0].mxu0
    %v1662 = vpop.f32.mrb[0].mxu0
    %1663 = vdwg.mxu0
    %v1664 = vadd.f32 %v1482, %v1658
    %v1665 = vadd.f32 %v1484, %v1660
    %s1666 = sadd.s32 %s1126, 1
    %s1667 = smul.u32 %s1666, 4
    %s1668 = smul.addr %s1667, 8
    %s1669 = scalar_lea.vmem [#allocation2], %s1668
    %v1670 = vld [vmem:[%s1669] sm:$0xff]
    %v1671 = vld [vmem:[%s1669 + $0x8] sm:$0xff]
    %v1672 = vpack.c.bf16 %v1670, %v1670
    %v1673 = vpack.c.bf16 %v1671, %v1671
    %s1674 = scalar_lea.vmem %s3, 480
    %v1675 = vld [vmem:[%s1674] sm:$0xff]
    %v1676 = vld [vmem:[%s1674 + $0x8] sm:$0xff]
    %v1677 = vld [vmem:[%s1674 + $0x10] sm:$0xff]
    %v1678 = vld [vmem:[%s1674 + $0x18] sm:$0xff]
    %v1679 = vld [vmem:[%s1674 + $0x20] sm:$0xff]
    %v1680 = vld [vmem:[%s1674 + $0x28] sm:$0xff]
    %v1681 = vld [vmem:[%s1674 + $0x30] sm:$0xff]
    %v1682 = vld [vmem:[%s1674 + $0x38] sm:$0xff]
    %v1683 = vld [vmem:[%s1674 + $0x40] sm:$0xff]
    %v1684 = vld [vmem:[%s1674 + $0x48] sm:$0xff]
    %v1685 = vld [vmem:[%s1674 + $0x50] sm:$0xff]
    %v1686 = vld [vmem:[%s1674 + $0x58] sm:$0xff]
    %v1687 = vld [vmem:[%s1674 + $0x60] sm:$0xff]
    %v1688 = vld [vmem:[%s1674 + $0x68] sm:$0xff]
    %v1689 = vld [vmem:[%s1674 + $0x70] sm:$0xff]
    %v1690 = vld [vmem:[%s1674 + $0x78] sm:$0xff]
    %v1691 = vld [vmem:[%s1674 + $0x80] sm:$0xff]
    %v1692 = vld [vmem:[%s1674 + $0x88] sm:$0xff]
    %v1693 = vld [vmem:[%s1674 + $0x90] sm:$0xff]
    %v1694 = vld [vmem:[%s1674 + $0x98] sm:$0xff]
    %v1715 = vunpack.c.l.b16 %v1675
    %v1716 = vunpack.c.h.b16 %v1675
    %v1717 = vunpack.c.l.b16 %v1676
    %v1718 = vunpack.c.h.b16 %v1676
    %v1719 = vunpack.c.l.b16 %v1677
    %v1720 = vunpack.c.h.b16 %v1677
    %v1721 = vunpack.c.l.b16 %v1678
    %v1722 = vunpack.c.h.b16 %v1678
    %v1723 = vunpack.c.l.b16 %v1679
    %v1724 = vunpack.c.h.b16 %v1679
    %v1725 = vunpack.c.l.b16 %v1680
    %v1726 = vunpack.c.h.b16 %v1680
    %v1727 = vunpack.c.l.b16 %v1681
    %v1728 = vunpack.c.h.b16 %v1681
    %v1729 = vunpack.c.l.b16 %v1682
    %v1730 = vunpack.c.h.b16 %v1682
    %v1731 = vunpack.c.l.b16 %v1683
    %v1732 = vunpack.c.h.b16 %v1683
    %v1733 = vunpack.c.l.b16 %v1684
    %v1734 = vunpack.c.h.b16 %v1684
    %v1735 = vunpack.c.l.b16 %v1685
    %v1736 = vunpack.c.h.b16 %v1685
    %v1737 = vunpack.c.l.b16 %v1686
    %v1738 = vunpack.c.h.b16 %v1686
    %v1739 = vunpack.c.l.b16 %v1687
    %v1740 = vunpack.c.h.b16 %v1687
    %v1741 = vunpack.c.l.b16 %v1688
    %v1742 = vunpack.c.h.b16 %v1688
    %v1743 = vunpack.c.l.b16 %v1689
    %v1744 = vunpack.c.h.b16 %v1689
    %v1745 = vunpack.c.l.b16 %v1690
    %v1746 = vunpack.c.h.b16 %v1690
    %v1747 = vunpack.c.l.b16 %v1691
    %v1748 = vunpack.c.h.b16 %v1691
    %v1749 = vunpack.c.l.b16 %v1692
    %v1750 = vunpack.c.h.b16 %v1692
    %v1751 = vunpack.c.l.b16 %v1693
    %v1752 = vunpack.c.h.b16 %v1693
    %v1753 = vunpack.c.l.b16 %v1694
    %v1754 = vunpack.c.h.b16 %v1694
    %v1755 = vpack.c.b16 %v1717, %v1715
    %v1756 = vpack.c.b16 %v1718, %v1716
    %v1757 = vpack.c.b16 %v1721, %v1719
    %v1758 = vpack.c.b16 %v1722, %v1720
    %v1759 = vpack.c.b16 %v1725, %v1723
    %v1760 = vpack.c.b16 %v1726, %v1724
    %v1761 = vpack.c.b16 %v1729, %v1727
    %v1762 = vpack.c.b16 %v1730, %v1728
    %v1763 = vpack.c.b16 %v1733, %v1731
    %v1764 = vpack.c.b16 %v1734, %v1732
    %v1765 = vpack.c.b16 %v1737, %v1735
    %v1766 = vpack.c.b16 %v1738, %v1736
    %v1767 = vpack.c.b16 %v1741, %v1739
    %v1768 = vpack.c.b16 %v1742, %v1740
    %v1769 = vpack.c.b16 %v1745, %v1743
    %v1770 = vpack.c.b16 %v1746, %v1744
    %v1771 = vpack.c.b16 %v1749, %v1747
    %v1772 = vpack.c.b16 %v1750, %v1748
    %v1773 = vpack.c.b16 %v1753, %v1751
    %v1774 = vpack.c.b16 %v1754, %v1752
    %v1796 = vsel %vm22, %v1673, 0
    %1798 = vmatprep.subr.bf16.mxu0 %v1756
    %1799 = vmatpush1.bf16.msra.mxu0 %v1755
    %1800 = vmatprep.subr.bf16.mxu0 %v1758
    %1801 = vmatpush1.bf16.msra.mxu0 %v1757
    %1802 = vmatprep.subr.bf16.mxu0 %v1760
    %1803 = vmatpush1.bf16.msra.mxu0 %v1759
    %1804 = vmatprep.subr.bf16.mxu0 %v1762
    %1805 = vmatpush1.bf16.msra.mxu0 %v1761
    %1806 = vmatprep.subr.bf16.mxu0 %v1764
    %1807 = vmatpush1.bf16.msra.mxu0 %v1763
    %1808 = vmatprep.subr.bf16.mxu0 %v1766
    %1809 = vmatpush1.bf16.msra.mxu0 %v1765
    %1810 = vmatprep.subr.bf16.mxu0 %v1768
    %1811 = vmatpush1.bf16.msra.mxu0 %v1767
    %1812 = vmatprep.subr.bf16.mxu0 %v1770
    %1813 = vmatpush1.bf16.msra.mxu0 %v1769
    %1814 = vmatprep.subr.bf16.mxu0 %v1772
    %1815 = vmatpush1.bf16.msra.mxu0 %v1771
    %1816 = vmatprep.subr.bf16.mxu0 %v1774
    %1817 = vmatpush1.bf16.msra.mxu0 %v1773
    %1818 = vmatprep.subr.bf16.mxu0 0
    %1819 = vmatpush1.bf16.msra.mxu0 0
    %1820 = vmatprep.subr.bf16.mxu0 0
    %1821 = vmatpush1.bf16.msra.mxu0 0
    %1822 = vmatprep.subr.bf16.mxu0 0
    %1823 = vmatpush1.bf16.msra.mxu0 0
    %1824 = vmatprep.subr.bf16.mxu0 0
    %1825 = vmatpush1.bf16.msra.mxu0 0
    %1826 = vmatprep.subr.bf16.mxu0 0
    %1827 = vmatpush1.bf16.msra.mxu0 0
    %1828 = vmatprep.subr.bf16.mxu0 0
    %1829 = vmatpush1.bf16.msra.mxu0 0
    %1830 = vmatprep.mubr.bf16.mxu0 %v1796
    %1831 = vmatmul.mubr.bf16.gmra.mrb[0].mxu0 %v1672
    %v1832 = vpop.f32.mrb[0].mxu0
    %v1833 = vadd.f32 0.0, %v1832
    %v1834 = vpop.f32.mrb[0].mxu0
    %v1835 = vadd.f32 0.0, %v1834
    %v1836 = vpop.f32.mrb[0].mxu0
    %v1837 = vpop.f32.mrb[0].mxu0
    %1838 = vdwg.mxu0
    %v1839 = vadd.f32 %v1664, %v1833
    %v1840 = vadd.f32 %v1665, %v1835
    %v1841 = vld [vmem:[%s1669] sm:$0xfe]
    %v1842 = vld [vmem:[%s1669 + $0x8] sm:$0xfe]
    %v1843 = vld [vmem:[%s1669 + $0x10] sm:$0x1]
    %v1844 = vld [vmem:[%s1669 + $0x18] sm:$0x1]
    %v1845 = vpack.c.bf16 %v1843, %v1841
    %v1846 = vpack.c.bf16 %v1844, %v1842
    %s1847 = scalar_lea.vmem %s3, 640
    %v1848 = vld [vmem:[%s1847] sm:$0xff]
    %v1849 = vld [vmem:[%s1847 + $0x8] sm:$0xff]
    %v1850 = vld [vmem:[%s1847 + $0x10] sm:$0xff]
    %v1851 = vld [vmem:[%s1847 + $0x18] sm:$0xff]
    %v1852 = vld [vmem:[%s1847 + $0x20] sm:$0xff]
    %v1853 = vld [vmem:[%s1847 + $0x28] sm:$0xff]
    %v1854 = vld [vmem:[%s1847 + $0x30] sm:$0xff]
    %v1855 = vld [vmem:[%s1847 + $0x38] sm:$0xff]
    %v1856 = vld [vmem:[%s1847 + $0x40] sm:$0xff]
    %v1857 = vld [vmem:[%s1847 + $0x48] sm:$0xff]
    %v1858 = vld [vmem:[%s1847 + $0x50] sm:$0xff]
    %v1859 = vld [vmem:[%s1847 + $0x58] sm:$0xff]
    %v1860 = vld [vmem:[%s1847 + $0x60] sm:$0xff]
    %v1861 = vld [vmem:[%s1847 + $0x68] sm:$0xff]
    %v1862 = vld [vmem:[%s1847 + $0x70] sm:$0xff]
    %v1863 = vld [vmem:[%s1847 + $0x78] sm:$0xff]
    %v1864 = vld [vmem:[%s1847 + $0x80] sm:$0xff]
    %v1865 = vld [vmem:[%s1847 + $0x88] sm:$0xff]
    %v1866 = vld [vmem:[%s1847 + $0x90] sm:$0xff]
    %v1867 = vld [vmem:[%s1847 + $0x98] sm:$0xff]
    %v1869 = vshrl.u32 %v1845, 16
    %v1871 = vshll.u32 %v1845, 16
    %v1873 = vrot.slane %v1871, 1
    %v1874 = vor.u32 %v1869, %v1873
    %v1876 = vshrl.u32 %v1846, 16
    %v1878 = vshll.u32 %v1846, 16
    %v1880 = vrot.slane %v1878, 1
    %v1881 = vor.u32 %v1876, %v1880
    %v1903 = vunpack.c.l.b16 %v1848
    %v1904 = vunpack.c.h.b16 %v1848
    %v1905 = vunpack.c.l.b16 %v1849
    %v1906 = vunpack.c.h.b16 %v1849
    %v1907 = vunpack.c.l.b16 %v1850
    %v1908 = vunpack.c.h.b16 %v1850
    %v1909 = vunpack.c.l.b16 %v1851
    %v1910 = vunpack.c.h.b16 %v1851
    %v1911 = vunpack.c.l.b16 %v1852
    %v1912 = vunpack.c.h.b16 %v1852
    %v1913 = vunpack.c.l.b16 %v1853
    %v1914 = vunpack.c.h.b16 %v1853
    %v1915 = vunpack.c.l.b16 %v1854
    %v1916 = vunpack.c.h.b16 %v1854
    %v1917 = vunpack.c.l.b16 %v1855
    %v1918 = vunpack.c.h.b16 %v1855
    %v1919 = vunpack.c.l.b16 %v1856
    %v1920 = vunpack.c.h.b16 %v1856
    %v1921 = vunpack.c.l.b16 %v1857
    %v1922 = vunpack.c.h.b16 %v1857
    %v1923 = vunpack.c.l.b16 %v1858
    %v1924 = vunpack.c.h.b16 %v1858
    %v1925 = vunpack.c.l.b16 %v1859
    %v1926 = vunpack.c.h.b16 %v1859
    %v1927 = vunpack.c.l.b16 %v1860
    %v1928 = vunpack.c.h.b16 %v1860
    %v1929 = vunpack.c.l.b16 %v1861
    %v1930 = vunpack.c.h.b16 %v1861
    %v1931 = vunpack.c.l.b16 %v1862
    %v1932 = vunpack.c.h.b16 %v1862
    %v1933 = vunpack.c.l.b16 %v1863
    %v1934 = vunpack.c.h.b16 %v1863
    %v1935 = vunpack.c.l.b16 %v1864
    %v1936 = vunpack.c.h.b16 %v1864
    %v1937 = vunpack.c.l.b16 %v1865
    %v1938 = vunpack.c.h.b16 %v1865
    %v1939 = vunpack.c.l.b16 %v1866
    %v1940 = vunpack.c.h.b16 %v1866
    %v1941 = vunpack.c.l.b16 %v1867
    %v1942 = vunpack.c.h.b16 %v1867
    %v1943 = vpack.c.b16 %v1905, %v1903
    %v1944 = vpack.c.b16 %v1906, %v1904
    %v1945 = vpack.c.b16 %v1909, %v1907
    %v1946 = vpack.c.b16 %v1910, %v1908
    %v1947 = vpack.c.b16 %v1913, %v1911
    %v1948 = vpack.c.b16 %v1914, %v1912
    %v1949 = vpack.c.b16 %v1917, %v1915
    %v1950 = vpack.c.b16 %v1918, %v1916
    %v1951 = vpack.c.b16 %v1921, %v1919
    %v1952 = vpack.c.b16 %v1922, %v1920
    %v1953 = vpack.c.b16 %v1925, %v1923
    %v1954 = vpack.c.b16 %v1926, %v1924
    %v1955 = vpack.c.b16 %v1929, %v1927
    %v1956 = vpack.c.b16 %v1930, %v1928
    %v1957 = vpack.c.b16 %v1933, %v1931
    %v1958 = vpack.c.b16 %v1934, %v1932
    %v1959 = vpack.c.b16 %v1937, %v1935
    %v1960 = vpack.c.b16 %v1938, %v1936
    %v1961 = vpack.c.b16 %v1941, %v1939
    %v1962 = vpack.c.b16 %v1942, %v1940
    %v1984 = vsel %vm22, %v1881, 0
    %1986 = vmatprep.subr.bf16.mxu0 %v1944
    %1987 = vmatpush1.bf16.msra.mxu0 %v1943
    %1988 = vmatprep.subr.bf16.mxu0 %v1946
    %1989 = vmatpush1.bf16.msra.mxu0 %v1945
    %1990 = vmatprep.subr.bf16.mxu0 %v1948
    %1991 = vmatpush1.bf16.msra.mxu0 %v1947
    %1992 = vmatprep.subr.bf16.mxu0 %v1950
    %1993 = vmatpush1.bf16.msra.mxu0 %v1949
    %1994 = vmatprep.subr.bf16.mxu0 %v1952
    %1995 = vmatpush1.bf16.msra.mxu0 %v1951
    %1996 = vmatprep.subr.bf16.mxu0 %v1954
    %1997 = vmatpush1.bf16.msra.mxu0 %v1953
    %1998 = vmatprep.subr.bf16.mxu0 %v1956
    %1999 = vmatpush1.bf16.msra.mxu0 %v1955
    %2000 = vmatprep.subr.bf16.mxu0 %v1958
    %2001 = vmatpush1.bf16.msra.mxu0 %v1957
    %2002 = vmatprep.subr.bf16.mxu0 %v1960
    %2003 = vmatpush1.bf16.msra.mxu0 %v1959
    %2004 = vmatprep.subr.bf16.mxu0 %v1962
    %2005 = vmatpush1.bf16.msra.mxu0 %v1961
    %2006 = vmatprep.subr.bf16.mxu0 0
    %2007 = vmatpush1.bf16.msra.mxu0 0
    %2008 = vmatprep.subr.bf16.mxu0 0
    %2009 = vmatpush1.bf16.msra.mxu0 0
    %2010 = vmatprep.subr.bf16.mxu0 0
    %2011 = vmatpush1.bf16.msra.mxu0 0
    %2012 = vmatprep.subr.bf16.mxu0 0
    %2013 = vmatpush1.bf16.msra.mxu0 0
    %2014 = vmatprep.subr.bf16.mxu0 0
    %2015 = vmatpush1.bf16.msra.mxu0 0
    %2016 = vmatprep.subr.bf16.mxu0 0
    %2017 = vmatpush1.bf16.msra.mxu0 0
    %2018 = vmatprep.mubr.bf16.mxu0 %v1984
    %2019 = vmatmul.mubr.bf16.gmra.mrb[0].mxu0 %v1874
    %v2020 = vpop.f32.mrb[0].mxu0
    %v2021 = vadd.f32 0.0, %v2020
    %v2022 = vpop.f32.mrb[0].mxu0
    %v2023 = vadd.f32 0.0, %v2022
    %v2024 = vpop.f32.mrb[0].mxu0
    %v2025 = vpop.f32.mrb[0].mxu0
    %2026 = vdwg.mxu0
    %v2027 = vadd.f32 %v1839, %v2021
    %v2028 = vadd.f32 %v1840, %v2023
    %v2029 = vld [vmem:[%s1669] sm:$0xfc]
    %v2030 = vld [vmem:[%s1669 + $0x8] sm:$0xfc]
    %v2031 = vld [vmem:[%s1669 + $0x10] sm:$0x3]
    %v2032 = vld [vmem:[%s1669 + $0x18] sm:$0x3]
    %v2033 = vpack.c.bf16 %v2031, %v2029
    %v2034 = vpack.c.bf16 %v2032, %v2030
    %s2035 = scalar_lea.vmem %s3, 800
    %v2036 = vld [vmem:[%s2035] sm:$0xff]
    %v2037 = vld [vmem:[%s2035 + $0x8] sm:$0xff]
    %v2038 = vld [vmem:[%s2035 + $0x10] sm:$0xff]
    %v2039 = vld [vmem:[%s2035 + $0x18] sm:$0xff]
    %v2040 = vld [vmem:[%s2035 + $0x20] sm:$0xff]
    %v2041 = vld [vmem:[%s2035 + $0x28] sm:$0xff]
    %v2042 = vld [vmem:[%s2035 + $0x30] sm:$0xff]
    %v2043 = vld [vmem:[%s2035 + $0x38] sm:$0xff]
    %v2044 = vld [vmem:[%s2035 + $0x40] sm:$0xff]
    %v2045 = vld [vmem:[%s2035 + $0x48] sm:$0xff]
    %v2046 = vld [vmem:[%s2035 + $0x50] sm:$0xff]
    %v2047 = vld [vmem:[%s2035 + $0x58] sm:$0xff]
    %v2048 = vld [vmem:[%s2035 + $0x60] sm:$0xff]
    %v2049 = vld [vmem:[%s2035 + $0x68] sm:$0xff]
    %v2050 = vld [vmem:[%s2035 + $0x70] sm:$0xff]
    %v2051 = vld [vmem:[%s2035 + $0x78] sm:$0xff]
    %v2052 = vld [vmem:[%s2035 + $0x80] sm:$0xff]
    %v2053 = vld [vmem:[%s2035 + $0x88] sm:$0xff]
    %v2054 = vld [vmem:[%s2035 + $0x90] sm:$0xff]
    %v2055 = vld [vmem:[%s2035 + $0x98] sm:$0xff]
    %v2058 = vrot.slane %v2033, 1
    %v2059 = vrot.slane %v2034, 1
    %v2081 = vunpack.c.l.b16 %v2036
    %v2082 = vunpack.c.h.b16 %v2036
    %v2083 = vunpack.c.l.b16 %v2037
    %v2084 = vunpack.c.h.b16 %v2037
    %v2085 = vunpack.c.l.b16 %v2038
    %v2086 = vunpack.c.h.b16 %v2038
    %v2087 = vunpack.c.l.b16 %v2039
    %v2088 = vunpack.c.h.b16 %v2039
    %v2089 = vunpack.c.l.b16 %v2040
    %v2090 = vunpack.c.h.b16 %v2040
    %v2091 = vunpack.c.l.b16 %v2041
    %v2092 = vunpack.c.h.b16 %v2041
    %v2093 = vunpack.c.l.b16 %v2042
    %v2094 = vunpack.c.h.b16 %v2042
    %v2095 = vunpack.c.l.b16 %v2043
    %v2096 = vunpack.c.h.b16 %v2043
    %v2097 = vunpack.c.l.b16 %v2044
    %v2098 = vunpack.c.h.b16 %v2044
    %v2099 = vunpack.c.l.b16 %v2045
    %v2100 = vunpack.c.h.b16 %v2045
    %v2101 = vunpack.c.l.b16 %v2046
    %v2102 = vunpack.c.h.b16 %v2046
    %v2103 = vunpack.c.l.b16 %v2047
    %v2104 = vunpack.c.h.b16 %v2047
    %v2105 = vunpack.c.l.b16 %v2048
    %v2106 = vunpack.c.h.b16 %v2048
    %v2107 = vunpack.c.l.b16 %v2049
    %v2108 = vunpack.c.h.b16 %v2049
    %v2109 = vunpack.c.l.b16 %v2050
    %v2110 = vunpack.c.h.b16 %v2050
    %v2111 = vunpack.c.l.b16 %v2051
    %v2112 = vunpack.c.h.b16 %v2051
    %v2113 = vunpack.c.l.b16 %v2052
    %v2114 = vunpack.c.h.b16 %v2052
    %v2115 = vunpack.c.l.b16 %v2053
    %v2116 = vunpack.c.h.b16 %v2053
    %v2117 = vunpack.c.l.b16 %v2054
    %v2118 = vunpack.c.h.b16 %v2054
    %v2119 = vunpack.c.l.b16 %v2055
    %v2120 = vunpack.c.h.b16 %v2055
    %v2121 = vpack.c.b16 %v2083, %v2081
    %v2122 = vpack.c.b16 %v2084, %v2082
    %v2123 = vpack.c.b16 %v2087, %v2085
    %v2124 = vpack.c.b16 %v2088, %v2086
    %v2125 = vpack.c.b16 %v2091, %v2089
    %v2126 = vpack.c.b16 %v2092, %v2090
    %v2127 = vpack.c.b16 %v2095, %v2093
    %v2128 = vpack.c.b16 %v2096, %v2094
    %v2129 = vpack.c.b16 %v2099, %v2097
    %v2130 = vpack.c.b16 %v2100, %v2098
    %v2131 = vpack.c.b16 %v2103, %v2101
    %v2132 = vpack.c.b16 %v2104, %v2102
    %v2133 = vpack.c.b16 %v2107, %v2105
    %v2134 = vpack.c.b16 %v2108, %v2106
    %v2135 = vpack.c.b16 %v2111, %v2109
    %v2136 = vpack.c.b16 %v2112, %v2110
    %v2137 = vpack.c.b16 %v2115, %v2113
    %v2138 = vpack.c.b16 %v2116, %v2114
    %v2139 = vpack.c.b16 %v2119, %v2117
    %v2140 = vpack.c.b16 %v2120, %v2118
    %v2162 = vsel %vm22, %v2059, 0
    %2164 = vmatprep.subr.bf16.mxu0 %v2122
    %2165 = vmatpush1.bf16.msra.mxu0 %v2121
    %2166 = vmatprep.subr.bf16.mxu0 %v2124
    %2167 = vmatpush1.bf16.msra.mxu0 %v2123
    %2168 = vmatprep.subr.bf16.mxu0 %v2126
    %2169 = vmatpush1.bf16.msra.mxu0 %v2125
    %2170 = vmatprep.subr.bf16.mxu0 %v2128
    %2171 = vmatpush1.bf16.msra.mxu0 %v2127
    %2172 = vmatprep.subr.bf16.mxu0 %v2130
    %2173 = vmatpush1.bf16.msra.mxu0 %v2129
    %2174 = vmatprep.subr.bf16.mxu0 %v2132
    %2175 = vmatpush1.bf16.msra.mxu0 %v2131
    %2176 = vmatprep.subr.bf16.mxu0 %v2134
    %2177 = vmatpush1.bf16.msra.mxu0 %v2133
    %2178 = vmatprep.subr.bf16.mxu0 %v2136
    %2179 = vmatpush1.bf16.msra.mxu0 %v2135
    %2180 = vmatprep.subr.bf16.mxu0 %v2138
    %2181 = vmatpush1.bf16.msra.mxu0 %v2137
    %2182 = vmatprep.subr.bf16.mxu0 %v2140
    %2183 = vmatpush1.bf16.msra.mxu0 %v2139
    %2184 = vmatprep.subr.bf16.mxu0 0
    %2185 = vmatpush1.bf16.msra.mxu0 0
    %2186 = vmatprep.subr.bf16.mxu0 0
    %2187 = vmatpush1.bf16.msra.mxu0 0
    %2188 = vmatprep.subr.bf16.mxu0 0
    %2189 = vmatpush1.bf16.msra.mxu0 0
    %2190 = vmatprep.subr.bf16.mxu0 0
    %2191 = vmatpush1.bf16.msra.mxu0 0
    %2192 = vmatprep.subr.bf16.mxu0 0
    %2193 = vmatpush1.bf16.msra.mxu0 0
    %2194 = vmatprep.subr.bf16.mxu0 0
    %2195 = vmatpush1.bf16.msra.mxu0 0
    %2196 = vmatprep.mubr.bf16.mxu0 %v2162
    %2197 = vmatmul.mubr.bf16.gmra.mrb[0].mxu0 %v2058
    %v2198 = vpop.f32.mrb[0].mxu0
    %v2199 = vadd.f32 0.0, %v2198
    %v2200 = vpop.f32.mrb[0].mxu0
    %v2201 = vadd.f32 0.0, %v2200
    %v2202 = vpop.f32.mrb[0].mxu0
    %v2203 = vpop.f32.mrb[0].mxu0
    %2204 = vdwg.mxu0
    %v2205 = vadd.f32 %v2027, %v2199
    %v2206 = vadd.f32 %v2028, %v2201
    %s2207 = sadd.s32 %s1126, 2
    %s2208 = smul.u32 %s2207, 4
    %s2209 = smul.addr %s2208, 8
    %s2210 = scalar_lea.vmem [#allocation2], %s2209
    %v2211 = vld [vmem:[%s2210] sm:$0xff]
    %v2212 = vld [vmem:[%s2210 + $0x8] sm:$0xff]
    %v2213 = vpack.c.bf16 %v2211, %v2211
    %v2214 = vpack.c.bf16 %v2212, %v2212
    %s2215 = scalar_lea.vmem %s3, 960
    %v2216 = vld [vmem:[%s2215] sm:$0xff]
    %v2217 = vld [vmem:[%s2215 + $0x8] sm:$0xff]
    %v2218 = vld [vmem:[%s2215 + $0x10] sm:$0xff]
    %v2219 = vld [vmem:[%s2215 + $0x18] sm:$0xff]
    %v2220 = vld [vmem:[%s2215 + $0x20] sm:$0xff]
    %v2221 = vld [vmem:[%s2215 + $0x28] sm:$0xff]
    %v2222 = vld [vmem:[%s2215 + $0x30] sm:$0xff]
    %v2223 = vld [vmem:[%s2215 + $0x38] sm:$0xff]
    %v2224 = vld [vmem:[%s2215 + $0x40] sm:$0xff]
    %v2225 = vld [vmem:[%s2215 + $0x48] sm:$0xff]
    %v2226 = vld [vmem:[%s2215 + $0x50] sm:$0xff]
    %v2227 = vld [vmem:[%s2215 + $0x58] sm:$0xff]
    %v2228 = vld [vmem:[%s2215 + $0x60] sm:$0xff]
    %v2229 = vld [vmem:[%s2215 + $0x68] sm:$0xff]
    %v2230 = vld [vmem:[%s2215 + $0x70] sm:$0xff]
    %v2231 = vld [vmem:[%s2215 + $0x78] sm:$0xff]
    %v2232 = vld [vmem:[%s2215 + $0x80] sm:$0xff]
    %v2233 = vld [vmem:[%s2215 + $0x88] sm:$0xff]
    %v2234 = vld [vmem:[%s2215 + $0x90] sm:$0xff]
    %v2235 = vld [vmem:[%s2215 + $0x98] sm:$0xff]
    %v2256 = vunpack.c.l.b16 %v2216
    %v2257 = vunpack.c.h.b16 %v2216
    %v2258 = vunpack.c.l.b16 %v2217
    %v2259 = vunpack.c.h.b16 %v2217
    %v2260 = vunpack.c.l.b16 %v2218
    %v2261 = vunpack.c.h.b16 %v2218
    %v2262 = vunpack.c.l.b16 %v2219
    %v2263 = vunpack.c.h.b16 %v2219
    %v2264 = vunpack.c.l.b16 %v2220
    %v2265 = vunpack.c.h.b16 %v2220
    %v2266 = vunpack.c.l.b16 %v2221
    %v2267 = vunpack.c.h.b16 %v2221
    %v2268 = vunpack.c.l.b16 %v2222
    %v2269 = vunpack.c.h.b16 %v2222
    %v2270 = vunpack.c.l.b16 %v2223
    %v2271 = vunpack.c.h.b16 %v2223
    %v2272 = vunpack.c.l.b16 %v2224
    %v2273 = vunpack.c.h.b16 %v2224
    %v2274 = vunpack.c.l.b16 %v2225
    %v2275 = vunpack.c.h.b16 %v2225
    %v2276 = vunpack.c.l.b16 %v2226
    %v2277 = vunpack.c.h.b16 %v2226
    %v2278 = vunpack.c.l.b16 %v2227
    %v2279 = vunpack.c.h.b16 %v2227
    %v2280 = vunpack.c.l.b16 %v2228
    %v2281 = vunpack.c.h.b16 %v2228
    %v2282 = vunpack.c.l.b16 %v2229
    %v2283 = vunpack.c.h.b16 %v2229
    %v2284 = vunpack.c.l.b16 %v2230
    %v2285 = vunpack.c.h.b16 %v2230
    %v2286 = vunpack.c.l.b16 %v2231
    %v2287 = vunpack.c.h.b16 %v2231
    %v2288 = vunpack.c.l.b16 %v2232
    %v2289 = vunpack.c.h.b16 %v2232
    %v2290 = vunpack.c.l.b16 %v2233
    %v2291 = vunpack.c.h.b16 %v2233
    %v2292 = vunpack.c.l.b16 %v2234
    %v2293 = vunpack.c.h.b16 %v2234
    %v2294 = vunpack.c.l.b16 %v2235
    %v2295 = vunpack.c.h.b16 %v2235
    %v2296 = vpack.c.b16 %v2258, %v2256
    %v2297 = vpack.c.b16 %v2259, %v2257
    %v2298 = vpack.c.b16 %v2262, %v2260
    %v2299 = vpack.c.b16 %v2263, %v2261
    %v2300 = vpack.c.b16 %v2266, %v2264
    %v2301 = vpack.c.b16 %v2267, %v2265
    %v2302 = vpack.c.b16 %v2270, %v2268
    %v2303 = vpack.c.b16 %v2271, %v2269
    %v2304 = vpack.c.b16 %v2274, %v2272
    %v2305 = vpack.c.b16 %v2275, %v2273
    %v2306 = vpack.c.b16 %v2278, %v2276
    %v2307 = vpack.c.b16 %v2279, %v2277
    %v2308 = vpack.c.b16 %v2282, %v2280
    %v2309 = vpack.c.b16 %v2283, %v2281
    %v2310 = vpack.c.b16 %v2286, %v2284
    %v2311 = vpack.c.b16 %v2287, %v2285
    %v2312 = vpack.c.b16 %v2290, %v2288
    %v2313 = vpack.c.b16 %v2291, %v2289
    %v2314 = vpack.c.b16 %v2294, %v2292
    %v2315 = vpack.c.b16 %v2295, %v2293
    %v2337 = vsel %vm22, %v2214, 0
    %2339 = vmatprep.subr.bf16.mxu0 %v2297
    %2340 = vmatpush1.bf16.msra.mxu0 %v2296
    %2341 = vmatprep.subr.bf16.mxu0 %v2299
    %2342 = vmatpush1.bf16.msra.mxu0 %v2298
    %2343 = vmatprep.subr.bf16.mxu0 %v2301
    %2344 = vmatpush1.bf16.msra.mxu0 %v2300
    %2345 = vmatprep.subr.bf16.mxu0 %v2303
    %2346 = vmatpush1.bf16.msra.mxu0 %v2302
    %2347 = vmatprep.subr.bf16.mxu0 %v2305
    %2348 = vmatpush1.bf16.msra.mxu0 %v2304
    %2349 = vmatprep.subr.bf16.mxu0 %v2307
    %2350 = vmatpush1.bf16.msra.mxu0 %v2306
    %2351 = vmatprep.subr.bf16.mxu0 %v2309
    %2352 = vmatpush1.bf16.msra.mxu0 %v2308
    %2353 = vmatprep.subr.bf16.mxu0 %v2311
    %2354 = vmatpush1.bf16.msra.mxu0 %v2310
    %2355 = vmatprep.subr.bf16.mxu0 %v2313
    %2356 = vmatpush1.bf16.msra.mxu0 %v2312
    %2357 = vmatprep.subr.bf16.mxu0 %v2315
    %2358 = vmatpush1.bf16.msra.mxu0 %v2314
    %2359 = vmatprep.subr.bf16.mxu0 0
    %2360 = vmatpush1.bf16.msra.mxu0 0
    %2361 = vmatprep.subr.bf16.mxu0 0
    %2362 = vmatpush1.bf16.msra.mxu0 0
    %2363 = vmatprep.subr.bf16.mxu0 0
    %2364 = vmatpush1.bf16.msra.mxu0 0
    %2365 = vmatprep.subr.bf16.mxu0 0
    %2366 = vmatpush1.bf16.msra.mxu0 0
    %2367 = vmatprep.subr.bf16.mxu0 0
    %2368 = vmatpush1.bf16.msra.mxu0 0
    %2369 = vmatprep.subr.bf16.mxu0 0
    %2370 = vmatpush1.bf16.msra.mxu0 0
    %2371 = vmatprep.mubr.bf16.mxu0 %v2337
    %2372 = vmatmul.mubr.bf16.gmra.mrb[0].mxu0 %v2213
    %v2373 = vpop.f32.mrb[0].mxu0
    %v2374 = vadd.f32 0.0, %v2373
    %v2375 = vpop.f32.mrb[0].mxu0
    %v2376 = vadd.f32 0.0, %v2375
    %v2377 = vpop.f32.mrb[0].mxu0
    %v2378 = vpop.f32.mrb[0].mxu0
    %2379 = vdwg.mxu0
    %v2380 = vadd.f32 %v2205, %v2374
    %v2381 = vadd.f32 %v2206, %v2376
    %v2382 = vld [vmem:[%s2210] sm:$0xfe]
    %v2383 = vld [vmem:[%s2210 + $0x8] sm:$0xfe]
    %v2384 = vld [vmem:[%s2210 + $0x10] sm:$0x1]
    %v2385 = vld [vmem:[%s2210 + $0x18] sm:$0x1]
    %v2386 = vpack.c.bf16 %v2384, %v2382
    %v2387 = vpack.c.bf16 %v2385, %v2383
    %s2388 = scalar_lea.vmem %s3, 1120
    %v2389 = vld [vmem:[%s2388] sm:$0xff]
    %v2390 = vld [vmem:[%s2388 + $0x8] sm:$0xff]
    %v2391 = vld [vmem:[%s2388 + $0x10] sm:$0xff]
    %v2392 = vld [vmem:[%s2388 + $0x18] sm:$0xff]
    %v2393 = vld [vmem:[%s2388 + $0x20] sm:$0xff]
    %v2394 = vld [vmem:[%s2388 + $0x28] sm:$0xff]
    %v2395 = vld [vmem:[%s2388 + $0x30] sm:$0xff]
    %v2396 = vld [vmem:[%s2388 + $0x38] sm:$0xff]
    %v2397 = vld [vmem:[%s2388 + $0x40] sm:$0xff]
    %v2398 = vld [vmem:[%s2388 + $0x48] sm:$0xff]
    %v2399 = vld [vmem:[%s2388 + $0x50] sm:$0xff]
    %v2400 = vld [vmem:[%s2388 + $0x58] sm:$0xff]
    %v2401 = vld [vmem:[%s2388 + $0x60] sm:$0xff]
    %v2402 = vld [vmem:[%s2388 + $0x68] sm:$0xff]
    %v2403 = vld [vmem:[%s2388 + $0x70] sm:$0xff]
    %v2404 = vld [vmem:[%s2388 + $0x78] sm:$0xff]
    %v2405 = vld [vmem:[%s2388 + $0x80] sm:$0xff]
    %v2406 = vld [vmem:[%s2388 + $0x88] sm:$0xff]
    %v2407 = vld [vmem:[%s2388 + $0x90] sm:$0xff]
    %v2408 = vld [vmem:[%s2388 + $0x98] sm:$0xff]
    %v2410 = vshrl.u32 %v2386, 16
    %v2412 = vshll.u32 %v2386, 16
    %v2414 = vrot.slane %v2412, 1
    %v2415 = vor.u32 %v2410, %v2414
    %v2417 = vshrl.u32 %v2387, 16
    %v2419 = vshll.u32 %v2387, 16
    %v2421 = vrot.slane %v2419, 1
    %v2422 = vor.u32 %v2417, %v2421
    %v2444 = vunpack.c.l.b16 %v2389
    %v2445 = vunpack.c.h.b16 %v2389
    %v2446 = vunpack.c.l.b16 %v2390
    %v2447 = vunpack.c.h.b16 %v2390
    %v2448 = vunpack.c.l.b16 %v2391
    %v2449 = vunpack.c.h.b16 %v2391
    %v2450 = vunpack.c.l.b16 %v2392
    %v2451 = vunpack.c.h.b16 %v2392
    %v2452 = vunpack.c.l.b16 %v2393
    %v2453 = vunpack.c.h.b16 %v2393
    %v2454 = vunpack.c.l.b16 %v2394
    %v2455 = vunpack.c.h.b16 %v2394
    %v2456 = vunpack.c.l.b16 %v2395
    %v2457 = vunpack.c.h.b16 %v2395
    %v2458 = vunpack.c.l.b16 %v2396
    %v2459 = vunpack.c.h.b16 %v2396
    %v2460 = vunpack.c.l.b16 %v2397
    %v2461 = vunpack.c.h.b16 %v2397
    %v2462 = vunpack.c.l.b16 %v2398
    %v2463 = vunpack.c.h.b16 %v2398
    %v2464 = vunpack.c.l.b16 %v2399
    %v2465 = vunpack.c.h.b16 %v2399
    %v2466 = vunpack.c.l.b16 %v2400
    %v2467 = vunpack.c.h.b16 %v2400
    %v2468 = vunpack.c.l.b16 %v2401
    %v2469 = vunpack.c.h.b16 %v2401
    %v2470 = vunpack.c.l.b16 %v2402
    %v2471 = vunpack.c.h.b16 %v2402
    %v2472 = vunpack.c.l.b16 %v2403
    %v2473 = vunpack.c.h.b16 %v2403
    %v2474 = vunpack.c.l.b16 %v2404
    %v2475 = vunpack.c.h.b16 %v2404
    %v2476 = vunpack.c.l.b16 %v2405
    %v2477 = vunpack.c.h.b16 %v2405
    %v2478 = vunpack.c.l.b16 %v2406
    %v2479 = vunpack.c.h.b16 %v2406
    %v2480 = vunpack.c.l.b16 %v2407
    %v2481 = vunpack.c.h.b16 %v2407
    %v2482 = vunpack.c.l.b16 %v2408
    %v2483 = vunpack.c.h.b16 %v2408
    %v2484 = vpack.c.b16 %v2446, %v2444
    %v2485 = vpack.c.b16 %v2447, %v2445
    %v2486 = vpack.c.b16 %v2450, %v2448
    %v2487 = vpack.c.b16 %v2451, %v2449
    %v2488 = vpack.c.b16 %v2454, %v2452
    %v2489 = vpack.c.b16 %v2455, %v2453
    %v2490 = vpack.c.b16 %v2458, %v2456
    %v2491 = vpack.c.b16 %v2459, %v2457
    %v2492 = vpack.c.b16 %v2462, %v2460
    %v2493 = vpack.c.b16 %v2463, %v2461
    %v2494 = vpack.c.b16 %v2466, %v2464
    %v2495 = vpack.c.b16 %v2467, %v2465
    %v2496 = vpack.c.b16 %v2470, %v2468
    %v2497 = vpack.c.b16 %v2471, %v2469
    %v2498 = vpack.c.b16 %v2474, %v2472
    %v2499 = vpack.c.b16 %v2475, %v2473
    %v2500 = vpack.c.b16 %v2478, %v2476
    %v2501 = vpack.c.b16 %v2479, %v2477
    %v2502 = vpack.c.b16 %v2482, %v2480
    %v2503 = vpack.c.b16 %v2483, %v2481
    %v2525 = vsel %vm22, %v2422, 0
    %2527 = vmatprep.subr.bf16.mxu0 %v2485
    %2528 = vmatpush1.bf16.msra.mxu0 %v2484
    %2529 = vmatprep.subr.bf16.mxu0 %v2487
    %2530 = vmatpush1.bf16.msra.mxu0 %v2486
    %2531 = vmatprep.subr.bf16.mxu0 %v2489
    %2532 = vmatpush1.bf16.msra.mxu0 %v2488
    %2533 = vmatprep.subr.bf16.mxu0 %v2491
    %2534 = vmatpush1.bf16.msra.mxu0 %v2490
    %2535 = vmatprep.subr.bf16.mxu0 %v2493
    %2536 = vmatpush1.bf16.msra.mxu0 %v2492
    %2537 = vmatprep.subr.bf16.mxu0 %v2495
    %2538 = vmatpush1.bf16.msra.mxu0 %v2494
    %2539 = vmatprep.subr.bf16.mxu0 %v2497
    %2540 = vmatpush1.bf16.msra.mxu0 %v2496
    %2541 = vmatprep.subr.bf16.mxu0 %v2499
    %2542 = vmatpush1.bf16.msra.mxu0 %v2498
    %2543 = vmatprep.subr.bf16.mxu0 %v2501
    %2544 = vmatpush1.bf16.msra.mxu0 %v2500
    %2545 = vmatprep.subr.bf16.mxu0 %v2503
    %2546 = vmatpush1.bf16.msra.mxu0 %v2502
    %2547 = vmatprep.subr.bf16.mxu0 0
    %2548 = vmatpush1.bf16.msra.mxu0 0
    %2549 = vmatprep.subr.bf16.mxu0 0
    %2550 = vmatpush1.bf16.msra.mxu0 0
    %2551 = vmatprep.subr.bf16.mxu0 0
    %2552 = vmatpush1.bf16.msra.mxu0 0
    %2553 = vmatprep.subr.bf16.mxu0 0
    %2554 = vmatpush1.bf16.msra.mxu0 0
    %2555 = vmatprep.subr.bf16.mxu0 0
    %2556 = vmatpush1.bf16.msra.mxu0 0
    %2557 = vmatprep.subr.bf16.mxu0 0
    %2558 = vmatpush1.bf16.msra.mxu0 0
    %2559 = vmatprep.mubr.bf16.mxu0 %v2525
    %2560 = vmatmul.mubr.bf16.gmra.mrb[0].mxu0 %v2415
    %v2561 = vpop.f32.mrb[0].mxu0
    %v2562 = vadd.f32 0.0, %v2561
    %v2563 = vpop.f32.mrb[0].mxu0
    %v2564 = vadd.f32 0.0, %v2563
    %v2565 = vpop.f32.mrb[0].mxu0
    %v2566 = vpop.f32.mrb[0].mxu0
    %2567 = vdwg.mxu0
    %v2568 = vadd.f32 %v2380, %v2562
    %v2569 = vadd.f32 %v2381, %v2564
    %v2570 = vld [vmem:[%s2210] sm:$0xfc]
    %v2571 = vld [vmem:[%s2210 + $0x8] sm:$0xfc]
    %v2572 = vld [vmem:[%s2210 + $0x10] sm:$0x3]
    %v2573 = vld [vmem:[%s2210 + $0x18] sm:$0x3]
    %v2574 = vpack.c.bf16 %v2572, %v2570
    %v2575 = vpack.c.bf16 %v2573, %v2571
    %s2576 = scalar_lea.vmem %s3, 1280
    %v2577 = vld [vmem:[%s2576] sm:$0xff]
    %v2578 = vld [vmem:[%s2576 + $0x8] sm:$0xff]
    %v2579 = vld [vmem:[%s2576 + $0x10] sm:$0xff]
    %v2580 = vld [vmem:[%s2576 + $0x18] sm:$0xff]
    %v2581 = vld [vmem:[%s2576 + $0x20] sm:$0xff]
    %v2582 = vld [vmem:[%s2576 + $0x28] sm:$0xff]
    %v2583 = vld [vmem:[%s2576 + $0x30] sm:$0xff]
    %v2584 = vld [vmem:[%s2576 + $0x38] sm:$0xff]
    %v2585 = vld [vmem:[%s2576 + $0x40] sm:$0xff]
    %v2586 = vld [vmem:[%s2576 + $0x48] sm:$0xff]
    %v2587 = vld [vmem:[%s2576 + $0x50] sm:$0xff]
    %v2588 = vld [vmem:[%s2576 + $0x58] sm:$0xff]
    %v2589 = vld [vmem:[%s2576 + $0x60] sm:$0xff]
    %v2590 = vld [vmem:[%s2576 + $0x68] sm:$0xff]
    %v2591 = vld [vmem:[%s2576 + $0x70] sm:$0xff]
    %v2592 = vld [vmem:[%s2576 + $0x78] sm:$0xff]
    %v2593 = vld [vmem:[%s2576 + $0x80] sm:$0xff]
    %v2594 = vld [vmem:[%s2576 + $0x88] sm:$0xff]
    %v2595 = vld [vmem:[%s2576 + $0x90] sm:$0xff]
    %v2596 = vld [vmem:[%s2576 + $0x98] sm:$0xff]
    %v2599 = vrot.slane %v2574, 1
    %v2600 = vrot.slane %v2575, 1
    %v2622 = vunpack.c.l.b16 %v2577
    %v2623 = vunpack.c.h.b16 %v2577
    %v2624 = vunpack.c.l.b16 %v2578
    %v2625 = vunpack.c.h.b16 %v2578
    %v2626 = vunpack.c.l.b16 %v2579
    %v2627 = vunpack.c.h.b16 %v2579
    %v2628 = vunpack.c.l.b16 %v2580
    %v2629 = vunpack.c.h.b16 %v2580
    %v2630 = vunpack.c.l.b16 %v2581
    %v2631 = vunpack.c.h.b16 %v2581
    %v2632 = vunpack.c.l.b16 %v2582
    %v2633 = vunpack.c.h.b16 %v2582
    %v2634 = vunpack.c.l.b16 %v2583
    %v2635 = vunpack.c.h.b16 %v2583
    %v2636 = vunpack.c.l.b16 %v2584
    %v2637 = vunpack.c.h.b16 %v2584
    %v2638 = vunpack.c.l.b16 %v2585
    %v2639 = vunpack.c.h.b16 %v2585
    %v2640 = vunpack.c.l.b16 %v2586
    %v2641 = vunpack.c.h.b16 %v2586
    %v2642 = vunpack.c.l.b16 %v2587
    %v2643 = vunpack.c.h.b16 %v2587
    %v2644 = vunpack.c.l.b16 %v2588
    %v2645 = vunpack.c.h.b16 %v2588
    %v2646 = vunpack.c.l.b16 %v2589
    %v2647 = vunpack.c.h.b16 %v2589
    %v2648 = vunpack.c.l.b16 %v2590
    %v2649 = vunpack.c.h.b16 %v2590
    %v2650 = vunpack.c.l.b16 %v2591
    %v2651 = vunpack.c.h.b16 %v2591
    %v2652 = vunpack.c.l.b16 %v2592
    %v2653 = vunpack.c.h.b16 %v2592
    %v2654 = vunpack.c.l.b16 %v2593
    %v2655 = vunpack.c.h.b16 %v2593
    %v2656 = vunpack.c.l.b16 %v2594
    %v2657 = vunpack.c.h.b16 %v2594
    %v2658 = vunpack.c.l.b16 %v2595
    %v2659 = vunpack.c.h.b16 %v2595
    %v2660 = vunpack.c.l.b16 %v2596
    %v2661 = vunpack.c.h.b16 %v2596
    %v2662 = vpack.c.b16 %v2624, %v2622
    %v2663 = vpack.c.b16 %v2625, %v2623
    %v2664 = vpack.c.b16 %v2628, %v2626
    %v2665 = vpack.c.b16 %v2629, %v2627
    %v2666 = vpack.c.b16 %v2632, %v2630
    %v2667 = vpack.c.b16 %v2633, %v2631
    %v2668 = vpack.c.b16 %v2636, %v2634
    %v2669 = vpack.c.b16 %v2637, %v2635
    %v2670 = vpack.c.b16 %v2640, %v2638
    %v2671 = vpack.c.b16 %v2641, %v2639
    %v2672 = vpack.c.b16 %v2644, %v2642
    %v2673 = vpack.c.b16 %v2645, %v2643
    %v2674 = vpack.c.b16 %v2648, %v2646
    %v2675 = vpack.c.b16 %v2649, %v2647
    %v2676 = vpack.c.b16 %v2652, %v2650
    %v2677 = vpack.c.b16 %v2653, %v2651
    %v2678 = vpack.c.b16 %v2656, %v2654
    %v2679 = vpack.c.b16 %v2657, %v2655
    %v2680 = vpack.c.b16 %v2660, %v2658
    %v2681 = vpack.c.b16 %v2661, %v2659
    %v2703 = vsel %vm22, %v2600, 0
    %2705 = vmatprep.subr.bf16.mxu0 %v2663
    %2706 = vmatpush1.bf16.msra.mxu0 %v2662
    %2707 = vmatprep.subr.bf16.mxu0 %v2665
    %2708 = vmatpush1.bf16.msra.mxu0 %v2664
    %2709 = vmatprep.subr.bf16.mxu0 %v2667
    %2710 = vmatpush1.bf16.msra.mxu0 %v2666
    %2711 = vmatprep.subr.bf16.mxu0 %v2669
    %2712 = vmatpush1.bf16.msra.mxu0 %v2668
    %2713 = vmatprep.subr.bf16.mxu0 %v2671
    %2714 = vmatpush1.bf16.msra.mxu0 %v2670
    %2715 = vmatprep.subr.bf16.mxu0 %v2673
    %2716 = vmatpush1.bf16.msra.mxu0 %v2672
    %2717 = vmatprep.subr.bf16.mxu0 %v2675
    %2718 = vmatpush1.bf16.msra.mxu0 %v2674
    %2719 = vmatprep.subr.bf16.mxu0 %v2677
    %2720 = vmatpush1.bf16.msra.mxu0 %v2676
    %2721 = vmatprep.subr.bf16.mxu0 %v2679
    %2722 = vmatpush1.bf16.msra.mxu0 %v2678
    %2723 = vmatprep.subr.bf16.mxu0 %v2681
    %2724 = vmatpush1.bf16.msra.mxu0 %v2680
    %2725 = vmatprep.subr.bf16.mxu0 0
    %2726 = vmatpush1.bf16.msra.mxu0 0
    %2727 = vmatprep.subr.bf16.mxu0 0
    %2728 = vmatpush1.bf16.msra.mxu0 0
    %2729 = vmatprep.subr.bf16.mxu0 0
    %2730 = vmatpush1.bf16.msra.mxu0 0
    %2731 = vmatprep.subr.bf16.mxu0 0
    %2732 = vmatpush1.bf16.msra.mxu0 0
    %2733 = vmatprep.subr.bf16.mxu0 0
    %2734 = vmatpush1.bf16.msra.mxu0 0
    %2735 = vmatprep.subr.bf16.mxu0 0
    %2736 = vmatpush1.bf16.msra.mxu0 0
    %2737 = vmatprep.mubr.bf16.mxu0 %v2703
    %2738 = vmatmul.mubr.bf16.gmra.mrb[0].mxu0 %v2599
    %v2739 = vpop.f32.mrb[0].mxu0
    %v2740 = vadd.f32 0.0, %v2739
    %v2741 = vpop.f32.mrb[0].mxu0
    %v2742 = vadd.f32 0.0, %v2741
    %v2743 = vpop.f32.mrb[0].mxu0
    %v2744 = vpop.f32.mrb[0].mxu0
    %2745 = vdwg.mxu0
    %v2746 = vadd.f32 %v2568, %v2740
    %v2747 = vadd.f32 %v2569, %v2742
    %v2748 = vld [vmem:[%s4] sm:$0x3]
    %v2750 = vlaneseq
    %v2751 = vshrl.u32 %v2750, 7
    %v2752 = vsub.s32 0, %v2751
    %v2753 = vrot.slane %v2748, %v2752
    %v2754 = vlaneseq
    %v2755 = vshrl.u32 %v2754, 7
    %v2756 = vsub.s32 1, %v2755
    %v2757 = vrot.slane %v2748, %v2756
    %v2760 = vadd.f32 %v2746, %v2753
    %v2761 = vadd.f32 %v2747, %v2757
    %v2762 = vmax.f32 %v2760, 0.0
    %v2763 = vmax.f32 %v2761, 0.0
    %v2766 = vrot.slane %v2762, 7
    %v2767 = vrot.slane %v2763, 7
    %s2770 = smul.addr %s1667, 8
    %s2771 = scalar_lea.vmem %s5, %s2770
    %2772 = vst [vmem:[%s2771] sm:$0xfe] %v2766
    %vm2773 = vcmask 261121
    %2774 = vst.msk [vmem:[%s2771 + $0x8] sm:$0xfe] %vm2773, %v2767
    %2775 = vst [vmem:[%s2771 + $0x10] sm:$0x1] %v2766
    %vm2776 = vcmask 253952
    %2777 = vst.msk [vmem:[%s2771 + $0x18] sm:$0x1] %vm2776, %v2767
  $region33: #{unet_forward.4} parent=0 // loop_footer
    %s1130 = sadd.s32 1, %s1126
  $region34: #{unet_forward.4} parent=0 // loop_footer_branch
    %1125 = sbr.rel target = $region30
  $region35: #{unet_forward.4} parent=0 // loop_exit
    _
  // Predicated region
  $region36: #{unet_forward.4} parent=0 // pred_check
    _
  $region37: #{unet_forward.4} parent=0 // pred_check_branch
    %2779 = sbr.rel (0) target = $region39
  $region38: #{unet_forward.4} parent=0 // pred_region
    _
  $region39: #{unet_forward.4} parent=0 // pred_fallthru
    _
  // Predicated region
  $region40: #{unet_forward.4} parent=0 // pred_check
    _
  $region41: #{unet_forward.4} parent=0 // pred_check_branch
    %2781 = sbr.rel (0) target = $region43
  $region42: #{unet_forward.4} parent=0 // pred_region
    _
  $region43: #{unet_forward.4} parent=0 // pred_fallthru
    _

// kernel: unet_forward.5
$region0: #{unet_forward.5}
  #allocation0 [shape = 'u32[]', space=smem, size = 0x4, offset = 0x4, fixed_abs, tag = 'smem constant byte address 0x4 - core index']
  #allocation1 [shape = 'u32[144,128]{1,0:T(1,128)}', space=vmem, size = 0x12000, scoped, tag = 'internal scratch']
  #allocation2 [shape = 'f32[18,18,144]{2,1,0:T(8,128)}', space=vmem, size = 0x6c000, scoped, tag = 'scratch operand']
  %s0 = inlined_call_operand.vmem [shape: f32[18,18,288], index: 0, kind: input, shape index: {}]
  %s1 = inlined_call_operand.vmem [shape: f32[18,18,144], index: 1, kind: input, shape index: {}]
  %s2 = inlined_call_operand.vmem [shape: bf16[9,288,144], index: 2, kind: input, shape index: {}]
  %s3 = inlined_call_operand.vmem [shape: bf16[9,144,144], index: 3, kind: input, shape index: {}]
  %s4 = inlined_call_operand.vmem [shape: f32[1,144], index: 4, kind: input, shape index: {}, may-alias: {4,6}]
  %s5 = inlined_call_operand.vmem [shape: bf16[9,144,144], index: 5, kind: input, shape index: {}]
  %s6 = inlined_call_operand.vmem [shape: f32[1,144], index: 6, kind: input, shape index: {}, may-alias: {4,6}]
  %s7 = inlined_call_operand.vmem [shape: bf16[144,32], index: 7, kind: input, shape index: {}]
  %s8 = inlined_call_operand.vmem [shape: f32[1,32], index: 8, kind: input, shape index: {}]
  %s9 = inlined_call_operand.vmem [shape: f32[16,16,32], index: 9, kind: output, shape index: {}]
  %s10 = sld [smem:[#allocation0]]
  $region60: #{unet_forward.5} parent=0
    _
  %s12 = ssub.s32 1, %s10
  %s13 = scalar_select 0, %s12, %s10
  // Predicated region
  $region2: #{unet_forward.5} parent=0 // pred_check
    _
  $region3: #{unet_forward.5} parent=0 // pred_check_branch
    %15 = sbr.rel (0) target = $region5
  $region4: #{unet_forward.5} parent=0 // pred_region
    _
  $region5: #{unet_forward.5} parent=0 // pred_fallthru
    _
  // Predicated region
  $region6: #{unet_forward.5} parent=0 // pred_check
    _
  $region7: #{unet_forward.5} parent=0 // pred_check_branch
    %17 = sbr.rel (0) target = $region9
  $region8: #{unet_forward.5} parent=0 // pred_region
    _
  $region9: #{unet_forward.5} parent=0 // pred_fallthru
    _
  // Predicated region
  $region10: #{unet_forward.5} parent=0 // pred_check
    _
  $region11: #{unet_forward.5} parent=0 // pred_check_branch
    %19 = sbr.rel (0) target = $region13
  $region12: #{unet_forward.5} parent=0 // pred_region
    _
  $region13: #{unet_forward.5} parent=0 // pred_fallthru
    _
  // Predicated region
  $region14: #{unet_forward.5} parent=0 // pred_check
    _
  $region15: #{unet_forward.5} parent=0 // pred_check_branch
    %21 = sbr.rel (0) target = $region17
  $region16: #{unet_forward.5} parent=0 // pred_region
    _
  $region17: #{unet_forward.5} parent=0 // pred_fallthru
    _
  // Predicated region
  $region18: #{unet_forward.5} parent=0 // pred_check
    _
  $region19: #{unet_forward.5} parent=0 // pred_check_branch
    %23 = sbr.rel (0) target = $region21
  $region20: #{unet_forward.5} parent=0 // pred_region
    _
  $region21: #{unet_forward.5} parent=0 // pred_fallthru
    _
  // Predicated region
  $region22: #{unet_forward.5} parent=0 // pred_check
    _
  $region23: #{unet_forward.5} parent=0 // pred_check_branch
    %25 = sbr.rel (0) target = $region25
  $region24: #{unet_forward.5} parent=0 // pred_region
    _
  $region25: #{unet_forward.5} parent=0 // pred_fallthru
    _
  // Predicated region
  $region26: #{unet_forward.5} parent=0 // pred_check
    _
  $region27: #{unet_forward.5} parent=0 // pred_check_branch
    %27 = sbr.rel (0) target = $region29
  $region28: #{unet_forward.5} parent=0 // pred_region
    _
  $region29: #{unet_forward.5} parent=0 // pred_fallthru
    _
  // Predicated region
  $region30: #{unet_forward.5} parent=0 // pred_check
    _
  $region31: #{unet_forward.5} parent=0 // pred_check_branch
    %29 = sbr.rel (0) target = $region33
  $region32: #{unet_forward.5} parent=0 // pred_region
    _
  $region33: #{unet_forward.5} parent=0 // pred_fallthru
    _
  // Predicated region
  $region34: #{unet_forward.5} parent=0 // pred_check
    _
  $region35: #{unet_forward.5} parent=0 // pred_check_branch
    %31 = sbr.rel (0) target = $region37
  $region36: #{unet_forward.5} parent=0 // pred_region
    _
  $region37: #{unet_forward.5} parent=0 // pred_fallthru
    _
  %33 = vst [vmem:[#allocation2] sm:$0xff] 0.0
  %vm34 = vcmask 130048
  %35 = vst.msk [vmem:[#allocation2 + $0x8] sm:$0xff] %vm34, 0.0
  %36 = vst [vmem:[#allocation2 + $0x10] sm:$0xff] 0.0
  %37 = vst.msk [vmem:[#allocation2 + $0x18] sm:$0xff] %vm34, 0.0
  %38 = vst [vmem:[#allocation2 + $0x20] sm:$0x3] 0.0
  %vm39 = vcmask 123904
  %40 = vst.msk [vmem:[#allocation2 + $0x28] sm:$0x3] %vm39, 0.0
  %41 = vst [vmem:[#allocation2 + $0x30] sm:$0xff] 0.0
  %42 = vst.msk [vmem:[#allocation2 + $0x38] sm:$0xff] %vm34, 0.0
  %43 = vst [vmem:[#allocation2 + $0x40] sm:$0xff] 0.0
  %44 = vst.msk [vmem:[#allocation2 + $0x48] sm:$0xff] %vm34, 0.0
  %45 = vst [vmem:[#allocation2 + $0x50] sm:$0x3] 0.0
  %46 = vst.msk [vmem:[#allocation2 + $0x58] sm:$0x3] %vm39, 0.0
  %47 = vst [vmem:[#allocation2 + $0x60] sm:$0xff] 0.0
  %48 = vst.msk [vmem:[#allocation2 + $0x68] sm:$0xff] %vm34, 0.0
  %49 = vst [vmem:[#allocation2 + $0x70] sm:$0xff] 0.0
  %50 = vst.msk [vmem:[#allocation2 + $0x78] sm:$0xff] %vm34, 0.0
  %51 = vst [vmem:[#allocation2 + $0x80] sm:$0x3] 0.0
  %52 = vst.msk [vmem:[#allocation2 + $0x88] sm:$0x3] %vm39, 0.0
  %53 = vst [vmem:[#allocation2 + $0x90] sm:$0xff] 0.0
  %54 = vst.msk [vmem:[#allocation2 + $0x98] sm:$0xff] %vm34, 0.0
  %55 = vst [vmem:[#allocation2 + $0xa0] sm:$0xff] 0.0
  %56 = vst.msk [vmem:[#allocation2 + $0xa8] sm:$0xff] %vm34, 0.0
  %57 = vst [vmem:[#allocation2 + $0xb0] sm:$0x3] 0.0
  %58 = vst.msk [vmem:[#allocation2 + $0xb8] sm:$0x3] %vm39, 0.0
  %59 = vst [vmem:[#allocation2 + $0xc0] sm:$0xff] 0.0
  %60 = vst.msk [vmem:[#allocation2 + $0xc8] sm:$0xff] %vm34, 0.0
  %61 = vst [vmem:[#allocation2 + $0xd0] sm:$0xff] 0.0
  %62 = vst.msk [vmem:[#allocation2 + $0xd8] sm:$0xff] %vm34, 0.0
  %63 = vst [vmem:[#allocation2 + $0xe0] sm:$0x3] 0.0
  %64 = vst.msk [vmem:[#allocation2 + $0xe8] sm:$0x3] %vm39, 0.0
  %65 = vst [vmem:[#allocation2 + $0xf0] sm:$0xff] 0.0
  %66 = vst.msk [vmem:[#allocation2 + $0xf8] sm:$0xff] %vm34, 0.0
  %67 = vst [vmem:[#allocation2 + $0x100] sm:$0xff] 0.0
  %68 = vst.msk [vmem:[#allocation2 + $0x108] sm:$0xff] %vm34, 0.0
  %69 = vst [vmem:[#allocation2 + $0x110] sm:$0x3] 0.0
  %70 = vst.msk [vmem:[#allocation2 + $0x118] sm:$0x3] %vm39, 0.0
  %71 = vst [vmem:[#allocation2 + $0x120] sm:$0xff] 0.0
  %72 = vst.msk [vmem:[#allocation2 + $0x128] sm:$0xff] %vm34, 0.0
  %73 = vst [vmem:[#allocation2 + $0x130] sm:$0xff] 0.0
  %74 = vst.msk [vmem:[#allocation2 + $0x138] sm:$0xff] %vm34, 0.0
  %75 = vst [vmem:[#allocation2 + $0x140] sm:$0x3] 0.0
  %76 = vst.msk [vmem:[#allocation2 + $0x148] sm:$0x3] %vm39, 0.0
  %77 = vst [vmem:[#allocation2 + $0x150] sm:$0xff] 0.0
  %78 = vst.msk [vmem:[#allocation2 + $0x158] sm:$0xff] %vm34, 0.0
  %79 = vst [vmem:[#allocation2 + $0x160] sm:$0xff] 0.0
  %80 = vst.msk [vmem:[#allocation2 + $0x168] sm:$0xff] %vm34, 0.0
  %81 = vst [vmem:[#allocation2 + $0x170] sm:$0x3] 0.0
  %82 = vst.msk [vmem:[#allocation2 + $0x178] sm:$0x3] %vm39, 0.0
  %83 = vst [vmem:[#allocation2 + $0x180] sm:$0xff] 0.0
  %84 = vst.msk [vmem:[#allocation2 + $0x188] sm:$0xff] %vm34, 0.0
  %85 = vst [vmem:[#allocation2 + $0x190] sm:$0xff] 0.0
  %86 = vst.msk [vmem:[#allocation2 + $0x198] sm:$0xff] %vm34, 0.0
  %87 = vst [vmem:[#allocation2 + $0x1a0] sm:$0x3] 0.0
  %88 = vst.msk [vmem:[#allocation2 + $0x1a8] sm:$0x3] %vm39, 0.0
  %89 = vst [vmem:[#allocation2 + $0x1b0] sm:$0xff] 0.0
  %90 = vst.msk [vmem:[#allocation2 + $0x1b8] sm:$0xff] %vm34, 0.0
  %91 = vst [vmem:[#allocation2 + $0x1c0] sm:$0xff] 0.0
  %92 = vst.msk [vmem:[#allocation2 + $0x1c8] sm:$0xff] %vm34, 0.0
  %93 = vst [vmem:[#allocation2 + $0x1d0] sm:$0x3] 0.0
  %94 = vst.msk [vmem:[#allocation2 + $0x1d8] sm:$0x3] %vm39, 0.0
  %95 = vst [vmem:[#allocation2 + $0x1e0] sm:$0xff] 0.0
  %96 = vst.msk [vmem:[#allocation2 + $0x1e8] sm:$0xff] %vm34, 0.0
  %97 = vst [vmem:[#allocation2 + $0x1f0] sm:$0xff] 0.0
  %98 = vst.msk [vmem:[#allocation2 + $0x1f8] sm:$0xff] %vm34, 0.0
  %99 = vst [vmem:[#allocation2 + $0x200] sm:$0x3] 0.0
  %100 = vst.msk [vmem:[#allocation2 + $0x208] sm:$0x3] %vm39, 0.0
  %101 = vst [vmem:[#allocation2 + $0x210] sm:$0xff] 0.0
  %102 = vst.msk [vmem:[#allocation2 + $0x218] sm:$0xff] %vm34, 0.0
  %103 = vst [vmem:[#allocation2 + $0x220] sm:$0xff] 0.0
  %104 = vst.msk [vmem:[#allocation2 + $0x228] sm:$0xff] %vm34, 0.0
  %105 = vst [vmem:[#allocation2 + $0x230] sm:$0x3] 0.0
  %106 = vst.msk [vmem:[#allocation2 + $0x238] sm:$0x3] %vm39, 0.0
  %107 = vst [vmem:[#allocation2 + $0x240] sm:$0xff] 0.0
  %108 = vst.msk [vmem:[#allocation2 + $0x248] sm:$0xff] %vm34, 0.0
  %109 = vst [vmem:[#allocation2 + $0x250] sm:$0xff] 0.0
  %110 = vst.msk [vmem:[#allocation2 + $0x258] sm:$0xff] %vm34, 0.0
  %111 = vst [vmem:[#allocation2 + $0x260] sm:$0x3] 0.0
  %112 = vst.msk [vmem:[#allocation2 + $0x268] sm:$0x3] %vm39, 0.0
  %113 = vst [vmem:[#allocation2 + $0x270] sm:$0xff] 0.0
  %114 = vst.msk [vmem:[#allocation2 + $0x278] sm:$0xff] %vm34, 0.0
  %115 = vst [vmem:[#allocation2 + $0x280] sm:$0xff] 0.0
  %116 = vst.msk [vmem:[#allocation2 + $0x288] sm:$0xff] %vm34, 0.0
  %117 = vst [vmem:[#allocation2 + $0x290] sm:$0x3] 0.0
  %118 = vst.msk [vmem:[#allocation2 + $0x298] sm:$0x3] %vm39, 0.0
  %119 = vst [vmem:[#allocation2 + $0x2a0] sm:$0xff] 0.0
  %120 = vst.msk [vmem:[#allocation2 + $0x2a8] sm:$0xff] %vm34, 0.0
  %121 = vst [vmem:[#allocation2 + $0x2b0] sm:$0xff] 0.0
  %122 = vst.msk [vmem:[#allocation2 + $0x2b8] sm:$0xff] %vm34, 0.0
  %123 = vst [vmem:[#allocation2 + $0x2c0] sm:$0x3] 0.0
  %124 = vst.msk [vmem:[#allocation2 + $0x2c8] sm:$0x3] %vm39, 0.0
  %125 = vst [vmem:[#allocation2 + $0x2d0] sm:$0xff] 0.0
  %126 = vst.msk [vmem:[#allocation2 + $0x2d8] sm:$0xff] %vm34, 0.0
  %127 = vst [vmem:[#allocation2 + $0x2e0] sm:$0xff] 0.0
  %128 = vst.msk [vmem:[#allocation2 + $0x2e8] sm:$0xff] %vm34, 0.0
  %129 = vst [vmem:[#allocation2 + $0x2f0] sm:$0x3] 0.0
  %130 = vst.msk [vmem:[#allocation2 + $0x2f8] sm:$0x3] %vm39, 0.0
  %131 = vst [vmem:[#allocation2 + $0x300] sm:$0xff] 0.0
  %132 = vst.msk [vmem:[#allocation2 + $0x308] sm:$0xff] %vm34, 0.0
  %133 = vst [vmem:[#allocation2 + $0x310] sm:$0xff] 0.0
  %134 = vst.msk [vmem:[#allocation2 + $0x318] sm:$0xff] %vm34, 0.0
  %135 = vst [vmem:[#allocation2 + $0x320] sm:$0x3] 0.0
  %136 = vst.msk [vmem:[#allocation2 + $0x328] sm:$0x3] %vm39, 0.0
  %137 = vst [vmem:[#allocation2 + $0x330] sm:$0xff] 0.0
  %138 = vst.msk [vmem:[#allocation2 + $0x338] sm:$0xff] %vm34, 0.0
  %139 = vst [vmem:[#allocation2 + $0x340] sm:$0xff] 0.0
  %140 = vst.msk [vmem:[#allocation2 + $0x348] sm:$0xff] %vm34, 0.0
  %141 = vst [vmem:[#allocation2 + $0x350] sm:$0x3] 0.0
  %142 = vst.msk [vmem:[#allocation2 + $0x358] sm:$0x3] %vm39, 0.0
  loop: start=0, step=1, limit=16
  $region38: #{unet_forward.5} parent=0 // loop_pre_header
    _
  $region39: #{unet_forward.5} parent=0 // loop_header
    %s144 = sphi 0, %s148
    %p145 = scmp.ge.s32.totalorder %s144, 16
  $region40: #{unet_forward.5} parent=0 // loop_header_branch
    %147 = sbr.rel (%p145) target = $region44
  $region41: #{unet_forward.5} parent=0 // loop_body
    %s149 = smul.u32 %s144, 9
    %s150 = smul.addr %s149, 8
    %s151 = scalar_lea.vmem %s0, %s150
    %v152 = vld [vmem:[%s151] sm:$0xff]
    %v153 = vld [vmem:[%s151 + $0x8] sm:$0xff]
    %v154 = vld [vmem:[%s151 + $0x10] sm:$0xff]
    %v155 = vld [vmem:[%s151 + $0x18] sm:$0xff]
    %v156 = vld [vmem:[%s151 + $0x20] sm:$0xff]
    %v157 = vld [vmem:[%s151 + $0x28] sm:$0xff]
    %v158 = vpack.c.bf16 %v155, %v152
    %v159 = vpack.c.bf16 %v156, %v153
    %v160 = vpack.c.bf16 %v157, %v154
    %v161 = vld [vmem:[%s2] sm:$0xff]
    %v162 = vld [vmem:[%s2 + $0x8] sm:$0xff]
    %v163 = vld [vmem:[%s2 + $0x10] sm:$0xff]
    %v164 = vld [vmem:[%s2 + $0x18] sm:$0xff]
    %v165 = vld [vmem:[%s2 + $0x20] sm:$0xff]
    %v166 = vld [vmem:[%s2 + $0x28] sm:$0xff]
    %v167 = vld [vmem:[%s2 + $0x30] sm:$0xff]
    %v168 = vld [vmem:[%s2 + $0x38] sm:$0xff]
    %v169 = vld [vmem:[%s2 + $0x40] sm:$0xff]
    %v170 = vld [vmem:[%s2 + $0x48] sm:$0xff]
    %v171 = vld [vmem:[%s2 + $0x50] sm:$0xff]
    %v172 = vld [vmem:[%s2 + $0x58] sm:$0xff]
    %v173 = vld [vmem:[%s2 + $0x60] sm:$0xff]
    %v174 = vld [vmem:[%s2 + $0x68] sm:$0xff]
    %v175 = vld [vmem:[%s2 + $0x70] sm:$0xff]
    %v176 = vld [vmem:[%s2 + $0x78] sm:$0xff]
    %v177 = vld [vmem:[%s2 + $0x80] sm:$0xff]
    %v178 = vld [vmem:[%s2 + $0x88] sm:$0xff]
    %v179 = vld [vmem:[%s2 + $0x90] sm:$0xff]
    %v180 = vld [vmem:[%s2 + $0x98] sm:$0xff]
    %v181 = vld [vmem:[%s2 + $0xa0] sm:$0xff]
    %v182 = vld [vmem:[%s2 + $0xa8] sm:$0xff]
    %v183 = vld [vmem:[%s2 + $0xb0] sm:$0xff]
    %v184 = vld [vmem:[%s2 + $0xb8] sm:$0xff]
    %v185 = vld [vmem:[%s2 + $0xc0] sm:$0xff]
    %v186 = vld [vmem:[%s2 + $0xc8] sm:$0xff]
    %v187 = vld [vmem:[%s2 + $0xd0] sm:$0xff]
    %v188 = vld [vmem:[%s2 + $0xd8] sm:$0xff]
    %v189 = vld [vmem:[%s2 + $0xe0] sm:$0xff]
    %v190 = vld [vmem:[%s2 + $0xe8] sm:$0xff]
    %v191 = vld [vmem:[%s2 + $0xf0] sm:$0xff]
    %v192 = vld [vmem:[%s2 + $0xf8] sm:$0xff]
    %v193 = vld [vmem:[%s2 + $0x100] sm:$0xff]
    %v194 = vld [vmem:[%s2 + $0x108] sm:$0xff]
    %v195 = vld [vmem:[%s2 + $0x110] sm:$0xff]
    %v196 = vld [vmem:[%s2 + $0x118] sm:$0xff]
    %s197 = smul.u32 %s144, 6
    %s198 = smul.addr %s197, 8
    %s199 = scalar_lea.vmem %s1, %s198
    %v200 = vld [vmem:[%s199] sm:$0xff]
    %v201 = vld [vmem:[%s199 + $0x8] sm:$0xff]
    %v202 = vld [vmem:[%s199 + $0x10] sm:$0xff]
    %v203 = vld [vmem:[%s199 + $0x18] sm:$0xff]
    %v204 = vpack.c.bf16 %v202, %v200
    %v205 = vpack.c.bf16 %v203, %v201
    %v206 = vld [vmem:[%s3] sm:$0xff]
    %v207 = vld [vmem:[%s3 + $0x8] sm:$0xff]
    %v208 = vld [vmem:[%s3 + $0x10] sm:$0xff]
    %v209 = vld [vmem:[%s3 + $0x18] sm:$0xff]
    %v210 = vld [vmem:[%s3 + $0x20] sm:$0xff]
    %v211 = vld [vmem:[%s3 + $0x28] sm:$0xff]
    %v212 = vld [vmem:[%s3 + $0x30] sm:$0xff]
    %v213 = vld [vmem:[%s3 + $0x38] sm:$0xff]
    %v214 = vld [vmem:[%s3 + $0x40] sm:$0xff]
    %v215 = vld [vmem:[%s3 + $0x48] sm:$0xff]
    %v216 = vld [vmem:[%s3 + $0x50] sm:$0xff]
    %v217 = vld [vmem:[%s3 + $0x58] sm:$0xff]
    %v218 = vld [vmem:[%s3 + $0x60] sm:$0xff]
    %v219 = vld [vmem:[%s3 + $0x68] sm:$0xff]
    %v220 = vld [vmem:[%s3 + $0x70] sm:$0xff]
    %v221 = vld [vmem:[%s3 + $0x78] sm:$0xff]
    %v222 = vld [vmem:[%s3 + $0x80] sm:$0xff]
    %v223 = vld [vmem:[%s3 + $0x88] sm:$0xff]
    %v242 = vunpack.c.l.b16 %v206
    %v243 = vunpack.c.h.b16 %v206
    %v244 = vunpack.c.l.b16 %v207
    %v245 = vunpack.c.h.b16 %v207
    %v246 = vunpack.c.l.b16 %v208
    %v247 = vunpack.c.h.b16 %v208
    %v248 = vunpack.c.l.b16 %v209
    %v249 = vunpack.c.h.b16 %v209
    %v250 = vunpack.c.l.b16 %v210
    %v251 = vunpack.c.h.b16 %v210
    %v252 = vunpack.c.l.b16 %v211
    %v253 = vunpack.c.h.b16 %v211
    %v254 = vunpack.c.l.b16 %v212
    %v255 = vunpack.c.h.b16 %v212
    %v256 = vunpack.c.l.b16 %v213
    %v257 = vunpack.c.h.b16 %v213
    %v258 = vunpack.c.l.b16 %v214
    %v259 = vunpack.c.h.b16 %v214
    %v260 = vunpack.c.l.b16 %v215
    %v261 = vunpack.c.h.b16 %v215
    %v262 = vunpack.c.l.b16 %v216
    %v263 = vunpack.c.h.b16 %v216
    %v264 = vunpack.c.l.b16 %v217
    %v265 = vunpack.c.h.b16 %v217
    %v266 = vunpack.c.l.b16 %v218
    %v267 = vunpack.c.h.b16 %v218
    %v268 = vunpack.c.l.b16 %v219
    %v269 = vunpack.c.h.b16 %v219
    %v270 = vunpack.c.l.b16 %v220
    %v271 = vunpack.c.h.b16 %v220
    %v272 = vunpack.c.l.b16 %v221
    %v273 = vunpack.c.h.b16 %v221
    %v274 = vunpack.c.l.b16 %v222
    %v275 = vunpack.c.h.b16 %v222
    %v276 = vunpack.c.l.b16 %v223
    %v277 = vunpack.c.h.b16 %v223
    %v278 = vpack.c.b16 %v244, %v242
    %v279 = vpack.c.b16 %v245, %v243
    %v280 = vpack.c.b16 %v248, %v246
    %v281 = vpack.c.b16 %v249, %v247
    %v282 = vpack.c.b16 %v252, %v250
    %v283 = vpack.c.b16 %v253, %v251
    %v284 = vpack.c.b16 %v256, %v254
    %v285 = vpack.c.b16 %v257, %v255
    %v286 = vpack.c.b16 %v260, %v258
    %v287 = vpack.c.b16 %v261, %v259
    %v288 = vpack.c.b16 %v264, %v262
    %v289 = vpack.c.b16 %v265, %v263
    %v290 = vpack.c.b16 %v268, %v266
    %v291 = vpack.c.b16 %v269, %v267
    %v292 = vpack.c.b16 %v272, %v270
    %v293 = vpack.c.b16 %v273, %v271
    %v294 = vpack.c.b16 %v276, %v274
    %v295 = vpack.c.b16 %v277, %v275
    %v315 = vsel %vm34, %v205, 0
    %317 = vmatprep.subr.bf16.mxu0 %v279
    %318 = vmatpush1.bf16.msra.mxu0 %v278
    %319 = vmatprep.subr.bf16.mxu0 %v281
    %320 = vmatpush1.bf16.msra.mxu0 %v280
    %321 = vmatprep.subr.bf16.mxu0 %v283
    %322 = vmatpush1.bf16.msra.mxu0 %v282
    %323 = vmatprep.subr.bf16.mxu0 %v285
    %324 = vmatpush1.bf16.msra.mxu0 %v284
    %325 = vmatprep.subr.bf16.mxu0 %v287
    %326 = vmatpush1.bf16.msra.mxu0 %v286
    %327 = vmatprep.subr.bf16.mxu0 %v289
    %328 = vmatpush1.bf16.msra.mxu0 %v288
    %329 = vmatprep.subr.bf16.mxu0 %v291
    %330 = vmatpush1.bf16.msra.mxu0 %v290
    %331 = vmatprep.subr.bf16.mxu0 %v293
    %332 = vmatpush1.bf16.msra.mxu0 %v292
    %333 = vmatprep.subr.bf16.mxu0 %v295
    %334 = vmatpush1.bf16.msra.mxu0 %v294
    %335 = vmatprep.subr.bf16.mxu0 0
    %336 = vmatpush1.bf16.msra.mxu0 0
    %337 = vmatprep.subr.bf16.mxu0 0
    %338 = vmatpush1.bf16.msra.mxu0 0
    %339 = vmatprep.subr.bf16.mxu0 0
    %340 = vmatpush1.bf16.msra.mxu0 0
    %341 = vmatprep.subr.bf16.mxu0 0
    %342 = vmatpush1.bf16.msra.mxu0 0
    %343 = vmatprep.subr.bf16.mxu0 0
    %344 = vmatpush1.bf16.msra.mxu0 0
    %345 = vmatprep.subr.bf16.mxu0 0
    %346 = vmatpush1.bf16.msra.mxu0 0
    %347 = vmatprep.subr.bf16.mxu0 0
    %348 = vmatpush1.bf16.msra.mxu0 0
    %349 = vmatprep.mubr.bf16.mxu0 %v315
    %350 = vmatmul.mubr.bf16.gmra.mrb[0].mxu0 %v204
    %v351 = vpop.f32.mrb[0].mxu0
    %v352 = vadd.f32 0.0, %v351
    %v353 = vpop.f32.mrb[0].mxu0
    %v354 = vadd.f32 0.0, %v353
    %v355 = vpop.f32.mrb[0].mxu0
    %v356 = vadd.f32 0.0, %v355
    %v357 = vpop.f32.mrb[0].mxu0
    %v358 = vadd.f32 0.0, %v357
    %359 = vdwg.mxu0
    %v396 = vunpack.c.l.b16 %v161
    %v397 = vunpack.c.h.b16 %v161
    %v398 = vunpack.c.l.b16 %v162
    %v399 = vunpack.c.h.b16 %v162
    %v400 = vunpack.c.l.b16 %v163
    %v401 = vunpack.c.h.b16 %v163
    %v402 = vunpack.c.l.b16 %v164
    %v403 = vunpack.c.h.b16 %v164
    %v404 = vunpack.c.l.b16 %v165
    %v405 = vunpack.c.h.b16 %v165
    %v406 = vunpack.c.l.b16 %v166
    %v407 = vunpack.c.h.b16 %v166
    %v408 = vunpack.c.l.b16 %v167
    %v409 = vunpack.c.h.b16 %v167
    %v410 = vunpack.c.l.b16 %v168
    %v411 = vunpack.c.h.b16 %v168
    %v412 = vunpack.c.l.b16 %v169
    %v413 = vunpack.c.h.b16 %v169
    %v414 = vunpack.c.l.b16 %v170
    %v415 = vunpack.c.h.b16 %v170
    %v416 = vunpack.c.l.b16 %v171
    %v417 = vunpack.c.h.b16 %v171
    %v418 = vunpack.c.l.b16 %v172
    %v419 = vunpack.c.h.b16 %v172
    %v420 = vunpack.c.l.b16 %v173
    %v421 = vunpack.c.h.b16 %v173
    %v422 = vunpack.c.l.b16 %v174
    %v423 = vunpack.c.h.b16 %v174
    %v424 = vunpack.c.l.b16 %v175
    %v425 = vunpack.c.h.b16 %v175
    %v426 = vunpack.c.l.b16 %v176
    %v427 = vunpack.c.h.b16 %v176
    %v428 = vunpack.c.l.b16 %v177
    %v429 = vunpack.c.h.b16 %v177
    %v430 = vunpack.c.l.b16 %v178
    %v431 = vunpack.c.h.b16 %v178
    %v432 = vunpack.c.l.b16 %v179
    %v433 = vunpack.c.h.b16 %v179
    %v434 = vunpack.c.l.b16 %v180
    %v435 = vunpack.c.h.b16 %v180
    %v436 = vunpack.c.l.b16 %v181
    %v437 = vunpack.c.h.b16 %v181
    %v438 = vunpack.c.l.b16 %v182
    %v439 = vunpack.c.h.b16 %v182
    %v440 = vunpack.c.l.b16 %v183
    %v441 = vunpack.c.h.b16 %v183
    %v442 = vunpack.c.l.b16 %v184
    %v443 = vunpack.c.h.b16 %v184
    %v444 = vunpack.c.l.b16 %v185
    %v445 = vunpack.c.h.b16 %v185
    %v446 = vunpack.c.l.b16 %v186
    %v447 = vunpack.c.h.b16 %v186
    %v448 = vunpack.c.l.b16 %v187
    %v449 = vunpack.c.h.b16 %v187
    %v450 = vunpack.c.l.b16 %v188
    %v451 = vunpack.c.h.b16 %v188
    %v452 = vunpack.c.l.b16 %v189
    %v453 = vunpack.c.h.b16 %v189
    %v454 = vunpack.c.l.b16 %v190
    %v455 = vunpack.c.h.b16 %v190
    %v456 = vunpack.c.l.b16 %v191
    %v457 = vunpack.c.h.b16 %v191
    %v458 = vunpack.c.l.b16 %v192
    %v459 = vunpack.c.h.b16 %v192
    %v460 = vunpack.c.l.b16 %v193
    %v461 = vunpack.c.h.b16 %v193
    %v462 = vunpack.c.l.b16 %v194
    %v463 = vunpack.c.h.b16 %v194
    %v464 = vunpack.c.l.b16 %v195
    %v465 = vunpack.c.h.b16 %v195
    %v466 = vunpack.c.l.b16 %v196
    %v467 = vunpack.c.h.b16 %v196
    %v468 = vpack.c.b16 %v398, %v396
    %v469 = vpack.c.b16 %v399, %v397
    %v470 = vpack.c.b16 %v402, %v400
    %v471 = vpack.c.b16 %v403, %v401
    %v472 = vpack.c.b16 %v406, %v404
    %v473 = vpack.c.b16 %v407, %v405
    %v474 = vpack.c.b16 %v410, %v408
    %v475 = vpack.c.b16 %v411, %v409
    %v476 = vpack.c.b16 %v414, %v412
    %v477 = vpack.c.b16 %v415, %v413
    %v478 = vpack.c.b16 %v418, %v416
    %v479 = vpack.c.b16 %v419, %v417
    %v480 = vpack.c.b16 %v422, %v420
    %v481 = vpack.c.b16 %v423, %v421
    %v482 = vpack.c.b16 %v426, %v424
    %v483 = vpack.c.b16 %v427, %v425
    %v484 = vpack.c.b16 %v430, %v428
    %v485 = vpack.c.b16 %v431, %v429
    %v486 = vpack.c.b16 %v434, %v432
    %v487 = vpack.c.b16 %v435, %v433
    %v488 = vpack.c.b16 %v438, %v436
    %v489 = vpack.c.b16 %v439, %v437
    %v490 = vpack.c.b16 %v442, %v440
    %v491 = vpack.c.b16 %v443, %v441
    %v492 = vpack.c.b16 %v446, %v444
    %v493 = vpack.c.b16 %v447, %v445
    %v494 = vpack.c.b16 %v450, %v448
    %v495 = vpack.c.b16 %v451, %v449
    %v496 = vpack.c.b16 %v454, %v452
    %v497 = vpack.c.b16 %v455, %v453
    %v498 = vpack.c.b16 %v458, %v456
    %v499 = vpack.c.b16 %v459, %v457
    %v500 = vpack.c.b16 %v462, %v460
    %v501 = vpack.c.b16 %v463, %v461
    %v502 = vpack.c.b16 %v466, %v464
    %v503 = vpack.c.b16 %v467, %v465
    %vm540 = vcmask 261120
    %v542 = vsel %vm540, %v160, 0
    %544 = vmatprep.subr.bf16.mxu0 %v469
    %545 = vmatpush1.bf16.msra.mxu0 %v468
    %546 = vmatprep.subr.bf16.mxu0 %v471
    %547 = vmatpush1.bf16.msra.mxu0 %v470
    %548 = vmatprep.subr.bf16.mxu0 %v473
    %549 = vmatpush1.bf16.msra.mxu0 %v472
    %550 = vmatprep.subr.bf16.mxu0 %v475
    %551 = vmatpush1.bf16.msra.mxu0 %v474
    %552 = vmatprep.subr.bf16.mxu0 %v477
    %553 = vmatpush1.bf16.msra.mxu0 %v476
    %554 = vmatprep.subr.bf16.mxu0 %v479
    %555 = vmatpush1.bf16.msra.mxu0 %v478
    %556 = vmatprep.subr.bf16.mxu0 %v481
    %557 = vmatpush1.bf16.msra.mxu0 %v480
    %558 = vmatprep.subr.bf16.mxu0 %v483
    %559 = vmatpush1.bf16.msra.mxu0 %v482
    %560 = vmatprep.subr.bf16.mxu0 %v485
    %561 = vmatpush1.bf16.msra.mxu0 %v484
    %562 = vmatprep.subr.bf16.mxu0 %v487
    %563 = vmatpush1.bf16.msra.mxu0 %v486
    %564 = vmatprep.subr.bf16.mxu0 %v489
    %565 = vmatpush1.bf16.msra.mxu0 %v488
    %566 = vmatprep.subr.bf16.mxu0 %v491
    %567 = vmatpush1.bf16.msra.mxu0 %v490
    %568 = vmatprep.subr.bf16.mxu0 %v493
    %569 = vmatpush1.bf16.msra.mxu0 %v492
    %570 = vmatprep.subr.bf16.mxu0 %v495
    %571 = vmatpush1.bf16.msra.mxu0 %v494
    %572 = vmatprep.subr.bf16.mxu0 %v497
    %573 = vmatpush1.bf16.msra.mxu0 %v496
    %574 = vmatprep.subr.bf16.mxu0 %v499
    %575 = vmatpush1.bf16.msra.mxu0 %v498
    %576 = vmatprep.mubr.bf16.mxu0 %v159
    %577 = vmatmul.mubr.bf16.gmra.mrb[0].mxu0 %v158
    %v578 = vpop.f32.mrb[0].mxu0
    %v579 = vadd.f32 %v352, %v578
    %v580 = vpop.f32.mrb[0].mxu0
    %v581 = vadd.f32 %v354, %v580
    %v582 = vpop.f32.mrb[0].mxu0
    %v583 = vadd.f32 %v356, %v582
    %v584 = vpop.f32.mrb[0].mxu0
    %v585 = vadd.f32 %v358, %v584
    %586 = vdwg.mxu0
    %587 = vmatprep.subr.bf16.mxu0 %v501
    %588 = vmatpush1.bf16.msra.mxu0 %v500
    %589 = vmatprep.subr.bf16.mxu0 %v503
    %590 = vmatpush1.bf16.msra.mxu0 %v502
    %591 = vmatprep.subr.bf16.mxu0 0
    %592 = vmatpush1.bf16.msra.mxu0 0
    %593 = vmatprep.subr.bf16.mxu0 0
    %594 = vmatpush1.bf16.msra.mxu0 0
    %595 = vmatprep.subr.bf16.mxu0 0
    %596 = vmatpush1.bf16.msra.mxu0 0
    %597 = vmatprep.subr.bf16.mxu0 0
    %598 = vmatpush1.bf16.msra.mxu0 0
    %599 = vmatprep.subr.bf16.mxu0 0
    %600 = vmatpush1.bf16.msra.mxu0 0
    %601 = vmatprep.subr.bf16.mxu0 0
    %602 = vmatpush1.bf16.msra.mxu0 0
    %603 = vmatprep.subr.bf16.mxu0 0
    %604 = vmatpush1.bf16.msra.mxu0 0
    %605 = vmatprep.subr.bf16.mxu0 0
    %606 = vmatpush1.bf16.msra.mxu0 0
    %607 = vmatprep.subr.bf16.mxu0 0
    %608 = vmatpush1.bf16.msra.mxu0 0
    %609 = vmatprep.subr.bf16.mxu0 0
    %610 = vmatpush1.bf16.msra.mxu0 0
    %611 = vmatprep.subr.bf16.mxu0 0
    %612 = vmatpush1.bf16.msra.mxu0 0
    %613 = vmatprep.subr.bf16.mxu0 0
    %614 = vmatpush1.bf16.msra.mxu0 0
    %615 = vmatprep.subr.bf16.mxu0 0
    %616 = vmatpush1.bf16.msra.mxu0 0
    %617 = vmatprep.subr.bf16.mxu0 0
    %618 = vmatpush1.bf16.msra.mxu0 0
    %619 = vmatprep.mubr.bf16.mxu0 0
    %620 = vmatmul.mubr.bf16.gmra.mrb[0].mxu0 %v542
    %v621 = vpop.f32.mrb[0].mxu0
    %v622 = vadd.f32 %v579, %v621
    %v623 = vpop.f32.mrb[0].mxu0
    %v624 = vadd.f32 %v581, %v623
    %v625 = vpop.f32.mrb[0].mxu0
    %v626 = vadd.f32 %v583, %v625
    %v627 = vpop.f32.mrb[0].mxu0
    %v628 = vadd.f32 %v585, %v627
    %629 = vdwg.mxu0
    %v630 = vld [vmem:[%s151] sm:$0xfe]
    %v631 = vld [vmem:[%s151 + $0x8] sm:$0xfe]
    %v632 = vld [vmem:[%s151 + $0x10] sm:$0xfe]
    %v633 = vld [vmem:[%s151 + $0x18] sm:$0xff]
    %v634 = vld [vmem:[%s151 + $0x20] sm:$0xff]
    %v635 = vld [vmem:[%s151 + $0x28] sm:$0xff]
    %v636 = vld [vmem:[%s151 + $0x30] sm:$0x1]
    %v637 = vld [vmem:[%s151 + $0x38] sm:$0x1]
    %v638 = vld [vmem:[%s151 + $0x40] sm:$0x1]
    %v639 = vpack.c.bf16 %v633, %v630
    %v640 = vpack.c.bf16 %v634, %v631
    %v641 = vpack.c.bf16 %v635, %v632
    %v642 = vpack.c.bf16 %v636, %v636
    %v643 = vpack.c.bf16 %v637, %v637
    %v644 = vpack.c.bf16 %v638, %v638
    %s645 = scalar_lea.vmem %s2, 288
    %v646 = vld [vmem:[%s645] sm:$0xff]
    %v647 = vld [vmem:[%s645 + $0x8] sm:$0xff]
    %v648 = vld [vmem:[%s645 + $0x10] sm:$0xff]
    %v649 = vld [vmem:[%s645 + $0x18] sm:$0xff]
    %v650 = vld [vmem:[%s645 + $0x20] sm:$0xff]
    %v651 = vld [vmem:[%s645 + $0x28] sm:$0xff]
    %v652 = vld [vmem:[%s645 + $0x30] sm:$0xff]
    %v653 = vld [vmem:[%s645 + $0x38] sm:$0xff]
    %v654 = vld [vmem:[%s645 + $0x40] sm:$0xff]
    %v655 = vld [vmem:[%s645 + $0x48] sm:$0xff]
    %v656 = vld [vmem:[%s645 + $0x50] sm:$0xff]
    %v657 = vld [vmem:[%s645 + $0x58] sm:$0xff]
    %v658 = vld [vmem:[%s645 + $0x60] sm:$0xff]
    %v659 = vld [vmem:[%s645 + $0x68] sm:$0xff]
    %v660 = vld [vmem:[%s645 + $0x70] sm:$0xff]
    %v661 = vld [vmem:[%s645 + $0x78] sm:$0xff]
    %v662 = vld [vmem:[%s645 + $0x80] sm:$0xff]
    %v663 = vld [vmem:[%s645 + $0x88] sm:$0xff]
    %v664 = vld [vmem:[%s645 + $0x90] sm:$0xff]
    %v665 = vld [vmem:[%s645 + $0x98] sm:$0xff]
    %v666 = vld [vmem:[%s645 + $0xa0] sm:$0xff]
    %v667 = vld [vmem:[%s645 + $0xa8] sm:$0xff]
    %v668 = vld [vmem:[%s645 + $0xb0] sm:$0xff]
    %v669 = vld [vmem:[%s645 + $0xb8] sm:$0xff]
    %v670 = vld [vmem:[%s645 + $0xc0] sm:$0xff]
    %v671 = vld [vmem:[%s645 + $0xc8] sm:$0xff]
    %v672 = vld [vmem:[%s645 + $0xd0] sm:$0xff]
    %v673 = vld [vmem:[%s645 + $0xd8] sm:$0xff]
    %v674 = vld [vmem:[%s645 + $0xe0] sm:$0xff]
    %v675 = vld [vmem:[%s645 + $0xe8] sm:$0xff]
    %v676 = vld [vmem:[%s645 + $0xf0] sm:$0xff]
    %v677 = vld [vmem:[%s645 + $0xf8] sm:$0xff]
    %v678 = vld [vmem:[%s645 + $0x100] sm:$0xff]
    %v679 = vld [vmem:[%s645 + $0x108] sm:$0xff]
    %v680 = vld [vmem:[%s645 + $0x110] sm:$0xff]
    %v681 = vld [vmem:[%s645 + $0x118] sm:$0xff]
    %vm682 = vsmask.f32 7424
    %v684 = vshrl.u32 %v639, 16
    %v686 = vshll.u32 %v639, 16
    %v688 = vrot.slane %v686, 1
    %v689 = vor.u32 %v684, %v688
    %v691 = vshll.u32 %v642, 16
    %v693 = vrot.slane %v691, 1
    %v694 = vsel %vm682, %v689, %v693
    %v696 = vshrl.u32 %v640, 16
    %v698 = vshll.u32 %v640, 16
    %v700 = vrot.slane %v698, 1
    %v701 = vor.u32 %v696, %v700
    %v703 = vshll.u32 %v643, 16
    %v705 = vrot.slane %v703, 1
    %v706 = vsel %vm682, %v701, %v705
    %v708 = vshrl.u32 %v641, 16
    %v710 = vshll.u32 %v641, 16
    %v712 = vrot.slane %v710, 1
    %v713 = vor.u32 %v708, %v712
    %v715 = vshll.u32 %v644, 16
    %v717 = vrot.slane %v715, 1
    %v718 = vsel %vm682, %v713, %v717
    %v757 = vunpack.c.l.b16 %v646
    %v758 = vunpack.c.h.b16 %v646
    %v759 = vunpack.c.l.b16 %v647
    %v760 = vunpack.c.h.b16 %v647
    %v761 = vunpack.c.l.b16 %v648
    %v762 = vunpack.c.h.b16 %v648
    %v763 = vunpack.c.l.b16 %v649
    %v764 = vunpack.c.h.b16 %v649
    %v765 = vunpack.c.l.b16 %v650
    %v766 = vunpack.c.h.b16 %v650
    %v767 = vunpack.c.l.b16 %v651
    %v768 = vunpack.c.h.b16 %v651
    %v769 = vunpack.c.l.b16 %v652
    %v770 = vunpack.c.h.b16 %v652
    %v771 = vunpack.c.l.b16 %v653
    %v772 = vunpack.c.h.b16 %v653
    %v773 = vunpack.c.l.b16 %v654
    %v774 = vunpack.c.h.b16 %v654
    %v775 = vunpack.c.l.b16 %v655
    %v776 = vunpack.c.h.b16 %v655
    %v777 = vunpack.c.l.b16 %v656
    %v778 = vunpack.c.h.b16 %v656
    %v779 = vunpack.c.l.b16 %v657
    %v780 = vunpack.c.h.b16 %v657
    %v781 = vunpack.c.l.b16 %v658
    %v782 = vunpack.c.h.b16 %v658
    %v783 = vunpack.c.l.b16 %v659
    %v784 = vunpack.c.h.b16 %v659
    %v785 = vunpack.c.l.b16 %v660
    %v786 = vunpack.c.h.b16 %v660
    %v787 = vunpack.c.l.b16 %v661
    %v788 = vunpack.c.h.b16 %v661
    %v789 = vunpack.c.l.b16 %v662
    %v790 = vunpack.c.h.b16 %v662
    %v791 = vunpack.c.l.b16 %v663
    %v792 = vunpack.c.h.b16 %v663
    %v793 = vunpack.c.l.b16 %v664
    %v794 = vunpack.c.h.b16 %v664
    %v795 = vunpack.c.l.b16 %v665
    %v796 = vunpack.c.h.b16 %v665
    %v797 = vunpack.c.l.b16 %v666
    %v798 = vunpack.c.h.b16 %v666
    %v799 = vunpack.c.l.b16 %v667
    %v800 = vunpack.c.h.b16 %v667
    %v801 = vunpack.c.l.b16 %v668
    %v802 = vunpack.c.h.b16 %v668
    %v803 = vunpack.c.l.b16 %v669
    %v804 = vunpack.c.h.b16 %v669
    %v805 = vunpack.c.l.b16 %v670
    %v806 = vunpack.c.h.b16 %v670
    %v807 = vunpack.c.l.b16 %v671
    %v808 = vunpack.c.h.b16 %v671
    %v809 = vunpack.c.l.b16 %v672
    %v810 = vunpack.c.h.b16 %v672
    %v811 = vunpack.c.l.b16 %v673
    %v812 = vunpack.c.h.b16 %v673
    %v813 = vunpack.c.l.b16 %v674
    %v814 = vunpack.c.h.b16 %v674
    %v815 = vunpack.c.l.b16 %v675
    %v816 = vunpack.c.h.b16 %v675
    %v817 = vunpack.c.l.b16 %v676
    %v818 = vunpack.c.h.b16 %v676
    %v819 = vunpack.c.l.b16 %v677
    %v820 = vunpack.c.h.b16 %v677
    %v821 = vunpack.c.l.b16 %v678
    %v822 = vunpack.c.h.b16 %v678
    %v823 = vunpack.c.l.b16 %v679
    %v824 = vunpack.c.h.b16 %v679
    %v825 = vunpack.c.l.b16 %v680
    %v826 = vunpack.c.h.b16 %v680
    %v827 = vunpack.c.l.b16 %v681
    %v828 = vunpack.c.h.b16 %v681
    %v829 = vpack.c.b16 %v759, %v757
    %v830 = vpack.c.b16 %v760, %v758
    %v831 = vpack.c.b16 %v763, %v761
    %v832 = vpack.c.b16 %v764, %v762
    %v833 = vpack.c.b16 %v767, %v765
    %v834 = vpack.c.b16 %v768, %v766
    %v835 = vpack.c.b16 %v771, %v769
    %v836 = vpack.c.b16 %v772, %v770
    %v837 = vpack.c.b16 %v775, %v773
    %v838 = vpack.c.b16 %v776, %v774
    %v839 = vpack.c.b16 %v779, %v777
    %v840 = vpack.c.b16 %v780, %v778
    %v841 = vpack.c.b16 %v783, %v781
    %v842 = vpack.c.b16 %v784, %v782
    %v843 = vpack.c.b16 %v787, %v785
    %v844 = vpack.c.b16 %v788, %v786
    %v845 = vpack.c.b16 %v791, %v789
    %v846 = vpack.c.b16 %v792, %v790
    %v847 = vpack.c.b16 %v795, %v793
    %v848 = vpack.c.b16 %v796, %v794
    %v849 = vpack.c.b16 %v799, %v797
    %v850 = vpack.c.b16 %v800, %v798
    %v851 = vpack.c.b16 %v803, %v801
    %v852 = vpack.c.b16 %v804, %v802
    %v853 = vpack.c.b16 %v807, %v805
    %v854 = vpack.c.b16 %v808, %v806
    %v855 = vpack.c.b16 %v811, %v809
    %v856 = vpack.c.b16 %v812, %v810
    %v857 = vpack.c.b16 %v815, %v813
    %v858 = vpack.c.b16 %v816, %v814
    %v859 = vpack.c.b16 %v819, %v817
    %v860 = vpack.c.b16 %v820, %v818
    %v861 = vpack.c.b16 %v823, %v821
    %v862 = vpack.c.b16 %v824, %v822
    %v863 = vpack.c.b16 %v827, %v825
    %v864 = vpack.c.b16 %v828, %v826
    %v902 = vsel %vm540, %v718, 0
    %904 = vmatprep.subr.bf16.mxu0 %v830
    %905 = vmatpush1.bf16.msra.mxu0 %v829
    %906 = vmatprep.subr.bf16.mxu0 %v832
    %907 = vmatpush1.bf16.msra.mxu0 %v831
    %908 = vmatprep.subr.bf16.mxu0 %v834
    %909 = vmatpush1.bf16.msra.mxu0 %v833
    %910 = vmatprep.subr.bf16.mxu0 %v836
    %911 = vmatpush1.bf16.msra.mxu0 %v835
    %912 = vmatprep.subr.bf16.mxu0 %v838
    %913 = vmatpush1.bf16.msra.mxu0 %v837
    %914 = vmatprep.subr.bf16.mxu0 %v840
    %915 = vmatpush1.bf16.msra.mxu0 %v839
    %916 = vmatprep.subr.bf16.mxu0 %v842
    %917 = vmatpush1.bf16.msra.mxu0 %v841
    %918 = vmatprep.subr.bf16.mxu0 %v844
    %919 = vmatpush1.bf16.msra.mxu0 %v843
    %920 = vmatprep.subr.bf16.mxu0 %v846
    %921 = vmatpush1.bf16.msra.mxu0 %v845
    %922 = vmatprep.subr.bf16.mxu0 %v848
    %923 = vmatpush1.bf16.msra.mxu0 %v847
    %924 = vmatprep.subr.bf16.mxu0 %v850
    %925 = vmatpush1.bf16.msra.mxu0 %v849
    %926 = vmatprep.subr.bf16.mxu0 %v852
    %927 = vmatpush1.bf16.msra.mxu0 %v851
    %928 = vmatprep.subr.bf16.mxu0 %v854
    %929 = vmatpush1.bf16.msra.mxu0 %v853
    %930 = vmatprep.subr.bf16.mxu0 %v856
    %931 = vmatpush1.bf16.msra.mxu0 %v855
    %932 = vmatprep.subr.bf16.mxu0 %v858
    %933 = vmatpush1.bf16.msra.mxu0 %v857
    %934 = vmatprep.subr.bf16.mxu0 %v860
    %935 = vmatpush1.bf16.msra.mxu0 %v859
    %936 = vmatprep.mubr.bf16.mxu0 %v706
    %937 = vmatmul.mubr.bf16.gmra.mrb[0].mxu0 %v694
    %v938 = vpop.f32.mrb[0].mxu0
    %v939 = vadd.f32 0.0, %v938
    %v940 = vpop.f32.mrb[0].mxu0
    %v941 = vadd.f32 0.0, %v940
    %v942 = vpop.f32.mrb[0].mxu0
    %v943 = vadd.f32 0.0, %v942
    %v944 = vpop.f32.mrb[0].mxu0
    %v945 = vadd.f32 0.0, %v944
    %946 = vdwg.mxu0
    %947 = vmatprep.subr.bf16.mxu0 %v862
    %948 = vmatpush1.bf16.msra.mxu0 %v861
    %949 = vmatprep.subr.bf16.mxu0 %v864
    %950 = vmatpush1.bf16.msra.mxu0 %v863
    %951 = vmatprep.subr.bf16.mxu0 0
    %952 = vmatpush1.bf16.msra.mxu0 0
    %953 = vmatprep.subr.bf16.mxu0 0
    %954 = vmatpush1.bf16.msra.mxu0 0
    %955 = vmatprep.subr.bf16.mxu0 0
    %956 = vmatpush1.bf16.msra.mxu0 0
    %957 = vmatprep.subr.bf16.mxu0 0
    %958 = vmatpush1.bf16.msra.mxu0 0
    %959 = vmatprep.subr.bf16.mxu0 0
    %960 = vmatpush1.bf16.msra.mxu0 0
    %961 = vmatprep.subr.bf16.mxu0 0
    %962 = vmatpush1.bf16.msra.mxu0 0
    %963 = vmatprep.subr.bf16.mxu0 0
    %964 = vmatpush1.bf16.msra.mxu0 0
    %965 = vmatprep.subr.bf16.mxu0 0
    %966 = vmatpush1.bf16.msra.mxu0 0
    %967 = vmatprep.subr.bf16.mxu0 0
    %968 = vmatpush1.bf16.msra.mxu0 0
    %969 = vmatprep.subr.bf16.mxu0 0
    %970 = vmatpush1.bf16.msra.mxu0 0
    %971 = vmatprep.subr.bf16.mxu0 0
    %972 = vmatpush1.bf16.msra.mxu0 0
    %973 = vmatprep.subr.bf16.mxu0 0
    %974 = vmatpush1.bf16.msra.mxu0 0
    %975 = vmatprep.subr.bf16.mxu0 0
    %976 = vmatpush1.bf16.msra.mxu0 0
    %977 = vmatprep.subr.bf16.mxu0 0
    %978 = vmatpush1.bf16.msra.mxu0 0
    %979 = vmatprep.mubr.bf16.mxu0 0
    %980 = vmatmul.mubr.bf16.gmra.mrb[0].mxu0 %v902
    %v981 = vpop.f32.mrb[0].mxu0
    %v982 = vadd.f32 %v939, %v981
    %v983 = vpop.f32.mrb[0].mxu0
    %v984 = vadd.f32 %v941, %v983
    %v985 = vpop.f32.mrb[0].mxu0
    %v986 = vadd.f32 %v943, %v985
    %v987 = vpop.f32.mrb[0].mxu0
    %v988 = vadd.f32 %v945, %v987
    %989 = vdwg.mxu0
    %v990 = vadd.f32 %v622, %v982
    %v991 = vadd.f32 %v624, %v984
    %v992 = vadd.f32 %v626, %v986
    %v993 = vadd.f32 %v628, %v988
    %v994 = vld [vmem:[%s199] sm:$0xfe]
    %v995 = vld [vmem:[%s199 + $0x8] sm:$0xfe]
    %v996 = vld [vmem:[%s199 + $0x10] sm:$0xff]
    %v997 = vld [vmem:[%s199 + $0x18] sm:$0xff]
    %v998 = vld [vmem:[%s199 + $0x20] sm:$0x1]
    %v999 = vld [vmem:[%s199 + $0x28] sm:$0x1]
    %v1000 = vpack.c.bf16 %v996, %v994
    %v1001 = vpack.c.bf16 %v997, %v995
    %v1002 = vpack.c.bf16 %v998, %v998
    %v1003 = vpack.c.bf16 %v999, %v999
    %s1004 = scalar_lea.vmem %s3, 144
    %v1005 = vld [vmem:[%s1004] sm:$0xff]
    %v1006 = vld [vmem:[%s1004 + $0x8] sm:$0xff]
    %v1007 = vld [vmem:[%s1004 + $0x10] sm:$0xff]
    %v1008 = vld [vmem:[%s1004 + $0x18] sm:$0xff]
    %v1009 = vld [vmem:[%s1004 + $0x20] sm:$0xff]
    %v1010 = vld [vmem:[%s1004 + $0x28] sm:$0xff]
    %v1011 = vld [vmem:[%s1004 + $0x30] sm:$0xff]
    %v1012 = vld [vmem:[%s1004 + $0x38] sm:$0xff]
    %v1013 = vld [vmem:[%s1004 + $0x40] sm:$0xff]
    %v1014 = vld [vmem:[%s1004 + $0x48] sm:$0xff]
    %v1015 = vld [vmem:[%s1004 + $0x50] sm:$0xff]
    %v1016 = vld [vmem:[%s1004 + $0x58] sm:$0xff]
    %v1017 = vld [vmem:[%s1004 + $0x60] sm:$0xff]
    %v1018 = vld [vmem:[%s1004 + $0x68] sm:$0xff]
    %v1019 = vld [vmem:[%s1004 + $0x70] sm:$0xff]
    %v1020 = vld [vmem:[%s1004 + $0x78] sm:$0xff]
    %v1021 = vld [vmem:[%s1004 + $0x80] sm:$0xff]
    %v1022 = vld [vmem:[%s1004 + $0x88] sm:$0xff]
    %v1024 = vshrl.u32 %v1000, 16
    %v1026 = vshll.u32 %v1000, 16
    %v1028 = vrot.slane %v1026, 1
    %v1029 = vor.u32 %v1024, %v1028
    %v1031 = vshll.u32 %v1002, 16
    %v1033 = vrot.slane %v1031, 1
    %v1034 = vsel %vm682, %v1029, %v1033
    %v1036 = vshrl.u32 %v1001, 16
    %v1038 = vshll.u32 %v1001, 16
    %v1040 = vrot.slane %v1038, 1
    %v1041 = vor.u32 %v1036, %v1040
    %v1043 = vshll.u32 %v1003, 16
    %v1045 = vrot.slane %v1043, 1
    %v1046 = vsel %vm682, %v1041, %v1045
    %v1066 = vunpack.c.l.b16 %v1005
    %v1067 = vunpack.c.h.b16 %v1005
    %v1068 = vunpack.c.l.b16 %v1006
    %v1069 = vunpack.c.h.b16 %v1006
    %v1070 = vunpack.c.l.b16 %v1007
    %v1071 = vunpack.c.h.b16 %v1007
    %v1072 = vunpack.c.l.b16 %v1008
    %v1073 = vunpack.c.h.b16 %v1008
    %v1074 = vunpack.c.l.b16 %v1009
    %v1075 = vunpack.c.h.b16 %v1009
    %v1076 = vunpack.c.l.b16 %v1010
    %v1077 = vunpack.c.h.b16 %v1010
    %v1078 = vunpack.c.l.b16 %v1011
    %v1079 = vunpack.c.h.b16 %v1011
    %v1080 = vunpack.c.l.b16 %v1012
    %v1081 = vunpack.c.h.b16 %v1012
    %v1082 = vunpack.c.l.b16 %v1013
    %v1083 = vunpack.c.h.b16 %v1013
    %v1084 = vunpack.c.l.b16 %v1014
    %v1085 = vunpack.c.h.b16 %v1014
    %v1086 = vunpack.c.l.b16 %v1015
    %v1087 = vunpack.c.h.b16 %v1015
    %v1088 = vunpack.c.l.b16 %v1016
    %v1089 = vunpack.c.h.b16 %v1016
    %v1090 = vunpack.c.l.b16 %v1017
    %v1091 = vunpack.c.h.b16 %v1017
    %v1092 = vunpack.c.l.b16 %v1018
    %v1093 = vunpack.c.h.b16 %v1018
    %v1094 = vunpack.c.l.b16 %v1019
    %v1095 = vunpack.c.h.b16 %v1019
    %v1096 = vunpack.c.l.b16 %v1020
    %v1097 = vunpack.c.h.b16 %v1020
    %v1098 = vunpack.c.l.b16 %v1021
    %v1099 = vunpack.c.h.b16 %v1021
    %v1100 = vunpack.c.l.b16 %v1022
    %v1101 = vunpack.c.h.b16 %v1022
    %v1102 = vpack.c.b16 %v1068, %v1066
    %v1103 = vpack.c.b16 %v1069, %v1067
    %v1104 = vpack.c.b16 %v1072, %v1070
    %v1105 = vpack.c.b16 %v1073, %v1071
    %v1106 = vpack.c.b16 %v1076, %v1074
    %v1107 = vpack.c.b16 %v1077, %v1075
    %v1108 = vpack.c.b16 %v1080, %v1078
    %v1109 = vpack.c.b16 %v1081, %v1079
    %v1110 = vpack.c.b16 %v1084, %v1082
    %v1111 = vpack.c.b16 %v1085, %v1083
    %v1112 = vpack.c.b16 %v1088, %v1086
    %v1113 = vpack.c.b16 %v1089, %v1087
    %v1114 = vpack.c.b16 %v1092, %v1090
    %v1115 = vpack.c.b16 %v1093, %v1091
    %v1116 = vpack.c.b16 %v1096, %v1094
    %v1117 = vpack.c.b16 %v1097, %v1095
    %v1118 = vpack.c.b16 %v1100, %v1098
    %v1119 = vpack.c.b16 %v1101, %v1099
    %v1139 = vsel %vm34, %v1046, 0
    %1141 = vmatprep.subr.bf16.mxu0 %v1103
    %1142 = vmatpush1.bf16.msra.mxu0 %v1102
    %1143 = vmatprep.subr.bf16.mxu0 %v1105
    %1144 = vmatpush1.bf16.msra.mxu0 %v1104
    %1145 = vmatprep.subr.bf16.mxu0 %v1107
    %1146 = vmatpush1.bf16.msra.mxu0 %v1106
    %1147 = vmatprep.subr.bf16.mxu0 %v1109
    %1148 = vmatpush1.bf16.msra.mxu0 %v1108
    %1149 = vmatprep.subr.bf16.mxu0 %v1111
    %1150 = vmatpush1.bf16.msra.mxu0 %v1110
    %1151 = vmatprep.subr.bf16.mxu0 %v1113
    %1152 = vmatpush1.bf16.msra.mxu0 %v1112
    %1153 = vmatprep.subr.bf16.mxu0 %v1115
    %1154 = vmatpush1.bf16.msra.mxu0 %v1114
    %1155 = vmatprep.subr.bf16.mxu0 %v1117
    %1156 = vmatpush1.bf16.msra.mxu0 %v1116
    %1157 = vmatprep.subr.bf16.mxu0 %v1119
    %1158 = vmatpush1.bf16.msra.mxu0 %v1118
    %1159 = vmatprep.subr.bf16.mxu0 0
    %1160 = vmatpush1.bf16.msra.mxu0 0
    %1161 = vmatprep.subr.bf16.mxu0 0
    %1162 = vmatpush1.bf16.msra.mxu0 0
    %1163 = vmatprep.subr.bf16.mxu0 0
    %1164 = vmatpush1.bf16.msra.mxu0 0
    %1165 = vmatprep.subr.bf16.mxu0 0
    %1166 = vmatpush1.bf16.msra.mxu0 0
    %1167 = vmatprep.subr.bf16.mxu0 0
    %1168 = vmatpush1.bf16.msra.mxu0 0
    %1169 = vmatprep.subr.bf16.mxu0 0
    %1170 = vmatpush1.bf16.msra.mxu0 0
    %1171 = vmatprep.subr.bf16.mxu0 0
    %1172 = vmatpush1.bf16.msra.mxu0 0
    %1173 = vmatprep.mubr.bf16.mxu0 %v1139
    %1174 = vmatmul.mubr.bf16.gmra.mrb[0].mxu0 %v1034
    %v1175 = vpop.f32.mrb[0].mxu0
    %v1176 = vadd.f32 0.0, %v1175
    %v1177 = vpop.f32.mrb[0].mxu0
    %v1178 = vadd.f32 0.0, %v1177
    %v1179 = vpop.f32.mrb[0].mxu0
    %v1180 = vadd.f32 0.0, %v1179
    %v1181 = vpop.f32.mrb[0].mxu0
    %v1182 = vadd.f32 0.0, %v1181
    %1183 = vdwg.mxu0
    %v1184 = vadd.f32 %v990, %v1176
    %v1185 = vadd.f32 %v991, %v1178
    %v1186 = vadd.f32 %v992, %v1180
    %v1187 = vadd.f32 %v993, %v1182
    %v1188 = vld [vmem:[%s151] sm:$0xfc]
    %v1189 = vld [vmem:[%s151 + $0x8] sm:$0xfc]
    %v1190 = vld [vmem:[%s151 + $0x10] sm:$0xfc]
    %v1191 = vld [vmem:[%s151 + $0x30] sm:$0x3]
    %v1192 = vld [vmem:[%s151 + $0x38] sm:$0x3]
    %v1193 = vld [vmem:[%s151 + $0x40] sm:$0x3]
    %v1194 = vpack.c.bf16 %v633, %v1188
    %v1195 = vpack.c.bf16 %v634, %v1189
    %v1196 = vpack.c.bf16 %v635, %v1190
    %v1197 = vpack.c.bf16 %v1191, %v1191
    %v1198 = vpack.c.bf16 %v1192, %v1192
    %v1199 = vpack.c.bf16 %v1193, %v1193
    %s1200 = scalar_lea.vmem %s2, 576
    %v1201 = vld [vmem:[%s1200] sm:$0xff]
    %v1202 = vld [vmem:[%s1200 + $0x8] sm:$0xff]
    %v1203 = vld [vmem:[%s1200 + $0x10] sm:$0xff]
    %v1204 = vld [vmem:[%s1200 + $0x18] sm:$0xff]
    %v1205 = vld [vmem:[%s1200 + $0x20] sm:$0xff]
    %v1206 = vld [vmem:[%s1200 + $0x28] sm:$0xff]
    %v1207 = vld [vmem:[%s1200 + $0x30] sm:$0xff]
    %v1208 = vld [vmem:[%s1200 + $0x38] sm:$0xff]
    %v1209 = vld [vmem:[%s1200 + $0x40] sm:$0xff]
    %v1210 = vld [vmem:[%s1200 + $0x48] sm:$0xff]
    %v1211 = vld [vmem:[%s1200 + $0x50] sm:$0xff]
    %v1212 = vld [vmem:[%s1200 + $0x58] sm:$0xff]
    %v1213 = vld [vmem:[%s1200 + $0x60] sm:$0xff]
    %v1214 = vld [vmem:[%s1200 + $0x68] sm:$0xff]
    %v1215 = vld [vmem:[%s1200 + $0x70] sm:$0xff]
    %v1216 = vld [vmem:[%s1200 + $0x78] sm:$0xff]
    %v1217 = vld [vmem:[%s1200 + $0x80] sm:$0xff]
    %v1218 = vld [vmem:[%s1200 + $0x88] sm:$0xff]
    %v1219 = vld [vmem:[%s1200 + $0x90] sm:$0xff]
    %v1220 = vld [vmem:[%s1200 + $0x98] sm:$0xff]
    %v1221 = vld [vmem:[%s1200 + $0xa0] sm:$0xff]
    %v1222 = vld [vmem:[%s1200 + $0xa8] sm:$0xff]
    %v1223 = vld [vmem:[%s1200 + $0xb0] sm:$0xff]
    %v1224 = vld [vmem:[%s1200 + $0xb8] sm:$0xff]
    %v1225 = vld [vmem:[%s1200 + $0xc0] sm:$0xff]
    %v1226 = vld [vmem:[%s1200 + $0xc8] sm:$0xff]
    %v1227 = vld [vmem:[%s1200 + $0xd0] sm:$0xff]
    %v1228 = vld [vmem:[%s1200 + $0xd8] sm:$0xff]
    %v1229 = vld [vmem:[%s1200 + $0xe0] sm:$0xff]
    %v1230 = vld [vmem:[%s1200 + $0xe8] sm:$0xff]
    %v1231 = vld [vmem:[%s1200 + $0xf0] sm:$0xff]
    %v1232 = vld [vmem:[%s1200 + $0xf8] sm:$0xff]
    %v1233 = vld [vmem:[%s1200 + $0x100] sm:$0xff]
    %v1234 = vld [vmem:[%s1200 + $0x108] sm:$0xff]
    %v1235 = vld [vmem:[%s1200 + $0x110] sm:$0xff]
    %v1236 = vld [vmem:[%s1200 + $0x118] sm:$0xff]
    %vm1243 = vcmask 1046528
    %v1244 = vrot.slane %v1194, 1
    %v1245 = vrot.slane %v1197, 1
    %v1246 = vsel %vm1243, %v1244, %v1245
    %v1247 = vrot.slane %v1195, 1
    %v1248 = vrot.slane %v1198, 1
    %v1249 = vsel %vm1243, %v1247, %v1248
    %v1250 = vrot.slane %v1196, 1
    %v1251 = vrot.slane %v1199, 1
    %v1252 = vsel %vm1243, %v1250, %v1251
    %v1291 = vunpack.c.l.b16 %v1201
    %v1292 = vunpack.c.h.b16 %v1201
    %v1293 = vunpack.c.l.b16 %v1202
    %v1294 = vunpack.c.h.b16 %v1202
    %v1295 = vunpack.c.l.b16 %v1203
    %v1296 = vunpack.c.h.b16 %v1203
    %v1297 = vunpack.c.l.b16 %v1204
    %v1298 = vunpack.c.h.b16 %v1204
    %v1299 = vunpack.c.l.b16 %v1205
    %v1300 = vunpack.c.h.b16 %v1205
    %v1301 = vunpack.c.l.b16 %v1206
    %v1302 = vunpack.c.h.b16 %v1206
    %v1303 = vunpack.c.l.b16 %v1207
    %v1304 = vunpack.c.h.b16 %v1207
    %v1305 = vunpack.c.l.b16 %v1208
    %v1306 = vunpack.c.h.b16 %v1208
    %v1307 = vunpack.c.l.b16 %v1209
    %v1308 = vunpack.c.h.b16 %v1209
    %v1309 = vunpack.c.l.b16 %v1210
    %v1310 = vunpack.c.h.b16 %v1210
    %v1311 = vunpack.c.l.b16 %v1211
    %v1312 = vunpack.c.h.b16 %v1211
    %v1313 = vunpack.c.l.b16 %v1212
    %v1314 = vunpack.c.h.b16 %v1212
    %v1315 = vunpack.c.l.b16 %v1213
    %v1316 = vunpack.c.h.b16 %v1213
    %v1317 = vunpack.c.l.b16 %v1214
    %v1318 = vunpack.c.h.b16 %v1214
    %v1319 = vunpack.c.l.b16 %v1215
    %v1320 = vunpack.c.h.b16 %v1215
    %v1321 = vunpack.c.l.b16 %v1216
    %v1322 = vunpack.c.h.b16 %v1216
    %v1323 = vunpack.c.l.b16 %v1217
    %v1324 = vunpack.c.h.b16 %v1217
    %v1325 = vunpack.c.l.b16 %v1218
    %v1326 = vunpack.c.h.b16 %v1218
    %v1327 = vunpack.c.l.b16 %v1219
    %v1328 = vunpack.c.h.b16 %v1219
    %v1329 = vunpack.c.l.b16 %v1220
    %v1330 = vunpack.c.h.b16 %v1220
    %v1331 = vunpack.c.l.b16 %v1221
    %v1332 = vunpack.c.h.b16 %v1221
    %v1333 = vunpack.c.l.b16 %v1222
    %v1334 = vunpack.c.h.b16 %v1222
    %v1335 = vunpack.c.l.b16 %v1223
    %v1336 = vunpack.c.h.b16 %v1223
    %v1337 = vunpack.c.l.b16 %v1224
    %v1338 = vunpack.c.h.b16 %v1224
    %v1339 = vunpack.c.l.b16 %v1225
    %v1340 = vunpack.c.h.b16 %v1225
    %v1341 = vunpack.c.l.b16 %v1226
    %v1342 = vunpack.c.h.b16 %v1226
    %v1343 = vunpack.c.l.b16 %v1227
    %v1344 = vunpack.c.h.b16 %v1227
    %v1345 = vunpack.c.l.b16 %v1228
    %v1346 = vunpack.c.h.b16 %v1228
    %v1347 = vunpack.c.l.b16 %v1229
    %v1348 = vunpack.c.h.b16 %v1229
    %v1349 = vunpack.c.l.b16 %v1230
    %v1350 = vunpack.c.h.b16 %v1230
    %v1351 = vunpack.c.l.b16 %v1231
    %v1352 = vunpack.c.h.b16 %v1231
    %v1353 = vunpack.c.l.b16 %v1232
    %v1354 = vunpack.c.h.b16 %v1232
    %v1355 = vunpack.c.l.b16 %v1233
    %v1356 = vunpack.c.h.b16 %v1233
    %v1357 = vunpack.c.l.b16 %v1234
    %v1358 = vunpack.c.h.b16 %v1234
    %v1359 = vunpack.c.l.b16 %v1235
    %v1360 = vunpack.c.h.b16 %v1235
    %v1361 = vunpack.c.l.b16 %v1236
    %v1362 = vunpack.c.h.b16 %v1236
    %v1363 = vpack.c.b16 %v1293, %v1291
    %v1364 = vpack.c.b16 %v1294, %v1292
    %v1365 = vpack.c.b16 %v1297, %v1295
    %v1366 = vpack.c.b16 %v1298, %v1296
    %v1367 = vpack.c.b16 %v1301, %v1299
    %v1368 = vpack.c.b16 %v1302, %v1300
    %v1369 = vpack.c.b16 %v1305, %v1303
    %v1370 = vpack.c.b16 %v1306, %v1304
    %v1371 = vpack.c.b16 %v1309, %v1307
    %v1372 = vpack.c.b16 %v1310, %v1308
    %v1373 = vpack.c.b16 %v1313, %v1311
    %v1374 = vpack.c.b16 %v1314, %v1312
    %v1375 = vpack.c.b16 %v1317, %v1315
    %v1376 = vpack.c.b16 %v1318, %v1316
    %v1377 = vpack.c.b16 %v1321, %v1319
    %v1378 = vpack.c.b16 %v1322, %v1320
    %v1379 = vpack.c.b16 %v1325, %v1323
    %v1380 = vpack.c.b16 %v1326, %v1324
    %v1381 = vpack.c.b16 %v1329, %v1327
    %v1382 = vpack.c.b16 %v1330, %v1328
    %v1383 = vpack.c.b16 %v1333, %v1331
    %v1384 = vpack.c.b16 %v1334, %v1332
    %v1385 = vpack.c.b16 %v1337, %v1335
    %v1386 = vpack.c.b16 %v1338, %v1336
    %v1387 = vpack.c.b16 %v1341, %v1339
    %v1388 = vpack.c.b16 %v1342, %v1340
    %v1389 = vpack.c.b16 %v1345, %v1343
    %v1390 = vpack.c.b16 %v1346, %v1344
    %v1391 = vpack.c.b16 %v1349, %v1347
    %v1392 = vpack.c.b16 %v1350, %v1348
    %v1393 = vpack.c.b16 %v1353, %v1351
    %v1394 = vpack.c.b16 %v1354, %v1352
    %v1395 = vpack.c.b16 %v1357, %v1355
    %v1396 = vpack.c.b16 %v1358, %v1356
    %v1397 = vpack.c.b16 %v1361, %v1359
    %v1398 = vpack.c.b16 %v1362, %v1360
    %v1436 = vsel %vm540, %v1252, 0
    %1438 = vmatprep.subr.bf16.mxu0 %v1364
    %1439 = vmatpush1.bf16.msra.mxu0 %v1363
    %1440 = vmatprep.subr.bf16.mxu0 %v1366
    %1441 = vmatpush1.bf16.msra.mxu0 %v1365
    %1442 = vmatprep.subr.bf16.mxu0 %v1368
    %1443 = vmatpush1.bf16.msra.mxu0 %v1367
    %1444 = vmatprep.subr.bf16.mxu0 %v1370
    %1445 = vmatpush1.bf16.msra.mxu0 %v1369
    %1446 = vmatprep.subr.bf16.mxu0 %v1372
    %1447 = vmatpush1.bf16.msra.mxu0 %v1371
    %1448 = vmatprep.subr.bf16.mxu0 %v1374
    %1449 = vmatpush1.bf16.msra.mxu0 %v1373
    %1450 = vmatprep.subr.bf16.mxu0 %v1376
    %1451 = vmatpush1.bf16.msra.mxu0 %v1375
    %1452 = vmatprep.subr.bf16.mxu0 %v1378
    %1453 = vmatpush1.bf16.msra.mxu0 %v1377
    %1454 = vmatprep.subr.bf16.mxu0 %v1380
    %1455 = vmatpush1.bf16.msra.mxu0 %v1379
    %1456 = vmatprep.subr.bf16.mxu0 %v1382
    %1457 = vmatpush1.bf16.msra.mxu0 %v1381
    %1458 = vmatprep.subr.bf16.mxu0 %v1384
    %1459 = vmatpush1.bf16.msra.mxu0 %v1383
    %1460 = vmatprep.subr.bf16.mxu0 %v1386
    %1461 = vmatpush1.bf16.msra.mxu0 %v1385
    %1462 = vmatprep.subr.bf16.mxu0 %v1388
    %1463 = vmatpush1.bf16.msra.mxu0 %v1387
    %1464 = vmatprep.subr.bf16.mxu0 %v1390
    %1465 = vmatpush1.bf16.msra.mxu0 %v1389
    %1466 = vmatprep.subr.bf16.mxu0 %v1392
    %1467 = vmatpush1.bf16.msra.mxu0 %v1391
    %1468 = vmatprep.subr.bf16.mxu0 %v1394
    %1469 = vmatpush1.bf16.msra.mxu0 %v1393
    %1470 = vmatprep.mubr.bf16.mxu0 %v1249
    %1471 = vmatmul.mubr.bf16.gmra.mrb[0].mxu0 %v1246
    %v1472 = vpop.f32.mrb[0].mxu0
    %v1473 = vadd.f32 0.0, %v1472
    %v1474 = vpop.f32.mrb[0].mxu0
    %v1475 = vadd.f32 0.0, %v1474
    %v1476 = vpop.f32.mrb[0].mxu0
    %v1477 = vadd.f32 0.0, %v1476
    %v1478 = vpop.f32.mrb[0].mxu0
    %v1479 = vadd.f32 0.0, %v1478
    %1480 = vdwg.mxu0
    %1481 = vmatprep.subr.bf16.mxu0 %v1396
    %1482 = vmatpush1.bf16.msra.mxu0 %v1395
    %1483 = vmatprep.subr.bf16.mxu0 %v1398
    %1484 = vmatpush1.bf16.msra.mxu0 %v1397
    %1485 = vmatprep.subr.bf16.mxu0 0
    %1486 = vmatpush1.bf16.msra.mxu0 0
    %1487 = vmatprep.subr.bf16.mxu0 0
    %1488 = vmatpush1.bf16.msra.mxu0 0
    %1489 = vmatprep.subr.bf16.mxu0 0
    %1490 = vmatpush1.bf16.msra.mxu0 0
    %1491 = vmatprep.subr.bf16.mxu0 0
    %1492 = vmatpush1.bf16.msra.mxu0 0
    %1493 = vmatprep.subr.bf16.mxu0 0
    %1494 = vmatpush1.bf16.msra.mxu0 0
    %1495 = vmatprep.subr.bf16.mxu0 0
    %1496 = vmatpush1.bf16.msra.mxu0 0
    %1497 = vmatprep.subr.bf16.mxu0 0
    %1498 = vmatpush1.bf16.msra.mxu0 0
    %1499 = vmatprep.subr.bf16.mxu0 0
    %1500 = vmatpush1.bf16.msra.mxu0 0
    %1501 = vmatprep.subr.bf16.mxu0 0
    %1502 = vmatpush1.bf16.msra.mxu0 0
    %1503 = vmatprep.subr.bf16.mxu0 0
    %1504 = vmatpush1.bf16.msra.mxu0 0
    %1505 = vmatprep.subr.bf16.mxu0 0
    %1506 = vmatpush1.bf16.msra.mxu0 0
    %1507 = vmatprep.subr.bf16.mxu0 0
    %1508 = vmatpush1.bf16.msra.mxu0 0
    %1509 = vmatprep.subr.bf16.mxu0 0
    %1510 = vmatpush1.bf16.msra.mxu0 0
    %1511 = vmatprep.subr.bf16.mxu0 0
    %1512 = vmatpush1.bf16.msra.mxu0 0
    %1513 = vmatprep.mubr.bf16.mxu0 0
    %1514 = vmatmul.mubr.bf16.gmra.mrb[0].mxu0 %v1436
    %v1515 = vpop.f32.mrb[0].mxu0
    %v1516 = vadd.f32 %v1473, %v1515
    %v1517 = vpop.f32.mrb[0].mxu0
    %v1518 = vadd.f32 %v1475, %v1517
    %v1519 = vpop.f32.mrb[0].mxu0
    %v1520 = vadd.f32 %v1477, %v1519
    %v1521 = vpop.f32.mrb[0].mxu0
    %v1522 = vadd.f32 %v1479, %v1521
    %1523 = vdwg.mxu0
    %v1524 = vadd.f32 %v1184, %v1516
    %v1525 = vadd.f32 %v1185, %v1518
    %v1526 = vadd.f32 %v1186, %v1520
    %v1527 = vadd.f32 %v1187, %v1522
    %v1528 = vld [vmem:[%s199] sm:$0xfc]
    %v1529 = vld [vmem:[%s199 + $0x8] sm:$0xfc]
    %v1530 = vld [vmem:[%s199 + $0x20] sm:$0x3]
    %v1531 = vld [vmem:[%s199 + $0x28] sm:$0x3]
    %v1532 = vpack.c.bf16 %v996, %v1528
    %v1533 = vpack.c.bf16 %v997, %v1529
    %v1534 = vpack.c.bf16 %v1530, %v1530
    %v1535 = vpack.c.bf16 %v1531, %v1531
    %s1536 = scalar_lea.vmem %s3, 288
    %v1537 = vld [vmem:[%s1536] sm:$0xff]
    %v1538 = vld [vmem:[%s1536 + $0x8] sm:$0xff]
    %v1539 = vld [vmem:[%s1536 + $0x10] sm:$0xff]
    %v1540 = vld [vmem:[%s1536 + $0x18] sm:$0xff]
    %v1541 = vld [vmem:[%s1536 + $0x20] sm:$0xff]
    %v1542 = vld [vmem:[%s1536 + $0x28] sm:$0xff]
    %v1543 = vld [vmem:[%s1536 + $0x30] sm:$0xff]
    %v1544 = vld [vmem:[%s1536 + $0x38] sm:$0xff]
    %v1545 = vld [vmem:[%s1536 + $0x40] sm:$0xff]
    %v1546 = vld [vmem:[%s1536 + $0x48] sm:$0xff]
    %v1547 = vld [vmem:[%s1536 + $0x50] sm:$0xff]
    %v1548 = vld [vmem:[%s1536 + $0x58] sm:$0xff]
    %v1549 = vld [vmem:[%s1536 + $0x60] sm:$0xff]
    %v1550 = vld [vmem:[%s1536 + $0x68] sm:$0xff]
    %v1551 = vld [vmem:[%s1536 + $0x70] sm:$0xff]
    %v1552 = vld [vmem:[%s1536 + $0x78] sm:$0xff]
    %v1553 = vld [vmem:[%s1536 + $0x80] sm:$0xff]
    %v1554 = vld [vmem:[%s1536 + $0x88] sm:$0xff]
    %v1559 = vrot.slane %v1532, 1
    %v1560 = vrot.slane %v1534, 1
    %v1561 = vsel %vm1243, %v1559, %v1560
    %v1562 = vrot.slane %v1533, 1
    %v1563 = vrot.slane %v1535, 1
    %v1564 = vsel %vm1243, %v1562, %v1563
    %v1584 = vunpack.c.l.b16 %v1537
    %v1585 = vunpack.c.h.b16 %v1537
    %v1586 = vunpack.c.l.b16 %v1538
    %v1587 = vunpack.c.h.b16 %v1538
    %v1588 = vunpack.c.l.b16 %v1539
    %v1589 = vunpack.c.h.b16 %v1539
    %v1590 = vunpack.c.l.b16 %v1540
    %v1591 = vunpack.c.h.b16 %v1540
    %v1592 = vunpack.c.l.b16 %v1541
    %v1593 = vunpack.c.h.b16 %v1541
    %v1594 = vunpack.c.l.b16 %v1542
    %v1595 = vunpack.c.h.b16 %v1542
    %v1596 = vunpack.c.l.b16 %v1543
    %v1597 = vunpack.c.h.b16 %v1543
    %v1598 = vunpack.c.l.b16 %v1544
    %v1599 = vunpack.c.h.b16 %v1544
    %v1600 = vunpack.c.l.b16 %v1545
    %v1601 = vunpack.c.h.b16 %v1545
    %v1602 = vunpack.c.l.b16 %v1546
    %v1603 = vunpack.c.h.b16 %v1546
    %v1604 = vunpack.c.l.b16 %v1547
    %v1605 = vunpack.c.h.b16 %v1547
    %v1606 = vunpack.c.l.b16 %v1548
    %v1607 = vunpack.c.h.b16 %v1548
    %v1608 = vunpack.c.l.b16 %v1549
    %v1609 = vunpack.c.h.b16 %v1549
    %v1610 = vunpack.c.l.b16 %v1550
    %v1611 = vunpack.c.h.b16 %v1550
    %v1612 = vunpack.c.l.b16 %v1551
    %v1613 = vunpack.c.h.b16 %v1551
    %v1614 = vunpack.c.l.b16 %v1552
    %v1615 = vunpack.c.h.b16 %v1552
    %v1616 = vunpack.c.l.b16 %v1553
    %v1617 = vunpack.c.h.b16 %v1553
    %v1618 = vunpack.c.l.b16 %v1554
    %v1619 = vunpack.c.h.b16 %v1554
    %v1620 = vpack.c.b16 %v1586, %v1584
    %v1621 = vpack.c.b16 %v1587, %v1585
    %v1622 = vpack.c.b16 %v1590, %v1588
    %v1623 = vpack.c.b16 %v1591, %v1589
    %v1624 = vpack.c.b16 %v1594, %v1592
    %v1625 = vpack.c.b16 %v1595, %v1593
    %v1626 = vpack.c.b16 %v1598, %v1596
    %v1627 = vpack.c.b16 %v1599, %v1597
    %v1628 = vpack.c.b16 %v1602, %v1600
    %v1629 = vpack.c.b16 %v1603, %v1601
    %v1630 = vpack.c.b16 %v1606, %v1604
    %v1631 = vpack.c.b16 %v1607, %v1605
    %v1632 = vpack.c.b16 %v1610, %v1608
    %v1633 = vpack.c.b16 %v1611, %v1609
    %v1634 = vpack.c.b16 %v1614, %v1612
    %v1635 = vpack.c.b16 %v1615, %v1613
    %v1636 = vpack.c.b16 %v1618, %v1616
    %v1637 = vpack.c.b16 %v1619, %v1617
    %v1657 = vsel %vm34, %v1564, 0
    %1659 = vmatprep.subr.bf16.mxu0 %v1621
    %1660 = vmatpush1.bf16.msra.mxu0 %v1620
    %1661 = vmatprep.subr.bf16.mxu0 %v1623
    %1662 = vmatpush1.bf16.msra.mxu0 %v1622
    %1663 = vmatprep.subr.bf16.mxu0 %v1625
    %1664 = vmatpush1.bf16.msra.mxu0 %v1624
    %1665 = vmatprep.subr.bf16.mxu0 %v1627
    %1666 = vmatpush1.bf16.msra.mxu0 %v1626
    %1667 = vmatprep.subr.bf16.mxu0 %v1629
    %1668 = vmatpush1.bf16.msra.mxu0 %v1628
    %1669 = vmatprep.subr.bf16.mxu0 %v1631
    %1670 = vmatpush1.bf16.msra.mxu0 %v1630
    %1671 = vmatprep.subr.bf16.mxu0 %v1633
    %1672 = vmatpush1.bf16.msra.mxu0 %v1632
    %1673 = vmatprep.subr.bf16.mxu0 %v1635
    %1674 = vmatpush1.bf16.msra.mxu0 %v1634
    %1675 = vmatprep.subr.bf16.mxu0 %v1637
    %1676 = vmatpush1.bf16.msra.mxu0 %v1636
    %1677 = vmatprep.subr.bf16.mxu0 0
    %1678 = vmatpush1.bf16.msra.mxu0 0
    %1679 = vmatprep.subr.bf16.mxu0 0
    %1680 = vmatpush1.bf16.msra.mxu0 0
    %1681 = vmatprep.subr.bf16.mxu0 0
    %1682 = vmatpush1.bf16.msra.mxu0 0
    %1683 = vmatprep.subr.bf16.mxu0 0
    %1684 = vmatpush1.bf16.msra.mxu0 0
    %1685 = vmatprep.subr.bf16.mxu0 0
    %1686 = vmatpush1.bf16.msra.mxu0 0
    %1687 = vmatprep.subr.bf16.mxu0 0
    %1688 = vmatpush1.bf16.msra.mxu0 0
    %1689 = vmatprep.subr.bf16.mxu0 0
    %1690 = vmatpush1.bf16.msra.mxu0 0
    %1691 = vmatprep.mubr.bf16.mxu0 %v1657
    %1692 = vmatmul.mubr.bf16.gmra.mrb[0].mxu0 %v1561
    %v1693 = vpop.f32.mrb[0].mxu0
    %v1694 = vadd.f32 0.0, %v1693
    %v1695 = vpop.f32.mrb[0].mxu0
    %v1696 = vadd.f32 0.0, %v1695
    %v1697 = vpop.f32.mrb[0].mxu0
    %v1698 = vadd.f32 0.0, %v1697
    %v1699 = vpop.f32.mrb[0].mxu0
    %v1700 = vadd.f32 0.0, %v1699
    %1701 = vdwg.mxu0
    %v1702 = vadd.f32 %v1524, %v1694
    %v1703 = vadd.f32 %v1525, %v1696
    %v1704 = vadd.f32 %v1526, %v1698
    %v1705 = vadd.f32 %v1527, %v1700
    %s1706 = sadd.s32 %s144, 1
    %s1707 = smul.u32 %s1706, 9
    %s1708 = smul.addr %s1707, 8
    %s1709 = scalar_lea.vmem %s0, %s1708
    %v1710 = vld [vmem:[%s1709] sm:$0xff]
    %v1711 = vld [vmem:[%s1709 + $0x8] sm:$0xff]
    %v1712 = vld [vmem:[%s1709 + $0x10] sm:$0xff]
    %v1713 = vld [vmem:[%s1709 + $0x18] sm:$0xff]
    %v1714 = vld [vmem:[%s1709 + $0x20] sm:$0xff]
    %v1715 = vld [vmem:[%s1709 + $0x28] sm:$0xff]
    %v1716 = vpack.c.bf16 %v1713, %v1710
    %v1717 = vpack.c.bf16 %v1714, %v1711
    %v1718 = vpack.c.bf16 %v1715, %v1712
    %s1719 = scalar_lea.vmem %s2, 864
    %v1720 = vld [vmem:[%s1719] sm:$0xff]
    %v1721 = vld [vmem:[%s1719 + $0x8] sm:$0xff]
    %v1722 = vld [vmem:[%s1719 + $0x10] sm:$0xff]
    %v1723 = vld [vmem:[%s1719 + $0x18] sm:$0xff]
    %v1724 = vld [vmem:[%s1719 + $0x20] sm:$0xff]
    %v1725 = vld [vmem:[%s1719 + $0x28] sm:$0xff]
    %v1726 = vld [vmem:[%s1719 + $0x30] sm:$0xff]
    %v1727 = vld [vmem:[%s1719 + $0x38] sm:$0xff]
    %v1728 = vld [vmem:[%s1719 + $0x40] sm:$0xff]
    %v1729 = vld [vmem:[%s1719 + $0x48] sm:$0xff]
    %v1730 = vld [vmem:[%s1719 + $0x50] sm:$0xff]
    %v1731 = vld [vmem:[%s1719 + $0x58] sm:$0xff]
    %v1732 = vld [vmem:[%s1719 + $0x60] sm:$0xff]
    %v1733 = vld [vmem:[%s1719 + $0x68] sm:$0xff]
    %v1734 = vld [vmem:[%s1719 + $0x70] sm:$0xff]
    %v1735 = vld [vmem:[%s1719 + $0x78] sm:$0xff]
    %v1736 = vld [vmem:[%s1719 + $0x80] sm:$0xff]
    %v1737 = vld [vmem:[%s1719 + $0x88] sm:$0xff]
    %v1738 = vld [vmem:[%s1719 + $0x90] sm:$0xff]
    %v1739 = vld [vmem:[%s1719 + $0x98] sm:$0xff]
    %v1740 = vld [vmem:[%s1719 + $0xa0] sm:$0xff]
    %v1741 = vld [vmem:[%s1719 + $0xa8] sm:$0xff]
    %v1742 = vld [vmem:[%s1719 + $0xb0] sm:$0xff]
    %v1743 = vld [vmem:[%s1719 + $0xb8] sm:$0xff]
    %v1744 = vld [vmem:[%s1719 + $0xc0] sm:$0xff]
    %v1745 = vld [vmem:[%s1719 + $0xc8] sm:$0xff]
    %v1746 = vld [vmem:[%s1719 + $0xd0] sm:$0xff]
    %v1747 = vld [vmem:[%s1719 + $0xd8] sm:$0xff]
    %v1748 = vld [vmem:[%s1719 + $0xe0] sm:$0xff]
    %v1749 = vld [vmem:[%s1719 + $0xe8] sm:$0xff]
    %v1750 = vld [vmem:[%s1719 + $0xf0] sm:$0xff]
    %v1751 = vld [vmem:[%s1719 + $0xf8] sm:$0xff]
    %v1752 = vld [vmem:[%s1719 + $0x100] sm:$0xff]
    %v1753 = vld [vmem:[%s1719 + $0x108] sm:$0xff]
    %v1754 = vld [vmem:[%s1719 + $0x110] sm:$0xff]
    %v1755 = vld [vmem:[%s1719 + $0x118] sm:$0xff]
    %v1792 = vunpack.c.l.b16 %v1720
    %v1793 = vunpack.c.h.b16 %v1720
    %v1794 = vunpack.c.l.b16 %v1721
    %v1795 = vunpack.c.h.b16 %v1721
    %v1796 = vunpack.c.l.b16 %v1722
    %v1797 = vunpack.c.h.b16 %v1722
    %v1798 = vunpack.c.l.b16 %v1723
    %v1799 = vunpack.c.h.b16 %v1723
    %v1800 = vunpack.c.l.b16 %v1724
    %v1801 = vunpack.c.h.b16 %v1724
    %v1802 = vunpack.c.l.b16 %v1725
    %v1803 = vunpack.c.h.b16 %v1725
    %v1804 = vunpack.c.l.b16 %v1726
    %v1805 = vunpack.c.h.b16 %v1726
    %v1806 = vunpack.c.l.b16 %v1727
    %v1807 = vunpack.c.h.b16 %v1727
    %v1808 = vunpack.c.l.b16 %v1728
    %v1809 = vunpack.c.h.b16 %v1728
    %v1810 = vunpack.c.l.b16 %v1729
    %v1811 = vunpack.c.h.b16 %v1729
    %v1812 = vunpack.c.l.b16 %v1730
    %v1813 = vunpack.c.h.b16 %v1730
    %v1814 = vunpack.c.l.b16 %v1731
    %v1815 = vunpack.c.h.b16 %v1731
    %v1816 = vunpack.c.l.b16 %v1732
    %v1817 = vunpack.c.h.b16 %v1732
    %v1818 = vunpack.c.l.b16 %v1733
    %v1819 = vunpack.c.h.b16 %v1733
    %v1820 = vunpack.c.l.b16 %v1734
    %v1821 = vunpack.c.h.b16 %v1734
    %v1822 = vunpack.c.l.b16 %v1735
    %v1823 = vunpack.c.h.b16 %v1735
    %v1824 = vunpack.c.l.b16 %v1736
    %v1825 = vunpack.c.h.b16 %v1736
    %v1826 = vunpack.c.l.b16 %v1737
    %v1827 = vunpack.c.h.b16 %v1737
    %v1828 = vunpack.c.l.b16 %v1738
    %v1829 = vunpack.c.h.b16 %v1738
    %v1830 = vunpack.c.l.b16 %v1739
    %v1831 = vunpack.c.h.b16 %v1739
    %v1832 = vunpack.c.l.b16 %v1740
    %v1833 = vunpack.c.h.b16 %v1740
    %v1834 = vunpack.c.l.b16 %v1741
    %v1835 = vunpack.c.h.b16 %v1741
    %v1836 = vunpack.c.l.b16 %v1742
    %v1837 = vunpack.c.h.b16 %v1742
    %v1838 = vunpack.c.l.b16 %v1743
    %v1839 = vunpack.c.h.b16 %v1743
    %v1840 = vunpack.c.l.b16 %v1744
    %v1841 = vunpack.c.h.b16 %v1744
    %v1842 = vunpack.c.l.b16 %v1745
    %v1843 = vunpack.c.h.b16 %v1745
    %v1844 = vunpack.c.l.b16 %v1746
    %v1845 = vunpack.c.h.b16 %v1746
    %v1846 = vunpack.c.l.b16 %v1747
    %v1847 = vunpack.c.h.b16 %v1747
    %v1848 = vunpack.c.l.b16 %v1748
    %v1849 = vunpack.c.h.b16 %v1748
    %v1850 = vunpack.c.l.b16 %v1749
    %v1851 = vunpack.c.h.b16 %v1749
    %v1852 = vunpack.c.l.b16 %v1750
    %v1853 = vunpack.c.h.b16 %v1750
    %v1854 = vunpack.c.l.b16 %v1751
    %v1855 = vunpack.c.h.b16 %v1751
    %v1856 = vunpack.c.l.b16 %v1752
    %v1857 = vunpack.c.h.b16 %v1752
    %v1858 = vunpack.c.l.b16 %v1753
    %v1859 = vunpack.c.h.b16 %v1753
    %v1860 = vunpack.c.l.b16 %v1754
    %v1861 = vunpack.c.h.b16 %v1754
    %v1862 = vunpack.c.l.b16 %v1755
    %v1863 = vunpack.c.h.b16 %v1755
    %v1864 = vpack.c.b16 %v1794, %v1792
    %v1865 = vpack.c.b16 %v1795, %v1793
    %v1866 = vpack.c.b16 %v1798, %v1796
    %v1867 = vpack.c.b16 %v1799, %v1797
    %v1868 = vpack.c.b16 %v1802, %v1800
    %v1869 = vpack.c.b16 %v1803, %v1801
    %v1870 = vpack.c.b16 %v1806, %v1804
    %v1871 = vpack.c.b16 %v1807, %v1805
    %v1872 = vpack.c.b16 %v1810, %v1808
    %v1873 = vpack.c.b16 %v1811, %v1809
    %v1874 = vpack.c.b16 %v1814, %v1812
    %v1875 = vpack.c.b16 %v1815, %v1813
    %v1876 = vpack.c.b16 %v1818, %v1816
    %v1877 = vpack.c.b16 %v1819, %v1817
    %v1878 = vpack.c.b16 %v1822, %v1820
    %v1879 = vpack.c.b16 %v1823, %v1821
    %v1880 = vpack.c.b16 %v1826, %v1824
    %v1881 = vpack.c.b16 %v1827, %v1825
    %v1882 = vpack.c.b16 %v1830, %v1828
    %v1883 = vpack.c.b16 %v1831, %v1829
    %v1884 = vpack.c.b16 %v1834, %v1832
    %v1885 = vpack.c.b16 %v1835, %v1833
    %v1886 = vpack.c.b16 %v1838, %v1836
    %v1887 = vpack.c.b16 %v1839, %v1837
    %v1888 = vpack.c.b16 %v1842, %v1840
    %v1889 = vpack.c.b16 %v1843, %v1841
    %v1890 = vpack.c.b16 %v1846, %v1844
    %v1891 = vpack.c.b16 %v1847, %v1845
    %v1892 = vpack.c.b16 %v1850, %v1848
    %v1893 = vpack.c.b16 %v1851, %v1849
    %v1894 = vpack.c.b16 %v1854, %v1852
    %v1895 = vpack.c.b16 %v1855, %v1853
    %v1896 = vpack.c.b16 %v1858, %v1856
    %v1897 = vpack.c.b16 %v1859, %v1857
    %v1898 = vpack.c.b16 %v1862, %v1860
    %v1899 = vpack.c.b16 %v1863, %v1861
    %v1937 = vsel %vm540, %v1718, 0
    %1939 = vmatprep.subr.bf16.mxu0 %v1865
    %1940 = vmatpush1.bf16.msra.mxu0 %v1864
    %1941 = vmatprep.subr.bf16.mxu0 %v1867
    %1942 = vmatpush1.bf16.msra.mxu0 %v1866
    %1943 = vmatprep.subr.bf16.mxu0 %v1869
    %1944 = vmatpush1.bf16.msra.mxu0 %v1868
    %1945 = vmatprep.subr.bf16.mxu0 %v1871
    %1946 = vmatpush1.bf16.msra.mxu0 %v1870
    %1947 = vmatprep.subr.bf16.mxu0 %v1873
    %1948 = vmatpush1.bf16.msra.mxu0 %v1872
    %1949 = vmatprep.subr.bf16.mxu0 %v1875
    %1950 = vmatpush1.bf16.msra.mxu0 %v1874
    %1951 = vmatprep.subr.bf16.mxu0 %v1877
    %1952 = vmatpush1.bf16.msra.mxu0 %v1876
    %1953 = vmatprep.subr.bf16.mxu0 %v1879
    %1954 = vmatpush1.bf16.msra.mxu0 %v1878
    %1955 = vmatprep.subr.bf16.mxu0 %v1881
    %1956 = vmatpush1.bf16.msra.mxu0 %v1880
    %1957 = vmatprep.subr.bf16.mxu0 %v1883
    %1958 = vmatpush1.bf16.msra.mxu0 %v1882
    %1959 = vmatprep.subr.bf16.mxu0 %v1885
    %1960 = vmatpush1.bf16.msra.mxu0 %v1884
    %1961 = vmatprep.subr.bf16.mxu0 %v1887
    %1962 = vmatpush1.bf16.msra.mxu0 %v1886
    %1963 = vmatprep.subr.bf16.mxu0 %v1889
    %1964 = vmatpush1.bf16.msra.mxu0 %v1888
    %1965 = vmatprep.subr.bf16.mxu0 %v1891
    %1966 = vmatpush1.bf16.msra.mxu0 %v1890
    %1967 = vmatprep.subr.bf16.mxu0 %v1893
    %1968 = vmatpush1.bf16.msra.mxu0 %v1892
    %1969 = vmatprep.subr.bf16.mxu0 %v1895
    %1970 = vmatpush1.bf16.msra.mxu0 %v1894
    %1971 = vmatprep.mubr.bf16.mxu0 %v1717
    %1972 = vmatmul.mubr.bf16.gmra.mrb[0].mxu0 %v1716
    %v1973 = vpop.f32.mrb[0].mxu0
    %v1974 = vadd.f32 0.0, %v1973
    %v1975 = vpop.f32.mrb[0].mxu0
    %v1976 = vadd.f32 0.0, %v1975
    %v1977 = vpop.f32.mrb[0].mxu0
    %v1978 = vadd.f32 0.0, %v1977
    %v1979 = vpop.f32.mrb[0].mxu0
    %v1980 = vadd.f32 0.0, %v1979
    %1981 = vdwg.mxu0
    %1982 = vmatprep.subr.bf16.mxu0 %v1897
    %1983 = vmatpush1.bf16.msra.mxu0 %v1896
    %1984 = vmatprep.subr.bf16.mxu0 %v1899
    %1985 = vmatpush1.bf16.msra.mxu0 %v1898
    %1986 = vmatprep.subr.bf16.mxu0 0
    %1987 = vmatpush1.bf16.msra.mxu0 0
    %1988 = vmatprep.subr.bf16.mxu0 0
    %1989 = vmatpush1.bf16.msra.mxu0 0
    %1990 = vmatprep.subr.bf16.mxu0 0
    %1991 = vmatpush1.bf16.msra.mxu0 0
    %1992 = vmatprep.subr.bf16.mxu0 0
    %1993 = vmatpush1.bf16.msra.mxu0 0
    %1994 = vmatprep.subr.bf16.mxu0 0
    %1995 = vmatpush1.bf16.msra.mxu0 0
    %1996 = vmatprep.subr.bf16.mxu0 0
    %1997 = vmatpush1.bf16.msra.mxu0 0
    %1998 = vmatprep.subr.bf16.mxu0 0
    %1999 = vmatpush1.bf16.msra.mxu0 0
    %2000 = vmatprep.subr.bf16.mxu0 0
    %2001 = vmatpush1.bf16.msra.mxu0 0
    %2002 = vmatprep.subr.bf16.mxu0 0
    %2003 = vmatpush1.bf16.msra.mxu0 0
    %2004 = vmatprep.subr.bf16.mxu0 0
    %2005 = vmatpush1.bf16.msra.mxu0 0
    %2006 = vmatprep.subr.bf16.mxu0 0
    %2007 = vmatpush1.bf16.msra.mxu0 0
    %2008 = vmatprep.subr.bf16.mxu0 0
    %2009 = vmatpush1.bf16.msra.mxu0 0
    %2010 = vmatprep.subr.bf16.mxu0 0
    %2011 = vmatpush1.bf16.msra.mxu0 0
    %2012 = vmatprep.subr.bf16.mxu0 0
    %2013 = vmatpush1.bf16.msra.mxu0 0
    %2014 = vmatprep.mubr.bf16.mxu0 0
    %2015 = vmatmul.mubr.bf16.gmra.mrb[0].mxu0 %v1937
    %v2016 = vpop.f32.mrb[0].mxu0
    %v2017 = vadd.f32 %v1974, %v2016
    %v2018 = vpop.f32.mrb[0].mxu0
    %v2019 = vadd.f32 %v1976, %v2018
    %v2020 = vpop.f32.mrb[0].mxu0
    %v2021 = vadd.f32 %v1978, %v2020
    %v2022 = vpop.f32.mrb[0].mxu0
    %v2023 = vadd.f32 %v1980, %v2022
    %2024 = vdwg.mxu0
    %v2025 = vadd.f32 %v1702, %v2017
    %v2026 = vadd.f32 %v1703, %v2019
    %v2027 = vadd.f32 %v1704, %v2021
    %v2028 = vadd.f32 %v1705, %v2023
    %s2029 = smul.u32 %s1706, 6
    %s2030 = smul.addr %s2029, 8
    %s2031 = scalar_lea.vmem %s1, %s2030
    %v2032 = vld [vmem:[%s2031] sm:$0xff]
    %v2033 = vld [vmem:[%s2031 + $0x8] sm:$0xff]
    %v2034 = vld [vmem:[%s2031 + $0x10] sm:$0xff]
    %v2035 = vld [vmem:[%s2031 + $0x18] sm:$0xff]
    %v2036 = vpack.c.bf16 %v2034, %v2032
    %v2037 = vpack.c.bf16 %v2035, %v2033
    %s2038 = scalar_lea.vmem %s3, 432
    %v2039 = vld [vmem:[%s2038] sm:$0xff]
    %v2040 = vld [vmem:[%s2038 + $0x8] sm:$0xff]
    %v2041 = vld [vmem:[%s2038 + $0x10] sm:$0xff]
    %v2042 = vld [vmem:[%s2038 + $0x18] sm:$0xff]
    %v2043 = vld [vmem:[%s2038 + $0x20] sm:$0xff]
    %v2044 = vld [vmem:[%s2038 + $0x28] sm:$0xff]
    %v2045 = vld [vmem:[%s2038 + $0x30] sm:$0xff]
    %v2046 = vld [vmem:[%s2038 + $0x38] sm:$0xff]
    %v2047 = vld [vmem:[%s2038 + $0x40] sm:$0xff]
    %v2048 = vld [vmem:[%s2038 + $0x48] sm:$0xff]
    %v2049 = vld [vmem:[%s2038 + $0x50] sm:$0xff]
    %v2050 = vld [vmem:[%s2038 + $0x58] sm:$0xff]
    %v2051 = vld [vmem:[%s2038 + $0x60] sm:$0xff]
    %v2052 = vld [vmem:[%s2038 + $0x68] sm:$0xff]
    %v2053 = vld [vmem:[%s2038 + $0x70] sm:$0xff]
    %v2054 = vld [vmem:[%s2038 + $0x78] sm:$0xff]
    %v2055 = vld [vmem:[%s2038 + $0x80] sm:$0xff]
    %v2056 = vld [vmem:[%s2038 + $0x88] sm:$0xff]
    %v2075 = vunpack.c.l.b16 %v2039
    %v2076 = vunpack.c.h.b16 %v2039
    %v2077 = vunpack.c.l.b16 %v2040
    %v2078 = vunpack.c.h.b16 %v2040
    %v2079 = vunpack.c.l.b16 %v2041
    %v2080 = vunpack.c.h.b16 %v2041
    %v2081 = vunpack.c.l.b16 %v2042
    %v2082 = vunpack.c.h.b16 %v2042
    %v2083 = vunpack.c.l.b16 %v2043
    %v2084 = vunpack.c.h.b16 %v2043
    %v2085 = vunpack.c.l.b16 %v2044
    %v2086 = vunpack.c.h.b16 %v2044
    %v2087 = vunpack.c.l.b16 %v2045
    %v2088 = vunpack.c.h.b16 %v2045
    %v2089 = vunpack.c.l.b16 %v2046
    %v2090 = vunpack.c.h.b16 %v2046
    %v2091 = vunpack.c.l.b16 %v2047
    %v2092 = vunpack.c.h.b16 %v2047
    %v2093 = vunpack.c.l.b16 %v2048
    %v2094 = vunpack.c.h.b16 %v2048
    %v2095 = vunpack.c.l.b16 %v2049
    %v2096 = vunpack.c.h.b16 %v2049
    %v2097 = vunpack.c.l.b16 %v2050
    %v2098 = vunpack.c.h.b16 %v2050
    %v2099 = vunpack.c.l.b16 %v2051
    %v2100 = vunpack.c.h.b16 %v2051
    %v2101 = vunpack.c.l.b16 %v2052
    %v2102 = vunpack.c.h.b16 %v2052
    %v2103 = vunpack.c.l.b16 %v2053
    %v2104 = vunpack.c.h.b16 %v2053
    %v2105 = vunpack.c.l.b16 %v2054
    %v2106 = vunpack.c.h.b16 %v2054
    %v2107 = vunpack.c.l.b16 %v2055
    %v2108 = vunpack.c.h.b16 %v2055
    %v2109 = vunpack.c.l.b16 %v2056
    %v2110 = vunpack.c.h.b16 %v2056
    %v2111 = vpack.c.b16 %v2077, %v2075
    %v2112 = vpack.c.b16 %v2078, %v2076
    %v2113 = vpack.c.b16 %v2081, %v2079
    %v2114 = vpack.c.b16 %v2082, %v2080
    %v2115 = vpack.c.b16 %v2085, %v2083
    %v2116 = vpack.c.b16 %v2086, %v2084
    %v2117 = vpack.c.b16 %v2089, %v2087
    %v2118 = vpack.c.b16 %v2090, %v2088
    %v2119 = vpack.c.b16 %v2093, %v2091
    %v2120 = vpack.c.b16 %v2094, %v2092
    %v2121 = vpack.c.b16 %v2097, %v2095
    %v2122 = vpack.c.b16 %v2098, %v2096
    %v2123 = vpack.c.b16 %v2101, %v2099
    %v2124 = vpack.c.b16 %v2102, %v2100
    %v2125 = vpack.c.b16 %v2105, %v2103
    %v2126 = vpack.c.b16 %v2106, %v2104
    %v2127 = vpack.c.b16 %v2109, %v2107
    %v2128 = vpack.c.b16 %v2110, %v2108
    %v2148 = vsel %vm34, %v2037, 0
    %2150 = vmatprep.subr.bf16.mxu0 %v2112
    %2151 = vmatpush1.bf16.msra.mxu0 %v2111
    %2152 = vmatprep.subr.bf16.mxu0 %v2114
    %2153 = vmatpush1.bf16.msra.mxu0 %v2113
    %2154 = vmatprep.subr.bf16.mxu0 %v2116
    %2155 = vmatpush1.bf16.msra.mxu0 %v2115
    %2156 = vmatprep.subr.bf16.mxu0 %v2118
    %2157 = vmatpush1.bf16.msra.mxu0 %v2117
    %2158 = vmatprep.subr.bf16.mxu0 %v2120
    %2159 = vmatpush1.bf16.msra.mxu0 %v2119
    %2160 = vmatprep.subr.bf16.mxu0 %v2122
    %2161 = vmatpush1.bf16.msra.mxu0 %v2121
    %2162 = vmatprep.subr.bf16.mxu0 %v2124
    %2163 = vmatpush1.bf16.msra.mxu0 %v2123
    %2164 = vmatprep.subr.bf16.mxu0 %v2126
    %2165 = vmatpush1.bf16.msra.mxu0 %v2125
    %2166 = vmatprep.subr.bf16.mxu0 %v2128
    %2167 = vmatpush1.bf16.msra.mxu0 %v2127
    %2168 = vmatprep.subr.bf16.mxu0 0
    %2169 = vmatpush1.bf16.msra.mxu0 0
    %2170 = vmatprep.subr.bf16.mxu0 0
    %2171 = vmatpush1.bf16.msra.mxu0 0
    %2172 = vmatprep.subr.bf16.mxu0 0
    %2173 = vmatpush1.bf16.msra.mxu0 0
    %2174 = vmatprep.subr.bf16.mxu0 0
    %2175 = vmatpush1.bf16.msra.mxu0 0
    %2176 = vmatprep.subr.bf16.mxu0 0
    %2177 = vmatpush1.bf16.msra.mxu0 0
    %2178 = vmatprep.subr.bf16.mxu0 0
    %2179 = vmatpush1.bf16.msra.mxu0 0
    %2180 = vmatprep.subr.bf16.mxu0 0
    %2181 = vmatpush1.bf16.msra.mxu0 0
    %2182 = vmatprep.mubr.bf16.mxu0 %v2148
    %2183 = vmatmul.mubr.bf16.gmra.mrb[0].mxu0 %v2036
    %v2184 = vpop.f32.mrb[0].mxu0
    %v2185 = vadd.f32 0.0, %v2184
    %v2186 = vpop.f32.mrb[0].mxu0
    %v2187 = vadd.f32 0.0, %v2186
    %v2188 = vpop.f32.mrb[0].mxu0
    %v2189 = vadd.f32 0.0, %v2188
    %v2190 = vpop.f32.mrb[0].mxu0
    %v2191 = vadd.f32 0.0, %v2190
    %2192 = vdwg.mxu0
    %v2193 = vadd.f32 %v2025, %v2185
    %v2194 = vadd.f32 %v2026, %v2187
    %v2195 = vadd.f32 %v2027, %v2189
    %v2196 = vadd.f32 %v2028, %v2191
    %v2197 = vld [vmem:[%s1709] sm:$0xfe]
    %v2198 = vld [vmem:[%s1709 + $0x8] sm:$0xfe]
    %v2199 = vld [vmem:[%s1709 + $0x10] sm:$0xfe]
    %v2200 = vld [vmem:[%s1709 + $0x18] sm:$0xff]
    %v2201 = vld [vmem:[%s1709 + $0x20] sm:$0xff]
    %v2202 = vld [vmem:[%s1709 + $0x28] sm:$0xff]
    %v2203 = vld [vmem:[%s1709 + $0x30] sm:$0x1]
    %v2204 = vld [vmem:[%s1709 + $0x38] sm:$0x1]
    %v2205 = vld [vmem:[%s1709 + $0x40] sm:$0x1]
    %v2206 = vpack.c.bf16 %v2200, %v2197
    %v2207 = vpack.c.bf16 %v2201, %v2198
    %v2208 = vpack.c.bf16 %v2202, %v2199
    %v2209 = vpack.c.bf16 %v2203, %v2203
    %v2210 = vpack.c.bf16 %v2204, %v2204
    %v2211 = vpack.c.bf16 %v2205, %v2205
    %s2212 = scalar_lea.vmem %s2, 1152
    %v2213 = vld [vmem:[%s2212] sm:$0xff]
    %v2214 = vld [vmem:[%s2212 + $0x8] sm:$0xff]
    %v2215 = vld [vmem:[%s2212 + $0x10] sm:$0xff]
    %v2216 = vld [vmem:[%s2212 + $0x18] sm:$0xff]
    %v2217 = vld [vmem:[%s2212 + $0x20] sm:$0xff]
    %v2218 = vld [vmem:[%s2212 + $0x28] sm:$0xff]
    %v2219 = vld [vmem:[%s2212 + $0x30] sm:$0xff]
    %v2220 = vld [vmem:[%s2212 + $0x38] sm:$0xff]
    %v2221 = vld [vmem:[%s2212 + $0x40] sm:$0xff]
    %v2222 = vld [vmem:[%s2212 + $0x48] sm:$0xff]
    %v2223 = vld [vmem:[%s2212 + $0x50] sm:$0xff]
    %v2224 = vld [vmem:[%s2212 + $0x58] sm:$0xff]
    %v2225 = vld [vmem:[%s2212 + $0x60] sm:$0xff]
    %v2226 = vld [vmem:[%s2212 + $0x68] sm:$0xff]
    %v2227 = vld [vmem:[%s2212 + $0x70] sm:$0xff]
    %v2228 = vld [vmem:[%s2212 + $0x78] sm:$0xff]
    %v2229 = vld [vmem:[%s2212 + $0x80] sm:$0xff]
    %v2230 = vld [vmem:[%s2212 + $0x88] sm:$0xff]
    %v2231 = vld [vmem:[%s2212 + $0x90] sm:$0xff]
    %v2232 = vld [vmem:[%s2212 + $0x98] sm:$0xff]
    %v2233 = vld [vmem:[%s2212 + $0xa0] sm:$0xff]
    %v2234 = vld [vmem:[%s2212 + $0xa8] sm:$0xff]
    %v2235 = vld [vmem:[%s2212 + $0xb0] sm:$0xff]
    %v2236 = vld [vmem:[%s2212 + $0xb8] sm:$0xff]
    %v2237 = vld [vmem:[%s2212 + $0xc0] sm:$0xff]
    %v2238 = vld [vmem:[%s2212 + $0xc8] sm:$0xff]
    %v2239 = vld [vmem:[%s2212 + $0xd0] sm:$0xff]
    %v2240 = vld [vmem:[%s2212 + $0xd8] sm:$0xff]
    %v2241 = vld [vmem:[%s2212 + $0xe0] sm:$0xff]
    %v2242 = vld [vmem:[%s2212 + $0xe8] sm:$0xff]
    %v2243 = vld [vmem:[%s2212 + $0xf0] sm:$0xff]
    %v2244 = vld [vmem:[%s2212 + $0xf8] sm:$0xff]
    %v2245 = vld [vmem:[%s2212 + $0x100] sm:$0xff]
    %v2246 = vld [vmem:[%s2212 + $0x108] sm:$0xff]
    %v2247 = vld [vmem:[%s2212 + $0x110] sm:$0xff]
    %v2248 = vld [vmem:[%s2212 + $0x118] sm:$0xff]
    %v2250 = vshrl.u32 %v2206, 16
    %v2252 = vshll.u32 %v2206, 16
    %v2254 = vrot.slane %v2252, 1
    %v2255 = vor.u32 %v2250, %v2254
    %v2257 = vshll.u32 %v2209, 16
    %v2259 = vrot.slane %v2257, 1
    %v2260 = vsel %vm682, %v2255, %v2259
    %v2262 = vshrl.u32 %v2207, 16
    %v2264 = vshll.u32 %v2207, 16
    %v2266 = vrot.slane %v2264, 1
    %v2267 = vor.u32 %v2262, %v2266
    %v2269 = vshll.u32 %v2210, 16
    %v2271 = vrot.slane %v2269, 1
    %v2272 = vsel %vm682, %v2267, %v2271
    %v2274 = vshrl.u32 %v2208, 16
    %v2276 = vshll.u32 %v2208, 16
    %v2278 = vrot.slane %v2276, 1
    %v2279 = vor.u32 %v2274, %v2278
    %v2281 = vshll.u32 %v2211, 16
    %v2283 = vrot.slane %v2281, 1
    %v2284 = vsel %vm682, %v2279, %v2283
    %v2323 = vunpack.c.l.b16 %v2213
    %v2324 = vunpack.c.h.b16 %v2213
    %v2325 = vunpack.c.l.b16 %v2214
    %v2326 = vunpack.c.h.b16 %v2214
    %v2327 = vunpack.c.l.b16 %v2215
    %v2328 = vunpack.c.h.b16 %v2215
    %v2329 = vunpack.c.l.b16 %v2216
    %v2330 = vunpack.c.h.b16 %v2216
    %v2331 = vunpack.c.l.b16 %v2217
    %v2332 = vunpack.c.h.b16 %v2217
    %v2333 = vunpack.c.l.b16 %v2218
    %v2334 = vunpack.c.h.b16 %v2218
    %v2335 = vunpack.c.l.b16 %v2219
    %v2336 = vunpack.c.h.b16 %v2219
    %v2337 = vunpack.c.l.b16 %v2220
    %v2338 = vunpack.c.h.b16 %v2220
    %v2339 = vunpack.c.l.b16 %v2221
    %v2340 = vunpack.c.h.b16 %v2221
    %v2341 = vunpack.c.l.b16 %v2222
    %v2342 = vunpack.c.h.b16 %v2222
    %v2343 = vunpack.c.l.b16 %v2223
    %v2344 = vunpack.c.h.b16 %v2223
    %v2345 = vunpack.c.l.b16 %v2224
    %v2346 = vunpack.c.h.b16 %v2224
    %v2347 = vunpack.c.l.b16 %v2225
    %v2348 = vunpack.c.h.b16 %v2225
    %v2349 = vunpack.c.l.b16 %v2226
    %v2350 = vunpack.c.h.b16 %v2226
    %v2351 = vunpack.c.l.b16 %v2227
    %v2352 = vunpack.c.h.b16 %v2227
    %v2353 = vunpack.c.l.b16 %v2228
    %v2354 = vunpack.c.h.b16 %v2228
    %v2355 = vunpack.c.l.b16 %v2229
    %v2356 = vunpack.c.h.b16 %v2229
    %v2357 = vunpack.c.l.b16 %v2230
    %v2358 = vunpack.c.h.b16 %v2230
    %v2359 = vunpack.c.l.b16 %v2231
    %v2360 = vunpack.c.h.b16 %v2231
    %v2361 = vunpack.c.l.b16 %v2232
    %v2362 = vunpack.c.h.b16 %v2232
    %v2363 = vunpack.c.l.b16 %v2233
    %v2364 = vunpack.c.h.b16 %v2233
    %v2365 = vunpack.c.l.b16 %v2234
    %v2366 = vunpack.c.h.b16 %v2234
    %v2367 = vunpack.c.l.b16 %v2235
    %v2368 = vunpack.c.h.b16 %v2235
    %v2369 = vunpack.c.l.b16 %v2236
    %v2370 = vunpack.c.h.b16 %v2236
    %v2371 = vunpack.c.l.b16 %v2237
    %v2372 = vunpack.c.h.b16 %v2237
    %v2373 = vunpack.c.l.b16 %v2238
    %v2374 = vunpack.c.h.b16 %v2238
    %v2375 = vunpack.c.l.b16 %v2239
    %v2376 = vunpack.c.h.b16 %v2239
    %v2377 = vunpack.c.l.b16 %v2240
    %v2378 = vunpack.c.h.b16 %v2240
    %v2379 = vunpack.c.l.b16 %v2241
    %v2380 = vunpack.c.h.b16 %v2241
    %v2381 = vunpack.c.l.b16 %v2242
    %v2382 = vunpack.c.h.b16 %v2242
    %v2383 = vunpack.c.l.b16 %v2243
    %v2384 = vunpack.c.h.b16 %v2243
    %v2385 = vunpack.c.l.b16 %v2244
    %v2386 = vunpack.c.h.b16 %v2244
    %v2387 = vunpack.c.l.b16 %v2245
    %v2388 = vunpack.c.h.b16 %v2245
    %v2389 = vunpack.c.l.b16 %v2246
    %v2390 = vunpack.c.h.b16 %v2246
    %v2391 = vunpack.c.l.b16 %v2247
    %v2392 = vunpack.c.h.b16 %v2247
    %v2393 = vunpack.c.l.b16 %v2248
    %v2394 = vunpack.c.h.b16 %v2248
    %v2395 = vpack.c.b16 %v2325, %v2323
    %v2396 = vpack.c.b16 %v2326, %v2324
    %v2397 = vpack.c.b16 %v2329, %v2327
    %v2398 = vpack.c.b16 %v2330, %v2328
    %v2399 = vpack.c.b16 %v2333, %v2331
    %v2400 = vpack.c.b16 %v2334, %v2332
    %v2401 = vpack.c.b16 %v2337, %v2335
    %v2402 = vpack.c.b16 %v2338, %v2336
    %v2403 = vpack.c.b16 %v2341, %v2339
    %v2404 = vpack.c.b16 %v2342, %v2340
    %v2405 = vpack.c.b16 %v2345, %v2343
    %v2406 = vpack.c.b16 %v2346, %v2344
    %v2407 = vpack.c.b16 %v2349, %v2347
    %v2408 = vpack.c.b16 %v2350, %v2348
    %v2409 = vpack.c.b16 %v2353, %v2351
    %v2410 = vpack.c.b16 %v2354, %v2352
    %v2411 = vpack.c.b16 %v2357, %v2355
    %v2412 = vpack.c.b16 %v2358, %v2356
    %v2413 = vpack.c.b16 %v2361, %v2359
    %v2414 = vpack.c.b16 %v2362, %v2360
    %v2415 = vpack.c.b16 %v2365, %v2363
    %v2416 = vpack.c.b16 %v2366, %v2364
    %v2417 = vpack.c.b16 %v2369, %v2367
    %v2418 = vpack.c.b16 %v2370, %v2368
    %v2419 = vpack.c.b16 %v2373, %v2371
    %v2420 = vpack.c.b16 %v2374, %v2372
    %v2421 = vpack.c.b16 %v2377, %v2375
    %v2422 = vpack.c.b16 %v2378, %v2376
    %v2423 = vpack.c.b16 %v2381, %v2379
    %v2424 = vpack.c.b16 %v2382, %v2380
    %v2425 = vpack.c.b16 %v2385, %v2383
    %v2426 = vpack.c.b16 %v2386, %v2384
    %v2427 = vpack.c.b16 %v2389, %v2387
    %v2428 = vpack.c.b16 %v2390, %v2388
    %v2429 = vpack.c.b16 %v2393, %v2391
    %v2430 = vpack.c.b16 %v2394, %v2392
    %v2468 = vsel %vm540, %v2284, 0
    %2470 = vmatprep.subr.bf16.mxu0 %v2396
    %2471 = vmatpush1.bf16.msra.mxu0 %v2395
    %2472 = vmatprep.subr.bf16.mxu0 %v2398
    %2473 = vmatpush1.bf16.msra.mxu0 %v2397
    %2474 = vmatprep.subr.bf16.mxu0 %v2400
    %2475 = vmatpush1.bf16.msra.mxu0 %v2399
    %2476 = vmatprep.subr.bf16.mxu0 %v2402
    %2477 = vmatpush1.bf16.msra.mxu0 %v2401
    %2478 = vmatprep.subr.bf16.mxu0 %v2404
    %2479 = vmatpush1.bf16.msra.mxu0 %v2403
    %2480 = vmatprep.subr.bf16.mxu0 %v2406
    %2481 = vmatpush1.bf16.msra.mxu0 %v2405
    %2482 = vmatprep.subr.bf16.mxu0 %v2408
    %2483 = vmatpush1.bf16.msra.mxu0 %v2407
    %2484 = vmatprep.subr.bf16.mxu0 %v2410
    %2485 = vmatpush1.bf16.msra.mxu0 %v2409
    %2486 = vmatprep.subr.bf16.mxu0 %v2412
    %2487 = vmatpush1.bf16.msra.mxu0 %v2411
    %2488 = vmatprep.subr.bf16.mxu0 %v2414
    %2489 = vmatpush1.bf16.msra.mxu0 %v2413
    %2490 = vmatprep.subr.bf16.mxu0 %v2416
    %2491 = vmatpush1.bf16.msra.mxu0 %v2415
    %2492 = vmatprep.subr.bf16.mxu0 %v2418
    %2493 = vmatpush1.bf16.msra.mxu0 %v2417
    %2494 = vmatprep.subr.bf16.mxu0 %v2420
    %2495 = vmatpush1.bf16.msra.mxu0 %v2419
    %2496 = vmatprep.subr.bf16.mxu0 %v2422
    %2497 = vmatpush1.bf16.msra.mxu0 %v2421
    %2498 = vmatprep.subr.bf16.mxu0 %v2424
    %2499 = vmatpush1.bf16.msra.mxu0 %v2423
    %2500 = vmatprep.subr.bf16.mxu0 %v2426
    %2501 = vmatpush1.bf16.msra.mxu0 %v2425
    %2502 = vmatprep.mubr.bf16.mxu0 %v2272
    %2503 = vmatmul.mubr.bf16.gmra.mrb[0].mxu0 %v2260
    %v2504 = vpop.f32.mrb[0].mxu0
    %v2505 = vadd.f32 0.0, %v2504
    %v2506 = vpop.f32.mrb[0].mxu0
    %v2507 = vadd.f32 0.0, %v2506
    %v2508 = vpop.f32.mrb[0].mxu0
    %v2509 = vadd.f32 0.0, %v2508
    %v2510 = vpop.f32.mrb[0].mxu0
    %v2511 = vadd.f32 0.0, %v2510
    %2512 = vdwg.mxu0
    %2513 = vmatprep.subr.bf16.mxu0 %v2428
    %2514 = vmatpush1.bf16.msra.mxu0 %v2427
    %2515 = vmatprep.subr.bf16.mxu0 %v2430
    %2516 = vmatpush1.bf16.msra.mxu0 %v2429
    %2517 = vmatprep.subr.bf16.mxu0 0
    %2518 = vmatpush1.bf16.msra.mxu0 0
    %2519 = vmatprep.subr.bf16.mxu0 0
    %2520 = vmatpush1.bf16.msra.mxu0 0
    %2521 = vmatprep.subr.bf16.mxu0 0
    %2522 = vmatpush1.bf16.msra.mxu0 0
    %2523 = vmatprep.subr.bf16.mxu0 0
    %2524 = vmatpush1.bf16.msra.mxu0 0
    %2525 = vmatprep.subr.bf16.mxu0 0
    %2526 = vmatpush1.bf16.msra.mxu0 0
    %2527 = vmatprep.subr.bf16.mxu0 0
    %2528 = vmatpush1.bf16.msra.mxu0 0
    %2529 = vmatprep.subr.bf16.mxu0 0
    %2530 = vmatpush1.bf16.msra.mxu0 0
    %2531 = vmatprep.subr.bf16.mxu0 0
    %2532 = vmatpush1.bf16.msra.mxu0 0
    %2533 = vmatprep.subr.bf16.mxu0 0
    %2534 = vmatpush1.bf16.msra.mxu0 0
    %2535 = vmatprep.subr.bf16.mxu0 0
    %2536 = vmatpush1.bf16.msra.mxu0 0
    %2537 = vmatprep.subr.bf16.mxu0 0
    %2538 = vmatpush1.bf16.msra.mxu0 0
    %2539 = vmatprep.subr.bf16.mxu0 0
    %2540 = vmatpush1.bf16.msra.mxu0 0
    %2541 = vmatprep.subr.bf16.mxu0 0
    %2542 = vmatpush1.bf16.msra.mxu0 0
    %2543 = vmatprep.subr.bf16.mxu0 0
    %2544 = vmatpush1.bf16.msra.mxu0 0
    %2545 = vmatprep.mubr.bf16.mxu0 0
    %2546 = vmatmul.mubr.bf16.gmra.mrb[0].mxu0 %v2468
    %v2547 = vpop.f32.mrb[0].mxu0
    %v2548 = vadd.f32 %v2505, %v2547
    %v2549 = vpop.f32.mrb[0].mxu0
    %v2550 = vadd.f32 %v2507, %v2549
    %v2551 = vpop.f32.mrb[0].mxu0
    %v2552 = vadd.f32 %v2509, %v2551
    %v2553 = vpop.f32.mrb[0].mxu0
    %v2554 = vadd.f32 %v2511, %v2553
    %2555 = vdwg.mxu0
    %v2556 = vadd.f32 %v2193, %v2548
    %v2557 = vadd.f32 %v2194, %v2550
    %v2558 = vadd.f32 %v2195, %v2552
    %v2559 = vadd.f32 %v2196, %v2554
    %v2560 = vld [vmem:[%s2031] sm:$0xfe]
    %v2561 = vld [vmem:[%s2031 + $0x8] sm:$0xfe]
    %v2562 = vld [vmem:[%s2031 + $0x10] sm:$0xff]
    %v2563 = vld [vmem:[%s2031 + $0x18] sm:$0xff]
    %v2564 = vld [vmem:[%s2031 + $0x20] sm:$0x1]
    %v2565 = vld [vmem:[%s2031 + $0x28] sm:$0x1]
    %v2566 = vpack.c.bf16 %v2562, %v2560
    %v2567 = vpack.c.bf16 %v2563, %v2561
    %v2568 = vpack.c.bf16 %v2564, %v2564
    %v2569 = vpack.c.bf16 %v2565, %v2565
    %s2570 = scalar_lea.vmem %s3, 576
    %v2571 = vld [vmem:[%s2570] sm:$0xff]
    %v2572 = vld [vmem:[%s2570 + $0x8] sm:$0xff]
    %v2573 = vld [vmem:[%s2570 + $0x10] sm:$0xff]
    %v2574 = vld [vmem:[%s2570 + $0x18] sm:$0xff]
    %v2575 = vld [vmem:[%s2570 + $0x20] sm:$0xff]
    %v2576 = vld [vmem:[%s2570 + $0x28] sm:$0xff]
    %v2577 = vld [vmem:[%s2570 + $0x30] sm:$0xff]
    %v2578 = vld [vmem:[%s2570 + $0x38] sm:$0xff]
    %v2579 = vld [vmem:[%s2570 + $0x40] sm:$0xff]
    %v2580 = vld [vmem:[%s2570 + $0x48] sm:$0xff]
    %v2581 = vld [vmem:[%s2570 + $0x50] sm:$0xff]
    %v2582 = vld [vmem:[%s2570 + $0x58] sm:$0xff]
    %v2583 = vld [vmem:[%s2570 + $0x60] sm:$0xff]
    %v2584 = vld [vmem:[%s2570 + $0x68] sm:$0xff]
    %v2585 = vld [vmem:[%s2570 + $0x70] sm:$0xff]
    %v2586 = vld [vmem:[%s2570 + $0x78] sm:$0xff]
    %v2587 = vld [vmem:[%s2570 + $0x80] sm:$0xff]
    %v2588 = vld [vmem:[%s2570 + $0x88] sm:$0xff]
    %v2590 = vshrl.u32 %v2566, 16
    %v2592 = vshll.u32 %v2566, 16
    %v2594 = vrot.slane %v2592, 1
    %v2595 = vor.u32 %v2590, %v2594
    %v2597 = vshll.u32 %v2568, 16
    %v2599 = vrot.slane %v2597, 1
    %v2600 = vsel %vm682, %v2595, %v2599
    %v2602 = vshrl.u32 %v2567, 16
    %v2604 = vshll.u32 %v2567, 16
    %v2606 = vrot.slane %v2604, 1
    %v2607 = vor.u32 %v2602, %v2606
    %v2609 = vshll.u32 %v2569, 16
    %v2611 = vrot.slane %v2609, 1
    %v2612 = vsel %vm682, %v2607, %v2611
    %v2632 = vunpack.c.l.b16 %v2571
    %v2633 = vunpack.c.h.b16 %v2571
    %v2634 = vunpack.c.l.b16 %v2572
    %v2635 = vunpack.c.h.b16 %v2572
    %v2636 = vunpack.c.l.b16 %v2573
    %v2637 = vunpack.c.h.b16 %v2573
    %v2638 = vunpack.c.l.b16 %v2574
    %v2639 = vunpack.c.h.b16 %v2574
    %v2640 = vunpack.c.l.b16 %v2575
    %v2641 = vunpack.c.h.b16 %v2575
    %v2642 = vunpack.c.l.b16 %v2576
    %v2643 = vunpack.c.h.b16 %v2576
    %v2644 = vunpack.c.l.b16 %v2577
    %v2645 = vunpack.c.h.b16 %v2577
    %v2646 = vunpack.c.l.b16 %v2578
    %v2647 = vunpack.c.h.b16 %v2578
    %v2648 = vunpack.c.l.b16 %v2579
    %v2649 = vunpack.c.h.b16 %v2579
    %v2650 = vunpack.c.l.b16 %v2580
    %v2651 = vunpack.c.h.b16 %v2580
    %v2652 = vunpack.c.l.b16 %v2581
    %v2653 = vunpack.c.h.b16 %v2581
    %v2654 = vunpack.c.l.b16 %v2582
    %v2655 = vunpack.c.h.b16 %v2582
    %v2656 = vunpack.c.l.b16 %v2583
    %v2657 = vunpack.c.h.b16 %v2583
    %v2658 = vunpack.c.l.b16 %v2584
    %v2659 = vunpack.c.h.b16 %v2584
    %v2660 = vunpack.c.l.b16 %v2585
    %v2661 = vunpack.c.h.b16 %v2585
    %v2662 = vunpack.c.l.b16 %v2586
    %v2663 = vunpack.c.h.b16 %v2586
    %v2664 = vunpack.c.l.b16 %v2587
    %v2665 = vunpack.c.h.b16 %v2587
    %v2666 = vunpack.c.l.b16 %v2588
    %v2667 = vunpack.c.h.b16 %v2588
    %v2668 = vpack.c.b16 %v2634, %v2632
    %v2669 = vpack.c.b16 %v2635, %v2633
    %v2670 = vpack.c.b16 %v2638, %v2636
    %v2671 = vpack.c.b16 %v2639, %v2637
    %v2672 = vpack.c.b16 %v2642, %v2640
    %v2673 = vpack.c.b16 %v2643, %v2641
    %v2674 = vpack.c.b16 %v2646, %v2644
    %v2675 = vpack.c.b16 %v2647, %v2645
    %v2676 = vpack.c.b16 %v2650, %v2648
    %v2677 = vpack.c.b16 %v2651, %v2649
    %v2678 = vpack.c.b16 %v2654, %v2652
    %v2679 = vpack.c.b16 %v2655, %v2653
    %v2680 = vpack.c.b16 %v2658, %v2656
    %v2681 = vpack.c.b16 %v2659, %v2657
    %v2682 = vpack.c.b16 %v2662, %v2660
    %v2683 = vpack.c.b16 %v2663, %v2661
    %v2684 = vpack.c.b16 %v2666, %v2664
    %v2685 = vpack.c.b16 %v2667, %v2665
    %v2705 = vsel %vm34, %v2612, 0
    %2707 = vmatprep.subr.bf16.mxu0 %v2669
    %2708 = vmatpush1.bf16.msra.mxu0 %v2668
    %2709 = vmatprep.subr.bf16.mxu0 %v2671
    %2710 = vmatpush1.bf16.msra.mxu0 %v2670
    %2711 = vmatprep.subr.bf16.mxu0 %v2673
    %2712 = vmatpush1.bf16.msra.mxu0 %v2672
    %2713 = vmatprep.subr.bf16.mxu0 %v2675
    %2714 = vmatpush1.bf16.msra.mxu0 %v2674
    %2715 = vmatprep.subr.bf16.mxu0 %v2677
    %2716 = vmatpush1.bf16.msra.mxu0 %v2676
    %2717 = vmatprep.subr.bf16.mxu0 %v2679
    %2718 = vmatpush1.bf16.msra.mxu0 %v2678
    %2719 = vmatprep.subr.bf16.mxu0 %v2681
    %2720 = vmatpush1.bf16.msra.mxu0 %v2680
    %2721 = vmatprep.subr.bf16.mxu0 %v2683
    %2722 = vmatpush1.bf16.msra.mxu0 %v2682
    %2723 = vmatprep.subr.bf16.mxu0 %v2685
    %2724 = vmatpush1.bf16.msra.mxu0 %v2684
    %2725 = vmatprep.subr.bf16.mxu0 0
    %2726 = vmatpush1.bf16.msra.mxu0 0
    %2727 = vmatprep.subr.bf16.mxu0 0
    %2728 = vmatpush1.bf16.msra.mxu0 0
    %2729 = vmatprep.subr.bf16.mxu0 0
    %2730 = vmatpush1.bf16.msra.mxu0 0
    %2731 = vmatprep.subr.bf16.mxu0 0
    %2732 = vmatpush1.bf16.msra.mxu0 0
    %2733 = vmatprep.subr.bf16.mxu0 0
    %2734 = vmatpush1.bf16.msra.mxu0 0
    %2735 = vmatprep.subr.bf16.mxu0 0
    %2736 = vmatpush1.bf16.msra.mxu0 0
    %2737 = vmatprep.subr.bf16.mxu0 0
    %2738 = vmatpush1.bf16.msra.mxu0 0
    %2739 = vmatprep.mubr.bf16.mxu0 %v2705
    %2740 = vmatmul.mubr.bf16.gmra.mrb[0].mxu0 %v2600
    %v2741 = vpop.f32.mrb[0].mxu0
    %v2742 = vadd.f32 0.0, %v2741
    %v2743 = vpop.f32.mrb[0].mxu0
    %v2744 = vadd.f32 0.0, %v2743
    %v2745 = vpop.f32.mrb[0].mxu0
    %v2746 = vadd.f32 0.0, %v2745
    %v2747 = vpop.f32.mrb[0].mxu0
    %v2748 = vadd.f32 0.0, %v2747
    %2749 = vdwg.mxu0
    %v2750 = vadd.f32 %v2556, %v2742
    %v2751 = vadd.f32 %v2557, %v2744
    %v2752 = vadd.f32 %v2558, %v2746
    %v2753 = vadd.f32 %v2559, %v2748
    %v2754 = vld [vmem:[%s1709] sm:$0xfc]
    %v2755 = vld [vmem:[%s1709 + $0x8] sm:$0xfc]
    %v2756 = vld [vmem:[%s1709 + $0x10] sm:$0xfc]
    %v2757 = vld [vmem:[%s1709 + $0x30] sm:$0x3]
    %v2758 = vld [vmem:[%s1709 + $0x38] sm:$0x3]
    %v2759 = vld [vmem:[%s1709 + $0x40] sm:$0x3]
    %v2760 = vpack.c.bf16 %v2200, %v2754
    %v2761 = vpack.c.bf16 %v2201, %v2755
    %v2762 = vpack.c.bf16 %v2202, %v2756
    %v2763 = vpack.c.bf16 %v2757, %v2757
    %v2764 = vpack.c.bf16 %v2758, %v2758
    %v2765 = vpack.c.bf16 %v2759, %v2759
    %s2766 = scalar_lea.vmem %s2, 1440
    %v2767 = vld [vmem:[%s2766] sm:$0xff]
    %v2768 = vld [vmem:[%s2766 + $0x8] sm:$0xff]
    %v2769 = vld [vmem:[%s2766 + $0x10] sm:$0xff]
    %v2770 = vld [vmem:[%s2766 + $0x18] sm:$0xff]
    %v2771 = vld [vmem:[%s2766 + $0x20] sm:$0xff]
    %v2772 = vld [vmem:[%s2766 + $0x28] sm:$0xff]
    %v2773 = vld [vmem:[%s2766 + $0x30] sm:$0xff]
    %v2774 = vld [vmem:[%s2766 + $0x38] sm:$0xff]
    %v2775 = vld [vmem:[%s2766 + $0x40] sm:$0xff]
    %v2776 = vld [vmem:[%s2766 + $0x48] sm:$0xff]
    %v2777 = vld [vmem:[%s2766 + $0x50] sm:$0xff]
    %v2778 = vld [vmem:[%s2766 + $0x58] sm:$0xff]
    %v2779 = vld [vmem:[%s2766 + $0x60] sm:$0xff]
    %v2780 = vld [vmem:[%s2766 + $0x68] sm:$0xff]
    %v2781 = vld [vmem:[%s2766 + $0x70] sm:$0xff]
    %v2782 = vld [vmem:[%s2766 + $0x78] sm:$0xff]
    %v2783 = vld [vmem:[%s2766 + $0x80] sm:$0xff]
    %v2784 = vld [vmem:[%s2766 + $0x88] sm:$0xff]
    %v2785 = vld [vmem:[%s2766 + $0x90] sm:$0xff]
    %v2786 = vld [vmem:[%s2766 + $0x98] sm:$0xff]
    %v2787 = vld [vmem:[%s2766 + $0xa0] sm:$0xff]
    %v2788 = vld [vmem:[%s2766 + $0xa8] sm:$0xff]
    %v2789 = vld [vmem:[%s2766 + $0xb0] sm:$0xff]
    %v2790 = vld [vmem:[%s2766 + $0xb8] sm:$0xff]
    %v2791 = vld [vmem:[%s2766 + $0xc0] sm:$0xff]
    %v2792 = vld [vmem:[%s2766 + $0xc8] sm:$0xff]
    %v2793 = vld [vmem:[%s2766 + $0xd0] sm:$0xff]
    %v2794 = vld [vmem:[%s2766 + $0xd8] sm:$0xff]
    %v2795 = vld [vmem:[%s2766 + $0xe0] sm:$0xff]
    %v2796 = vld [vmem:[%s2766 + $0xe8] sm:$0xff]
    %v2797 = vld [vmem:[%s2766 + $0xf0] sm:$0xff]
    %v2798 = vld [vmem:[%s2766 + $0xf8] sm:$0xff]
    %v2799 = vld [vmem:[%s2766 + $0x100] sm:$0xff]
    %v2800 = vld [vmem:[%s2766 + $0x108] sm:$0xff]
    %v2801 = vld [vmem:[%s2766 + $0x110] sm:$0xff]
    %v2802 = vld [vmem:[%s2766 + $0x118] sm:$0xff]
    %v2809 = vrot.slane %v2760, 1
    %v2810 = vrot.slane %v2763, 1
    %v2811 = vsel %vm1243, %v2809, %v2810
    %v2812 = vrot.slane %v2761, 1
    %v2813 = vrot.slane %v2764, 1
    %v2814 = vsel %vm1243, %v2812, %v2813
    %v2815 = vrot.slane %v2762, 1
    %v2816 = vrot.slane %v2765, 1
    %v2817 = vsel %vm1243, %v2815, %v2816
    %v2856 = vunpack.c.l.b16 %v2767
    %v2857 = vunpack.c.h.b16 %v2767
    %v2858 = vunpack.c.l.b16 %v2768
    %v2859 = vunpack.c.h.b16 %v2768
    %v2860 = vunpack.c.l.b16 %v2769
    %v2861 = vunpack.c.h.b16 %v2769
    %v2862 = vunpack.c.l.b16 %v2770
    %v2863 = vunpack.c.h.b16 %v2770
    %v2864 = vunpack.c.l.b16 %v2771
    %v2865 = vunpack.c.h.b16 %v2771
    %v2866 = vunpack.c.l.b16 %v2772
    %v2867 = vunpack.c.h.b16 %v2772
    %v2868 = vunpack.c.l.b16 %v2773
    %v2869 = vunpack.c.h.b16 %v2773
    %v2870 = vunpack.c.l.b16 %v2774
    %v2871 = vunpack.c.h.b16 %v2774
    %v2872 = vunpack.c.l.b16 %v2775
    %v2873 = vunpack.c.h.b16 %v2775
    %v2874 = vunpack.c.l.b16 %v2776
    %v2875 = vunpack.c.h.b16 %v2776
    %v2876 = vunpack.c.l.b16 %v2777
    %v2877 = vunpack.c.h.b16 %v2777
    %v2878 = vunpack.c.l.b16 %v2778
    %v2879 = vunpack.c.h.b16 %v2778
    %v2880 = vunpack.c.l.b16 %v2779
    %v2881 = vunpack.c.h.b16 %v2779
    %v2882 = vunpack.c.l.b16 %v2780
    %v2883 = vunpack.c.h.b16 %v2780
    %v2884 = vunpack.c.l.b16 %v2781
    %v2885 = vunpack.c.h.b16 %v2781
    %v2886 = vunpack.c.l.b16 %v2782
    %v2887 = vunpack.c.h.b16 %v2782
    %v2888 = vunpack.c.l.b16 %v2783
    %v2889 = vunpack.c.h.b16 %v2783
    %v2890 = vunpack.c.l.b16 %v2784
    %v2891 = vunpack.c.h.b16 %v2784
    %v2892 = vunpack.c.l.b16 %v2785
    %v2893 = vunpack.c.h.b16 %v2785
    %v2894 = vunpack.c.l.b16 %v2786
    %v2895 = vunpack.c.h.b16 %v2786
    %v2896 = vunpack.c.l.b16 %v2787
    %v2897 = vunpack.c.h.b16 %v2787
    %v2898 = vunpack.c.l.b16 %v2788
    %v2899 = vunpack.c.h.b16 %v2788
    %v2900 = vunpack.c.l.b16 %v2789
    %v2901 = vunpack.c.h.b16 %v2789
    %v2902 = vunpack.c.l.b16 %v2790
    %v2903 = vunpack.c.h.b16 %v2790
    %v2904 = vunpack.c.l.b16 %v2791
    %v2905 = vunpack.c.h.b16 %v2791
    %v2906 = vunpack.c.l.b16 %v2792
    %v2907 = vunpack.c.h.b16 %v2792
    %v2908 = vunpack.c.l.b16 %v2793
    %v2909 = vunpack.c.h.b16 %v2793
    %v2910 = vunpack.c.l.b16 %v2794
    %v2911 = vunpack.c.h.b16 %v2794
    %v2912 = vunpack.c.l.b16 %v2795
    %v2913 = vunpack.c.h.b16 %v2795
    %v2914 = vunpack.c.l.b16 %v2796
    %v2915 = vunpack.c.h.b16 %v2796
    %v2916 = vunpack.c.l.b16 %v2797
    %v2917 = vunpack.c.h.b16 %v2797
    %v2918 = vunpack.c.l.b16 %v2798
    %v2919 = vunpack.c.h.b16 %v2798
    %v2920 = vunpack.c.l.b16 %v2799
    %v2921 = vunpack.c.h.b16 %v2799
    %v2922 = vunpack.c.l.b16 %v2800
    %v2923 = vunpack.c.h.b16 %v2800
    %v2924 = vunpack.c.l.b16 %v2801
    %v2925 = vunpack.c.h.b16 %v2801
    %v2926 = vunpack.c.l.b16 %v2802
    %v2927 = vunpack.c.h.b16 %v2802
    %v2928 = vpack.c.b16 %v2858, %v2856
    %v2929 = vpack.c.b16 %v2859, %v2857
    %v2930 = vpack.c.b16 %v2862, %v2860
    %v2931 = vpack.c.b16 %v2863, %v2861
    %v2932 = vpack.c.b16 %v2866, %v2864
    %v2933 = vpack.c.b16 %v2867, %v2865
    %v2934 = vpack.c.b16 %v2870, %v2868
    %v2935 = vpack.c.b16 %v2871, %v2869
    %v2936 = vpack.c.b16 %v2874, %v2872
    %v2937 = vpack.c.b16 %v2875, %v2873
    %v2938 = vpack.c.b16 %v2878, %v2876
    %v2939 = vpack.c.b16 %v2879, %v2877
    %v2940 = vpack.c.b16 %v2882, %v2880
    %v2941 = vpack.c.b16 %v2883, %v2881
    %v2942 = vpack.c.b16 %v2886, %v2884
    %v2943 = vpack.c.b16 %v2887, %v2885
    %v2944 = vpack.c.b16 %v2890, %v2888
    %v2945 = vpack.c.b16 %v2891, %v2889
    %v2946 = vpack.c.b16 %v2894, %v2892
    %v2947 = vpack.c.b16 %v2895, %v2893
    %v2948 = vpack.c.b16 %v2898, %v2896
    %v2949 = vpack.c.b16 %v2899, %v2897
    %v2950 = vpack.c.b16 %v2902, %v2900
    %v2951 = vpack.c.b16 %v2903, %v2901
    %v2952 = vpack.c.b16 %v2906, %v2904
    %v2953 = vpack.c.b16 %v2907, %v2905
    %v2954 = vpack.c.b16 %v2910, %v2908
    %v2955 = vpack.c.b16 %v2911, %v2909
    %v2956 = vpack.c.b16 %v2914, %v2912
    %v2957 = vpack.c.b16 %v2915, %v2913
    %v2958 = vpack.c.b16 %v2918, %v2916
    %v2959 = vpack.c.b16 %v2919, %v2917
    %v2960 = vpack.c.b16 %v2922, %v2920
    %v2961 = vpack.c.b16 %v2923, %v2921
    %v2962 = vpack.c.b16 %v2926, %v2924
    %v2963 = vpack.c.b16 %v2927, %v2925
    %v3001 = vsel %vm540, %v2817, 0
    %3003 = vmatprep.subr.bf16.mxu0 %v2929
    %3004 = vmatpush1.bf16.msra.mxu0 %v2928
    %3005 = vmatprep.subr.bf16.mxu0 %v2931
    %3006 = vmatpush1.bf16.msra.mxu0 %v2930
    %3007 = vmatprep.subr.bf16.mxu0 %v2933
    %3008 = vmatpush1.bf16.msra.mxu0 %v2932
    %3009 = vmatprep.subr.bf16.mxu0 %v2935
    %3010 = vmatpush1.bf16.msra.mxu0 %v2934
    %3011 = vmatprep.subr.bf16.mxu0 %v2937
    %3012 = vmatpush1.bf16.msra.mxu0 %v2936
    %3013 = vmatprep.subr.bf16.mxu0 %v2939
    %3014 = vmatpush1.bf16.msra.mxu0 %v2938
    %3015 = vmatprep.subr.bf16.mxu0 %v2941
    %3016 = vmatpush1.bf16.msra.mxu0 %v2940
    %3017 = vmatprep.subr.bf16.mxu0 %v2943
    %3018 = vmatpush1.bf16.msra.mxu0 %v2942
    %3019 = vmatprep.subr.bf16.mxu0 %v2945
    %3020 = vmatpush1.bf16.msra.mxu0 %v2944
    %3021 = vmatprep.subr.bf16.mxu0 %v2947
    %3022 = vmatpush1.bf16.msra.mxu0 %v2946
    %3023 = vmatprep.subr.bf16.mxu0 %v2949
    %3024 = vmatpush1.bf16.msra.mxu0 %v2948
    %3025 = vmatprep.subr.bf16.mxu0 %v2951
    %3026 = vmatpush1.bf16.msra.mxu0 %v2950
    %3027 = vmatprep.subr.bf16.mxu0 %v2953
    %3028 = vmatpush1.bf16.msra.mxu0 %v2952
    %3029 = vmatprep.subr.bf16.mxu0 %v2955
    %3030 = vmatpush1.bf16.msra.mxu0 %v2954
    %3031 = vmatprep.subr.bf16.mxu0 %v2957
    %3032 = vmatpush1.bf16.msra.mxu0 %v2956
    %3033 = vmatprep.subr.bf16.mxu0 %v2959
    %3034 = vmatpush1.bf16.msra.mxu0 %v2958
    %3035 = vmatprep.mubr.bf16.mxu0 %v2814
    %3036 = vmatmul.mubr.bf16.gmra.mrb[0].mxu0 %v2811
    %v3037 = vpop.f32.mrb[0].mxu0
    %v3038 = vadd.f32 0.0, %v3037
    %v3039 = vpop.f32.mrb[0].mxu0
    %v3040 = vadd.f32 0.0, %v3039
    %v3041 = vpop.f32.mrb[0].mxu0
    %v3042 = vadd.f32 0.0, %v3041
    %v3043 = vpop.f32.mrb[0].mxu0
    %v3044 = vadd.f32 0.0, %v3043
    %3045 = vdwg.mxu0
    %3046 = vmatprep.subr.bf16.mxu0 %v2961
    %3047 = vmatpush1.bf16.msra.mxu0 %v2960
    %3048 = vmatprep.subr.bf16.mxu0 %v2963
    %3049 = vmatpush1.bf16.msra.mxu0 %v2962
    %3050 = vmatprep.subr.bf16.mxu0 0
    %3051 = vmatpush1.bf16.msra.mxu0 0
    %3052 = vmatprep.subr.bf16.mxu0 0
    %3053 = vmatpush1.bf16.msra.mxu0 0
    %3054 = vmatprep.subr.bf16.mxu0 0
    %3055 = vmatpush1.bf16.msra.mxu0 0
    %3056 = vmatprep.subr.bf16.mxu0 0
    %3057 = vmatpush1.bf16.msra.mxu0 0
    %3058 = vmatprep.subr.bf16.mxu0 0
    %3059 = vmatpush1.bf16.msra.mxu0 0
    %3060 = vmatprep.subr.bf16.mxu0 0
    %3061 = vmatpush1.bf16.msra.mxu0 0
    %3062 = vmatprep.subr.bf16.mxu0 0
    %3063 = vmatpush1.bf16.msra.mxu0 0
    %3064 = vmatprep.subr.bf16.mxu0 0
    %3065 = vmatpush1.bf16.msra.mxu0 0
    %3066 = vmatprep.subr.bf16.mxu0 0
    %3067 = vmatpush1.bf16.msra.mxu0 0
    %3068 = vmatprep.subr.bf16.mxu0 0
    %3069 = vmatpush1.bf16.msra.mxu0 0
    %3070 = vmatprep.subr.bf16.mxu0 0
    %3071 = vmatpush1.bf16.msra.mxu0 0
    %3072 = vmatprep.subr.bf16.mxu0 0
    %3073 = vmatpush1.bf16.msra.mxu0 0
    %3074 = vmatprep.subr.bf16.mxu0 0
    %3075 = vmatpush1.bf16.msra.mxu0 0
    %3076 = vmatprep.subr.bf16.mxu0 0
    %3077 = vmatpush1.bf16.msra.mxu0 0
    %3078 = vmatprep.mubr.bf16.mxu0 0
    %3079 = vmatmul.mubr.bf16.gmra.mrb[0].mxu0 %v3001
    %v3080 = vpop.f32.mrb[0].mxu0
    %v3081 = vadd.f32 %v3038, %v3080
    %v3082 = vpop.f32.mrb[0].mxu0
    %v3083 = vadd.f32 %v3040, %v3082
    %v3084 = vpop.f32.mrb[0].mxu0
    %v3085 = vadd.f32 %v3042, %v3084
    %v3086 = vpop.f32.mrb[0].mxu0
    %v3087 = vadd.f32 %v3044, %v3086
    %3088 = vdwg.mxu0
    %v3089 = vadd.f32 %v2750, %v3081
    %v3090 = vadd.f32 %v2751, %v3083
    %v3091 = vadd.f32 %v2752, %v3085
    %v3092 = vadd.f32 %v2753, %v3087
    %v3093 = vld [vmem:[%s2031] sm:$0xfc]
    %v3094 = vld [vmem:[%s2031 + $0x8] sm:$0xfc]
    %v3095 = vld [vmem:[%s2031 + $0x20] sm:$0x3]
    %v3096 = vld [vmem:[%s2031 + $0x28] sm:$0x3]
    %v3097 = vpack.c.bf16 %v2562, %v3093
    %v3098 = vpack.c.bf16 %v2563, %v3094
    %v3099 = vpack.c.bf16 %v3095, %v3095
    %v3100 = vpack.c.bf16 %v3096, %v3096
    %s3101 = scalar_lea.vmem %s3, 720
    %v3102 = vld [vmem:[%s3101] sm:$0xff]
    %v3103 = vld [vmem:[%s3101 + $0x8] sm:$0xff]
    %v3104 = vld [vmem:[%s3101 + $0x10] sm:$0xff]
    %v3105 = vld [vmem:[%s3101 + $0x18] sm:$0xff]
    %v3106 = vld [vmem:[%s3101 + $0x20] sm:$0xff]
    %v3107 = vld [vmem:[%s3101 + $0x28] sm:$0xff]
    %v3108 = vld [vmem:[%s3101 + $0x30] sm:$0xff]
    %v3109 = vld [vmem:[%s3101 + $0x38] sm:$0xff]
    %v3110 = vld [vmem:[%s3101 + $0x40] sm:$0xff]
    %v3111 = vld [vmem:[%s3101 + $0x48] sm:$0xff]
    %v3112 = vld [vmem:[%s3101 + $0x50] sm:$0xff]
    %v3113 = vld [vmem:[%s3101 + $0x58] sm:$0xff]
    %v3114 = vld [vmem:[%s3101 + $0x60] sm:$0xff]
    %v3115 = vld [vmem:[%s3101 + $0x68] sm:$0xff]
    %v3116 = vld [vmem:[%s3101 + $0x70] sm:$0xff]
    %v3117 = vld [vmem:[%s3101 + $0x78] sm:$0xff]
    %v3118 = vld [vmem:[%s3101 + $0x80] sm:$0xff]
    %v3119 = vld [vmem:[%s3101 + $0x88] sm:$0xff]
    %v3124 = vrot.slane %v3097, 1
    %v3125 = vrot.slane %v3099, 1
    %v3126 = vsel %vm1243, %v3124, %v3125
    %v3127 = vrot.slane %v3098, 1
    %v3128 = vrot.slane %v3100, 1
    %v3129 = vsel %vm1243, %v3127, %v3128
    %v3149 = vunpack.c.l.b16 %v3102
    %v3150 = vunpack.c.h.b16 %v3102
    %v3151 = vunpack.c.l.b16 %v3103
    %v3152 = vunpack.c.h.b16 %v3103
    %v3153 = vunpack.c.l.b16 %v3104
    %v3154 = vunpack.c.h.b16 %v3104
    %v3155 = vunpack.c.l.b16 %v3105
    %v3156 = vunpack.c.h.b16 %v3105
    %v3157 = vunpack.c.l.b16 %v3106
    %v3158 = vunpack.c.h.b16 %v3106
    %v3159 = vunpack.c.l.b16 %v3107
    %v3160 = vunpack.c.h.b16 %v3107
    %v3161 = vunpack.c.l.b16 %v3108
    %v3162 = vunpack.c.h.b16 %v3108
    %v3163 = vunpack.c.l.b16 %v3109
    %v3164 = vunpack.c.h.b16 %v3109
    %v3165 = vunpack.c.l.b16 %v3110
    %v3166 = vunpack.c.h.b16 %v3110
    %v3167 = vunpack.c.l.b16 %v3111
    %v3168 = vunpack.c.h.b16 %v3111
    %v3169 = vunpack.c.l.b16 %v3112
    %v3170 = vunpack.c.h.b16 %v3112
    %v3171 = vunpack.c.l.b16 %v3113
    %v3172 = vunpack.c.h.b16 %v3113
    %v3173 = vunpack.c.l.b16 %v3114
    %v3174 = vunpack.c.h.b16 %v3114
    %v3175 = vunpack.c.l.b16 %v3115
    %v3176 = vunpack.c.h.b16 %v3115
    %v3177 = vunpack.c.l.b16 %v3116
    %v3178 = vunpack.c.h.b16 %v3116
    %v3179 = vunpack.c.l.b16 %v3117
    %v3180 = vunpack.c.h.b16 %v3117
    %v3181 = vunpack.c.l.b16 %v3118
    %v3182 = vunpack.c.h.b16 %v3118
    %v3183 = vunpack.c.l.b16 %v3119
    %v3184 = vunpack.c.h.b16 %v3119
    %v3185 = vpack.c.b16 %v3151, %v3149
    %v3186 = vpack.c.b16 %v3152, %v3150
    %v3187 = vpack.c.b16 %v3155, %v3153
    %v3188 = vpack.c.b16 %v3156, %v3154
    %v3189 = vpack.c.b16 %v3159, %v3157
    %v3190 = vpack.c.b16 %v3160, %v3158
    %v3191 = vpack.c.b16 %v3163, %v3161
    %v3192 = vpack.c.b16 %v3164, %v3162
    %v3193 = vpack.c.b16 %v3167, %v3165
    %v3194 = vpack.c.b16 %v3168, %v3166
    %v3195 = vpack.c.b16 %v3171, %v3169
    %v3196 = vpack.c.b16 %v3172, %v3170
    %v3197 = vpack.c.b16 %v3175, %v3173
    %v3198 = vpack.c.b16 %v3176, %v3174
    %v3199 = vpack.c.b16 %v3179, %v3177
    %v3200 = vpack.c.b16 %v3180, %v3178
    %v3201 = vpack.c.b16 %v3183, %v3181
    %v3202 = vpack.c.b16 %v3184, %v3182
    %v3222 = vsel %vm34, %v3129, 0
    %3224 = vmatprep.subr.bf16.mxu0 %v3186
    %3225 = vmatpush1.bf16.msra.mxu0 %v3185
    %3226 = vmatprep.subr.bf16.mxu0 %v3188
    %3227 = vmatpush1.bf16.msra.mxu0 %v3187
    %3228 = vmatprep.subr.bf16.mxu0 %v3190
    %3229 = vmatpush1.bf16.msra.mxu0 %v3189
    %3230 = vmatprep.subr.bf16.mxu0 %v3192
    %3231 = vmatpush1.bf16.msra.mxu0 %v3191
    %3232 = vmatprep.subr.bf16.mxu0 %v3194
    %3233 = vmatpush1.bf16.msra.mxu0 %v3193
    %3234 = vmatprep.subr.bf16.mxu0 %v3196
    %3235 = vmatpush1.bf16.msra.mxu0 %v3195
    %3236 = vmatprep.subr.bf16.mxu0 %v3198
    %3237 = vmatpush1.bf16.msra.mxu0 %v3197
    %3238 = vmatprep.subr.bf16.mxu0 %v3200
    %3239 = vmatpush1.bf16.msra.mxu0 %v3199
    %3240 = vmatprep.subr.bf16.mxu0 %v3202
    %3241 = vmatpush1.bf16.msra.mxu0 %v3201
    %3242 = vmatprep.subr.bf16.mxu0 0
    %3243 = vmatpush1.bf16.msra.mxu0 0
    %3244 = vmatprep.subr.bf16.mxu0 0
    %3245 = vmatpush1.bf16.msra.mxu0 0
    %3246 = vmatprep.subr.bf16.mxu0 0
    %3247 = vmatpush1.bf16.msra.mxu0 0
    %3248 = vmatprep.subr.bf16.mxu0 0
    %3249 = vmatpush1.bf16.msra.mxu0 0
    %3250 = vmatprep.subr.bf16.mxu0 0
    %3251 = vmatpush1.bf16.msra.mxu0 0
    %3252 = vmatprep.subr.bf16.mxu0 0
    %3253 = vmatpush1.bf16.msra.mxu0 0
    %3254 = vmatprep.subr.bf16.mxu0 0
    %3255 = vmatpush1.bf16.msra.mxu0 0
    %3256 = vmatprep.mubr.bf16.mxu0 %v3222
    %3257 = vmatmul.mubr.bf16.gmra.mrb[0].mxu0 %v3126
    %v3258 = vpop.f32.mrb[0].mxu0
    %v3259 = vadd.f32 0.0, %v3258
    %v3260 = vpop.f32.mrb[0].mxu0
    %v3261 = vadd.f32 0.0, %v3260
    %v3262 = vpop.f32.mrb[0].mxu0
    %v3263 = vadd.f32 0.0, %v3262
    %v3264 = vpop.f32.mrb[0].mxu0
    %v3265 = vadd.f32 0.0, %v3264
    %3266 = vdwg.mxu0
    %v3267 = vadd.f32 %v3089, %v3259
    %v3268 = vadd.f32 %v3090, %v3261
    %v3269 = vadd.f32 %v3091, %v3263
    %v3270 = vadd.f32 %v3092, %v3265
    %s3271 = sadd.s32 %s144, 2
    %s3272 = smul.u32 %s3271, 9
    %s3273 = smul.addr %s3272, 8
    %s3274 = scalar_lea.vmem %s0, %s3273
    %v3275 = vld [vmem:[%s3274] sm:$0xff]
    %v3276 = vld [vmem:[%s3274 + $0x8] sm:$0xff]
    %v3277 = vld [vmem:[%s3274 + $0x10] sm:$0xff]
    %v3278 = vld [vmem:[%s3274 + $0x18] sm:$0xff]
    %v3279 = vld [vmem:[%s3274 + $0x20] sm:$0xff]
    %v3280 = vld [vmem:[%s3274 + $0x28] sm:$0xff]
    %v3281 = vpack.c.bf16 %v3278, %v3275
    %v3282 = vpack.c.bf16 %v3279, %v3276
    %v3283 = vpack.c.bf16 %v3280, %v3277
    %s3284 = scalar_lea.vmem %s2, 1728
    %v3285 = vld [vmem:[%s3284] sm:$0xff]
    %v3286 = vld [vmem:[%s3284 + $0x8] sm:$0xff]
    %v3287 = vld [vmem:[%s3284 + $0x10] sm:$0xff]
    %v3288 = vld [vmem:[%s3284 + $0x18] sm:$0xff]
    %v3289 = vld [vmem:[%s3284 + $0x20] sm:$0xff]
    %v3290 = vld [vmem:[%s3284 + $0x28] sm:$0xff]
    %v3291 = vld [vmem:[%s3284 + $0x30] sm:$0xff]
    %v3292 = vld [vmem:[%s3284 + $0x38] sm:$0xff]
    %v3293 = vld [vmem:[%s3284 + $0x40] sm:$0xff]
    %v3294 = vld [vmem:[%s3284 + $0x48] sm:$0xff]
    %v3295 = vld [vmem:[%s3284 + $0x50] sm:$0xff]
    %v3296 = vld [vmem:[%s3284 + $0x58] sm:$0xff]
    %v3297 = vld [vmem:[%s3284 + $0x60] sm:$0xff]
    %v3298 = vld [vmem:[%s3284 + $0x68] sm:$0xff]
    %v3299 = vld [vmem:[%s3284 + $0x70] sm:$0xff]
    %v3300 = vld [vmem:[%s3284 + $0x78] sm:$0xff]
    %v3301 = vld [vmem:[%s3284 + $0x80] sm:$0xff]
    %v3302 = vld [vmem:[%s3284 + $0x88] sm:$0xff]
    %v3303 = vld [vmem:[%s3284 + $0x90] sm:$0xff]
    %v3304 = vld [vmem:[%s3284 + $0x98] sm:$0xff]
    %v3305 = vld [vmem:[%s3284 + $0xa0] sm:$0xff]
    %v3306 = vld [vmem:[%s3284 + $0xa8] sm:$0xff]
    %v3307 = vld [vmem:[%s3284 + $0xb0] sm:$0xff]
    %v3308 = vld [vmem:[%s3284 + $0xb8] sm:$0xff]
    %v3309 = vld [vmem:[%s3284 + $0xc0] sm:$0xff]
    %v3310 = vld [vmem:[%s3284 + $0xc8] sm:$0xff]
    %v3311 = vld [vmem:[%s3284 + $0xd0] sm:$0xff]
    %v3312 = vld [vmem:[%s3284 + $0xd8] sm:$0xff]
    %v3313 = vld [vmem:[%s3284 + $0xe0] sm:$0xff]
    %v3314 = vld [vmem:[%s3284 + $0xe8] sm:$0xff]
    %v3315 = vld [vmem:[%s3284 + $0xf0] sm:$0xff]
    %v3316 = vld [vmem:[%s3284 + $0xf8] sm:$0xff]
    %v3317 = vld [vmem:[%s3284 + $0x100] sm:$0xff]
    %v3318 = vld [vmem:[%s3284 + $0x108] sm:$0xff]
    %v3319 = vld [vmem:[%s3284 + $0x110] sm:$0xff]
    %v3320 = vld [vmem:[%s3284 + $0x118] sm:$0xff]
    %v3357 = vunpack.c.l.b16 %v3285
    %v3358 = vunpack.c.h.b16 %v3285
    %v3359 = vunpack.c.l.b16 %v3286
    %v3360 = vunpack.c.h.b16 %v3286
    %v3361 = vunpack.c.l.b16 %v3287
    %v3362 = vunpack.c.h.b16 %v3287
    %v3363 = vunpack.c.l.b16 %v3288
    %v3364 = vunpack.c.h.b16 %v3288
    %v3365 = vunpack.c.l.b16 %v3289
    %v3366 = vunpack.c.h.b16 %v3289
    %v3367 = vunpack.c.l.b16 %v3290
    %v3368 = vunpack.c.h.b16 %v3290
    %v3369 = vunpack.c.l.b16 %v3291
    %v3370 = vunpack.c.h.b16 %v3291
    %v3371 = vunpack.c.l.b16 %v3292
    %v3372 = vunpack.c.h.b16 %v3292
    %v3373 = vunpack.c.l.b16 %v3293
    %v3374 = vunpack.c.h.b16 %v3293
    %v3375 = vunpack.c.l.b16 %v3294
    %v3376 = vunpack.c.h.b16 %v3294
    %v3377 = vunpack.c.l.b16 %v3295
    %v3378 = vunpack.c.h.b16 %v3295
    %v3379 = vunpack.c.l.b16 %v3296
    %v3380 = vunpack.c.h.b16 %v3296
    %v3381 = vunpack.c.l.b16 %v3297
    %v3382 = vunpack.c.h.b16 %v3297
    %v3383 = vunpack.c.l.b16 %v3298
    %v3384 = vunpack.c.h.b16 %v3298
    %v3385 = vunpack.c.l.b16 %v3299
    %v3386 = vunpack.c.h.b16 %v3299
    %v3387 = vunpack.c.l.b16 %v3300
    %v3388 = vunpack.c.h.b16 %v3300
    %v3389 = vunpack.c.l.b16 %v3301
    %v3390 = vunpack.c.h.b16 %v3301
    %v3391 = vunpack.c.l.b16 %v3302
    %v3392 = vunpack.c.h.b16 %v3302
    %v3393 = vunpack.c.l.b16 %v3303
    %v3394 = vunpack.c.h.b16 %v3303
    %v3395 = vunpack.c.l.b16 %v3304
    %v3396 = vunpack.c.h.b16 %v3304
    %v3397 = vunpack.c.l.b16 %v3305
    %v3398 = vunpack.c.h.b16 %v3305
    %v3399 = vunpack.c.l.b16 %v3306
    %v3400 = vunpack.c.h.b16 %v3306
    %v3401 = vunpack.c.l.b16 %v3307
    %v3402 = vunpack.c.h.b16 %v3307
    %v3403 = vunpack.c.l.b16 %v3308
    %v3404 = vunpack.c.h.b16 %v3308
    %v3405 = vunpack.c.l.b16 %v3309
    %v3406 = vunpack.c.h.b16 %v3309
    %v3407 = vunpack.c.l.b16 %v3310
    %v3408 = vunpack.c.h.b16 %v3310
    %v3409 = vunpack.c.l.b16 %v3311
    %v3410 = vunpack.c.h.b16 %v3311
    %v3411 = vunpack.c.l.b16 %v3312
    %v3412 = vunpack.c.h.b16 %v3312
    %v3413 = vunpack.c.l.b16 %v3313
    %v3414 = vunpack.c.h.b16 %v3313
    %v3415 = vunpack.c.l.b16 %v3314
    %v3416 = vunpack.c.h.b16 %v3314
    %v3417 = vunpack.c.l.b16 %v3315
    %v3418 = vunpack.c.h.b16 %v3315
    %v3419 = vunpack.c.l.b16 %v3316
    %v3420 = vunpack.c.h.b16 %v3316
    %v3421 = vunpack.c.l.b16 %v3317
    %v3422 = vunpack.c.h.b16 %v3317
    %v3423 = vunpack.c.l.b16 %v3318
    %v3424 = vunpack.c.h.b16 %v3318
    %v3425 = vunpack.c.l.b16 %v3319
    %v3426 = vunpack.c.h.b16 %v3319
    %v3427 = vunpack.c.l.b16 %v3320
    %v3428 = vunpack.c.h.b16 %v3320
    %v3429 = vpack.c.b16 %v3359, %v3357
    %v3430 = vpack.c.b16 %v3360, %v3358
    %v3431 = vpack.c.b16 %v3363, %v3361
    %v3432 = vpack.c.b16 %v3364, %v3362
    %v3433 = vpack.c.b16 %v3367, %v3365
    %v3434 = vpack.c.b16 %v3368, %v3366
    %v3435 = vpack.c.b16 %v3371, %v3369
    %v3436 = vpack.c.b16 %v3372, %v3370
    %v3437 = vpack.c.b16 %v3375, %v3373
    %v3438 = vpack.c.b16 %v3376, %v3374
    %v3439 = vpack.c.b16 %v3379, %v3377
    %v3440 = vpack.c.b16 %v3380, %v3378
    %v3441 = vpack.c.b16 %v3383, %v3381
    %v3442 = vpack.c.b16 %v3384, %v3382
    %v3443 = vpack.c.b16 %v3387, %v3385
    %v3444 = vpack.c.b16 %v3388, %v3386
    %v3445 = vpack.c.b16 %v3391, %v3389
    %v3446 = vpack.c.b16 %v3392, %v3390
    %v3447 = vpack.c.b16 %v3395, %v3393
    %v3448 = vpack.c.b16 %v3396, %v3394
    %v3449 = vpack.c.b16 %v3399, %v3397
    %v3450 = vpack.c.b16 %v3400, %v3398
    %v3451 = vpack.c.b16 %v3403, %v3401
    %v3452 = vpack.c.b16 %v3404, %v3402
    %v3453 = vpack.c.b16 %v3407, %v3405
    %v3454 = vpack.c.b16 %v3408, %v3406
    %v3455 = vpack.c.b16 %v3411, %v3409
    %v3456 = vpack.c.b16 %v3412, %v3410
    %v3457 = vpack.c.b16 %v3415, %v3413
    %v3458 = vpack.c.b16 %v3416, %v3414
    %v3459 = vpack.c.b16 %v3419, %v3417
    %v3460 = vpack.c.b16 %v3420, %v3418
    %v3461 = vpack.c.b16 %v3423, %v3421
    %v3462 = vpack.c.b16 %v3424, %v3422
    %v3463 = vpack.c.b16 %v3427, %v3425
    %v3464 = vpack.c.b16 %v3428, %v3426
    %v3502 = vsel %vm540, %v3283, 0
    %3504 = vmatprep.subr.bf16.mxu0 %v3430
    %3505 = vmatpush1.bf16.msra.mxu0 %v3429
    %3506 = vmatprep.subr.bf16.mxu0 %v3432
    %3507 = vmatpush1.bf16.msra.mxu0 %v3431
    %3508 = vmatprep.subr.bf16.mxu0 %v3434
    %3509 = vmatpush1.bf16.msra.mxu0 %v3433
    %3510 = vmatprep.subr.bf16.mxu0 %v3436
    %3511 = vmatpush1.bf16.msra.mxu0 %v3435
    %3512 = vmatprep.subr.bf16.mxu0 %v3438
    %3513 = vmatpush1.bf16.msra.mxu0 %v3437
    %3514 = vmatprep.subr.bf16.mxu0 %v3440
    %3515 = vmatpush1.bf16.msra.mxu0 %v3439
    %3516 = vmatprep.subr.bf16.mxu0 %v3442
    %3517 = vmatpush1.bf16.msra.mxu0 %v3441
    %3518 = vmatprep.subr.bf16.mxu0 %v3444
    %3519 = vmatpush1.bf16.msra.mxu0 %v3443
    %3520 = vmatprep.subr.bf16.mxu0 %v3446
    %3521 = vmatpush1.bf16.msra.mxu0 %v3445
    %3522 = vmatprep.subr.bf16.mxu0 %v3448
    %3523 = vmatpush1.bf16.msra.mxu0 %v3447
    %3524 = vmatprep.subr.bf16.mxu0 %v3450
    %3525 = vmatpush1.bf16.msra.mxu0 %v3449
    %3526 = vmatprep.subr.bf16.mxu0 %v3452
    %3527 = vmatpush1.bf16.msra.mxu0 %v3451
    %3528 = vmatprep.subr.bf16.mxu0 %v3454
    %3529 = vmatpush1.bf16.msra.mxu0 %v3453
    %3530 = vmatprep.subr.bf16.mxu0 %v3456
    %3531 = vmatpush1.bf16.msra.mxu0 %v3455
    %3532 = vmatprep.subr.bf16.mxu0 %v3458
    %3533 = vmatpush1.bf16.msra.mxu0 %v3457
    %3534 = vmatprep.subr.bf16.mxu0 %v3460
    %3535 = vmatpush1.bf16.msra.mxu0 %v3459
    %3536 = vmatprep.mubr.bf16.mxu0 %v3282
    %3537 = vmatmul.mubr.bf16.gmra.mrb[0].mxu0 %v3281
    %v3538 = vpop.f32.mrb[0].mxu0
    %v3539 = vadd.f32 0.0, %v3538
    %v3540 = vpop.f32.mrb[0].mxu0
    %v3541 = vadd.f32 0.0, %v3540
    %v3542 = vpop.f32.mrb[0].mxu0
    %v3543 = vadd.f32 0.0, %v3542
    %v3544 = vpop.f32.mrb[0].mxu0
    %v3545 = vadd.f32 0.0, %v3544
    %3546 = vdwg.mxu0
    %3547 = vmatprep.subr.bf16.mxu0 %v3462
    %3548 = vmatpush1.bf16.msra.mxu0 %v3461
    %3549 = vmatprep.subr.bf16.mxu0 %v3464
    %3550 = vmatpush1.bf16.msra.mxu0 %v3463
    %3551 = vmatprep.subr.bf16.mxu0 0
    %3552 = vmatpush1.bf16.msra.mxu0 0
    %3553 = vmatprep.subr.bf16.mxu0 0
    %3554 = vmatpush1.bf16.msra.mxu0 0
    %3555 = vmatprep.subr.bf16.mxu0 0
    %3556 = vmatpush1.bf16.msra.mxu0 0
    %3557 = vmatprep.subr.bf16.mxu0 0
    %3558 = vmatpush1.bf16.msra.mxu0 0
    %3559 = vmatprep.subr.bf16.mxu0 0
    %3560 = vmatpush1.bf16.msra.mxu0 0
    %3561 = vmatprep.subr.bf16.mxu0 0
    %3562 = vmatpush1.bf16.msra.mxu0 0
    %3563 = vmatprep.subr.bf16.mxu0 0
    %3564 = vmatpush1.bf16.msra.mxu0 0
    %3565 = vmatprep.subr.bf16.mxu0 0
    %3566 = vmatpush1.bf16.msra.mxu0 0
    %3567 = vmatprep.subr.bf16.mxu0 0
    %3568 = vmatpush1.bf16.msra.mxu0 0
    %3569 = vmatprep.subr.bf16.mxu0 0
    %3570 = vmatpush1.bf16.msra.mxu0 0
    %3571 = vmatprep.subr.bf16.mxu0 0
    %3572 = vmatpush1.bf16.msra.mxu0 0
    %3573 = vmatprep.subr.bf16.mxu0 0
    %3574 = vmatpush1.bf16.msra.mxu0 0
    %3575 = vmatprep.subr.bf16.mxu0 0
    %3576 = vmatpush1.bf16.msra.mxu0 0
    %3577 = vmatprep.subr.bf16.mxu0 0
    %3578 = vmatpush1.bf16.msra.mxu0 0
    %3579 = vmatprep.mubr.bf16.mxu0 0
    %3580 = vmatmul.mubr.bf16.gmra.mrb[0].mxu0 %v3502
    %v3581 = vpop.f32.mrb[0].mxu0
    %v3582 = vadd.f32 %v3539, %v3581
    %v3583 = vpop.f32.mrb[0].mxu0
    %v3584 = vadd.f32 %v3541, %v3583
    %v3585 = vpop.f32.mrb[0].mxu0
    %v3586 = vadd.f32 %v3543, %v3585
    %v3587 = vpop.f32.mrb[0].mxu0
    %v3588 = vadd.f32 %v3545, %v3587
    %3589 = vdwg.mxu0
    %v3590 = vadd.f32 %v3267, %v3582
    %v3591 = vadd.f32 %v3268, %v3584
    %v3592 = vadd.f32 %v3269, %v3586
    %v3593 = vadd.f32 %v3270, %v3588
    %s3594 = smul.u32 %s3271, 6
    %s3595 = smul.addr %s3594, 8
    %s3596 = scalar_lea.vmem %s1, %s3595
    %v3597 = vld [vmem:[%s3596] sm:$0xff]
    %v3598 = vld [vmem:[%s3596 + $0x8] sm:$0xff]
    %v3599 = vld [vmem:[%s3596 + $0x10] sm:$0xff]
    %v3600 = vld [vmem:[%s3596 + $0x18] sm:$0xff]
    %v3601 = vpack.c.bf16 %v3599, %v3597
    %v3602 = vpack.c.bf16 %v3600, %v3598
    %s3603 = scalar_lea.vmem %s3, 864
    %v3604 = vld [vmem:[%s3603] sm:$0xff]
    %v3605 = vld [vmem:[%s3603 + $0x8] sm:$0xff]
    %v3606 = vld [vmem:[%s3603 + $0x10] sm:$0xff]
    %v3607 = vld [vmem:[%s3603 + $0x18] sm:$0xff]
    %v3608 = vld [vmem:[%s3603 + $0x20] sm:$0xff]
    %v3609 = vld [vmem:[%s3603 + $0x28] sm:$0xff]
    %v3610 = vld [vmem:[%s3603 + $0x30] sm:$0xff]
    %v3611 = vld [vmem:[%s3603 + $0x38] sm:$0xff]
    %v3612 = vld [vmem:[%s3603 + $0x40] sm:$0xff]
    %v3613 = vld [vmem:[%s3603 + $0x48] sm:$0xff]
    %v3614 = vld [vmem:[%s3603 + $0x50] sm:$0xff]
    %v3615 = vld [vmem:[%s3603 + $0x58] sm:$0xff]
    %v3616 = vld [vmem:[%s3603 + $0x60] sm:$0xff]
    %v3617 = vld [vmem:[%s3603 + $0x68] sm:$0xff]
    %v3618 = vld [vmem:[%s3603 + $0x70] sm:$0xff]
    %v3619 = vld [vmem:[%s3603 + $0x78] sm:$0xff]
    %v3620 = vld [vmem:[%s3603 + $0x80] sm:$0xff]
    %v3621 = vld [vmem:[%s3603 + $0x88] sm:$0xff]
    %v3640 = vunpack.c.l.b16 %v3604
    %v3641 = vunpack.c.h.b16 %v3604
    %v3642 = vunpack.c.l.b16 %v3605
    %v3643 = vunpack.c.h.b16 %v3605
    %v3644 = vunpack.c.l.b16 %v3606
    %v3645 = vunpack.c.h.b16 %v3606
    %v3646 = vunpack.c.l.b16 %v3607
    %v3647 = vunpack.c.h.b16 %v3607
    %v3648 = vunpack.c.l.b16 %v3608
    %v3649 = vunpack.c.h.b16 %v3608
    %v3650 = vunpack.c.l.b16 %v3609
    %v3651 = vunpack.c.h.b16 %v3609
    %v3652 = vunpack.c.l.b16 %v3610
    %v3653 = vunpack.c.h.b16 %v3610
    %v3654 = vunpack.c.l.b16 %v3611
    %v3655 = vunpack.c.h.b16 %v3611
    %v3656 = vunpack.c.l.b16 %v3612
    %v3657 = vunpack.c.h.b16 %v3612
    %v3658 = vunpack.c.l.b16 %v3613
    %v3659 = vunpack.c.h.b16 %v3613
    %v3660 = vunpack.c.l.b16 %v3614
    %v3661 = vunpack.c.h.b16 %v3614
    %v3662 = vunpack.c.l.b16 %v3615
    %v3663 = vunpack.c.h.b16 %v3615
    %v3664 = vunpack.c.l.b16 %v3616
    %v3665 = vunpack.c.h.b16 %v3616
    %v3666 = vunpack.c.l.b16 %v3617
    %v3667 = vunpack.c.h.b16 %v3617
    %v3668 = vunpack.c.l.b16 %v3618
    %v3669 = vunpack.c.h.b16 %v3618
    %v3670 = vunpack.c.l.b16 %v3619
    %v3671 = vunpack.c.h.b16 %v3619
    %v3672 = vunpack.c.l.b16 %v3620
    %v3673 = vunpack.c.h.b16 %v3620
    %v3674 = vunpack.c.l.b16 %v3621
    %v3675 = vunpack.c.h.b16 %v3621
    %v3676 = vpack.c.b16 %v3642, %v3640
    %v3677 = vpack.c.b16 %v3643, %v3641
    %v3678 = vpack.c.b16 %v3646, %v3644
    %v3679 = vpack.c.b16 %v3647, %v3645
    %v3680 = vpack.c.b16 %v3650, %v3648
    %v3681 = vpack.c.b16 %v3651, %v3649
    %v3682 = vpack.c.b16 %v3654, %v3652
    %v3683 = vpack.c.b16 %v3655, %v3653
    %v3684 = vpack.c.b16 %v3658, %v3656
    %v3685 = vpack.c.b16 %v3659, %v3657
    %v3686 = vpack.c.b16 %v3662, %v3660
    %v3687 = vpack.c.b16 %v3663, %v3661
    %v3688 = vpack.c.b16 %v3666, %v3664
    %v3689 = vpack.c.b16 %v3667, %v3665
    %v3690 = vpack.c.b16 %v3670, %v3668
    %v3691 = vpack.c.b16 %v3671, %v3669
    %v3692 = vpack.c.b16 %v3674, %v3672
    %v3693 = vpack.c.b16 %v3675, %v3673
    %v3713 = vsel %vm34, %v3602, 0
    %3715 = vmatprep.subr.bf16.mxu0 %v3677
    %3716 = vmatpush1.bf16.msra.mxu0 %v3676
    %3717 = vmatprep.subr.bf16.mxu0 %v3679
    %3718 = vmatpush1.bf16.msra.mxu0 %v3678
    %3719 = vmatprep.subr.bf16.mxu0 %v3681
    %3720 = vmatpush1.bf16.msra.mxu0 %v3680
    %3721 = vmatprep.subr.bf16.mxu0 %v3683
    %3722 = vmatpush1.bf16.msra.mxu0 %v3682
    %3723 = vmatprep.subr.bf16.mxu0 %v3685
    %3724 = vmatpush1.bf16.msra.mxu0 %v3684
    %3725 = vmatprep.subr.bf16.mxu0 %v3687
    %3726 = vmatpush1.bf16.msra.mxu0 %v3686
    %3727 = vmatprep.subr.bf16.mxu0 %v3689
    %3728 = vmatpush1.bf16.msra.mxu0 %v3688
    %3729 = vmatprep.subr.bf16.mxu0 %v3691
    %3730 = vmatpush1.bf16.msra.mxu0 %v3690
    %3731 = vmatprep.subr.bf16.mxu0 %v3693
    %3732 = vmatpush1.bf16.msra.mxu0 %v3692
    %3733 = vmatprep.subr.bf16.mxu0 0
    %3734 = vmatpush1.bf16.msra.mxu0 0
    %3735 = vmatprep.subr.bf16.mxu0 0
    %3736 = vmatpush1.bf16.msra.mxu0 0
    %3737 = vmatprep.subr.bf16.mxu0 0
    %3738 = vmatpush1.bf16.msra.mxu0 0
    %3739 = vmatprep.subr.bf16.mxu0 0
    %3740 = vmatpush1.bf16.msra.mxu0 0
    %3741 = vmatprep.subr.bf16.mxu0 0
    %3742 = vmatpush1.bf16.msra.mxu0 0
    %3743 = vmatprep.subr.bf16.mxu0 0
    %3744 = vmatpush1.bf16.msra.mxu0 0
    %3745 = vmatprep.subr.bf16.mxu0 0
    %3746 = vmatpush1.bf16.msra.mxu0 0
    %3747 = vmatprep.mubr.bf16.mxu0 %v3713
    %3748 = vmatmul.mubr.bf16.gmra.mrb[0].mxu0 %v3601
    %v3749 = vpop.f32.mrb[0].mxu0
    %v3750 = vadd.f32 0.0, %v3749
    %v3751 = vpop.f32.mrb[0].mxu0
    %v3752 = vadd.f32 0.0, %v3751
    %v3753 = vpop.f32.mrb[0].mxu0
    %v3754 = vadd.f32 0.0, %v3753
    %v3755 = vpop.f32.mrb[0].mxu0
    %v3756 = vadd.f32 0.0, %v3755
    %3757 = vdwg.mxu0
    %v3758 = vadd.f32 %v3590, %v3750
    %v3759 = vadd.f32 %v3591, %v3752
    %v3760 = vadd.f32 %v3592, %v3754
    %v3761 = vadd.f32 %v3593, %v3756
    %v3762 = vld [vmem:[%s3274] sm:$0xfe]
    %v3763 = vld [vmem:[%s3274 + $0x8] sm:$0xfe]
    %v3764 = vld [vmem:[%s3274 + $0x10] sm:$0xfe]
    %v3765 = vld [vmem:[%s3274 + $0x18] sm:$0xff]
    %v3766 = vld [vmem:[%s3274 + $0x20] sm:$0xff]
    %v3767 = vld [vmem:[%s3274 + $0x28] sm:$0xff]
    %v3768 = vld [vmem:[%s3274 + $0x30] sm:$0x1]
    %v3769 = vld [vmem:[%s3274 + $0x38] sm:$0x1]
    %v3770 = vld [vmem:[%s3274 + $0x40] sm:$0x1]
    %v3771 = vpack.c.bf16 %v3765, %v3762
    %v3772 = vpack.c.bf16 %v3766, %v3763
    %v3773 = vpack.c.bf16 %v3767, %v3764
    %v3774 = vpack.c.bf16 %v3768, %v3768
    %v3775 = vpack.c.bf16 %v3769, %v3769
    %v3776 = vpack.c.bf16 %v3770, %v3770
    %s3777 = scalar_lea.vmem %s2, 2016
    %v3778 = vld [vmem:[%s3777] sm:$0xff]
    %v3779 = vld [vmem:[%s3777 + $0x8] sm:$0xff]
    %v3780 = vld [vmem:[%s3777 + $0x10] sm:$0xff]
    %v3781 = vld [vmem:[%s3777 + $0x18] sm:$0xff]
    %v3782 = vld [vmem:[%s3777 + $0x20] sm:$0xff]
    %v3783 = vld [vmem:[%s3777 + $0x28] sm:$0xff]
    %v3784 = vld [vmem:[%s3777 + $0x30] sm:$0xff]
    %v3785 = vld [vmem:[%s3777 + $0x38] sm:$0xff]
    %v3786 = vld [vmem:[%s3777 + $0x40] sm:$0xff]
    %v3787 = vld [vmem:[%s3777 + $0x48] sm:$0xff]
    %v3788 = vld [vmem:[%s3777 + $0x50] sm:$0xff]
    %v3789 = vld [vmem:[%s3777 + $0x58] sm:$0xff]
    %v3790 = vld [vmem:[%s3777 + $0x60] sm:$0xff]
    %v3791 = vld [vmem:[%s3777 + $0x68] sm:$0xff]
    %v3792 = vld [vmem:[%s3777 + $0x70] sm:$0xff]
    %v3793 = vld [vmem:[%s3777 + $0x78] sm:$0xff]
    %v3794 = vld [vmem:[%s3777 + $0x80] sm:$0xff]
    %v3795 = vld [vmem:[%s3777 + $0x88] sm:$0xff]
    %v3796 = vld [vmem:[%s3777 + $0x90] sm:$0xff]
    %v3797 = vld [vmem:[%s3777 + $0x98] sm:$0xff]
    %v3798 = vld [vmem:[%s3777 + $0xa0] sm:$0xff]
    %v3799 = vld [vmem:[%s3777 + $0xa8] sm:$0xff]
    %v3800 = vld [vmem:[%s3777 + $0xb0] sm:$0xff]
    %v3801 = vld [vmem:[%s3777 + $0xb8] sm:$0xff]
    %v3802 = vld [vmem:[%s3777 + $0xc0] sm:$0xff]
    %v3803 = vld [vmem:[%s3777 + $0xc8] sm:$0xff]
    %v3804 = vld [vmem:[%s3777 + $0xd0] sm:$0xff]
    %v3805 = vld [vmem:[%s3777 + $0xd8] sm:$0xff]
    %v3806 = vld [vmem:[%s3777 + $0xe0] sm:$0xff]
    %v3807 = vld [vmem:[%s3777 + $0xe8] sm:$0xff]
    %v3808 = vld [vmem:[%s3777 + $0xf0] sm:$0xff]
    %v3809 = vld [vmem:[%s3777 + $0xf8] sm:$0xff]
    %v3810 = vld [vmem:[%s3777 + $0x100] sm:$0xff]
    %v3811 = vld [vmem:[%s3777 + $0x108] sm:$0xff]
    %v3812 = vld [vmem:[%s3777 + $0x110] sm:$0xff]
    %v3813 = vld [vmem:[%s3777 + $0x118] sm:$0xff]
    %v3815 = vshrl.u32 %v3771, 16
    %v3817 = vshll.u32 %v3771, 16
    %v3819 = vrot.slane %v3817, 1
    %v3820 = vor.u32 %v3815, %v3819
    %v3822 = vshll.u32 %v3774, 16
    %v3824 = vrot.slane %v3822, 1
    %v3825 = vsel %vm682, %v3820, %v3824
    %v3827 = vshrl.u32 %v3772, 16
    %v3829 = vshll.u32 %v3772, 16
    %v3831 = vrot.slane %v3829, 1
    %v3832 = vor.u32 %v3827, %v3831
    %v3834 = vshll.u32 %v3775, 16
    %v3836 = vrot.slane %v3834, 1
    %v3837 = vsel %vm682, %v3832, %v3836
    %v3839 = vshrl.u32 %v3773, 16
    %v3841 = vshll.u32 %v3773, 16
    %v3843 = vrot.slane %v3841, 1
    %v3844 = vor.u32 %v3839, %v3843
    %v3846 = vshll.u32 %v3776, 16
    %v3848 = vrot.slane %v3846, 1
    %v3849 = vsel %vm682, %v3844, %v3848
    %v3888 = vunpack.c.l.b16 %v3778
    %v3889 = vunpack.c.h.b16 %v3778
    %v3890 = vunpack.c.l.b16 %v3779
    %v3891 = vunpack.c.h.b16 %v3779
    %v3892 = vunpack.c.l.b16 %v3780
    %v3893 = vunpack.c.h.b16 %v3780
    %v3894 = vunpack.c.l.b16 %v3781
    %v3895 = vunpack.c.h.b16 %v3781
    %v3896 = vunpack.c.l.b16 %v3782
    %v3897 = vunpack.c.h.b16 %v3782
    %v3898 = vunpack.c.l.b16 %v3783
    %v3899 = vunpack.c.h.b16 %v3783
    %v3900 = vunpack.c.l.b16 %v3784
    %v3901 = vunpack.c.h.b16 %v3784
    %v3902 = vunpack.c.l.b16 %v3785
    %v3903 = vunpack.c.h.b16 %v3785
    %v3904 = vunpack.c.l.b16 %v3786
    %v3905 = vunpack.c.h.b16 %v3786
    %v3906 = vunpack.c.l.b16 %v3787
    %v3907 = vunpack.c.h.b16 %v3787
    %v3908 = vunpack.c.l.b16 %v3788
    %v3909 = vunpack.c.h.b16 %v3788
    %v3910 = vunpack.c.l.b16 %v3789
    %v3911 = vunpack.c.h.b16 %v3789
    %v3912 = vunpack.c.l.b16 %v3790
    %v3913 = vunpack.c.h.b16 %v3790
    %v3914 = vunpack.c.l.b16 %v3791
    %v3915 = vunpack.c.h.b16 %v3791
    %v3916 = vunpack.c.l.b16 %v3792
    %v3917 = vunpack.c.h.b16 %v3792
    %v3918 = vunpack.c.l.b16 %v3793
    %v3919 = vunpack.c.h.b16 %v3793
    %v3920 = vunpack.c.l.b16 %v3794
    %v3921 = vunpack.c.h.b16 %v3794
    %v3922 = vunpack.c.l.b16 %v3795
    %v3923 = vunpack.c.h.b16 %v3795
    %v3924 = vunpack.c.l.b16 %v3796
    %v3925 = vunpack.c.h.b16 %v3796
    %v3926 = vunpack.c.l.b16 %v3797
    %v3927 = vunpack.c.h.b16 %v3797
    %v3928 = vunpack.c.l.b16 %v3798
    %v3929 = vunpack.c.h.b16 %v3798
    %v3930 = vunpack.c.l.b16 %v3799
    %v3931 = vunpack.c.h.b16 %v3799
    %v3932 = vunpack.c.l.b16 %v3800
    %v3933 = vunpack.c.h.b16 %v3800
    %v3934 = vunpack.c.l.b16 %v3801
    %v3935 = vunpack.c.h.b16 %v3801
    %v3936 = vunpack.c.l.b16 %v3802
    %v3937 = vunpack.c.h.b16 %v3802
    %v3938 = vunpack.c.l.b16 %v3803
    %v3939 = vunpack.c.h.b16 %v3803
    %v3940 = vunpack.c.l.b16 %v3804
    %v3941 = vunpack.c.h.b16 %v3804
    %v3942 = vunpack.c.l.b16 %v3805
    %v3943 = vunpack.c.h.b16 %v3805
    %v3944 = vunpack.c.l.b16 %v3806
    %v3945 = vunpack.c.h.b16 %v3806
    %v3946 = vunpack.c.l.b16 %v3807
    %v3947 = vunpack.c.h.b16 %v3807
    %v3948 = vunpack.c.l.b16 %v3808
    %v3949 = vunpack.c.h.b16 %v3808
    %v3950 = vunpack.c.l.b16 %v3809
    %v3951 = vunpack.c.h.b16 %v3809
    %v3952 = vunpack.c.l.b16 %v3810
    %v3953 = vunpack.c.h.b16 %v3810
    %v3954 = vunpack.c.l.b16 %v3811
    %v3955 = vunpack.c.h.b16 %v3811
    %v3956 = vunpack.c.l.b16 %v3812
    %v3957 = vunpack.c.h.b16 %v3812
    %v3958 = vunpack.c.l.b16 %v3813
    %v3959 = vunpack.c.h.b16 %v3813
    %v3960 = vpack.c.b16 %v3890, %v3888
    %v3961 = vpack.c.b16 %v3891, %v3889
    %v3962 = vpack.c.b16 %v3894, %v3892
    %v3963 = vpack.c.b16 %v3895, %v3893
    %v3964 = vpack.c.b16 %v3898, %v3896
    %v3965 = vpack.c.b16 %v3899, %v3897
    %v3966 = vpack.c.b16 %v3902, %v3900
    %v3967 = vpack.c.b16 %v3903, %v3901
    %v3968 = vpack.c.b16 %v3906, %v3904
    %v3969 = vpack.c.b16 %v3907, %v3905
    %v3970 = vpack.c.b16 %v3910, %v3908
    %v3971 = vpack.c.b16 %v3911, %v3909
    %v3972 = vpack.c.b16 %v3914, %v3912
    %v3973 = vpack.c.b16 %v3915, %v3913
    %v3974 = vpack.c.b16 %v3918, %v3916
    %v3975 = vpack.c.b16 %v3919, %v3917
    %v3976 = vpack.c.b16 %v3922, %v3920
    %v3977 = vpack.c.b16 %v3923, %v3921
    %v3978 = vpack.c.b16 %v3926, %v3924
    %v3979 = vpack.c.b16 %v3927, %v3925
    %v3980 = vpack.c.b16 %v3930, %v3928
    %v3981 = vpack.c.b16 %v3931, %v3929
    %v3982 = vpack.c.b16 %v3934, %v3932
    %v3983 = vpack.c.b16 %v3935, %v3933
    %v3984 = vpack.c.b16 %v3938, %v3936
    %v3985 = vpack.c.b16 %v3939, %v3937
    %v3986 = vpack.c.b16 %v3942, %v3940
    %v3987 = vpack.c.b16 %v3943, %v3941
    %v3988 = vpack.c.b16 %v3946, %v3944
    %v3989 = vpack.c.b16 %v3947, %v3945
    %v3990 = vpack.c.b16 %v3950, %v3948
    %v3991 = vpack.c.b16 %v3951, %v3949
    %v3992 = vpack.c.b16 %v3954, %v3952
    %v3993 = vpack.c.b16 %v3955, %v3953
    %v3994 = vpack.c.b16 %v3958, %v3956
    %v3995 = vpack.c.b16 %v3959, %v3957
    %v4033 = vsel %vm540, %v3849, 0
    %4035 = vmatprep.subr.bf16.mxu0 %v3961
    %4036 = vmatpush1.bf16.msra.mxu0 %v3960
    %4037 = vmatprep.subr.bf16.mxu0 %v3963
    %4038 = vmatpush1.bf16.msra.mxu0 %v3962
    %4039 = vmatprep.subr.bf16.mxu0 %v3965
    %4040 = vmatpush1.bf16.msra.mxu0 %v3964
    %4041 = vmatprep.subr.bf16.mxu0 %v3967
    %4042 = vmatpush1.bf16.msra.mxu0 %v3966
    %4043 = vmatprep.subr.bf16.mxu0 %v3969
    %4044 = vmatpush1.bf16.msra.mxu0 %v3968
    %4045 = vmatprep.subr.bf16.mxu0 %v3971
    %4046 = vmatpush1.bf16.msra.mxu0 %v3970
    %4047 = vmatprep.subr.bf16.mxu0 %v3973
    %4048 = vmatpush1.bf16.msra.mxu0 %v3972
    %4049 = vmatprep.subr.bf16.mxu0 %v3975
    %4050 = vmatpush1.bf16.msra.mxu0 %v3974
    %4051 = vmatprep.subr.bf16.mxu0 %v3977
    %4052 = vmatpush1.bf16.msra.mxu0 %v3976
    %4053 = vmatprep.subr.bf16.mxu0 %v3979
    %4054 = vmatpush1.bf16.msra.mxu0 %v3978
    %4055 = vmatprep.subr.bf16.mxu0 %v3981
    %4056 = vmatpush1.bf16.msra.mxu0 %v3980
    %4057 = vmatprep.subr.bf16.mxu0 %v3983
    %4058 = vmatpush1.bf16.msra.mxu0 %v3982
    %4059 = vmatprep.subr.bf16.mxu0 %v3985
    %4060 = vmatpush1.bf16.msra.mxu0 %v3984
    %4061 = vmatprep.subr.bf16.mxu0 %v3987
    %4062 = vmatpush1.bf16.msra.mxu0 %v3986
    %4063 = vmatprep.subr.bf16.mxu0 %v3989
    %4064 = vmatpush1.bf16.msra.mxu0 %v3988
    %4065 = vmatprep.subr.bf16.mxu0 %v3991
    %4066 = vmatpush1.bf16.msra.mxu0 %v3990
    %4067 = vmatprep.mubr.bf16.mxu0 %v3837
    %4068 = vmatmul.mubr.bf16.gmra.mrb[0].mxu0 %v3825
    %v4069 = vpop.f32.mrb[0].mxu0
    %v4070 = vadd.f32 0.0, %v4069
    %v4071 = vpop.f32.mrb[0].mxu0
    %v4072 = vadd.f32 0.0, %v4071
    %v4073 = vpop.f32.mrb[0].mxu0
    %v4074 = vadd.f32 0.0, %v4073
    %v4075 = vpop.f32.mrb[0].mxu0
    %v4076 = vadd.f32 0.0, %v4075
    %4077 = vdwg.mxu0
    %4078 = vmatprep.subr.bf16.mxu0 %v3993
    %4079 = vmatpush1.bf16.msra.mxu0 %v3992
    %4080 = vmatprep.subr.bf16.mxu0 %v3995
    %4081 = vmatpush1.bf16.msra.mxu0 %v3994
    %4082 = vmatprep.subr.bf16.mxu0 0
    %4083 = vmatpush1.bf16.msra.mxu0 0
    %4084 = vmatprep.subr.bf16.mxu0 0
    %4085 = vmatpush1.bf16.msra.mxu0 0
    %4086 = vmatprep.subr.bf16.mxu0 0
    %4087 = vmatpush1.bf16.msra.mxu0 0
    %4088 = vmatprep.subr.bf16.mxu0 0
    %4089 = vmatpush1.bf16.msra.mxu0 0
    %4090 = vmatprep.subr.bf16.mxu0 0
    %4091 = vmatpush1.bf16.msra.mxu0 0
    %4092 = vmatprep.subr.bf16.mxu0 0
    %4093 = vmatpush1.bf16.msra.mxu0 0
    %4094 = vmatprep.subr.bf16.mxu0 0
    %4095 = vmatpush1.bf16.msra.mxu0 0
    %4096 = vmatprep.subr.bf16.mxu0 0
    %4097 = vmatpush1.bf16.msra.mxu0 0
    %4098 = vmatprep.subr.bf16.mxu0 0
    %4099 = vmatpush1.bf16.msra.mxu0 0
    %4100 = vmatprep.subr.bf16.mxu0 0
    %4101 = vmatpush1.bf16.msra.mxu0 0
    %4102 = vmatprep.subr.bf16.mxu0 0
    %4103 = vmatpush1.bf16.msra.mxu0 0
    %4104 = vmatprep.subr.bf16.mxu0 0
    %4105 = vmatpush1.bf16.msra.mxu0 0
    %4106 = vmatprep.subr.bf16.mxu0 0
    %4107 = vmatpush1.bf16.msra.mxu0 0
    %4108 = vmatprep.subr.bf16.mxu0 0
    %4109 = vmatpush1.bf16.msra.mxu0 0
    %4110 = vmatprep.mubr.bf16.mxu0 0
    %4111 = vmatmul.mubr.bf16.gmra.mrb[0].mxu0 %v4033
    %v4112 = vpop.f32.mrb[0].mxu0
    %v4113 = vadd.f32 %v4070, %v4112
    %v4114 = vpop.f32.mrb[0].mxu0
    %v4115 = vadd.f32 %v4072, %v4114
    %v4116 = vpop.f32.mrb[0].mxu0
    %v4117 = vadd.f32 %v4074, %v4116
    %v4118 = vpop.f32.mrb[0].mxu0
    %v4119 = vadd.f32 %v4076, %v4118
    %4120 = vdwg.mxu0
    %v4121 = vadd.f32 %v3758, %v4113
    %v4122 = vadd.f32 %v3759, %v4115
    %v4123 = vadd.f32 %v3760, %v4117
    %v4124 = vadd.f32 %v3761, %v4119
    %v4125 = vld [vmem:[%s3596] sm:$0xfe]
    %v4126 = vld [vmem:[%s3596 + $0x8] sm:$0xfe]
    %v4127 = vld [vmem:[%s3596 + $0x10] sm:$0xff]
    %v4128 = vld [vmem:[%s3596 + $0x18] sm:$0xff]
    %v4129 = vld [vmem:[%s3596 + $0x20] sm:$0x1]
    %v4130 = vld [vmem:[%s3596 + $0x28] sm:$0x1]
    %v4131 = vpack.c.bf16 %v4127, %v4125
    %v4132 = vpack.c.bf16 %v4128, %v4126
    %v4133 = vpack.c.bf16 %v4129, %v4129
    %v4134 = vpack.c.bf16 %v4130, %v4130
    %s4135 = scalar_lea.vmem %s3, 1008
    %v4136 = vld [vmem:[%s4135] sm:$0xff]
    %v4137 = vld [vmem:[%s4135 + $0x8] sm:$0xff]
    %v4138 = vld [vmem:[%s4135 + $0x10] sm:$0xff]
    %v4139 = vld [vmem:[%s4135 + $0x18] sm:$0xff]
    %v4140 = vld [vmem:[%s4135 + $0x20] sm:$0xff]
    %v4141 = vld [vmem:[%s4135 + $0x28] sm:$0xff]
    %v4142 = vld [vmem:[%s4135 + $0x30] sm:$0xff]
    %v4143 = vld [vmem:[%s4135 + $0x38] sm:$0xff]
    %v4144 = vld [vmem:[%s4135 + $0x40] sm:$0xff]
    %v4145 = vld [vmem:[%s4135 + $0x48] sm:$0xff]
    %v4146 = vld [vmem:[%s4135 + $0x50] sm:$0xff]
    %v4147 = vld [vmem:[%s4135 + $0x58] sm:$0xff]
    %v4148 = vld [vmem:[%s4135 + $0x60] sm:$0xff]
    %v4149 = vld [vmem:[%s4135 + $0x68] sm:$0xff]
    %v4150 = vld [vmem:[%s4135 + $0x70] sm:$0xff]
    %v4151 = vld [vmem:[%s4135 + $0x78] sm:$0xff]
    %v4152 = vld [vmem:[%s4135 + $0x80] sm:$0xff]
    %v4153 = vld [vmem:[%s4135 + $0x88] sm:$0xff]
    %v4155 = vshrl.u32 %v4131, 16
    %v4157 = vshll.u32 %v4131, 16
    %v4159 = vrot.slane %v4157, 1
    %v4160 = vor.u32 %v4155, %v4159
    %v4162 = vshll.u32 %v4133, 16
    %v4164 = vrot.slane %v4162, 1
    %v4165 = vsel %vm682, %v4160, %v4164
    %v4167 = vshrl.u32 %v4132, 16
    %v4169 = vshll.u32 %v4132, 16
    %v4171 = vrot.slane %v4169, 1
    %v4172 = vor.u32 %v4167, %v4171
    %v4174 = vshll.u32 %v4134, 16
    %v4176 = vrot.slane %v4174, 1
    %v4177 = vsel %vm682, %v4172, %v4176
    %v4197 = vunpack.c.l.b16 %v4136
    %v4198 = vunpack.c.h.b16 %v4136
    %v4199 = vunpack.c.l.b16 %v4137
    %v4200 = vunpack.c.h.b16 %v4137
    %v4201 = vunpack.c.l.b16 %v4138
    %v4202 = vunpack.c.h.b16 %v4138
    %v4203 = vunpack.c.l.b16 %v4139
    %v4204 = vunpack.c.h.b16 %v4139
    %v4205 = vunpack.c.l.b16 %v4140
    %v4206 = vunpack.c.h.b16 %v4140
    %v4207 = vunpack.c.l.b16 %v4141
    %v4208 = vunpack.c.h.b16 %v4141
    %v4209 = vunpack.c.l.b16 %v4142
    %v4210 = vunpack.c.h.b16 %v4142
    %v4211 = vunpack.c.l.b16 %v4143
    %v4212 = vunpack.c.h.b16 %v4143
    %v4213 = vunpack.c.l.b16 %v4144
    %v4214 = vunpack.c.h.b16 %v4144
    %v4215 = vunpack.c.l.b16 %v4145
    %v4216 = vunpack.c.h.b16 %v4145
    %v4217 = vunpack.c.l.b16 %v4146
    %v4218 = vunpack.c.h.b16 %v4146
    %v4219 = vunpack.c.l.b16 %v4147
    %v4220 = vunpack.c.h.b16 %v4147
    %v4221 = vunpack.c.l.b16 %v4148
    %v4222 = vunpack.c.h.b16 %v4148
    %v4223 = vunpack.c.l.b16 %v4149
    %v4224 = vunpack.c.h.b16 %v4149
    %v4225 = vunpack.c.l.b16 %v4150
    %v4226 = vunpack.c.h.b16 %v4150
    %v4227 = vunpack.c.l.b16 %v4151
    %v4228 = vunpack.c.h.b16 %v4151
    %v4229 = vunpack.c.l.b16 %v4152
    %v4230 = vunpack.c.h.b16 %v4152
    %v4231 = vunpack.c.l.b16 %v4153
    %v4232 = vunpack.c.h.b16 %v4153
    %v4233 = vpack.c.b16 %v4199, %v4197
    %v4234 = vpack.c.b16 %v4200, %v4198
    %v4235 = vpack.c.b16 %v4203, %v4201
    %v4236 = vpack.c.b16 %v4204, %v4202
    %v4237 = vpack.c.b16 %v4207, %v4205
    %v4238 = vpack.c.b16 %v4208, %v4206
    %v4239 = vpack.c.b16 %v4211, %v4209
    %v4240 = vpack.c.b16 %v4212, %v4210
    %v4241 = vpack.c.b16 %v4215, %v4213
    %v4242 = vpack.c.b16 %v4216, %v4214
    %v4243 = vpack.c.b16 %v4219, %v4217
    %v4244 = vpack.c.b16 %v4220, %v4218
    %v4245 = vpack.c.b16 %v4223, %v4221
    %v4246 = vpack.c.b16 %v4224, %v4222
    %v4247 = vpack.c.b16 %v4227, %v4225
    %v4248 = vpack.c.b16 %v4228, %v4226
    %v4249 = vpack.c.b16 %v4231, %v4229
    %v4250 = vpack.c.b16 %v4232, %v4230
    %v4270 = vsel %vm34, %v4177, 0
    %4272 = vmatprep.subr.bf16.mxu0 %v4234
    %4273 = vmatpush1.bf16.msra.mxu0 %v4233
    %4274 = vmatprep.subr.bf16.mxu0 %v4236
    %4275 = vmatpush1.bf16.msra.mxu0 %v4235
    %4276 = vmatprep.subr.bf16.mxu0 %v4238
    %4277 = vmatpush1.bf16.msra.mxu0 %v4237
    %4278 = vmatprep.subr.bf16.mxu0 %v4240
    %4279 = vmatpush1.bf16.msra.mxu0 %v4239
    %4280 = vmatprep.subr.bf16.mxu0 %v4242
    %4281 = vmatpush1.bf16.msra.mxu0 %v4241
    %4282 = vmatprep.subr.bf16.mxu0 %v4244
    %4283 = vmatpush1.bf16.msra.mxu0 %v4243
    %4284 = vmatprep.subr.bf16.mxu0 %v4246
    %4285 = vmatpush1.bf16.msra.mxu0 %v4245
    %4286 = vmatprep.subr.bf16.mxu0 %v4248
    %4287 = vmatpush1.bf16.msra.mxu0 %v4247
    %4288 = vmatprep.subr.bf16.mxu0 %v4250
    %4289 = vmatpush1.bf16.msra.mxu0 %v4249
    %4290 = vmatprep.subr.bf16.mxu0 0
    %4291 = vmatpush1.bf16.msra.mxu0 0
    %4292 = vmatprep.subr.bf16.mxu0 0
    %4293 = vmatpush1.bf16.msra.mxu0 0
    %4294 = vmatprep.subr.bf16.mxu0 0
    %4295 = vmatpush1.bf16.msra.mxu0 0
    %4296 = vmatprep.subr.bf16.mxu0 0
    %4297 = vmatpush1.bf16.msra.mxu0 0
    %4298 = vmatprep.subr.bf16.mxu0 0
    %4299 = vmatpush1.bf16.msra.mxu0 0
    %4300 = vmatprep.subr.bf16.mxu0 0
    %4301 = vmatpush1.bf16.msra.mxu0 0
    %4302 = vmatprep.subr.bf16.mxu0 0
    %4303 = vmatpush1.bf16.msra.mxu0 0
    %4304 = vmatprep.mubr.bf16.mxu0 %v4270
    %4305 = vmatmul.mubr.bf16.gmra.mrb[0].mxu0 %v4165
    %v4306 = vpop.f32.mrb[0].mxu0
    %v4307 = vadd.f32 0.0, %v4306
    %v4308 = vpop.f32.mrb[0].mxu0
    %v4309 = vadd.f32 0.0, %v4308
    %v4310 = vpop.f32.mrb[0].mxu0
    %v4311 = vadd.f32 0.0, %v4310
    %v4312 = vpop.f32.mrb[0].mxu0
    %v4313 = vadd.f32 0.0, %v4312
    %4314 = vdwg.mxu0
    %v4315 = vadd.f32 %v4121, %v4307
    %v4316 = vadd.f32 %v4122, %v4309
    %v4317 = vadd.f32 %v4123, %v4311
    %v4318 = vadd.f32 %v4124, %v4313
    %v4319 = vld [vmem:[%s3274] sm:$0xfc]
    %v4320 = vld [vmem:[%s3274 + $0x8] sm:$0xfc]
    %v4321 = vld [vmem:[%s3274 + $0x10] sm:$0xfc]
    %v4322 = vld [vmem:[%s3274 + $0x30] sm:$0x3]
    %v4323 = vld [vmem:[%s3274 + $0x38] sm:$0x3]
    %v4324 = vld [vmem:[%s3274 + $0x40] sm:$0x3]
    %v4325 = vpack.c.bf16 %v3765, %v4319
    %v4326 = vpack.c.bf16 %v3766, %v4320
    %v4327 = vpack.c.bf16 %v3767, %v4321
    %v4328 = vpack.c.bf16 %v4322, %v4322
    %v4329 = vpack.c.bf16 %v4323, %v4323
    %v4330 = vpack.c.bf16 %v4324, %v4324
    %s4331 = scalar_lea.vmem %s2, 2304
    %v4332 = vld [vmem:[%s4331] sm:$0xff]
    %v4333 = vld [vmem:[%s4331 + $0x8] sm:$0xff]
    %v4334 = vld [vmem:[%s4331 + $0x10] sm:$0xff]
    %v4335 = vld [vmem:[%s4331 + $0x18] sm:$0xff]
    %v4336 = vld [vmem:[%s4331 + $0x20] sm:$0xff]
    %v4337 = vld [vmem:[%s4331 + $0x28] sm:$0xff]
    %v4338 = vld [vmem:[%s4331 + $0x30] sm:$0xff]
    %v4339 = vld [vmem:[%s4331 + $0x38] sm:$0xff]
    %v4340 = vld [vmem:[%s4331 + $0x40] sm:$0xff]
    %v4341 = vld [vmem:[%s4331 + $0x48] sm:$0xff]
    %v4342 = vld [vmem:[%s4331 + $0x50] sm:$0xff]
    %v4343 = vld [vmem:[%s4331 + $0x58] sm:$0xff]
    %v4344 = vld [vmem:[%s4331 + $0x60] sm:$0xff]
    %v4345 = vld [vmem:[%s4331 + $0x68] sm:$0xff]
    %v4346 = vld [vmem:[%s4331 + $0x70] sm:$0xff]
    %v4347 = vld [vmem:[%s4331 + $0x78] sm:$0xff]
    %v4348 = vld [vmem:[%s4331 + $0x80] sm:$0xff]
    %v4349 = vld [vmem:[%s4331 + $0x88] sm:$0xff]
    %v4350 = vld [vmem:[%s4331 + $0x90] sm:$0xff]
    %v4351 = vld [vmem:[%s4331 + $0x98] sm:$0xff]
    %v4352 = vld [vmem:[%s4331 + $0xa0] sm:$0xff]
    %v4353 = vld [vmem:[%s4331 + $0xa8] sm:$0xff]
    %v4354 = vld [vmem:[%s4331 + $0xb0] sm:$0xff]
    %v4355 = vld [vmem:[%s4331 + $0xb8] sm:$0xff]
    %v4356 = vld [vmem:[%s4331 + $0xc0] sm:$0xff]
    %v4357 = vld [vmem:[%s4331 + $0xc8] sm:$0xff]
    %v4358 = vld [vmem:[%s4331 + $0xd0] sm:$0xff]
    %v4359 = vld [vmem:[%s4331 + $0xd8] sm:$0xff]
    %v4360 = vld [vmem:[%s4331 + $0xe0] sm:$0xff]
    %v4361 = vld [vmem:[%s4331 + $0xe8] sm:$0xff]
    %v4362 = vld [vmem:[%s4331 + $0xf0] sm:$0xff]
    %v4363 = vld [vmem:[%s4331 + $0xf8] sm:$0xff]
    %v4364 = vld [vmem:[%s4331 + $0x100] sm:$0xff]
    %v4365 = vld [vmem:[%s4331 + $0x108] sm:$0xff]
    %v4366 = vld [vmem:[%s4331 + $0x110] sm:$0xff]
    %v4367 = vld [vmem:[%s4331 + $0x118] sm:$0xff]
    %v4374 = vrot.slane %v4325, 1
    %v4375 = vrot.slane %v4328, 1
    %v4376 = vsel %vm1243, %v4374, %v4375
    %v4377 = vrot.slane %v4326, 1
    %v4378 = vrot.slane %v4329, 1
    %v4379 = vsel %vm1243, %v4377, %v4378
    %v4380 = vrot.slane %v4327, 1
    %v4381 = vrot.slane %v4330, 1
    %v4382 = vsel %vm1243, %v4380, %v4381
    %v4421 = vunpack.c.l.b16 %v4332
    %v4422 = vunpack.c.h.b16 %v4332
    %v4423 = vunpack.c.l.b16 %v4333
    %v4424 = vunpack.c.h.b16 %v4333
    %v4425 = vunpack.c.l.b16 %v4334
    %v4426 = vunpack.c.h.b16 %v4334
    %v4427 = vunpack.c.l.b16 %v4335
    %v4428 = vunpack.c.h.b16 %v4335
    %v4429 = vunpack.c.l.b16 %v4336
    %v4430 = vunpack.c.h.b16 %v4336
    %v4431 = vunpack.c.l.b16 %v4337
    %v4432 = vunpack.c.h.b16 %v4337
    %v4433 = vunpack.c.l.b16 %v4338
    %v4434 = vunpack.c.h.b16 %v4338
    %v4435 = vunpack.c.l.b16 %v4339
    %v4436 = vunpack.c.h.b16 %v4339
    %v4437 = vunpack.c.l.b16 %v4340
    %v4438 = vunpack.c.h.b16 %v4340
    %v4439 = vunpack.c.l.b16 %v4341
    %v4440 = vunpack.c.h.b16 %v4341
    %v4441 = vunpack.c.l.b16 %v4342
    %v4442 = vunpack.c.h.b16 %v4342
    %v4443 = vunpack.c.l.b16 %v4343
    %v4444 = vunpack.c.h.b16 %v4343
    %v4445 = vunpack.c.l.b16 %v4344
    %v4446 = vunpack.c.h.b16 %v4344
    %v4447 = vunpack.c.l.b16 %v4345
    %v4448 = vunpack.c.h.b16 %v4345
    %v4449 = vunpack.c.l.b16 %v4346
    %v4450 = vunpack.c.h.b16 %v4346
    %v4451 = vunpack.c.l.b16 %v4347
    %v4452 = vunpack.c.h.b16 %v4347
    %v4453 = vunpack.c.l.b16 %v4348
    %v4454 = vunpack.c.h.b16 %v4348
    %v4455 = vunpack.c.l.b16 %v4349
    %v4456 = vunpack.c.h.b16 %v4349
    %v4457 = vunpack.c.l.b16 %v4350
    %v4458 = vunpack.c.h.b16 %v4350
    %v4459 = vunpack.c.l.b16 %v4351
    %v4460 = vunpack.c.h.b16 %v4351
    %v4461 = vunpack.c.l.b16 %v4352
    %v4462 = vunpack.c.h.b16 %v4352
    %v4463 = vunpack.c.l.b16 %v4353
    %v4464 = vunpack.c.h.b16 %v4353
    %v4465 = vunpack.c.l.b16 %v4354
    %v4466 = vunpack.c.h.b16 %v4354
    %v4467 = vunpack.c.l.b16 %v4355
    %v4468 = vunpack.c.h.b16 %v4355
    %v4469 = vunpack.c.l.b16 %v4356
    %v4470 = vunpack.c.h.b16 %v4356
    %v4471 = vunpack.c.l.b16 %v4357
    %v4472 = vunpack.c.h.b16 %v4357
    %v4473 = vunpack.c.l.b16 %v4358
    %v4474 = vunpack.c.h.b16 %v4358
    %v4475 = vunpack.c.l.b16 %v4359
    %v4476 = vunpack.c.h.b16 %v4359
    %v4477 = vunpack.c.l.b16 %v4360
    %v4478 = vunpack.c.h.b16 %v4360
    %v4479 = vunpack.c.l.b16 %v4361
    %v4480 = vunpack.c.h.b16 %v4361
    %v4481 = vunpack.c.l.b16 %v4362
    %v4482 = vunpack.c.h.b16 %v4362
    %v4483 = vunpack.c.l.b16 %v4363
    %v4484 = vunpack.c.h.b16 %v4363
    %v4485 = vunpack.c.l.b16 %v4364
    %v4486 = vunpack.c.h.b16 %v4364
    %v4487 = vunpack.c.l.b16 %v4365
    %v4488 = vunpack.c.h.b16 %v4365
    %v4489 = vunpack.c.l.b16 %v4366
    %v4490 = vunpack.c.h.b16 %v4366
    %v4491 = vunpack.c.l.b16 %v4367
    %v4492 = vunpack.c.h.b16 %v4367
    %v4493 = vpack.c.b16 %v4423, %v4421
    %v4494 = vpack.c.b16 %v4424, %v4422
    %v4495 = vpack.c.b16 %v4427, %v4425
    %v4496 = vpack.c.b16 %v4428, %v4426
    %v4497 = vpack.c.b16 %v4431, %v4429
    %v4498 = vpack.c.b16 %v4432, %v4430
    %v4499 = vpack.c.b16 %v4435, %v4433
    %v4500 = vpack.c.b16 %v4436, %v4434
    %v4501 = vpack.c.b16 %v4439, %v4437
    %v4502 = vpack.c.b16 %v4440, %v4438
    %v4503 = vpack.c.b16 %v4443, %v4441
    %v4504 = vpack.c.b16 %v4444, %v4442
    %v4505 = vpack.c.b16 %v4447, %v4445
    %v4506 = vpack.c.b16 %v4448, %v4446
    %v4507 = vpack.c.b16 %v4451, %v4449
    %v4508 = vpack.c.b16 %v4452, %v4450
    %v4509 = vpack.c.b16 %v4455, %v4453
    %v4510 = vpack.c.b16 %v4456, %v4454
    %v4511 = vpack.c.b16 %v4459, %v4457
    %v4512 = vpack.c.b16 %v4460, %v4458
    %v4513 = vpack.c.b16 %v4463, %v4461
    %v4514 = vpack.c.b16 %v4464, %v4462
    %v4515 = vpack.c.b16 %v4467, %v4465
    %v4516 = vpack.c.b16 %v4468, %v4466
    %v4517 = vpack.c.b16 %v4471, %v4469
    %v4518 = vpack.c.b16 %v4472, %v4470
    %v4519 = vpack.c.b16 %v4475, %v4473
    %v4520 = vpack.c.b16 %v4476, %v4474
    %v4521 = vpack.c.b16 %v4479, %v4477
    %v4522 = vpack.c.b16 %v4480, %v4478
    %v4523 = vpack.c.b16 %v4483, %v4481
    %v4524 = vpack.c.b16 %v4484, %v4482
    %v4525 = vpack.c.b16 %v4487, %v4485
    %v4526 = vpack.c.b16 %v4488, %v4486
    %v4527 = vpack.c.b16 %v4491, %v4489
    %v4528 = vpack.c.b16 %v4492, %v4490
    %v4566 = vsel %vm540, %v4382, 0
    %4568 = vmatprep.subr.bf16.mxu0 %v4494
    %4569 = vmatpush1.bf16.msra.mxu0 %v4493
    %4570 = vmatprep.subr.bf16.mxu0 %v4496
    %4571 = vmatpush1.bf16.msra.mxu0 %v4495
    %4572 = vmatprep.subr.bf16.mxu0 %v4498
    %4573 = vmatpush1.bf16.msra.mxu0 %v4497
    %4574 = vmatprep.subr.bf16.mxu0 %v4500
    %4575 = vmatpush1.bf16.msra.mxu0 %v4499
    %4576 = vmatprep.subr.bf16.mxu0 %v4502
    %4577 = vmatpush1.bf16.msra.mxu0 %v4501
    %4578 = vmatprep.subr.bf16.mxu0 %v4504
    %4579 = vmatpush1.bf16.msra.mxu0 %v4503
    %4580 = vmatprep.subr.bf16.mxu0 %v4506
    %4581 = vmatpush1.bf16.msra.mxu0 %v4505
    %4582 = vmatprep.subr.bf16.mxu0 %v4508
    %4583 = vmatpush1.bf16.msra.mxu0 %v4507
    %4584 = vmatprep.subr.bf16.mxu0 %v4510
    %4585 = vmatpush1.bf16.msra.mxu0 %v4509
    %4586 = vmatprep.subr.bf16.mxu0 %v4512
    %4587 = vmatpush1.bf16.msra.mxu0 %v4511
    %4588 = vmatprep.subr.bf16.mxu0 %v4514
    %4589 = vmatpush1.bf16.msra.mxu0 %v4513
    %4590 = vmatprep.subr.bf16.mxu0 %v4516
    %4591 = vmatpush1.bf16.msra.mxu0 %v4515
    %4592 = vmatprep.subr.bf16.mxu0 %v4518
    %4593 = vmatpush1.bf16.msra.mxu0 %v4517
    %4594 = vmatprep.subr.bf16.mxu0 %v4520
    %4595 = vmatpush1.bf16.msra.mxu0 %v4519
    %4596 = vmatprep.subr.bf16.mxu0 %v4522
    %4597 = vmatpush1.bf16.msra.mxu0 %v4521
    %4598 = vmatprep.subr.bf16.mxu0 %v4524
    %4599 = vmatpush1.bf16.msra.mxu0 %v4523
    %4600 = vmatprep.mubr.bf16.mxu0 %v4379
    %4601 = vmatmul.mubr.bf16.gmra.mrb[0].mxu0 %v4376
    %v4602 = vpop.f32.mrb[0].mxu0
    %v4603 = vadd.f32 0.0, %v4602
    %v4604 = vpop.f32.mrb[0].mxu0
    %v4605 = vadd.f32 0.0, %v4604
    %v4606 = vpop.f32.mrb[0].mxu0
    %v4607 = vadd.f32 0.0, %v4606
    %v4608 = vpop.f32.mrb[0].mxu0
    %v4609 = vadd.f32 0.0, %v4608
    %4610 = vdwg.mxu0
    %4611 = vmatprep.subr.bf16.mxu0 %v4526
    %4612 = vmatpush1.bf16.msra.mxu0 %v4525
    %4613 = vmatprep.subr.bf16.mxu0 %v4528
    %4614 = vmatpush1.bf16.msra.mxu0 %v4527
    %4615 = vmatprep.subr.bf16.mxu0 0
    %4616 = vmatpush1.bf16.msra.mxu0 0
    %4617 = vmatprep.subr.bf16.mxu0 0
    %4618 = vmatpush1.bf16.msra.mxu0 0
    %4619 = vmatprep.subr.bf16.mxu0 0
    %4620 = vmatpush1.bf16.msra.mxu0 0
    %4621 = vmatprep.subr.bf16.mxu0 0
    %4622 = vmatpush1.bf16.msra.mxu0 0
    %4623 = vmatprep.subr.bf16.mxu0 0
    %4624 = vmatpush1.bf16.msra.mxu0 0
    %4625 = vmatprep.subr.bf16.mxu0 0
    %4626 = vmatpush1.bf16.msra.mxu0 0
    %4627 = vmatprep.subr.bf16.mxu0 0
    %4628 = vmatpush1.bf16.msra.mxu0 0
    %4629 = vmatprep.subr.bf16.mxu0 0
    %4630 = vmatpush1.bf16.msra.mxu0 0
    %4631 = vmatprep.subr.bf16.mxu0 0
    %4632 = vmatpush1.bf16.msra.mxu0 0
    %4633 = vmatprep.subr.bf16.mxu0 0
    %4634 = vmatpush1.bf16.msra.mxu0 0
    %4635 = vmatprep.subr.bf16.mxu0 0
    %4636 = vmatpush1.bf16.msra.mxu0 0
    %4637 = vmatprep.subr.bf16.mxu0 0
    %4638 = vmatpush1.bf16.msra.mxu0 0
    %4639 = vmatprep.subr.bf16.mxu0 0
    %4640 = vmatpush1.bf16.msra.mxu0 0
    %4641 = vmatprep.subr.bf16.mxu0 0
    %4642 = vmatpush1.bf16.msra.mxu0 0
    %4643 = vmatprep.mubr.bf16.mxu0 0
    %4644 = vmatmul.mubr.bf16.gmra.mrb[0].mxu0 %v4566
    %v4645 = vpop.f32.mrb[0].mxu0
    %v4646 = vadd.f32 %v4603, %v4645
    %v4647 = vpop.f32.mrb[0].mxu0
    %v4648 = vadd.f32 %v4605, %v4647
    %v4649 = vpop.f32.mrb[0].mxu0
    %v4650 = vadd.f32 %v4607, %v4649
    %v4651 = vpop.f32.mrb[0].mxu0
    %v4652 = vadd.f32 %v4609, %v4651
    %4653 = vdwg.mxu0
    %v4654 = vadd.f32 %v4315, %v4646
    %v4655 = vadd.f32 %v4316, %v4648
    %v4656 = vadd.f32 %v4317, %v4650
    %v4657 = vadd.f32 %v4318, %v4652
    %v4658 = vld [vmem:[%s3596] sm:$0xfc]
    %v4659 = vld [vmem:[%s3596 + $0x8] sm:$0xfc]
    %v4660 = vld [vmem:[%s3596 + $0x20] sm:$0x3]
    %v4661 = vld [vmem:[%s3596 + $0x28] sm:$0x3]
    %v4662 = vpack.c.bf16 %v4127, %v4658
    %v4663 = vpack.c.bf16 %v4128, %v4659
    %v4664 = vpack.c.bf16 %v4660, %v4660
    %v4665 = vpack.c.bf16 %v4661, %v4661
    %s4666 = scalar_lea.vmem %s3, 1152
    %v4667 = vld [vmem:[%s4666] sm:$0xff]
    %v4668 = vld [vmem:[%s4666 + $0x8] sm:$0xff]
    %v4669 = vld [vmem:[%s4666 + $0x10] sm:$0xff]
    %v4670 = vld [vmem:[%s4666 + $0x18] sm:$0xff]
    %v4671 = vld [vmem:[%s4666 + $0x20] sm:$0xff]
    %v4672 = vld [vmem:[%s4666 + $0x28] sm:$0xff]
    %v4673 = vld [vmem:[%s4666 + $0x30] sm:$0xff]
    %v4674 = vld [vmem:[%s4666 + $0x38] sm:$0xff]
    %v4675 = vld [vmem:[%s4666 + $0x40] sm:$0xff]
    %v4676 = vld [vmem:[%s4666 + $0x48] sm:$0xff]
    %v4677 = vld [vmem:[%s4666 + $0x50] sm:$0xff]
    %v4678 = vld [vmem:[%s4666 + $0x58] sm:$0xff]
    %v4679 = vld [vmem:[%s4666 + $0x60] sm:$0xff]
    %v4680 = vld [vmem:[%s4666 + $0x68] sm:$0xff]
    %v4681 = vld [vmem:[%s4666 + $0x70] sm:$0xff]
    %v4682 = vld [vmem:[%s4666 + $0x78] sm:$0xff]
    %v4683 = vld [vmem:[%s4666 + $0x80] sm:$0xff]
    %v4684 = vld [vmem:[%s4666 + $0x88] sm:$0xff]
    %v4689 = vrot.slane %v4662, 1
    %v4690 = vrot.slane %v4664, 1
    %v4691 = vsel %vm1243, %v4689, %v4690
    %v4692 = vrot.slane %v4663, 1
    %v4693 = vrot.slane %v4665, 1
    %v4694 = vsel %vm1243, %v4692, %v4693
    %v4714 = vunpack.c.l.b16 %v4667
    %v4715 = vunpack.c.h.b16 %v4667
    %v4716 = vunpack.c.l.b16 %v4668
    %v4717 = vunpack.c.h.b16 %v4668
    %v4718 = vunpack.c.l.b16 %v4669
    %v4719 = vunpack.c.h.b16 %v4669
    %v4720 = vunpack.c.l.b16 %v4670
    %v4721 = vunpack.c.h.b16 %v4670
    %v4722 = vunpack.c.l.b16 %v4671
    %v4723 = vunpack.c.h.b16 %v4671
    %v4724 = vunpack.c.l.b16 %v4672
    %v4725 = vunpack.c.h.b16 %v4672
    %v4726 = vunpack.c.l.b16 %v4673
    %v4727 = vunpack.c.h.b16 %v4673
    %v4728 = vunpack.c.l.b16 %v4674
    %v4729 = vunpack.c.h.b16 %v4674
    %v4730 = vunpack.c.l.b16 %v4675
    %v4731 = vunpack.c.h.b16 %v4675
    %v4732 = vunpack.c.l.b16 %v4676
    %v4733 = vunpack.c.h.b16 %v4676
    %v4734 = vunpack.c.l.b16 %v4677
    %v4735 = vunpack.c.h.b16 %v4677
    %v4736 = vunpack.c.l.b16 %v4678
    %v4737 = vunpack.c.h.b16 %v4678
    %v4738 = vunpack.c.l.b16 %v4679
    %v4739 = vunpack.c.h.b16 %v4679
    %v4740 = vunpack.c.l.b16 %v4680
    %v4741 = vunpack.c.h.b16 %v4680
    %v4742 = vunpack.c.l.b16 %v4681
    %v4743 = vunpack.c.h.b16 %v4681
    %v4744 = vunpack.c.l.b16 %v4682
    %v4745 = vunpack.c.h.b16 %v4682
    %v4746 = vunpack.c.l.b16 %v4683
    %v4747 = vunpack.c.h.b16 %v4683
    %v4748 = vunpack.c.l.b16 %v4684
    %v4749 = vunpack.c.h.b16 %v4684
    %v4750 = vpack.c.b16 %v4716, %v4714
    %v4751 = vpack.c.b16 %v4717, %v4715
    %v4752 = vpack.c.b16 %v4720, %v4718
    %v4753 = vpack.c.b16 %v4721, %v4719
    %v4754 = vpack.c.b16 %v4724, %v4722
    %v4755 = vpack.c.b16 %v4725, %v4723
    %v4756 = vpack.c.b16 %v4728, %v4726
    %v4757 = vpack.c.b16 %v4729, %v4727
    %v4758 = vpack.c.b16 %v4732, %v4730
    %v4759 = vpack.c.b16 %v4733, %v4731
    %v4760 = vpack.c.b16 %v4736, %v4734
    %v4761 = vpack.c.b16 %v4737, %v4735
    %v4762 = vpack.c.b16 %v4740, %v4738
    %v4763 = vpack.c.b16 %v4741, %v4739
    %v4764 = vpack.c.b16 %v4744, %v4742
    %v4765 = vpack.c.b16 %v4745, %v4743
    %v4766 = vpack.c.b16 %v4748, %v4746
    %v4767 = vpack.c.b16 %v4749, %v4747
    %v4787 = vsel %vm34, %v4694, 0
    %4789 = vmatprep.subr.bf16.mxu0 %v4751
    %4790 = vmatpush1.bf16.msra.mxu0 %v4750
    %4791 = vmatprep.subr.bf16.mxu0 %v4753
    %4792 = vmatpush1.bf16.msra.mxu0 %v4752
    %4793 = vmatprep.subr.bf16.mxu0 %v4755
    %4794 = vmatpush1.bf16.msra.mxu0 %v4754
    %4795 = vmatprep.subr.bf16.mxu0 %v4757
    %4796 = vmatpush1.bf16.msra.mxu0 %v4756
    %4797 = vmatprep.subr.bf16.mxu0 %v4759
    %4798 = vmatpush1.bf16.msra.mxu0 %v4758
    %4799 = vmatprep.subr.bf16.mxu0 %v4761
    %4800 = vmatpush1.bf16.msra.mxu0 %v4760
    %4801 = vmatprep.subr.bf16.mxu0 %v4763
    %4802 = vmatpush1.bf16.msra.mxu0 %v4762
    %4803 = vmatprep.subr.bf16.mxu0 %v4765
    %4804 = vmatpush1.bf16.msra.mxu0 %v4764
    %4805 = vmatprep.subr.bf16.mxu0 %v4767
    %4806 = vmatpush1.bf16.msra.mxu0 %v4766
    %4807 = vmatprep.subr.bf16.mxu0 0
    %4808 = vmatpush1.bf16.msra.mxu0 0
    %4809 = vmatprep.subr.bf16.mxu0 0
    %4810 = vmatpush1.bf16.msra.mxu0 0
    %4811 = vmatprep.subr.bf16.mxu0 0
    %4812 = vmatpush1.bf16.msra.mxu0 0
    %4813 = vmatprep.subr.bf16.mxu0 0
    %4814 = vmatpush1.bf16.msra.mxu0 0
    %4815 = vmatprep.subr.bf16.mxu0 0
    %4816 = vmatpush1.bf16.msra.mxu0 0
    %4817 = vmatprep.subr.bf16.mxu0 0
    %4818 = vmatpush1.bf16.msra.mxu0 0
    %4819 = vmatprep.subr.bf16.mxu0 0
    %4820 = vmatpush1.bf16.msra.mxu0 0
    %4821 = vmatprep.mubr.bf16.mxu0 %v4787
    %4822 = vmatmul.mubr.bf16.gmra.mrb[0].mxu0 %v4691
    %v4823 = vpop.f32.mrb[0].mxu0
    %v4824 = vadd.f32 0.0, %v4823
    %v4825 = vpop.f32.mrb[0].mxu0
    %v4826 = vadd.f32 0.0, %v4825
    %v4827 = vpop.f32.mrb[0].mxu0
    %v4828 = vadd.f32 0.0, %v4827
    %v4829 = vpop.f32.mrb[0].mxu0
    %v4830 = vadd.f32 0.0, %v4829
    %4831 = vdwg.mxu0
    %v4832 = vadd.f32 %v4654, %v4824
    %v4833 = vadd.f32 %v4655, %v4826
    %v4834 = vadd.f32 %v4656, %v4828
    %v4835 = vadd.f32 %v4657, %v4830
    %v4836 = vld [vmem:[%s4] sm:$0x3]
    %v4838 = vlaneseq
    %v4839 = vshrl.u32 %v4838, 7
    %v4840 = vsub.s32 0, %v4839
    %v4841 = vrot.slane %v4836, %v4840
    %v4842 = vlaneseq
    %v4843 = vshrl.u32 %v4842, 7
    %v4844 = vsub.s32 1, %v4843
    %v4845 = vrot.slane %v4836, %v4844
    %v4848 = vadd.f32 %v4832, %v4841
    %v4849 = vadd.f32 %v4833, %v4845
    %v4850 = vadd.f32 %v4834, %v4841
    %v4851 = vadd.f32 %v4835, %v4845
    %v4852 = vmax.f32 %v4848, 0.0
    %v4853 = vmax.f32 %v4849, 0.0
    %v4854 = vmax.f32 %v4850, 0.0
    %v4855 = vmax.f32 %v4851, 0.0
    %vm4860 = vcmask 1040384
    %v4861 = vrot.slane %v4852, 7
    %v4862 = vrot.slane %v4853, 7
    %v4863 = vrot.slane %v4854, 7
    %v4864 = vsel %vm4860, %v4861, %v4863
    %v4865 = vrot.slane %v4855, 7
    %v4866 = vsel %vm4860, %v4862, %v4865
    %s4873 = smul.addr %s2029, 8
    %s4874 = scalar_lea.vmem [#allocation2], %s4873
    %4875 = vst [vmem:[%s4874] sm:$0xfe] %v4861
    %vm4876 = vcmask 130049
    %4877 = vst.msk [vmem:[%s4874 + $0x8] sm:$0xfe] %vm4876, %v4862
    %4878 = vst [vmem:[%s4874 + $0x10] sm:$0xff] %v4864
    %4879 = vst.msk [vmem:[%s4874 + $0x18] sm:$0xff] %vm34, %v4866
    %4880 = vst [vmem:[%s4874 + $0x20] sm:$0x1] %v4863
    %vm4881 = vcmask 122880
    %4882 = vst.msk [vmem:[%s4874 + $0x28] sm:$0x1] %vm4881, %v4865
  $region42: #{unet_forward.5} parent=0 // loop_footer
    %s148 = sadd.s32 1, %s144
  $region43: #{unet_forward.5} parent=0 // loop_footer_branch
    %143 = sbr.rel target = $region39
  $region44: #{unet_forward.5} parent=0 // loop_exit
    _
  loop: start=0, step=1, limit=16
  $region45: #{unet_forward.5} parent=0 // loop_pre_header
    _
  $region46: #{unet_forward.5} parent=0 // loop_header
    %s4884 = sphi 0, %s4888
    %p4885 = scmp.ge.s32.totalorder %s4884, 16
  $region47: #{unet_forward.5} parent=0 // loop_header_branch
    %4887 = sbr.rel (%p4885) target = $region51
  $region48: #{unet_forward.5} parent=0 // loop_body
    %s4889 = smul.u32 %s4884, 6
    %s4890 = smul.addr %s4889, 8
    %s4891 = scalar_lea.vmem [#allocation2], %s4890
    %v4892 = vld [vmem:[%s4891] sm:$0xff]
    %v4893 = vld [vmem:[%s4891 + $0x8] sm:$0xff]
    %v4894 = vld [vmem:[%s4891 + $0x10] sm:$0xff]
    %v4895 = vld [vmem:[%s4891 + $0x18] sm:$0xff]
    %v4896 = vpack.c.bf16 %v4894, %v4892
    %v4897 = vpack.c.bf16 %v4895, %v4893
    %v4898 = vld [vmem:[%s5] sm:$0xff]
    %v4899 = vld [vmem:[%s5 + $0x8] sm:$0xff]
    %v4900 = vld [vmem:[%s5 + $0x10] sm:$0xff]
    %v4901 = vld [vmem:[%s5 + $0x18] sm:$0xff]
    %v4902 = vld [vmem:[%s5 + $0x20] sm:$0xff]
    %v4903 = vld [vmem:[%s5 + $0x28] sm:$0xff]
    %v4904 = vld [vmem:[%s5 + $0x30] sm:$0xff]
    %v4905 = vld [vmem:[%s5 + $0x38] sm:$0xff]
    %v4906 = vld [vmem:[%s5 + $0x40] sm:$0xff]
    %v4907 = vld [vmem:[%s5 + $0x48] sm:$0xff]
    %v4908 = vld [vmem:[%s5 + $0x50] sm:$0xff]
    %v4909 = vld [vmem:[%s5 + $0x58] sm:$0xff]
    %v4910 = vld [vmem:[%s5 + $0x60] sm:$0xff]
    %v4911 = vld [vmem:[%s5 + $0x68] sm:$0xff]
    %v4912 = vld [vmem:[%s5 + $0x70] sm:$0xff]
    %v4913 = vld [vmem:[%s5 + $0x78] sm:$0xff]
    %v4914 = vld [vmem:[%s5 + $0x80] sm:$0xff]
    %v4915 = vld [vmem:[%s5 + $0x88] sm:$0xff]
    %v4916 = vld [vmem:[%s4891] sm:$0xfe]
    %v4917 = vld [vmem:[%s4891 + $0x8] sm:$0xfe]
    %v4918 = vld [vmem:[%s4891 + $0x20] sm:$0x1]
    %v4919 = vld [vmem:[%s4891 + $0x28] sm:$0x1]
    %v4920 = vpack.c.bf16 %v4894, %v4916
    %v4921 = vpack.c.bf16 %v4895, %v4917
    %v4922 = vpack.c.bf16 %v4918, %v4918
    %v4923 = vpack.c.bf16 %v4919, %v4919
    %s4924 = scalar_lea.vmem %s5, 144
    %v4925 = vld [vmem:[%s4924] sm:$0xff]
    %v4926 = vld [vmem:[%s4924 + $0x8] sm:$0xff]
    %v4927 = vld [vmem:[%s4924 + $0x10] sm:$0xff]
    %v4928 = vld [vmem:[%s4924 + $0x18] sm:$0xff]
    %v4929 = vld [vmem:[%s4924 + $0x20] sm:$0xff]
    %v4930 = vld [vmem:[%s4924 + $0x28] sm:$0xff]
    %v4931 = vld [vmem:[%s4924 + $0x30] sm:$0xff]
    %v4932 = vld [vmem:[%s4924 + $0x38] sm:$0xff]
    %v4933 = vld [vmem:[%s4924 + $0x40] sm:$0xff]
    %v4934 = vld [vmem:[%s4924 + $0x48] sm:$0xff]
    %v4935 = vld [vmem:[%s4924 + $0x50] sm:$0xff]
    %v4936 = vld [vmem:[%s4924 + $0x58] sm:$0xff]
    %v4937 = vld [vmem:[%s4924 + $0x60] sm:$0xff]
    %v4938 = vld [vmem:[%s4924 + $0x68] sm:$0xff]
    %v4939 = vld [vmem:[%s4924 + $0x70] sm:$0xff]
    %v4940 = vld [vmem:[%s4924 + $0x78] sm:$0xff]
    %v4941 = vld [vmem:[%s4924 + $0x80] sm:$0xff]
    %v4942 = vld [vmem:[%s4924 + $0x88] sm:$0xff]
    %vm4943 = vsmask.f32 7424
    %v4945 = vshrl.u32 %v4920, 16
    %v4947 = vshll.u32 %v4920, 16
    %v4949 = vrot.slane %v4947, 1
    %v4950 = vor.u32 %v4945, %v4949
    %v4952 = vshll.u32 %v4922, 16
    %v4954 = vrot.slane %v4952, 1
    %v4955 = vsel %vm4943, %v4950, %v4954
    %v4957 = vshrl.u32 %v4921, 16
    %v4959 = vshll.u32 %v4921, 16
    %v4961 = vrot.slane %v4959, 1
    %v4962 = vor.u32 %v4957, %v4961
    %v4964 = vshll.u32 %v4923, 16
    %v4966 = vrot.slane %v4964, 1
    %v4967 = vsel %vm4943, %v4962, %v4966
    %v4987 = vunpack.c.l.b16 %v4925
    %v4988 = vunpack.c.h.b16 %v4925
    %v4989 = vunpack.c.l.b16 %v4926
    %v4990 = vunpack.c.h.b16 %v4926
    %v4991 = vunpack.c.l.b16 %v4927
    %v4992 = vunpack.c.h.b16 %v4927
    %v4993 = vunpack.c.l.b16 %v4928
    %v4994 = vunpack.c.h.b16 %v4928
    %v4995 = vunpack.c.l.b16 %v4929
    %v4996 = vunpack.c.h.b16 %v4929
    %v4997 = vunpack.c.l.b16 %v4930
    %v4998 = vunpack.c.h.b16 %v4930
    %v4999 = vunpack.c.l.b16 %v4931
    %v5000 = vunpack.c.h.b16 %v4931
    %v5001 = vunpack.c.l.b16 %v4932
    %v5002 = vunpack.c.h.b16 %v4932
    %v5003 = vunpack.c.l.b16 %v4933
    %v5004 = vunpack.c.h.b16 %v4933
    %v5005 = vunpack.c.l.b16 %v4934
    %v5006 = vunpack.c.h.b16 %v4934
    %v5007 = vunpack.c.l.b16 %v4935
    %v5008 = vunpack.c.h.b16 %v4935
    %v5009 = vunpack.c.l.b16 %v4936
    %v5010 = vunpack.c.h.b16 %v4936
    %v5011 = vunpack.c.l.b16 %v4937
    %v5012 = vunpack.c.h.b16 %v4937
    %v5013 = vunpack.c.l.b16 %v4938
    %v5014 = vunpack.c.h.b16 %v4938
    %v5015 = vunpack.c.l.b16 %v4939
    %v5016 = vunpack.c.h.b16 %v4939
    %v5017 = vunpack.c.l.b16 %v4940
    %v5018 = vunpack.c.h.b16 %v4940
    %v5019 = vunpack.c.l.b16 %v4941
    %v5020 = vunpack.c.h.b16 %v4941
    %v5021 = vunpack.c.l.b16 %v4942
    %v5022 = vunpack.c.h.b16 %v4942
    %v5023 = vpack.c.b16 %v4989, %v4987
    %v5024 = vpack.c.b16 %v4990, %v4988
    %v5025 = vpack.c.b16 %v4993, %v4991
    %v5026 = vpack.c.b16 %v4994, %v4992
    %v5027 = vpack.c.b16 %v4997, %v4995
    %v5028 = vpack.c.b16 %v4998, %v4996
    %v5029 = vpack.c.b16 %v5001, %v4999
    %v5030 = vpack.c.b16 %v5002, %v5000
    %v5031 = vpack.c.b16 %v5005, %v5003
    %v5032 = vpack.c.b16 %v5006, %v5004
    %v5033 = vpack.c.b16 %v5009, %v5007
    %v5034 = vpack.c.b16 %v5010, %v5008
    %v5035 = vpack.c.b16 %v5013, %v5011
    %v5036 = vpack.c.b16 %v5014, %v5012
    %v5037 = vpack.c.b16 %v5017, %v5015
    %v5038 = vpack.c.b16 %v5018, %v5016
    %v5039 = vpack.c.b16 %v5021, %v5019
    %v5040 = vpack.c.b16 %v5022, %v5020
    %v5060 = vsel %vm34, %v4967, 0
    %5062 = vmatprep.subr.bf16.mxu0 %v5024
    %5063 = vmatpush1.bf16.msra.mxu0 %v5023
    %5064 = vmatprep.subr.bf16.mxu0 %v5026
    %5065 = vmatpush1.bf16.msra.mxu0 %v5025
    %5066 = vmatprep.subr.bf16.mxu0 %v5028
    %5067 = vmatpush1.bf16.msra.mxu0 %v5027
    %5068 = vmatprep.subr.bf16.mxu0 %v5030
    %5069 = vmatpush1.bf16.msra.mxu0 %v5029
    %5070 = vmatprep.subr.bf16.mxu0 %v5032
    %5071 = vmatpush1.bf16.msra.mxu0 %v5031
    %5072 = vmatprep.subr.bf16.mxu0 %v5034
    %5073 = vmatpush1.bf16.msra.mxu0 %v5033
    %5074 = vmatprep.subr.bf16.mxu0 %v5036
    %5075 = vmatpush1.bf16.msra.mxu0 %v5035
    %5076 = vmatprep.subr.bf16.mxu0 %v5038
    %5077 = vmatpush1.bf16.msra.mxu0 %v5037
    %5078 = vmatprep.subr.bf16.mxu0 %v5040
    %5079 = vmatpush1.bf16.msra.mxu0 %v5039
    %5080 = vmatprep.subr.bf16.mxu0 0
    %5081 = vmatpush1.bf16.msra.mxu0 0
    %5082 = vmatprep.subr.bf16.mxu0 0
    %5083 = vmatpush1.bf16.msra.mxu0 0
    %5084 = vmatprep.subr.bf16.mxu0 0
    %5085 = vmatpush1.bf16.msra.mxu0 0
    %5086 = vmatprep.subr.bf16.mxu0 0
    %5087 = vmatpush1.bf16.msra.mxu0 0
    %5088 = vmatprep.subr.bf16.mxu0 0
    %5089 = vmatpush1.bf16.msra.mxu0 0
    %5090 = vmatprep.subr.bf16.mxu0 0
    %5091 = vmatpush1.bf16.msra.mxu0 0
    %5092 = vmatprep.subr.bf16.mxu0 0
    %5093 = vmatpush1.bf16.msra.mxu0 0
    %5094 = vmatprep.mubr.bf16.mxu0 %v5060
    %5095 = vmatmul.mubr.bf16.gmra.mrb[0].mxu0 %v4955
    %v5096 = vpop.f32.mrb[0].mxu0
    %v5097 = vadd.f32 0.0, %v5096
    %v5098 = vpop.f32.mrb[0].mxu0
    %v5099 = vadd.f32 0.0, %v5098
    %v5100 = vpop.f32.mrb[0].mxu0
    %v5101 = vadd.f32 0.0, %v5100
    %v5102 = vpop.f32.mrb[0].mxu0
    %v5103 = vadd.f32 0.0, %v5102
    %5104 = vdwg.mxu0
    %v5123 = vunpack.c.l.b16 %v4898
    %v5124 = vunpack.c.h.b16 %v4898
    %v5125 = vunpack.c.l.b16 %v4899
    %v5126 = vunpack.c.h.b16 %v4899
    %v5127 = vunpack.c.l.b16 %v4900
    %v5128 = vunpack.c.h.b16 %v4900
    %v5129 = vunpack.c.l.b16 %v4901
    %v5130 = vunpack.c.h.b16 %v4901
    %v5131 = vunpack.c.l.b16 %v4902
    %v5132 = vunpack.c.h.b16 %v4902
    %v5133 = vunpack.c.l.b16 %v4903
    %v5134 = vunpack.c.h.b16 %v4903
    %v5135 = vunpack.c.l.b16 %v4904
    %v5136 = vunpack.c.h.b16 %v4904
    %v5137 = vunpack.c.l.b16 %v4905
    %v5138 = vunpack.c.h.b16 %v4905
    %v5139 = vunpack.c.l.b16 %v4906
    %v5140 = vunpack.c.h.b16 %v4906
    %v5141 = vunpack.c.l.b16 %v4907
    %v5142 = vunpack.c.h.b16 %v4907
    %v5143 = vunpack.c.l.b16 %v4908
    %v5144 = vunpack.c.h.b16 %v4908
    %v5145 = vunpack.c.l.b16 %v4909
    %v5146 = vunpack.c.h.b16 %v4909
    %v5147 = vunpack.c.l.b16 %v4910
    %v5148 = vunpack.c.h.b16 %v4910
    %v5149 = vunpack.c.l.b16 %v4911
    %v5150 = vunpack.c.h.b16 %v4911
    %v5151 = vunpack.c.l.b16 %v4912
    %v5152 = vunpack.c.h.b16 %v4912
    %v5153 = vunpack.c.l.b16 %v4913
    %v5154 = vunpack.c.h.b16 %v4913
    %v5155 = vunpack.c.l.b16 %v4914
    %v5156 = vunpack.c.h.b16 %v4914
    %v5157 = vunpack.c.l.b16 %v4915
    %v5158 = vunpack.c.h.b16 %v4915
    %v5159 = vpack.c.b16 %v5125, %v5123
    %v5160 = vpack.c.b16 %v5126, %v5124
    %v5161 = vpack.c.b16 %v5129, %v5127
    %v5162 = vpack.c.b16 %v5130, %v5128
    %v5163 = vpack.c.b16 %v5133, %v5131
    %v5164 = vpack.c.b16 %v5134, %v5132
    %v5165 = vpack.c.b16 %v5137, %v5135
    %v5166 = vpack.c.b16 %v5138, %v5136
    %v5167 = vpack.c.b16 %v5141, %v5139
    %v5168 = vpack.c.b16 %v5142, %v5140
    %v5169 = vpack.c.b16 %v5145, %v5143
    %v5170 = vpack.c.b16 %v5146, %v5144
    %v5171 = vpack.c.b16 %v5149, %v5147
    %v5172 = vpack.c.b16 %v5150, %v5148
    %v5173 = vpack.c.b16 %v5153, %v5151
    %v5174 = vpack.c.b16 %v5154, %v5152
    %v5175 = vpack.c.b16 %v5157, %v5155
    %v5176 = vpack.c.b16 %v5158, %v5156
    %v5196 = vsel %vm34, %v4897, 0
    %5198 = vmatprep.subr.bf16.mxu0 %v5160
    %5199 = vmatpush1.bf16.msra.mxu0 %v5159
    %5200 = vmatprep.subr.bf16.mxu0 %v5162
    %5201 = vmatpush1.bf16.msra.mxu0 %v5161
    %5202 = vmatprep.subr.bf16.mxu0 %v5164
    %5203 = vmatpush1.bf16.msra.mxu0 %v5163
    %5204 = vmatprep.subr.bf16.mxu0 %v5166
    %5205 = vmatpush1.bf16.msra.mxu0 %v5165
    %5206 = vmatprep.subr.bf16.mxu0 %v5168
    %5207 = vmatpush1.bf16.msra.mxu0 %v5167
    %5208 = vmatprep.subr.bf16.mxu0 %v5170
    %5209 = vmatpush1.bf16.msra.mxu0 %v5169
    %5210 = vmatprep.subr.bf16.mxu0 %v5172
    %5211 = vmatpush1.bf16.msra.mxu0 %v5171
    %5212 = vmatprep.subr.bf16.mxu0 %v5174
    %5213 = vmatpush1.bf16.msra.mxu0 %v5173
    %5214 = vmatprep.subr.bf16.mxu0 %v5176
    %5215 = vmatpush1.bf16.msra.mxu0 %v5175
    %5216 = vmatprep.subr.bf16.mxu0 0
    %5217 = vmatpush1.bf16.msra.mxu0 0
    %5218 = vmatprep.subr.bf16.mxu0 0
    %5219 = vmatpush1.bf16.msra.mxu0 0
    %5220 = vmatprep.subr.bf16.mxu0 0
    %5221 = vmatpush1.bf16.msra.mxu0 0
    %5222 = vmatprep.subr.bf16.mxu0 0
    %5223 = vmatpush1.bf16.msra.mxu0 0
    %5224 = vmatprep.subr.bf16.mxu0 0
    %5225 = vmatpush1.bf16.msra.mxu0 0
    %5226 = vmatprep.subr.bf16.mxu0 0
    %5227 = vmatpush1.bf16.msra.mxu0 0
    %5228 = vmatprep.subr.bf16.mxu0 0
    %5229 = vmatpush1.bf16.msra.mxu0 0
    %5230 = vmatprep.mubr.bf16.mxu0 %v5196
    %5231 = vmatmul.mubr.bf16.gmra.mrb[0].mxu0 %v4896
    %v5232 = vpop.f32.mrb[0].mxu0
    %v5233 = vadd.f32 %v5097, %v5232
    %v5234 = vpop.f32.mrb[0].mxu0
    %v5235 = vadd.f32 %v5099, %v5234
    %v5236 = vpop.f32.mrb[0].mxu0
    %v5237 = vadd.f32 %v5101, %v5236
    %v5238 = vpop.f32.mrb[0].mxu0
    %v5239 = vadd.f32 %v5103, %v5238
    %5240 = vdwg.mxu0
    %v5241 = vld [vmem:[%s4891] sm:$0xfc]
    %v5242 = vld [vmem:[%s4891 + $0x8] sm:$0xfc]
    %v5243 = vld [vmem:[%s4891 + $0x20] sm:$0x3]
    %v5244 = vld [vmem:[%s4891 + $0x28] sm:$0x3]
    %v5245 = vpack.c.bf16 %v4894, %v5241
    %v5246 = vpack.c.bf16 %v4895, %v5242
    %v5247 = vpack.c.bf16 %v5243, %v5243
    %v5248 = vpack.c.bf16 %v5244, %v5244
    %s5249 = scalar_lea.vmem %s5, 288
    %v5250 = vld [vmem:[%s5249] sm:$0xff]
    %v5251 = vld [vmem:[%s5249 + $0x8] sm:$0xff]
    %v5252 = vld [vmem:[%s5249 + $0x10] sm:$0xff]
    %v5253 = vld [vmem:[%s5249 + $0x18] sm:$0xff]
    %v5254 = vld [vmem:[%s5249 + $0x20] sm:$0xff]
    %v5255 = vld [vmem:[%s5249 + $0x28] sm:$0xff]
    %v5256 = vld [vmem:[%s5249 + $0x30] sm:$0xff]
    %v5257 = vld [vmem:[%s5249 + $0x38] sm:$0xff]
    %v5258 = vld [vmem:[%s5249 + $0x40] sm:$0xff]
    %v5259 = vld [vmem:[%s5249 + $0x48] sm:$0xff]
    %v5260 = vld [vmem:[%s5249 + $0x50] sm:$0xff]
    %v5261 = vld [vmem:[%s5249 + $0x58] sm:$0xff]
    %v5262 = vld [vmem:[%s5249 + $0x60] sm:$0xff]
    %v5263 = vld [vmem:[%s5249 + $0x68] sm:$0xff]
    %v5264 = vld [vmem:[%s5249 + $0x70] sm:$0xff]
    %v5265 = vld [vmem:[%s5249 + $0x78] sm:$0xff]
    %v5266 = vld [vmem:[%s5249 + $0x80] sm:$0xff]
    %v5267 = vld [vmem:[%s5249 + $0x88] sm:$0xff]
    %vm5272 = vcmask 1046528
    %v5273 = vrot.slane %v5245, 1
    %v5274 = vrot.slane %v5247, 1
    %v5275 = vsel %vm5272, %v5273, %v5274
    %v5276 = vrot.slane %v5246, 1
    %v5277 = vrot.slane %v5248, 1
    %v5278 = vsel %vm5272, %v5276, %v5277
    %v5298 = vunpack.c.l.b16 %v5250
    %v5299 = vunpack.c.h.b16 %v5250
    %v5300 = vunpack.c.l.b16 %v5251
    %v5301 = vunpack.c.h.b16 %v5251
    %v5302 = vunpack.c.l.b16 %v5252
    %v5303 = vunpack.c.h.b16 %v5252
    %v5304 = vunpack.c.l.b16 %v5253
    %v5305 = vunpack.c.h.b16 %v5253
    %v5306 = vunpack.c.l.b16 %v5254
    %v5307 = vunpack.c.h.b16 %v5254
    %v5308 = vunpack.c.l.b16 %v5255
    %v5309 = vunpack.c.h.b16 %v5255
    %v5310 = vunpack.c.l.b16 %v5256
    %v5311 = vunpack.c.h.b16 %v5256
    %v5312 = vunpack.c.l.b16 %v5257
    %v5313 = vunpack.c.h.b16 %v5257
    %v5314 = vunpack.c.l.b16 %v5258
    %v5315 = vunpack.c.h.b16 %v5258
    %v5316 = vunpack.c.l.b16 %v5259
    %v5317 = vunpack.c.h.b16 %v5259
    %v5318 = vunpack.c.l.b16 %v5260
    %v5319 = vunpack.c.h.b16 %v5260
    %v5320 = vunpack.c.l.b16 %v5261
    %v5321 = vunpack.c.h.b16 %v5261
    %v5322 = vunpack.c.l.b16 %v5262
    %v5323 = vunpack.c.h.b16 %v5262
    %v5324 = vunpack.c.l.b16 %v5263
    %v5325 = vunpack.c.h.b16 %v5263
    %v5326 = vunpack.c.l.b16 %v5264
    %v5327 = vunpack.c.h.b16 %v5264
    %v5328 = vunpack.c.l.b16 %v5265
    %v5329 = vunpack.c.h.b16 %v5265
    %v5330 = vunpack.c.l.b16 %v5266
    %v5331 = vunpack.c.h.b16 %v5266
    %v5332 = vunpack.c.l.b16 %v5267
    %v5333 = vunpack.c.h.b16 %v5267
    %v5334 = vpack.c.b16 %v5300, %v5298
    %v5335 = vpack.c.b16 %v5301, %v5299
    %v5336 = vpack.c.b16 %v5304, %v5302
    %v5337 = vpack.c.b16 %v5305, %v5303
    %v5338 = vpack.c.b16 %v5308, %v5306
    %v5339 = vpack.c.b16 %v5309, %v5307
    %v5340 = vpack.c.b16 %v5312, %v5310
    %v5341 = vpack.c.b16 %v5313, %v5311
    %v5342 = vpack.c.b16 %v5316, %v5314
    %v5343 = vpack.c.b16 %v5317, %v5315
    %v5344 = vpack.c.b16 %v5320, %v5318
    %v5345 = vpack.c.b16 %v5321, %v5319
    %v5346 = vpack.c.b16 %v5324, %v5322
    %v5347 = vpack.c.b16 %v5325, %v5323
    %v5348 = vpack.c.b16 %v5328, %v5326
    %v5349 = vpack.c.b16 %v5329, %v5327
    %v5350 = vpack.c.b16 %v5332, %v5330
    %v5351 = vpack.c.b16 %v5333, %v5331
    %v5371 = vsel %vm34, %v5278, 0
    %5373 = vmatprep.subr.bf16.mxu0 %v5335
    %5374 = vmatpush1.bf16.msra.mxu0 %v5334
    %5375 = vmatprep.subr.bf16.mxu0 %v5337
    %5376 = vmatpush1.bf16.msra.mxu0 %v5336
    %5377 = vmatprep.subr.bf16.mxu0 %v5339
    %5378 = vmatpush1.bf16.msra.mxu0 %v5338
    %5379 = vmatprep.subr.bf16.mxu0 %v5341
    %5380 = vmatpush1.bf16.msra.mxu0 %v5340
    %5381 = vmatprep.subr.bf16.mxu0 %v5343
    %5382 = vmatpush1.bf16.msra.mxu0 %v5342
    %5383 = vmatprep.subr.bf16.mxu0 %v5345
    %5384 = vmatpush1.bf16.msra.mxu0 %v5344
    %5385 = vmatprep.subr.bf16.mxu0 %v5347
    %5386 = vmatpush1.bf16.msra.mxu0 %v5346
    %5387 = vmatprep.subr.bf16.mxu0 %v5349
    %5388 = vmatpush1.bf16.msra.mxu0 %v5348
    %5389 = vmatprep.subr.bf16.mxu0 %v5351
    %5390 = vmatpush1.bf16.msra.mxu0 %v5350
    %5391 = vmatprep.subr.bf16.mxu0 0
    %5392 = vmatpush1.bf16.msra.mxu0 0
    %5393 = vmatprep.subr.bf16.mxu0 0
    %5394 = vmatpush1.bf16.msra.mxu0 0
    %5395 = vmatprep.subr.bf16.mxu0 0
    %5396 = vmatpush1.bf16.msra.mxu0 0
    %5397 = vmatprep.subr.bf16.mxu0 0
    %5398 = vmatpush1.bf16.msra.mxu0 0
    %5399 = vmatprep.subr.bf16.mxu0 0
    %5400 = vmatpush1.bf16.msra.mxu0 0
    %5401 = vmatprep.subr.bf16.mxu0 0
    %5402 = vmatpush1.bf16.msra.mxu0 0
    %5403 = vmatprep.subr.bf16.mxu0 0
    %5404 = vmatpush1.bf16.msra.mxu0 0
    %5405 = vmatprep.mubr.bf16.mxu0 %v5371
    %5406 = vmatmul.mubr.bf16.gmra.mrb[0].mxu0 %v5275
    %v5407 = vpop.f32.mrb[0].mxu0
    %v5408 = vadd.f32 0.0, %v5407
    %v5409 = vpop.f32.mrb[0].mxu0
    %v5410 = vadd.f32 0.0, %v5409
    %v5411 = vpop.f32.mrb[0].mxu0
    %v5412 = vadd.f32 0.0, %v5411
    %v5413 = vpop.f32.mrb[0].mxu0
    %v5414 = vadd.f32 0.0, %v5413
    %5415 = vdwg.mxu0
    %v5416 = vadd.f32 %v5233, %v5408
    %v5417 = vadd.f32 %v5235, %v5410
    %v5418 = vadd.f32 %v5237, %v5412
    %v5419 = vadd.f32 %v5239, %v5414
    %s5420 = sadd.s32 %s4884, 1
    %s5421 = smul.u32 %s5420, 6
    %s5422 = smul.addr %s5421, 8
    %s5423 = scalar_lea.vmem [#allocation2], %s5422
    %v5424 = vld [vmem:[%s5423] sm:$0xff]
    %v5425 = vld [vmem:[%s5423 + $0x8] sm:$0xff]
    %v5426 = vld [vmem:[%s5423 + $0x10] sm:$0xff]
    %v5427 = vld [vmem:[%s5423 + $0x18] sm:$0xff]
    %v5428 = vpack.c.bf16 %v5426, %v5424
    %v5429 = vpack.c.bf16 %v5427, %v5425
    %s5430 = scalar_lea.vmem %s5, 432
    %v5431 = vld [vmem:[%s5430] sm:$0xff]
    %v5432 = vld [vmem:[%s5430 + $0x8] sm:$0xff]
    %v5433 = vld [vmem:[%s5430 + $0x10] sm:$0xff]
    %v5434 = vld [vmem:[%s5430 + $0x18] sm:$0xff]
    %v5435 = vld [vmem:[%s5430 + $0x20] sm:$0xff]
    %v5436 = vld [vmem:[%s5430 + $0x28] sm:$0xff]
    %v5437 = vld [vmem:[%s5430 + $0x30] sm:$0xff]
    %v5438 = vld [vmem:[%s5430 + $0x38] sm:$0xff]
    %v5439 = vld [vmem:[%s5430 + $0x40] sm:$0xff]
    %v5440 = vld [vmem:[%s5430 + $0x48] sm:$0xff]
    %v5441 = vld [vmem:[%s5430 + $0x50] sm:$0xff]
    %v5442 = vld [vmem:[%s5430 + $0x58] sm:$0xff]
    %v5443 = vld [vmem:[%s5430 + $0x60] sm:$0xff]
    %v5444 = vld [vmem:[%s5430 + $0x68] sm:$0xff]
    %v5445 = vld [vmem:[%s5430 + $0x70] sm:$0xff]
    %v5446 = vld [vmem:[%s5430 + $0x78] sm:$0xff]
    %v5447 = vld [vmem:[%s5430 + $0x80] sm:$0xff]
    %v5448 = vld [vmem:[%s5430 + $0x88] sm:$0xff]
    %v5467 = vunpack.c.l.b16 %v5431
    %v5468 = vunpack.c.h.b16 %v5431
    %v5469 = vunpack.c.l.b16 %v5432
    %v5470 = vunpack.c.h.b16 %v5432
    %v5471 = vunpack.c.l.b16 %v5433
    %v5472 = vunpack.c.h.b16 %v5433
    %v5473 = vunpack.c.l.b16 %v5434
    %v5474 = vunpack.c.h.b16 %v5434
    %v5475 = vunpack.c.l.b16 %v5435
    %v5476 = vunpack.c.h.b16 %v5435
    %v5477 = vunpack.c.l.b16 %v5436
    %v5478 = vunpack.c.h.b16 %v5436
    %v5479 = vunpack.c.l.b16 %v5437
    %v5480 = vunpack.c.h.b16 %v5437
    %v5481 = vunpack.c.l.b16 %v5438
    %v5482 = vunpack.c.h.b16 %v5438
    %v5483 = vunpack.c.l.b16 %v5439
    %v5484 = vunpack.c.h.b16 %v5439
    %v5485 = vunpack.c.l.b16 %v5440
    %v5486 = vunpack.c.h.b16 %v5440
    %v5487 = vunpack.c.l.b16 %v5441
    %v5488 = vunpack.c.h.b16 %v5441
    %v5489 = vunpack.c.l.b16 %v5442
    %v5490 = vunpack.c.h.b16 %v5442
    %v5491 = vunpack.c.l.b16 %v5443
    %v5492 = vunpack.c.h.b16 %v5443
    %v5493 = vunpack.c.l.b16 %v5444
    %v5494 = vunpack.c.h.b16 %v5444
    %v5495 = vunpack.c.l.b16 %v5445
    %v5496 = vunpack.c.h.b16 %v5445
    %v5497 = vunpack.c.l.b16 %v5446
    %v5498 = vunpack.c.h.b16 %v5446
    %v5499 = vunpack.c.l.b16 %v5447
    %v5500 = vunpack.c.h.b16 %v5447
    %v5501 = vunpack.c.l.b16 %v5448
    %v5502 = vunpack.c.h.b16 %v5448
    %v5503 = vpack.c.b16 %v5469, %v5467
    %v5504 = vpack.c.b16 %v5470, %v5468
    %v5505 = vpack.c.b16 %v5473, %v5471
    %v5506 = vpack.c.b16 %v5474, %v5472
    %v5507 = vpack.c.b16 %v5477, %v5475
    %v5508 = vpack.c.b16 %v5478, %v5476
    %v5509 = vpack.c.b16 %v5481, %v5479
    %v5510 = vpack.c.b16 %v5482, %v5480
    %v5511 = vpack.c.b16 %v5485, %v5483
    %v5512 = vpack.c.b16 %v5486, %v5484
    %v5513 = vpack.c.b16 %v5489, %v5487
    %v5514 = vpack.c.b16 %v5490, %v5488
    %v5515 = vpack.c.b16 %v5493, %v5491
    %v5516 = vpack.c.b16 %v5494, %v5492
    %v5517 = vpack.c.b16 %v5497, %v5495
    %v5518 = vpack.c.b16 %v5498, %v5496
    %v5519 = vpack.c.b16 %v5501, %v5499
    %v5520 = vpack.c.b16 %v5502, %v5500
    %v5540 = vsel %vm34, %v5429, 0
    %5542 = vmatprep.subr.bf16.mxu0 %v5504
    %5543 = vmatpush1.bf16.msra.mxu0 %v5503
    %5544 = vmatprep.subr.bf16.mxu0 %v5506
    %5545 = vmatpush1.bf16.msra.mxu0 %v5505
    %5546 = vmatprep.subr.bf16.mxu0 %v5508
    %5547 = vmatpush1.bf16.msra.mxu0 %v5507
    %5548 = vmatprep.subr.bf16.mxu0 %v5510
    %5549 = vmatpush1.bf16.msra.mxu0 %v5509
    %5550 = vmatprep.subr.bf16.mxu0 %v5512
    %5551 = vmatpush1.bf16.msra.mxu0 %v5511
    %5552 = vmatprep.subr.bf16.mxu0 %v5514
    %5553 = vmatpush1.bf16.msra.mxu0 %v5513
    %5554 = vmatprep.subr.bf16.mxu0 %v5516
    %5555 = vmatpush1.bf16.msra.mxu0 %v5515
    %5556 = vmatprep.subr.bf16.mxu0 %v5518
    %5557 = vmatpush1.bf16.msra.mxu0 %v5517
    %5558 = vmatprep.subr.bf16.mxu0 %v5520
    %5559 = vmatpush1.bf16.msra.mxu0 %v5519
    %5560 = vmatprep.subr.bf16.mxu0 0
    %5561 = vmatpush1.bf16.msra.mxu0 0
    %5562 = vmatprep.subr.bf16.mxu0 0
    %5563 = vmatpush1.bf16.msra.mxu0 0
    %5564 = vmatprep.subr.bf16.mxu0 0
    %5565 = vmatpush1.bf16.msra.mxu0 0
    %5566 = vmatprep.subr.bf16.mxu0 0
    %5567 = vmatpush1.bf16.msra.mxu0 0
    %5568 = vmatprep.subr.bf16.mxu0 0
    %5569 = vmatpush1.bf16.msra.mxu0 0
    %5570 = vmatprep.subr.bf16.mxu0 0
    %5571 = vmatpush1.bf16.msra.mxu0 0
    %5572 = vmatprep.subr.bf16.mxu0 0
    %5573 = vmatpush1.bf16.msra.mxu0 0
    %5574 = vmatprep.mubr.bf16.mxu0 %v5540
    %5575 = vmatmul.mubr.bf16.gmra.mrb[0].mxu0 %v5428
    %v5576 = vpop.f32.mrb[0].mxu0
    %v5577 = vadd.f32 0.0, %v5576
    %v5578 = vpop.f32.mrb[0].mxu0
    %v5579 = vadd.f32 0.0, %v5578
    %v5580 = vpop.f32.mrb[0].mxu0
    %v5581 = vadd.f32 0.0, %v5580
    %v5582 = vpop.f32.mrb[0].mxu0
    %v5583 = vadd.f32 0.0, %v5582
    %5584 = vdwg.mxu0
    %v5585 = vadd.f32 %v5416, %v5577
    %v5586 = vadd.f32 %v5417, %v5579
    %v5587 = vadd.f32 %v5418, %v5581
    %v5588 = vadd.f32 %v5419, %v5583
    %v5589 = vld [vmem:[%s5423] sm:$0xfe]
    %v5590 = vld [vmem:[%s5423 + $0x8] sm:$0xfe]
    %v5591 = vld [vmem:[%s5423 + $0x10] sm:$0xff]
    %v5592 = vld [vmem:[%s5423 + $0x18] sm:$0xff]
    %v5593 = vld [vmem:[%s5423 + $0x20] sm:$0x1]
    %v5594 = vld [vmem:[%s5423 + $0x28] sm:$0x1]
    %v5595 = vpack.c.bf16 %v5591, %v5589
    %v5596 = vpack.c.bf16 %v5592, %v5590
    %v5597 = vpack.c.bf16 %v5593, %v5593
    %v5598 = vpack.c.bf16 %v5594, %v5594
    %s5599 = scalar_lea.vmem %s5, 576
    %v5600 = vld [vmem:[%s5599] sm:$0xff]
    %v5601 = vld [vmem:[%s5599 + $0x8] sm:$0xff]
    %v5602 = vld [vmem:[%s5599 + $0x10] sm:$0xff]
    %v5603 = vld [vmem:[%s5599 + $0x18] sm:$0xff]
    %v5604 = vld [vmem:[%s5599 + $0x20] sm:$0xff]
    %v5605 = vld [vmem:[%s5599 + $0x28] sm:$0xff]
    %v5606 = vld [vmem:[%s5599 + $0x30] sm:$0xff]
    %v5607 = vld [vmem:[%s5599 + $0x38] sm:$0xff]
    %v5608 = vld [vmem:[%s5599 + $0x40] sm:$0xff]
    %v5609 = vld [vmem:[%s5599 + $0x48] sm:$0xff]
    %v5610 = vld [vmem:[%s5599 + $0x50] sm:$0xff]
    %v5611 = vld [vmem:[%s5599 + $0x58] sm:$0xff]
    %v5612 = vld [vmem:[%s5599 + $0x60] sm:$0xff]
    %v5613 = vld [vmem:[%s5599 + $0x68] sm:$0xff]
    %v5614 = vld [vmem:[%s5599 + $0x70] sm:$0xff]
    %v5615 = vld [vmem:[%s5599 + $0x78] sm:$0xff]
    %v5616 = vld [vmem:[%s5599 + $0x80] sm:$0xff]
    %v5617 = vld [vmem:[%s5599 + $0x88] sm:$0xff]
    %v5619 = vshrl.u32 %v5595, 16
    %v5621 = vshll.u32 %v5595, 16
    %v5623 = vrot.slane %v5621, 1
    %v5624 = vor.u32 %v5619, %v5623
    %v5626 = vshll.u32 %v5597, 16
    %v5628 = vrot.slane %v5626, 1
    %v5629 = vsel %vm4943, %v5624, %v5628
    %v5631 = vshrl.u32 %v5596, 16
    %v5633 = vshll.u32 %v5596, 16
    %v5635 = vrot.slane %v5633, 1
    %v5636 = vor.u32 %v5631, %v5635
    %v5638 = vshll.u32 %v5598, 16
    %v5640 = vrot.slane %v5638, 1
    %v5641 = vsel %vm4943, %v5636, %v5640
    %v5661 = vunpack.c.l.b16 %v5600
    %v5662 = vunpack.c.h.b16 %v5600
    %v5663 = vunpack.c.l.b16 %v5601
    %v5664 = vunpack.c.h.b16 %v5601
    %v5665 = vunpack.c.l.b16 %v5602
    %v5666 = vunpack.c.h.b16 %v5602
    %v5667 = vunpack.c.l.b16 %v5603
    %v5668 = vunpack.c.h.b16 %v5603
    %v5669 = vunpack.c.l.b16 %v5604
    %v5670 = vunpack.c.h.b16 %v5604
    %v5671 = vunpack.c.l.b16 %v5605
    %v5672 = vunpack.c.h.b16 %v5605
    %v5673 = vunpack.c.l.b16 %v5606
    %v5674 = vunpack.c.h.b16 %v5606
    %v5675 = vunpack.c.l.b16 %v5607
    %v5676 = vunpack.c.h.b16 %v5607
    %v5677 = vunpack.c.l.b16 %v5608
    %v5678 = vunpack.c.h.b16 %v5608
    %v5679 = vunpack.c.l.b16 %v5609
    %v5680 = vunpack.c.h.b16 %v5609
    %v5681 = vunpack.c.l.b16 %v5610
    %v5682 = vunpack.c.h.b16 %v5610
    %v5683 = vunpack.c.l.b16 %v5611
    %v5684 = vunpack.c.h.b16 %v5611
    %v5685 = vunpack.c.l.b16 %v5612
    %v5686 = vunpack.c.h.b16 %v5612
    %v5687 = vunpack.c.l.b16 %v5613
    %v5688 = vunpack.c.h.b16 %v5613
    %v5689 = vunpack.c.l.b16 %v5614
    %v5690 = vunpack.c.h.b16 %v5614
    %v5691 = vunpack.c.l.b16 %v5615
    %v5692 = vunpack.c.h.b16 %v5615
    %v5693 = vunpack.c.l.b16 %v5616
    %v5694 = vunpack.c.h.b16 %v5616
    %v5695 = vunpack.c.l.b16 %v5617
    %v5696 = vunpack.c.h.b16 %v5617
    %v5697 = vpack.c.b16 %v5663, %v5661
    %v5698 = vpack.c.b16 %v5664, %v5662
    %v5699 = vpack.c.b16 %v5667, %v5665
    %v5700 = vpack.c.b16 %v5668, %v5666
    %v5701 = vpack.c.b16 %v5671, %v5669
    %v5702 = vpack.c.b16 %v5672, %v5670
    %v5703 = vpack.c.b16 %v5675, %v5673
    %v5704 = vpack.c.b16 %v5676, %v5674
    %v5705 = vpack.c.b16 %v5679, %v5677
    %v5706 = vpack.c.b16 %v5680, %v5678
    %v5707 = vpack.c.b16 %v5683, %v5681
    %v5708 = vpack.c.b16 %v5684, %v5682
    %v5709 = vpack.c.b16 %v5687, %v5685
    %v5710 = vpack.c.b16 %v5688, %v5686
    %v5711 = vpack.c.b16 %v5691, %v5689
    %v5712 = vpack.c.b16 %v5692, %v5690
    %v5713 = vpack.c.b16 %v5695, %v5693
    %v5714 = vpack.c.b16 %v5696, %v5694
    %v5734 = vsel %vm34, %v5641, 0
    %5736 = vmatprep.subr.bf16.mxu0 %v5698
    %5737 = vmatpush1.bf16.msra.mxu0 %v5697
    %5738 = vmatprep.subr.bf16.mxu0 %v5700
    %5739 = vmatpush1.bf16.msra.mxu0 %v5699
    %5740 = vmatprep.subr.bf16.mxu0 %v5702
    %5741 = vmatpush1.bf16.msra.mxu0 %v5701
    %5742 = vmatprep.subr.bf16.mxu0 %v5704
    %5743 = vmatpush1.bf16.msra.mxu0 %v5703
    %5744 = vmatprep.subr.bf16.mxu0 %v5706
    %5745 = vmatpush1.bf16.msra.mxu0 %v5705
    %5746 = vmatprep.subr.bf16.mxu0 %v5708
    %5747 = vmatpush1.bf16.msra.mxu0 %v5707
    %5748 = vmatprep.subr.bf16.mxu0 %v5710
    %5749 = vmatpush1.bf16.msra.mxu0 %v5709
    %5750 = vmatprep.subr.bf16.mxu0 %v5712
    %5751 = vmatpush1.bf16.msra.mxu0 %v5711
    %5752 = vmatprep.subr.bf16.mxu0 %v5714
    %5753 = vmatpush1.bf16.msra.mxu0 %v5713
    %5754 = vmatprep.subr.bf16.mxu0 0
    %5755 = vmatpush1.bf16.msra.mxu0 0
    %5756 = vmatprep.subr.bf16.mxu0 0
    %5757 = vmatpush1.bf16.msra.mxu0 0
    %5758 = vmatprep.subr.bf16.mxu0 0
    %5759 = vmatpush1.bf16.msra.mxu0 0
    %5760 = vmatprep.subr.bf16.mxu0 0
    %5761 = vmatpush1.bf16.msra.mxu0 0
    %5762 = vmatprep.subr.bf16.mxu0 0
    %5763 = vmatpush1.bf16.msra.mxu0 0
    %5764 = vmatprep.subr.bf16.mxu0 0
    %5765 = vmatpush1.bf16.msra.mxu0 0
    %5766 = vmatprep.subr.bf16.mxu0 0
    %5767 = vmatpush1.bf16.msra.mxu0 0
    %5768 = vmatprep.mubr.bf16.mxu0 %v5734
    %5769 = vmatmul.mubr.bf16.gmra.mrb[0].mxu0 %v5629
    %v5770 = vpop.f32.mrb[0].mxu0
    %v5771 = vadd.f32 0.0, %v5770
    %v5772 = vpop.f32.mrb[0].mxu0
    %v5773 = vadd.f32 0.0, %v5772
    %v5774 = vpop.f32.mrb[0].mxu0
    %v5775 = vadd.f32 0.0, %v5774
    %v5776 = vpop.f32.mrb[0].mxu0
    %v5777 = vadd.f32 0.0, %v5776
    %5778 = vdwg.mxu0
    %v5779 = vadd.f32 %v5585, %v5771
    %v5780 = vadd.f32 %v5586, %v5773
    %v5781 = vadd.f32 %v5587, %v5775
    %v5782 = vadd.f32 %v5588, %v5777
    %v5783 = vld [vmem:[%s5423] sm:$0xfc]
    %v5784 = vld [vmem:[%s5423 + $0x8] sm:$0xfc]
    %v5785 = vld [vmem:[%s5423 + $0x20] sm:$0x3]
    %v5786 = vld [vmem:[%s5423 + $0x28] sm:$0x3]
    %v5787 = vpack.c.bf16 %v5591, %v5783
    %v5788 = vpack.c.bf16 %v5592, %v5784
    %v5789 = vpack.c.bf16 %v5785, %v5785
    %v5790 = vpack.c.bf16 %v5786, %v5786
    %s5791 = scalar_lea.vmem %s5, 720
    %v5792 = vld [vmem:[%s5791] sm:$0xff]
    %v5793 = vld [vmem:[%s5791 + $0x8] sm:$0xff]
    %v5794 = vld [vmem:[%s5791 + $0x10] sm:$0xff]
    %v5795 = vld [vmem:[%s5791 + $0x18] sm:$0xff]
    %v5796 = vld [vmem:[%s5791 + $0x20] sm:$0xff]
    %v5797 = vld [vmem:[%s5791 + $0x28] sm:$0xff]
    %v5798 = vld [vmem:[%s5791 + $0x30] sm:$0xff]
    %v5799 = vld [vmem:[%s5791 + $0x38] sm:$0xff]
    %v5800 = vld [vmem:[%s5791 + $0x40] sm:$0xff]
    %v5801 = vld [vmem:[%s5791 + $0x48] sm:$0xff]
    %v5802 = vld [vmem:[%s5791 + $0x50] sm:$0xff]
    %v5803 = vld [vmem:[%s5791 + $0x58] sm:$0xff]
    %v5804 = vld [vmem:[%s5791 + $0x60] sm:$0xff]
    %v5805 = vld [vmem:[%s5791 + $0x68] sm:$0xff]
    %v5806 = vld [vmem:[%s5791 + $0x70] sm:$0xff]
    %v5807 = vld [vmem:[%s5791 + $0x78] sm:$0xff]
    %v5808 = vld [vmem:[%s5791 + $0x80] sm:$0xff]
    %v5809 = vld [vmem:[%s5791 + $0x88] sm:$0xff]
    %v5814 = vrot.slane %v5787, 1
    %v5815 = vrot.slane %v5789, 1
    %v5816 = vsel %vm5272, %v5814, %v5815
    %v5817 = vrot.slane %v5788, 1
    %v5818 = vrot.slane %v5790, 1
    %v5819 = vsel %vm5272, %v5817, %v5818
    %v5839 = vunpack.c.l.b16 %v5792
    %v5840 = vunpack.c.h.b16 %v5792
    %v5841 = vunpack.c.l.b16 %v5793
    %v5842 = vunpack.c.h.b16 %v5793
    %v5843 = vunpack.c.l.b16 %v5794
    %v5844 = vunpack.c.h.b16 %v5794
    %v5845 = vunpack.c.l.b16 %v5795
    %v5846 = vunpack.c.h.b16 %v5795
    %v5847 = vunpack.c.l.b16 %v5796
    %v5848 = vunpack.c.h.b16 %v5796
    %v5849 = vunpack.c.l.b16 %v5797
    %v5850 = vunpack.c.h.b16 %v5797
    %v5851 = vunpack.c.l.b16 %v5798
    %v5852 = vunpack.c.h.b16 %v5798
    %v5853 = vunpack.c.l.b16 %v5799
    %v5854 = vunpack.c.h.b16 %v5799
    %v5855 = vunpack.c.l.b16 %v5800
    %v5856 = vunpack.c.h.b16 %v5800
    %v5857 = vunpack.c.l.b16 %v5801
    %v5858 = vunpack.c.h.b16 %v5801
    %v5859 = vunpack.c.l.b16 %v5802
    %v5860 = vunpack.c.h.b16 %v5802
    %v5861 = vunpack.c.l.b16 %v5803
    %v5862 = vunpack.c.h.b16 %v5803
    %v5863 = vunpack.c.l.b16 %v5804
    %v5864 = vunpack.c.h.b16 %v5804
    %v5865 = vunpack.c.l.b16 %v5805
    %v5866 = vunpack.c.h.b16 %v5805
    %v5867 = vunpack.c.l.b16 %v5806
    %v5868 = vunpack.c.h.b16 %v5806
    %v5869 = vunpack.c.l.b16 %v5807
    %v5870 = vunpack.c.h.b16 %v5807
    %v5871 = vunpack.c.l.b16 %v5808
    %v5872 = vunpack.c.h.b16 %v5808
    %v5873 = vunpack.c.l.b16 %v5809
    %v5874 = vunpack.c.h.b16 %v5809
    %v5875 = vpack.c.b16 %v5841, %v5839
    %v5876 = vpack.c.b16 %v5842, %v5840
    %v5877 = vpack.c.b16 %v5845, %v5843
    %v5878 = vpack.c.b16 %v5846, %v5844
    %v5879 = vpack.c.b16 %v5849, %v5847
    %v5880 = vpack.c.b16 %v5850, %v5848
    %v5881 = vpack.c.b16 %v5853, %v5851
    %v5882 = vpack.c.b16 %v5854, %v5852
    %v5883 = vpack.c.b16 %v5857, %v5855
    %v5884 = vpack.c.b16 %v5858, %v5856
    %v5885 = vpack.c.b16 %v5861, %v5859
    %v5886 = vpack.c.b16 %v5862, %v5860
    %v5887 = vpack.c.b16 %v5865, %v5863
    %v5888 = vpack.c.b16 %v5866, %v5864
    %v5889 = vpack.c.b16 %v5869, %v5867
    %v5890 = vpack.c.b16 %v5870, %v5868
    %v5891 = vpack.c.b16 %v5873, %v5871
    %v5892 = vpack.c.b16 %v5874, %v5872
    %v5912 = vsel %vm34, %v5819, 0
    %5914 = vmatprep.subr.bf16.mxu0 %v5876
    %5915 = vmatpush1.bf16.msra.mxu0 %v5875
    %5916 = vmatprep.subr.bf16.mxu0 %v5878
    %5917 = vmatpush1.bf16.msra.mxu0 %v5877
    %5918 = vmatprep.subr.bf16.mxu0 %v5880
    %5919 = vmatpush1.bf16.msra.mxu0 %v5879
    %5920 = vmatprep.subr.bf16.mxu0 %v5882
    %5921 = vmatpush1.bf16.msra.mxu0 %v5881
    %5922 = vmatprep.subr.bf16.mxu0 %v5884
    %5923 = vmatpush1.bf16.msra.mxu0 %v5883
    %5924 = vmatprep.subr.bf16.mxu0 %v5886
    %5925 = vmatpush1.bf16.msra.mxu0 %v5885
    %5926 = vmatprep.subr.bf16.mxu0 %v5888
    %5927 = vmatpush1.bf16.msra.mxu0 %v5887
    %5928 = vmatprep.subr.bf16.mxu0 %v5890
    %5929 = vmatpush1.bf16.msra.mxu0 %v5889
    %5930 = vmatprep.subr.bf16.mxu0 %v5892
    %5931 = vmatpush1.bf16.msra.mxu0 %v5891
    %5932 = vmatprep.subr.bf16.mxu0 0
    %5933 = vmatpush1.bf16.msra.mxu0 0
    %5934 = vmatprep.subr.bf16.mxu0 0
    %5935 = vmatpush1.bf16.msra.mxu0 0
    %5936 = vmatprep.subr.bf16.mxu0 0
    %5937 = vmatpush1.bf16.msra.mxu0 0
    %5938 = vmatprep.subr.bf16.mxu0 0
    %5939 = vmatpush1.bf16.msra.mxu0 0
    %5940 = vmatprep.subr.bf16.mxu0 0
    %5941 = vmatpush1.bf16.msra.mxu0 0
    %5942 = vmatprep.subr.bf16.mxu0 0
    %5943 = vmatpush1.bf16.msra.mxu0 0
    %5944 = vmatprep.subr.bf16.mxu0 0
    %5945 = vmatpush1.bf16.msra.mxu0 0
    %5946 = vmatprep.mubr.bf16.mxu0 %v5912
    %5947 = vmatmul.mubr.bf16.gmra.mrb[0].mxu0 %v5816
    %v5948 = vpop.f32.mrb[0].mxu0
    %v5949 = vadd.f32 0.0, %v5948
    %v5950 = vpop.f32.mrb[0].mxu0
    %v5951 = vadd.f32 0.0, %v5950
    %v5952 = vpop.f32.mrb[0].mxu0
    %v5953 = vadd.f32 0.0, %v5952
    %v5954 = vpop.f32.mrb[0].mxu0
    %v5955 = vadd.f32 0.0, %v5954
    %5956 = vdwg.mxu0
    %v5957 = vadd.f32 %v5779, %v5949
    %v5958 = vadd.f32 %v5780, %v5951
    %v5959 = vadd.f32 %v5781, %v5953
    %v5960 = vadd.f32 %v5782, %v5955
    %s5961 = sadd.s32 %s4884, 2
    %s5962 = smul.u32 %s5961, 6
    %s5963 = smul.addr %s5962, 8
    %s5964 = scalar_lea.vmem [#allocation2], %s5963
    %v5965 = vld [vmem:[%s5964] sm:$0xff]
    %v5966 = vld [vmem:[%s5964 + $0x8] sm:$0xff]
    %v5967 = vld [vmem:[%s5964 + $0x10] sm:$0xff]
    %v5968 = vld [vmem:[%s5964 + $0x18] sm:$0xff]
    %v5969 = vpack.c.bf16 %v5967, %v5965
    %v5970 = vpack.c.bf16 %v5968, %v5966
    %s5971 = scalar_lea.vmem %s5, 864
    %v5972 = vld [vmem:[%s5971] sm:$0xff]
    %v5973 = vld [vmem:[%s5971 + $0x8] sm:$0xff]
    %v5974 = vld [vmem:[%s5971 + $0x10] sm:$0xff]
    %v5975 = vld [vmem:[%s5971 + $0x18] sm:$0xff]
    %v5976 = vld [vmem:[%s5971 + $0x20] sm:$0xff]
    %v5977 = vld [vmem:[%s5971 + $0x28] sm:$0xff]
    %v5978 = vld [vmem:[%s5971 + $0x30] sm:$0xff]
    %v5979 = vld [vmem:[%s5971 + $0x38] sm:$0xff]
    %v5980 = vld [vmem:[%s5971 + $0x40] sm:$0xff]
    %v5981 = vld [vmem:[%s5971 + $0x48] sm:$0xff]
    %v5982 = vld [vmem:[%s5971 + $0x50] sm:$0xff]
    %v5983 = vld [vmem:[%s5971 + $0x58] sm:$0xff]
    %v5984 = vld [vmem:[%s5971 + $0x60] sm:$0xff]
    %v5985 = vld [vmem:[%s5971 + $0x68] sm:$0xff]
    %v5986 = vld [vmem:[%s5971 + $0x70] sm:$0xff]
    %v5987 = vld [vmem:[%s5971 + $0x78] sm:$0xff]
    %v5988 = vld [vmem:[%s5971 + $0x80] sm:$0xff]
    %v5989 = vld [vmem:[%s5971 + $0x88] sm:$0xff]
    %v6008 = vunpack.c.l.b16 %v5972
    %v6009 = vunpack.c.h.b16 %v5972
    %v6010 = vunpack.c.l.b16 %v5973
    %v6011 = vunpack.c.h.b16 %v5973
    %v6012 = vunpack.c.l.b16 %v5974
    %v6013 = vunpack.c.h.b16 %v5974
    %v6014 = vunpack.c.l.b16 %v5975
    %v6015 = vunpack.c.h.b16 %v5975
    %v6016 = vunpack.c.l.b16 %v5976
    %v6017 = vunpack.c.h.b16 %v5976
    %v6018 = vunpack.c.l.b16 %v5977
    %v6019 = vunpack.c.h.b16 %v5977
    %v6020 = vunpack.c.l.b16 %v5978
    %v6021 = vunpack.c.h.b16 %v5978
    %v6022 = vunpack.c.l.b16 %v5979
    %v6023 = vunpack.c.h.b16 %v5979
    %v6024 = vunpack.c.l.b16 %v5980
    %v6025 = vunpack.c.h.b16 %v5980
    %v6026 = vunpack.c.l.b16 %v5981
    %v6027 = vunpack.c.h.b16 %v5981
    %v6028 = vunpack.c.l.b16 %v5982
    %v6029 = vunpack.c.h.b16 %v5982
    %v6030 = vunpack.c.l.b16 %v5983
    %v6031 = vunpack.c.h.b16 %v5983
    %v6032 = vunpack.c.l.b16 %v5984
    %v6033 = vunpack.c.h.b16 %v5984
    %v6034 = vunpack.c.l.b16 %v5985
    %v6035 = vunpack.c.h.b16 %v5985
    %v6036 = vunpack.c.l.b16 %v5986
    %v6037 = vunpack.c.h.b16 %v5986
    %v6038 = vunpack.c.l.b16 %v5987
    %v6039 = vunpack.c.h.b16 %v5987
    %v6040 = vunpack.c.l.b16 %v5988
    %v6041 = vunpack.c.h.b16 %v5988
    %v6042 = vunpack.c.l.b16 %v5989
    %v6043 = vunpack.c.h.b16 %v5989
    %v6044 = vpack.c.b16 %v6010, %v6008
    %v6045 = vpack.c.b16 %v6011, %v6009
    %v6046 = vpack.c.b16 %v6014, %v6012
    %v6047 = vpack.c.b16 %v6015, %v6013
    %v6048 = vpack.c.b16 %v6018, %v6016
    %v6049 = vpack.c.b16 %v6019, %v6017
    %v6050 = vpack.c.b16 %v6022, %v6020
    %v6051 = vpack.c.b16 %v6023, %v6021
    %v6052 = vpack.c.b16 %v6026, %v6024
    %v6053 = vpack.c.b16 %v6027, %v6025
    %v6054 = vpack.c.b16 %v6030, %v6028
    %v6055 = vpack.c.b16 %v6031, %v6029
    %v6056 = vpack.c.b16 %v6034, %v6032
    %v6057 = vpack.c.b16 %v6035, %v6033
    %v6058 = vpack.c.b16 %v6038, %v6036
    %v6059 = vpack.c.b16 %v6039, %v6037
    %v6060 = vpack.c.b16 %v6042, %v6040
    %v6061 = vpack.c.b16 %v6043, %v6041
    %v6081 = vsel %vm34, %v5970, 0
    %6083 = vmatprep.subr.bf16.mxu0 %v6045
    %6084 = vmatpush1.bf16.msra.mxu0 %v6044
    %6085 = vmatprep.subr.bf16.mxu0 %v6047
    %6086 = vmatpush1.bf16.msra.mxu0 %v6046
    %6087 = vmatprep.subr.bf16.mxu0 %v6049
    %6088 = vmatpush1.bf16.msra.mxu0 %v6048
    %6089 = vmatprep.subr.bf16.mxu0 %v6051
    %6090 = vmatpush1.bf16.msra.mxu0 %v6050
    %6091 = vmatprep.subr.bf16.mxu0 %v6053
    %6092 = vmatpush1.bf16.msra.mxu0 %v6052
    %6093 = vmatprep.subr.bf16.mxu0 %v6055
    %6094 = vmatpush1.bf16.msra.mxu0 %v6054
    %6095 = vmatprep.subr.bf16.mxu0 %v6057
    %6096 = vmatpush1.bf16.msra.mxu0 %v6056
    %6097 = vmatprep.subr.bf16.mxu0 %v6059
    %6098 = vmatpush1.bf16.msra.mxu0 %v6058
    %6099 = vmatprep.subr.bf16.mxu0 %v6061
    %6100 = vmatpush1.bf16.msra.mxu0 %v6060
    %6101 = vmatprep.subr.bf16.mxu0 0
    %6102 = vmatpush1.bf16.msra.mxu0 0
    %6103 = vmatprep.subr.bf16.mxu0 0
    %6104 = vmatpush1.bf16.msra.mxu0 0
    %6105 = vmatprep.subr.bf16.mxu0 0
    %6106 = vmatpush1.bf16.msra.mxu0 0
    %6107 = vmatprep.subr.bf16.mxu0 0
    %6108 = vmatpush1.bf16.msra.mxu0 0
    %6109 = vmatprep.subr.bf16.mxu0 0
    %6110 = vmatpush1.bf16.msra.mxu0 0
    %6111 = vmatprep.subr.bf16.mxu0 0
    %6112 = vmatpush1.bf16.msra.mxu0 0
    %6113 = vmatprep.subr.bf16.mxu0 0
    %6114 = vmatpush1.bf16.msra.mxu0 0
    %6115 = vmatprep.mubr.bf16.mxu0 %v6081
    %6116 = vmatmul.mubr.bf16.gmra.mrb[0].mxu0 %v5969
    %v6117 = vpop.f32.mrb[0].mxu0
    %v6118 = vadd.f32 0.0, %v6117
    %v6119 = vpop.f32.mrb[0].mxu0
    %v6120 = vadd.f32 0.0, %v6119
    %v6121 = vpop.f32.mrb[0].mxu0
    %v6122 = vadd.f32 0.0, %v6121
    %v6123 = vpop.f32.mrb[0].mxu0
    %v6124 = vadd.f32 0.0, %v6123
    %6125 = vdwg.mxu0
    %v6126 = vadd.f32 %v5957, %v6118
    %v6127 = vadd.f32 %v5958, %v6120
    %v6128 = vadd.f32 %v5959, %v6122
    %v6129 = vadd.f32 %v5960, %v6124
    %v6130 = vld [vmem:[%s5964] sm:$0xfe]
    %v6131 = vld [vmem:[%s5964 + $0x8] sm:$0xfe]
    %v6132 = vld [vmem:[%s5964 + $0x10] sm:$0xff]
    %v6133 = vld [vmem:[%s5964 + $0x18] sm:$0xff]
    %v6134 = vld [vmem:[%s5964 + $0x20] sm:$0x1]
    %v6135 = vld [vmem:[%s5964 + $0x28] sm:$0x1]
    %v6136 = vpack.c.bf16 %v6132, %v6130
    %v6137 = vpack.c.bf16 %v6133, %v6131
    %v6138 = vpack.c.bf16 %v6134, %v6134
    %v6139 = vpack.c.bf16 %v6135, %v6135
    %s6140 = scalar_lea.vmem %s5, 1008
    %v6141 = vld [vmem:[%s6140] sm:$0xff]
    %v6142 = vld [vmem:[%s6140 + $0x8] sm:$0xff]
    %v6143 = vld [vmem:[%s6140 + $0x10] sm:$0xff]
    %v6144 = vld [vmem:[%s6140 + $0x18] sm:$0xff]
    %v6145 = vld [vmem:[%s6140 + $0x20] sm:$0xff]
    %v6146 = vld [vmem:[%s6140 + $0x28] sm:$0xff]
    %v6147 = vld [vmem:[%s6140 + $0x30] sm:$0xff]
    %v6148 = vld [vmem:[%s6140 + $0x38] sm:$0xff]
    %v6149 = vld [vmem:[%s6140 + $0x40] sm:$0xff]
    %v6150 = vld [vmem:[%s6140 + $0x48] sm:$0xff]
    %v6151 = vld [vmem:[%s6140 + $0x50] sm:$0xff]
    %v6152 = vld [vmem:[%s6140 + $0x58] sm:$0xff]
    %v6153 = vld [vmem:[%s6140 + $0x60] sm:$0xff]
    %v6154 = vld [vmem:[%s6140 + $0x68] sm:$0xff]
    %v6155 = vld [vmem:[%s6140 + $0x70] sm:$0xff]
    %v6156 = vld [vmem:[%s6140 + $0x78] sm:$0xff]
    %v6157 = vld [vmem:[%s6140 + $0x80] sm:$0xff]
    %v6158 = vld [vmem:[%s6140 + $0x88] sm:$0xff]
    %v6160 = vshrl.u32 %v6136, 16
    %v6162 = vshll.u32 %v6136, 16
    %v6164 = vrot.slane %v6162, 1
    %v6165 = vor.u32 %v6160, %v6164
    %v6167 = vshll.u32 %v6138, 16
    %v6169 = vrot.slane %v6167, 1
    %v6170 = vsel %vm4943, %v6165, %v6169
    %v6172 = vshrl.u32 %v6137, 16
    %v6174 = vshll.u32 %v6137, 16
    %v6176 = vrot.slane %v6174, 1
    %v6177 = vor.u32 %v6172, %v6176
    %v6179 = vshll.u32 %v6139, 16
    %v6181 = vrot.slane %v6179, 1
    %v6182 = vsel %vm4943, %v6177, %v6181
    %v6202 = vunpack.c.l.b16 %v6141
    %v6203 = vunpack.c.h.b16 %v6141
    %v6204 = vunpack.c.l.b16 %v6142
    %v6205 = vunpack.c.h.b16 %v6142
    %v6206 = vunpack.c.l.b16 %v6143
    %v6207 = vunpack.c.h.b16 %v6143
    %v6208 = vunpack.c.l.b16 %v6144
    %v6209 = vunpack.c.h.b16 %v6144
    %v6210 = vunpack.c.l.b16 %v6145
    %v6211 = vunpack.c.h.b16 %v6145
    %v6212 = vunpack.c.l.b16 %v6146
    %v6213 = vunpack.c.h.b16 %v6146
    %v6214 = vunpack.c.l.b16 %v6147
    %v6215 = vunpack.c.h.b16 %v6147
    %v6216 = vunpack.c.l.b16 %v6148
    %v6217 = vunpack.c.h.b16 %v6148
    %v6218 = vunpack.c.l.b16 %v6149
    %v6219 = vunpack.c.h.b16 %v6149
    %v6220 = vunpack.c.l.b16 %v6150
    %v6221 = vunpack.c.h.b16 %v6150
    %v6222 = vunpack.c.l.b16 %v6151
    %v6223 = vunpack.c.h.b16 %v6151
    %v6224 = vunpack.c.l.b16 %v6152
    %v6225 = vunpack.c.h.b16 %v6152
    %v6226 = vunpack.c.l.b16 %v6153
    %v6227 = vunpack.c.h.b16 %v6153
    %v6228 = vunpack.c.l.b16 %v6154
    %v6229 = vunpack.c.h.b16 %v6154
    %v6230 = vunpack.c.l.b16 %v6155
    %v6231 = vunpack.c.h.b16 %v6155
    %v6232 = vunpack.c.l.b16 %v6156
    %v6233 = vunpack.c.h.b16 %v6156
    %v6234 = vunpack.c.l.b16 %v6157
    %v6235 = vunpack.c.h.b16 %v6157
    %v6236 = vunpack.c.l.b16 %v6158
    %v6237 = vunpack.c.h.b16 %v6158
    %v6238 = vpack.c.b16 %v6204, %v6202
    %v6239 = vpack.c.b16 %v6205, %v6203
    %v6240 = vpack.c.b16 %v6208, %v6206
    %v6241 = vpack.c.b16 %v6209, %v6207
    %v6242 = vpack.c.b16 %v6212, %v6210
    %v6243 = vpack.c.b16 %v6213, %v6211
    %v6244 = vpack.c.b16 %v6216, %v6214
    %v6245 = vpack.c.b16 %v6217, %v6215
    %v6246 = vpack.c.b16 %v6220, %v6218
    %v6247 = vpack.c.b16 %v6221, %v6219
    %v6248 = vpack.c.b16 %v6224, %v6222
    %v6249 = vpack.c.b16 %v6225, %v6223
    %v6250 = vpack.c.b16 %v6228, %v6226
    %v6251 = vpack.c.b16 %v6229, %v6227
    %v6252 = vpack.c.b16 %v6232, %v6230
    %v6253 = vpack.c.b16 %v6233, %v6231
    %v6254 = vpack.c.b16 %v6236, %v6234
    %v6255 = vpack.c.b16 %v6237, %v6235
    %v6275 = vsel %vm34, %v6182, 0
    %6277 = vmatprep.subr.bf16.mxu0 %v6239
    %6278 = vmatpush1.bf16.msra.mxu0 %v6238
    %6279 = vmatprep.subr.bf16.mxu0 %v6241
    %6280 = vmatpush1.bf16.msra.mxu0 %v6240
    %6281 = vmatprep.subr.bf16.mxu0 %v6243
    %6282 = vmatpush1.bf16.msra.mxu0 %v6242
    %6283 = vmatprep.subr.bf16.mxu0 %v6245
    %6284 = vmatpush1.bf16.msra.mxu0 %v6244
    %6285 = vmatprep.subr.bf16.mxu0 %v6247
    %6286 = vmatpush1.bf16.msra.mxu0 %v6246
    %6287 = vmatprep.subr.bf16.mxu0 %v6249
    %6288 = vmatpush1.bf16.msra.mxu0 %v6248
    %6289 = vmatprep.subr.bf16.mxu0 %v6251
    %6290 = vmatpush1.bf16.msra.mxu0 %v6250
    %6291 = vmatprep.subr.bf16.mxu0 %v6253
    %6292 = vmatpush1.bf16.msra.mxu0 %v6252
    %6293 = vmatprep.subr.bf16.mxu0 %v6255
    %6294 = vmatpush1.bf16.msra.mxu0 %v6254
    %6295 = vmatprep.subr.bf16.mxu0 0
    %6296 = vmatpush1.bf16.msra.mxu0 0
    %6297 = vmatprep.subr.bf16.mxu0 0
    %6298 = vmatpush1.bf16.msra.mxu0 0
    %6299 = vmatprep.subr.bf16.mxu0 0
    %6300 = vmatpush1.bf16.msra.mxu0 0
    %6301 = vmatprep.subr.bf16.mxu0 0
    %6302 = vmatpush1.bf16.msra.mxu0 0
    %6303 = vmatprep.subr.bf16.mxu0 0
    %6304 = vmatpush1.bf16.msra.mxu0 0
    %6305 = vmatprep.subr.bf16.mxu0 0
    %6306 = vmatpush1.bf16.msra.mxu0 0
    %6307 = vmatprep.subr.bf16.mxu0 0
    %6308 = vmatpush1.bf16.msra.mxu0 0
    %6309 = vmatprep.mubr.bf16.mxu0 %v6275
    %6310 = vmatmul.mubr.bf16.gmra.mrb[0].mxu0 %v6170
    %v6311 = vpop.f32.mrb[0].mxu0
    %v6312 = vadd.f32 0.0, %v6311
    %v6313 = vpop.f32.mrb[0].mxu0
    %v6314 = vadd.f32 0.0, %v6313
    %v6315 = vpop.f32.mrb[0].mxu0
    %v6316 = vadd.f32 0.0, %v6315
    %v6317 = vpop.f32.mrb[0].mxu0
    %v6318 = vadd.f32 0.0, %v6317
    %6319 = vdwg.mxu0
    %v6320 = vadd.f32 %v6126, %v6312
    %v6321 = vadd.f32 %v6127, %v6314
    %v6322 = vadd.f32 %v6128, %v6316
    %v6323 = vadd.f32 %v6129, %v6318
    %v6324 = vld [vmem:[%s5964] sm:$0xfc]
    %v6325 = vld [vmem:[%s5964 + $0x8] sm:$0xfc]
    %v6326 = vld [vmem:[%s5964 + $0x20] sm:$0x3]
    %v6327 = vld [vmem:[%s5964 + $0x28] sm:$0x3]
    %v6328 = vpack.c.bf16 %v6132, %v6324
    %v6329 = vpack.c.bf16 %v6133, %v6325
    %v6330 = vpack.c.bf16 %v6326, %v6326
    %v6331 = vpack.c.bf16 %v6327, %v6327
    %s6332 = scalar_lea.vmem %s5, 1152
    %v6333 = vld [vmem:[%s6332] sm:$0xff]
    %v6334 = vld [vmem:[%s6332 + $0x8] sm:$0xff]
    %v6335 = vld [vmem:[%s6332 + $0x10] sm:$0xff]
    %v6336 = vld [vmem:[%s6332 + $0x18] sm:$0xff]
    %v6337 = vld [vmem:[%s6332 + $0x20] sm:$0xff]
    %v6338 = vld [vmem:[%s6332 + $0x28] sm:$0xff]
    %v6339 = vld [vmem:[%s6332 + $0x30] sm:$0xff]
    %v6340 = vld [vmem:[%s6332 + $0x38] sm:$0xff]
    %v6341 = vld [vmem:[%s6332 + $0x40] sm:$0xff]
    %v6342 = vld [vmem:[%s6332 + $0x48] sm:$0xff]
    %v6343 = vld [vmem:[%s6332 + $0x50] sm:$0xff]
    %v6344 = vld [vmem:[%s6332 + $0x58] sm:$0xff]
    %v6345 = vld [vmem:[%s6332 + $0x60] sm:$0xff]
    %v6346 = vld [vmem:[%s6332 + $0x68] sm:$0xff]
    %v6347 = vld [vmem:[%s6332 + $0x70] sm:$0xff]
    %v6348 = vld [vmem:[%s6332 + $0x78] sm:$0xff]
    %v6349 = vld [vmem:[%s6332 + $0x80] sm:$0xff]
    %v6350 = vld [vmem:[%s6332 + $0x88] sm:$0xff]
    %v6355 = vrot.slane %v6328, 1
    %v6356 = vrot.slane %v6330, 1
    %v6357 = vsel %vm5272, %v6355, %v6356
    %v6358 = vrot.slane %v6329, 1
    %v6359 = vrot.slane %v6331, 1
    %v6360 = vsel %vm5272, %v6358, %v6359
    %v6380 = vunpack.c.l.b16 %v6333
    %v6381 = vunpack.c.h.b16 %v6333
    %v6382 = vunpack.c.l.b16 %v6334
    %v6383 = vunpack.c.h.b16 %v6334
    %v6384 = vunpack.c.l.b16 %v6335
    %v6385 = vunpack.c.h.b16 %v6335
    %v6386 = vunpack.c.l.b16 %v6336
    %v6387 = vunpack.c.h.b16 %v6336
    %v6388 = vunpack.c.l.b16 %v6337
    %v6389 = vunpack.c.h.b16 %v6337
    %v6390 = vunpack.c.l.b16 %v6338
    %v6391 = vunpack.c.h.b16 %v6338
    %v6392 = vunpack.c.l.b16 %v6339
    %v6393 = vunpack.c.h.b16 %v6339
    %v6394 = vunpack.c.l.b16 %v6340
    %v6395 = vunpack.c.h.b16 %v6340
    %v6396 = vunpack.c.l.b16 %v6341
    %v6397 = vunpack.c.h.b16 %v6341
    %v6398 = vunpack.c.l.b16 %v6342
    %v6399 = vunpack.c.h.b16 %v6342
    %v6400 = vunpack.c.l.b16 %v6343
    %v6401 = vunpack.c.h.b16 %v6343
    %v6402 = vunpack.c.l.b16 %v6344
    %v6403 = vunpack.c.h.b16 %v6344
    %v6404 = vunpack.c.l.b16 %v6345
    %v6405 = vunpack.c.h.b16 %v6345
    %v6406 = vunpack.c.l.b16 %v6346
    %v6407 = vunpack.c.h.b16 %v6346
    %v6408 = vunpack.c.l.b16 %v6347
    %v6409 = vunpack.c.h.b16 %v6347
    %v6410 = vunpack.c.l.b16 %v6348
    %v6411 = vunpack.c.h.b16 %v6348
    %v6412 = vunpack.c.l.b16 %v6349
    %v6413 = vunpack.c.h.b16 %v6349
    %v6414 = vunpack.c.l.b16 %v6350
    %v6415 = vunpack.c.h.b16 %v6350
    %v6416 = vpack.c.b16 %v6382, %v6380
    %v6417 = vpack.c.b16 %v6383, %v6381
    %v6418 = vpack.c.b16 %v6386, %v6384
    %v6419 = vpack.c.b16 %v6387, %v6385
    %v6420 = vpack.c.b16 %v6390, %v6388
    %v6421 = vpack.c.b16 %v6391, %v6389
    %v6422 = vpack.c.b16 %v6394, %v6392
    %v6423 = vpack.c.b16 %v6395, %v6393
    %v6424 = vpack.c.b16 %v6398, %v6396
    %v6425 = vpack.c.b16 %v6399, %v6397
    %v6426 = vpack.c.b16 %v6402, %v6400
    %v6427 = vpack.c.b16 %v6403, %v6401
    %v6428 = vpack.c.b16 %v6406, %v6404
    %v6429 = vpack.c.b16 %v6407, %v6405
    %v6430 = vpack.c.b16 %v6410, %v6408
    %v6431 = vpack.c.b16 %v6411, %v6409
    %v6432 = vpack.c.b16 %v6414, %v6412
    %v6433 = vpack.c.b16 %v6415, %v6413
    %v6453 = vsel %vm34, %v6360, 0
    %6455 = vmatprep.subr.bf16.mxu0 %v6417
    %6456 = vmatpush1.bf16.msra.mxu0 %v6416
    %6457 = vmatprep.subr.bf16.mxu0 %v6419
    %6458 = vmatpush1.bf16.msra.mxu0 %v6418
    %6459 = vmatprep.subr.bf16.mxu0 %v6421
    %6460 = vmatpush1.bf16.msra.mxu0 %v6420
    %6461 = vmatprep.subr.bf16.mxu0 %v6423
    %6462 = vmatpush1.bf16.msra.mxu0 %v6422
    %6463 = vmatprep.subr.bf16.mxu0 %v6425
    %6464 = vmatpush1.bf16.msra.mxu0 %v6424
    %6465 = vmatprep.subr.bf16.mxu0 %v6427
    %6466 = vmatpush1.bf16.msra.mxu0 %v6426
    %6467 = vmatprep.subr.bf16.mxu0 %v6429
    %6468 = vmatpush1.bf16.msra.mxu0 %v6428
    %6469 = vmatprep.subr.bf16.mxu0 %v6431
    %6470 = vmatpush1.bf16.msra.mxu0 %v6430
    %6471 = vmatprep.subr.bf16.mxu0 %v6433
    %6472 = vmatpush1.bf16.msra.mxu0 %v6432
    %6473 = vmatprep.subr.bf16.mxu0 0
    %6474 = vmatpush1.bf16.msra.mxu0 0
    %6475 = vmatprep.subr.bf16.mxu0 0
    %6476 = vmatpush1.bf16.msra.mxu0 0
    %6477 = vmatprep.subr.bf16.mxu0 0
    %6478 = vmatpush1.bf16.msra.mxu0 0
    %6479 = vmatprep.subr.bf16.mxu0 0
    %6480 = vmatpush1.bf16.msra.mxu0 0
    %6481 = vmatprep.subr.bf16.mxu0 0
    %6482 = vmatpush1.bf16.msra.mxu0 0
    %6483 = vmatprep.subr.bf16.mxu0 0
    %6484 = vmatpush1.bf16.msra.mxu0 0
    %6485 = vmatprep.subr.bf16.mxu0 0
    %6486 = vmatpush1.bf16.msra.mxu0 0
    %6487 = vmatprep.mubr.bf16.mxu0 %v6453
    %6488 = vmatmul.mubr.bf16.gmra.mrb[0].mxu0 %v6357
    %v6489 = vpop.f32.mrb[0].mxu0
    %v6490 = vadd.f32 0.0, %v6489
    %v6491 = vpop.f32.mrb[0].mxu0
    %v6492 = vadd.f32 0.0, %v6491
    %v6493 = vpop.f32.mrb[0].mxu0
    %v6494 = vadd.f32 0.0, %v6493
    %v6495 = vpop.f32.mrb[0].mxu0
    %v6496 = vadd.f32 0.0, %v6495
    %6497 = vdwg.mxu0
    %v6498 = vadd.f32 %v6320, %v6490
    %v6499 = vadd.f32 %v6321, %v6492
    %v6500 = vadd.f32 %v6322, %v6494
    %v6501 = vadd.f32 %v6323, %v6496
    %v6502 = vld [vmem:[%s6] sm:$0x3]
    %v6504 = vlaneseq
    %v6505 = vshrl.u32 %v6504, 7
    %v6506 = vsub.s32 0, %v6505
    %v6507 = vrot.slane %v6502, %v6506
    %v6508 = vlaneseq
    %v6509 = vshrl.u32 %v6508, 7
    %v6510 = vsub.s32 1, %v6509
    %v6511 = vrot.slane %v6502, %v6510
    %v6514 = vadd.f32 %v6498, %v6507
    %v6515 = vadd.f32 %v6499, %v6511
    %v6516 = vadd.f32 %v6500, %v6507
    %v6517 = vadd.f32 %v6501, %v6511
    %v6518 = vmax.f32 %v6514, 0.0
    %v6519 = vmax.f32 %v6515, 0.0
    %v6520 = vmax.f32 %v6516, 0.0
    %v6521 = vmax.f32 %v6517, 0.0
    %v6522 = vpack.c.bf16 %v6520, %v6518
    %v6523 = vpack.c.bf16 %v6521, %v6519
    %v6524 = vld [vmem:[%s7] sm:$0xf]
    %v6525 = vld [vmem:[%s7 + $0x4] sm:$0xf]
    %v6526 = vld [vmem:[%s7 + $0x8] sm:$0xf]
    %v6527 = vld [vmem:[%s7 + $0xc] sm:$0xf]
    %v6528 = vld [vmem:[%s7 + $0x10] sm:$0xf]
    %v6529 = vld [vmem:[%s7 + $0x14] sm:$0xf]
    %v6530 = vld [vmem:[%s7 + $0x18] sm:$0xf]
    %v6531 = vld [vmem:[%s7 + $0x1c] sm:$0xf]
    %v6532 = vld [vmem:[%s7 + $0x20] sm:$0xf]
    %v6533 = vld [vmem:[%s7 + $0x24] sm:$0xf]
    %v6534 = vld [vmem:[%s7 + $0x28] sm:$0xf]
    %v6535 = vld [vmem:[%s7 + $0x2c] sm:$0xf]
    %v6536 = vld [vmem:[%s7 + $0x30] sm:$0xf]
    %v6537 = vld [vmem:[%s7 + $0x34] sm:$0xf]
    %v6538 = vld [vmem:[%s7 + $0x38] sm:$0xf]
    %v6539 = vld [vmem:[%s7 + $0x3c] sm:$0xf]
    %v6540 = vld [vmem:[%s7 + $0x40] sm:$0xf]
    %v6541 = vld [vmem:[%s7 + $0x44] sm:$0xf]
    %v6542 = vld [vmem:[%s8] sm:$0x1]
    %v6544 = vlaneseq
    %v6545 = vshrl.u32 %v6544, 7
    %v6546 = vsub.s32 0, %v6545
    %v6547 = vrot.slane %v6542, %v6546
    %v6567 = vunpack.c.l.b16 %v6524
    %v6568 = vunpack.c.l.b16 %v6525
    %v6569 = vunpack.c.l.b16 %v6526
    %v6570 = vunpack.c.l.b16 %v6527
    %v6571 = vunpack.c.l.b16 %v6528
    %v6572 = vunpack.c.l.b16 %v6529
    %v6573 = vunpack.c.l.b16 %v6530
    %v6574 = vunpack.c.l.b16 %v6531
    %v6575 = vunpack.c.l.b16 %v6532
    %v6576 = vunpack.c.l.b16 %v6533
    %v6577 = vunpack.c.l.b16 %v6534
    %v6578 = vunpack.c.l.b16 %v6535
    %v6579 = vunpack.c.l.b16 %v6536
    %v6580 = vunpack.c.l.b16 %v6537
    %v6581 = vunpack.c.l.b16 %v6538
    %v6582 = vunpack.c.l.b16 %v6539
    %v6583 = vunpack.c.l.b16 %v6540
    %v6584 = vunpack.c.l.b16 %v6541
    %v6585 = vpack.c.b16 %v6568, %v6567
    %v6586 = vpack.c.b16 %v6570, %v6569
    %v6587 = vpack.c.b16 %v6572, %v6571
    %v6588 = vpack.c.b16 %v6574, %v6573
    %v6589 = vpack.c.b16 %v6576, %v6575
    %v6590 = vpack.c.b16 %v6578, %v6577
    %v6591 = vpack.c.b16 %v6580, %v6579
    %v6592 = vpack.c.b16 %v6582, %v6581
    %v6593 = vpack.c.b16 %v6584, %v6583
    %v6604 = vsel %vm34, %v6523, 0
    %6606 = vmatprep.subr.bf16.mxu0 0
    %6607 = vmatpush1.bf16.msra.mxu0 %v6585
    %6608 = vmatprep.subr.bf16.mxu0 0
    %6609 = vmatpush1.bf16.msra.mxu0 %v6586
    %6610 = vmatprep.subr.bf16.mxu0 0
    %6611 = vmatpush1.bf16.msra.mxu0 %v6587
    %6612 = vmatprep.subr.bf16.mxu0 0
    %6613 = vmatpush1.bf16.msra.mxu0 %v6588
    %6614 = vmatprep.subr.bf16.mxu0 0
    %6615 = vmatpush1.bf16.msra.mxu0 %v6589
    %6616 = vmatprep.subr.bf16.mxu0 0
    %6617 = vmatpush1.bf16.msra.mxu0 %v6590
    %6618 = vmatprep.subr.bf16.mxu0 0
    %6619 = vmatpush1.bf16.msra.mxu0 %v6591
    %6620 = vmatprep.subr.bf16.mxu0 0
    %6621 = vmatpush1.bf16.msra.mxu0 %v6592
    %6622 = vmatprep.subr.bf16.mxu0 0
    %6623 = vmatpush1.bf16.msra.mxu0 %v6593
    %6624 = vmatprep.subr.bf16.mxu0 0
    %6625 = vmatpush1.bf16.msra.mxu0 0
    %6626 = vmatprep.subr.bf16.mxu0 0
    %6627 = vmatpush1.bf16.msra.mxu0 0
    %6628 = vmatprep.subr.bf16.mxu0 0
    %6629 = vmatpush1.bf16.msra.mxu0 0
    %6630 = vmatprep.subr.bf16.mxu0 0
    %6631 = vmatpush1.bf16.msra.mxu0 0
    %6632 = vmatprep.subr.bf16.mxu0 0
    %6633 = vmatpush1.bf16.msra.mxu0 0
    %6634 = vmatprep.subr.bf16.mxu0 0
    %6635 = vmatpush1.bf16.msra.mxu0 0
    %6636 = vmatprep.subr.bf16.mxu0 0
    %6637 = vmatpush1.bf16.msra.mxu0 0
    %6638 = vmatprep.mubr.bf16.mxu0 %v6604
    %6639 = vmatmul.mubr.bf16.gmra.mrb[0].mxu0 %v6522
    %v6640 = vpop.f32.mrb[0].mxu0
    %v6641 = vadd.f32 %v6547, %v6640
    %v6642 = vpop.f32.mrb[0].mxu0
    %v6643 = vpop.f32.mrb[0].mxu0
    %v6644 = vadd.f32 %v6547, %v6643
    %v6645 = vpop.f32.mrb[0].mxu0
    %6646 = vdwg.mxu0
    %s6647 = smul.u32 %s4884, 16
    %s6648 = scalar_lea.vmem %s9, %s6647
    %vm6649 = vcmask 261120
    %6650 = vst.msk [vmem:[%s6648] sm:$0xff] %vm6649, %v6641
    %6651 = vst.msk [vmem:[%s6648 + $0x8] sm:$0xff] %vm6649, %v6644
  $region49: #{unet_forward.5} parent=0 // loop_footer
    %s4888 = sadd.s32 1, %s4884
  $region50: #{unet_forward.5} parent=0 // loop_footer_branch
    %4883 = sbr.rel target = $region46
  $region51: #{unet_forward.5} parent=0 // loop_exit
    _
  // Predicated region
  $region52: #{unet_forward.5} parent=0 // pred_check
    _
  $region53: #{unet_forward.5} parent=0 // pred_check_branch
    %6653 = sbr.rel (0) target = $region55
  $region54: #{unet_forward.5} parent=0 // pred_region
    _
  $region55: #{unet_forward.5} parent=0 // pred_fallthru
    _
  // Predicated region
  $region56: #{unet_forward.5} parent=0 // pred_check
    _
  $region57: #{unet_forward.5} parent=0 // pred_check_branch
    %6655 = sbr.rel (0) target = $region59
  $region58: #{unet_forward.5} parent=0 // pred_region
    _
  $region59: #{unet_forward.5} parent=0 // pred_fallthru
    _

</llo_original>
